<compile_context>
chip_gen: v6e
topology: v6e:2x2x1
jax: 0.10.0
libtpu: 0.0.40
codegen_flags: <defaults>
</compile_context>

<pallas_src>
import functools

import jax
import jax.numpy as jnp
from jax.experimental import pallas as pl
from jax.experimental.pallas import tpu as pltpu

BN_EPS = 1e-5


# ------------------------------ small helpers -------------------------------


def _largest_divisor(n, target):
    """Largest divisor of n that is <= target (>= 1)."""
    for t in range(min(target, n), 0, -1):
        if n % t == 0:
            return t
    return 1


def _stats_row_tile(m, target=512):
    """Row-block for the (M, C) stats reduction: divides M, multiple of 8."""
    if m <= target:
        return m
    for t in range(target - target % 8, 7, -8):
        if m % t == 0:
            return t
    return m


# -------------------------- BatchNorm statistics -----------------------------


def _bn_stats_kernel(x_ref, sum_ref, sq_ref):
    """Accumulate per-channel sum and sum-of-squares over row blocks."""
    @pl.when(pl.program_id(0) == 0)
    def _():
        sum_ref[...] = jnp.zeros_like(sum_ref)
        sq_ref[...] = jnp.zeros_like(sq_ref)

    x = x_ref[...].astype(jnp.float32)
    sum_ref[...] += jnp.sum(x, axis=0, keepdims=True)
    sq_ref[...] += jnp.sum(x * x, axis=0, keepdims=True)


def bn_scale_shift(x_nhwc, gamma, beta):
    """Training-mode BatchNorm folded to per-channel (scale, shift), (1, C)."""
    n, h, w, c = x_nhwc.shape
    m = n * h * w
    xf = x_nhwc.reshape(m, c)
    tm = _stats_row_tile(m)
    s, q = pl.pallas_call(
        _bn_stats_kernel,
        grid=(m // tm,),
        in_specs=[pl.BlockSpec((tm, c), lambda i: (i, 0))],
        out_specs=[pl.BlockSpec((1, c), lambda i: (0, 0)),
                   pl.BlockSpec((1, c), lambda i: (0, 0))],
        out_shape=[jax.ShapeDtypeStruct((1, c), jnp.float32),
                   jax.ShapeDtypeStruct((1, c), jnp.float32)],
        compiler_params=pltpu.CompilerParams(
            dimension_semantics=("arbitrary",)),
    )(xf)
    mean = s / m
    var = q / m - mean * mean                      # biased variance
    scale = gamma.reshape(1, c) * jax.lax.rsqrt(var + BN_EPS)
    shift = beta.reshape(1, c) - mean * scale
    return scale, shift


# ------------------- fused BN + ReLU + pad + 3x3 conv kernel -----------------


def _fused_bn_relu_conv3x3_kernel(*refs, th, has_res):
    """normalize(scale,shift) + ReLU + zero-pad(1) + 3x3 conv
       [+ fused 1x1-conv residual branch] for one (batch, row-block) step."""
    if has_res:
        (x_ref, scale_ref, shift_ref, w_ref, b_ref,
         res_ref, w1_ref, b1_ref, o_ref, pbuf) = refs
    else:
        (x_ref, scale_ref, shift_ref, w_ref, b_ref, o_ref, pbuf) = refs

    _, hc, wc, cin = x_ref.shape
    cout = w_ref.shape[-1]
    i = pl.program_id(1)

    # Build the normalized, ReLU'd, zero-padded image once per batch element;
    # the VMEM scratch persists across the (arbitrary) row-block grid axis.
    @pl.when(i == 0)
    def _():
        pbuf[...] = jnp.zeros_like(pbuf)
        scale = scale_ref[...].reshape(1, 1, cin)      # hoisted broadcasts
        shift = shift_ref[...].reshape(1, 1, cin)

        def fill(j, carry):
            r = pl.multiple_of(j * th, th)
            xs = x_ref[0, pl.ds(r, th), :, :].astype(jnp.float32)
            pbuf[pl.ds(r + 1, th), pl.ds(1, wc), :] = jnp.maximum(
                xs * scale + shift, 0.0)
            return carry

        jax.lax.fori_loop(0, hc // th, fill, 0)

    # 3x3 "same" conv for output rows [i*th, (i+1)*th).
    r0 = pl.multiple_of(i * th, th)
    win = pbuf[pl.ds(r0, th + 2), :, :]                 # (th+2, wc+2, cin)
    taps = [win[kh:kh + th, kw:kw + wc, :]
            for kh in range(3) for kw in range(3)]

    if cin % 128 == 0:
        # Lane-aligned production path: one K = 9*Cin matmul (im2col).
        patches = jnp.concatenate(taps, axis=-1).reshape(th * wc, 9 * cin)
        acc = jnp.dot(patches, w_ref[...].reshape(9 * cin, cout),
                      preferred_element_type=jnp.float32)
    else:
        # Small-channel (toy) path: 9 accumulated MXU matmuls in fp32.
        acc = jnp.zeros((th * wc, cout), jnp.float32)
        for t in range(9):
            acc = acc + jnp.dot(taps[t].reshape(th * wc, cin), w_ref[t],
                                preferred_element_type=jnp.float32)
    acc = acc + b_ref[...]

    if has_res:
        # Fused branch-1: 1x1 conv on the residual source + residual add.
        res = res_ref[...].reshape(th * wc, cin).astype(jnp.float32)
        acc = acc + jnp.dot(res, w1_ref[...],
                            preferred_element_type=jnp.float32) + b1_ref[...]

    o_ref[...] = acc.reshape(1, th, wc, cout).astype(o_ref.dtype)


def fused_bn_relu_conv3x3(x_img, scale, shift, w9, bias,
                          res_src=None, w1=None, b1=None, row_tile=8):
    n, hc, wc, cin = x_img.shape
    cout = w9.shape[-1]
    th = _largest_divisor(hc, row_tile)
    has_res = res_src is not None

    in_specs = [
        pl.BlockSpec((1, hc, wc, cin), lambda nb, ib: (nb, 0, 0, 0)),  # image
        pl.BlockSpec((1, cin), lambda nb, ib: (0, 0)),                 # scale
        pl.BlockSpec((1, cin), lambda nb, ib: (0, 0)),                 # shift
        pl.BlockSpec((9, cin, cout), lambda nb, ib: (0, 0, 0)),        # w3x3
        pl.BlockSpec((1, cout), lambda nb, ib: (0, 0)),                # bias
    ]
    args = [x_img, scale, shift, w9, bias.reshape(1, cout)]
    if has_res:
        in_specs += [
            pl.BlockSpec((1, th, wc, cin), lambda nb, ib: (nb, ib, 0, 0)),
            pl.BlockSpec((cin, cout), lambda nb, ib: (0, 0)),
            pl.BlockSpec((1, cout), lambda nb, ib: (0, 0)),
        ]
        args += [res_src, w1, b1.reshape(1, cout)]

    kern = functools.partial(_fused_bn_relu_conv3x3_kernel,
                             th=th, has_res=has_res)
    return pl.pallas_call(
        kern,
        grid=(n, hc // th),
        in_specs=in_specs,
        out_specs=pl.BlockSpec((1, th, wc, cout),
                               lambda nb, ib: (nb, ib, 0, 0)),
        out_shape=jax.ShapeDtypeStruct((n, hc, wc, cout), x_img.dtype),
        scratch_shapes=[pltpu.VMEM((hc + 2, wc + 2, cin), jnp.float32)],
        compiler_params=pltpu.CompilerParams(
            dimension_semantics=("parallel", "arbitrary")),
    )(*args)


# --------------------------------- GBlock ------------------------------------


def upsample2x_nearest(x_nhwc):
    # torch.nn.Upsample(scale_factor=2, mode='nearest'); pure data movement.
    return jnp.repeat(jnp.repeat(x_nhwc, 2, axis=1), 2, axis=2)


def gblock_forward(x_nchw, params, up):
    """GBlock forward pass (training-mode BatchNorm). NCHW in / NCHW out."""
    x = jnp.transpose(x_nchw, (0, 2, 3, 1))                       # NHWC
    _, _, _, cin = x.shape
    cout = params["conv1_w"].shape[0]

    # bn1 stats on x. Nearest upsample duplicates every element exactly 4x,
    # so mean/var of up(x) equal those of x; the normalize+ReLU can therefore
    # be applied after the upsample, inside the conv2 kernel.
    scale1, shift1 = bn_scale_shift(x, params["bn1_g"], params["bn1_b"])

    xs = upsample2x_nearest(x) if up else x       # conv-resolution input

    # fused: bn1-normalize + ReLU + pad + conv2 (3x3, Cin->Cin)
    w2 = jnp.transpose(params["conv2_w"], (2, 3, 1, 0)).reshape(9, cin, cin)
    mid = fused_bn_relu_conv3x3(xs, scale1, shift1, w2, params["conv2_b"])

    scale2, shift2 = bn_scale_shift(mid, params["bn2_g"], params["bn2_b"])

    # fused: bn2-normalize + ReLU + pad + conv3 (3x3, Cin->Cout)
    #        + branch-1 conv1 (1x1 on xs) + residual add, all in one kernel.
    w3 = jnp.transpose(params["conv3_w"], (2, 3, 1, 0)).reshape(9, cin, cout)
    w1 = jnp.transpose(params["conv1_w"].reshape(cout, cin), (1, 0))
    y = fused_bn_relu_conv3x3(mid, scale2, shift2, w3, params["conv3_b"],
                              res_src=xs, w1=w1, b1=params["conv1_b"])

    return jnp.transpose(y, (0, 3, 1, 2))                         # NCHW


# ---------------------------- plain-JAX reference ----------------------------


def gblock_reference(x, params, up):
    def conv(x, w, b, pad):
        y = jax.lax.conv_general_dilated(
            x, w, window_strides=(1, 1), padding=[(pad, pad), (pad, pad)],
            dimension_numbers=("NCHW", "OIHW", "NCHW"))
        return y + b.reshape(1, -1, 1, 1)

    def bn(x, g, b):
        mean = jnp.mean(x, axis=(0, 2, 3), keepdims=True)
        var = jnp.mean((x - mean) ** 2, axis=(0, 2, 3), keepdims=True)
        return ((x - mean) * jax.lax.rsqrt(var + BN_EPS) * g.reshape(1, -1, 1, 1)
                + b.reshape(1, -1, 1, 1))

    def up2(x):
        return jnp.repeat(jnp.repeat(x, 2, axis=2), 2, axis=3)

    out1 = conv(up2(x) if up else x, params["conv1_w"], params["conv1_b"], 0)
    out2 = jnp.maximum(bn(x, params["bn1_g"], params["bn1_b"]), 0.0)
    if up:
        out2 = up2(out2)
    out2 = conv(out2, params["conv2_w"], params["conv2_b"], 1)
    out2 = jnp.maximum(bn(out2, params["bn2_g"], params["bn2_b"]), 0.0)
    out2 = conv(out2, params["conv3_w"], params["conv3_b"], 1)
    return out1 + out2


# ----------------------------------- main ------------------------------------


if __name__ == "__main__":
    N, Cin, Cout, H, W = 2, 4, 8, 16, 16

    key = jax.random.PRNGKey(0)
    ks = jax.random.split(key, 8)
    params = {
        "conv1_w": jax.random.normal(ks[0], (Cout, Cin, 1, 1), jnp.float32) * 0.1,
        "conv1_b": jax.random.normal(ks[1], (Cout,), jnp.float32) * 0.1,
        "conv2_w": jax.random.normal(ks[2], (Cin, Cin, 3, 3), jnp.float32) * 0.1,
        "conv2_b": jax.random.normal(ks[3], (Cin,), jnp.float32) * 0.1,
        "conv3_w": jax.random.normal(ks[4], (Cout, Cin, 3, 3), jnp.float32) * 0.1,
        "conv3_b": jax.random.normal(ks[5], (Cout,), jnp.float32) * 0.1,
        # PyTorch BatchNorm2d default affine init: weight=1, bias=0.
        "bn1_g": jnp.ones((Cin,), jnp.float32),
        "bn1_b": jnp.zeros((Cin,), jnp.float32),
        "bn2_g": jnp.ones((Cin,), jnp.float32),
        "bn2_b": jnp.zeros((Cin,), jnp.float32),
    }
    x = jax.random.normal(ks[6], (N, Cin, H, W), jnp.float32)

    fwd = jax.jit(gblock_forward, static_argnums=(2,))

    for up in (True, False):
        y = fwd(x, params, up)
        jax.block_until_ready(y)
        y_ref = gblock_reference(x, params, up)
        s = 2 if up else 1
        expected = (N, Cout, H * s, W * s)
        assert y.shape == expected, (y.shape, expected)
        if not jnp.allclose(y, y_ref, atol=1e-3, rtol=1e-3):
            err = float(jnp.max(jnp.abs(y - y_ref)))
            raise ValueError(f"Pallas GBlock mismatch vs reference "
                             f"(up={up}, max abs err {err})")

    print("KERNEL_OK")
</pallas_src>

<mosaic_0001>
module attributes {stable_mosaic.version = 11 : i64} {
  func.func @_bn_stats_kernel(%arg0: i32, %arg1: memref<512x4xf32, #tpu.memory_space<vmem>>, %arg2: memref<1x4xf32, #tpu.memory_space<vmem>>, %arg3: memref<1x4xf32, #tpu.memory_space<vmem>>) attributes {dimension_semantics = [#tpu.dimension_semantics<arbitrary>], iteration_bounds = array<i64: 1>, scalar_prefetch = 0 : i64, scratch_operands = 0 : i64, tpu.core_type = #tpu.core_type<tc>, window_params = [{transform_indices = @transform_0, window_bounds = array<i64: 512, 4>}, {pipeline_mode = #tpu.pipeline_mode<synchronous>, transform_indices = @transform_1, window_bounds = array<i64: 1, 4>}, {pipeline_mode = #tpu.pipeline_mode<synchronous>, transform_indices = @transform_2, window_bounds = array<i64: 1, 4>}]} {
    %c0_i32 = arith.constant 0 : i32
    %0 = arith.cmpi eq, %arg0, %c0_i32 : i32
    %1 = arith.extui %0 : i1 to i32
    %c0_i32_0 = arith.constant 0 : i32
    %2 = arith.cmpi ne, %1, %c0_i32_0 : i32
    scf.if %2 {
      %cst_11 = arith.constant 0.000000e+00 : f32
      %15 = vector.broadcast %cst_11 : f32 to vector<1x4xf32>
      %c0_12 = arith.constant 0 : index
      %c0_13 = arith.constant 0 : index
      %16 = vector.load %arg2[%c0_12, %c0_13] : memref<1x4xf32, #tpu.memory_space<vmem>>, vector<1x4xf32>
      tpu.vector_store %arg2[%c0_12, %c0_13], %15 {strides = array<i32>} : memref<1x4xf32, #tpu.memory_space<vmem>>, vector<1x4xf32>,
      %cst_14 = arith.constant 0.000000e+00 : f32
      %17 = vector.broadcast %cst_14 : f32 to vector<1x4xf32>
      %c0_15 = arith.constant 0 : index
      %c0_16 = arith.constant 0 : index
      %18 = vector.load %arg3[%c0_15, %c0_16] : memref<1x4xf32, #tpu.memory_space<vmem>>, vector<1x4xf32>
      tpu.vector_store %arg3[%c0_15, %c0_16], %17 {strides = array<i32>} : memref<1x4xf32, #tpu.memory_space<vmem>>, vector<1x4xf32>,
    } else {
    }
    %c0 = arith.constant 0 : index
    %c0_1 = arith.constant 0 : index
    %3 = vector.load %arg1[%c0, %c0_1] : memref<512x4xf32, #tpu.memory_space<vmem>>, vector<512x4xf32>
    %c0_2 = arith.constant 0 : index
    %c0_3 = arith.constant 0 : index
    %4 = vector.load %arg2[%c0_2, %c0_3] : memref<1x4xf32, #tpu.memory_space<vmem>>, vector<1x4xf32>
    %cst = arith.constant dense<0.000000e+00> : vector<4xf32>
    %5 = vector.multi_reduction <add>, %3, %cst [0] : vector<512x4xf32> to vector<4xf32>
    %6 = vector.shape_cast %5 : vector<4xf32> to vector<1x4xf32>
    %7 = arith.addf %4, %6 : vector<1x4xf32>
    %c0_4 = arith.constant 0 : index
    %c0_5 = arith.constant 0 : index
    %8 = vector.load %arg2[%c0_4, %c0_5] : memref<1x4xf32, #tpu.memory_space<vmem>>, vector<1x4xf32>
    tpu.vector_store %arg2[%c0_4, %c0_5], %7 {strides = array<i32>} : memref<1x4xf32, #tpu.memory_space<vmem>>, vector<1x4xf32>,
    %c0_6 = arith.constant 0 : index
    %c0_7 = arith.constant 0 : index
    %9 = vector.load %arg3[%c0_6, %c0_7] : memref<1x4xf32, #tpu.memory_space<vmem>>, vector<1x4xf32>
    %10 = arith.mulf %3, %3 : vector<512x4xf32>
    %cst_8 = arith.constant dense<0.000000e+00> : vector<4xf32>
    %11 = vector.multi_reduction <add>, %10, %cst_8 [0] : vector<512x4xf32> to vector<4xf32>
    %12 = vector.shape_cast %11 : vector<4xf32> to vector<1x4xf32>
    %13 = arith.addf %9, %12 : vector<1x4xf32>
    %c0_9 = arith.constant 0 : index
    %c0_10 = arith.constant 0 : index
    %14 = vector.load %arg3[%c0_9, %c0_10] : memref<1x4xf32, #tpu.memory_space<vmem>>, vector<1x4xf32>
    tpu.vector_store %arg3[%c0_9, %c0_10], %13 {strides = array<i32>} : memref<1x4xf32, #tpu.memory_space<vmem>>, vector<1x4xf32>,
    return
  }
  func.func @transform_0(%arg0: i32) -> (i32, i32) {
    %c0_i32 = arith.constant 0 : i32
    %c0_i32_0 = arith.constant 0 : i32
    return %arg0, %c0_i32 : i32, i32
  }
  func.func @transform_1(%arg0: i32) -> (i32, i32) {
    %c0_i32 = arith.constant 0 : i32
    %c0_i32_0 = arith.constant 0 : i32
    %c0_i32_1 = arith.constant 0 : i32
    return %c0_i32, %c0_i32_0 : i32, i32
  }
  func.func @transform_2(%arg0: i32) -> (i32, i32) {
    %c0_i32 = arith.constant 0 : i32
    %c0_i32_0 = arith.constant 0 : i32
    %c0_i32_1 = arith.constant 0 : i32
    return %c0_i32, %c0_i32_0 : i32, i32
  }
}

module attributes {stable_mosaic.version = 11 : i64} {
  func.func @_fused_bn_relu_conv3x3_kernel(%arg0: i32, %arg1: i32, %arg2: memref<1x32x32x4xf32, #tpu.memory_space<vmem>>, %arg3: memref<1x4xf32, #tpu.memory_space<vmem>>, %arg4: memref<1x4xf32, #tpu.memory_space<vmem>>, %arg5: memref<9x4x4xf32, #tpu.memory_space<vmem>>, %arg6: memref<1x4xf32, #tpu.memory_space<vmem>>, %arg7: memref<1x8x32x4xf32, #tpu.memory_space<vmem>>, %arg8: memref<34x34x4xf32, #tpu.memory_space<vmem>>) attributes {dimension_semantics = [#tpu.dimension_semantics<parallel>, #tpu.dimension_semantics<arbitrary>], iteration_bounds = array<i64: 2, 4>, scalar_prefetch = 0 : i64, scratch_operands = 1 : i64, tpu.core_type = #tpu.core_type<tc>, window_params = [{transform_indices = @transform_0, window_bounds = array<i64: 1, 32, 32, 4>}, {pipeline_mode = #tpu.pipeline_mode<synchronous>, transform_indices = @transform_1, window_bounds = array<i64: 1, 4>}, {pipeline_mode = #tpu.pipeline_mode<synchronous>, transform_indices = @transform_2, window_bounds = array<i64: 1, 4>}, {pipeline_mode = #tpu.pipeline_mode<synchronous>, transform_indices = @transform_3, window_bounds = array<i64: 9, 4, 4>}, {pipeline_mode = #tpu.pipeline_mode<synchronous>, transform_indices = @transform_4, window_bounds = array<i64: 1, 4>}, {transform_indices = @transform_5, window_bounds = array<i64: 1, 8, 32, 4>}]} {
    %c0_i32 = arith.constant 0 : i32
    %0 = arith.cmpi eq, %arg1, %c0_i32 : i32
    %1 = arith.extui %0 : i1 to i32
    %c0_i32_0 = arith.constant 0 : i32
    %2 = arith.cmpi ne, %1, %c0_i32_0 : i32
    scf.if %2 {
      %cst_36 = arith.constant 0.000000e+00 : f32
      %67 = vector.broadcast %cst_36 : f32 to vector<34x34x4xf32>
      %c0_37 = arith.constant 0 : index
      %c0_38 = arith.constant 0 : index
      %c0_39 = arith.constant 0 : index
      %68 = vector.load %arg8[%c0_37, %c0_38, %c0_39] : memref<34x34x4xf32, #tpu.memory_space<vmem>>, vector<34x34x4xf32>
      tpu.vector_store %arg8[%c0_37, %c0_38, %c0_39], %67 {strides = array<i32>} : memref<34x34x4xf32, #tpu.memory_space<vmem>>, vector<34x34x4xf32>,
      %c0_40 = arith.constant 0 : index
      %c0_41 = arith.constant 0 : index
      %69 = vector.load %arg3[%c0_40, %c0_41] : memref<1x4xf32, #tpu.memory_space<vmem>>, vector<1x4xf32>
      %70 = vector.shape_cast %69 : vector<1x4xf32> to vector<1x1x4xf32>
      %c0_42 = arith.constant 0 : index
      %c0_43 = arith.constant 0 : index
      %71 = vector.load %arg4[%c0_42, %c0_43] : memref<1x4xf32, #tpu.memory_space<vmem>>, vector<1x4xf32>
      %72 = vector.shape_cast %71 : vector<1x4xf32> to vector<1x1x4xf32>
      %c0_i32_44 = arith.constant 0 : i32
      %c4_i32 = arith.constant 4 : i32
      %73 = arith.addi %c0_i32_44, %c4_i32 : i32
      %c1_i32 = arith.constant 1 : i32
      scf.for %arg9 = %c0_i32_44 to %73 step %c1_i32  : i32 {
        %c8_i32_46 = arith.constant 8 : i32
        %74 = arith.muli %arg9, %c8_i32_46 : i32
        %75 = tpu.assume_multiple %74, 8 : i32
        %c0_47 = arith.constant 0 : index
        %76 = arith.index_cast %75 : i32 to index
        %c0_48 = arith.constant 0 : index
        %c0_49 = arith.constant 0 : index
        %77 = vector.load %arg2[%c0_47, %76, %c0_48, %c0_49] : memref<1x32x32x4xf32, #tpu.memory_space<vmem>>, vector<1x8x32x4xf32>
        %78 = vector.shape_cast %77 : vector<1x8x32x4xf32> to vector<8x32x4xf32>
        %79 = vector.broadcast %70 : vector<1x1x4xf32> to vector<8x32x4xf32>
        %80 = arith.mulf %78, %79 : vector<8x32x4xf32>
        %81 = vector.broadcast %72 : vector<1x1x4xf32> to vector<8x32x4xf32>
        %82 = arith.addf %80, %81 : vector<8x32x4xf32>
        %cst_50 = arith.constant 0.000000e+00 : f32
        %83 = vector.broadcast %cst_50 : f32 to vector<8x32x4xf32>
        %84 = arith.maximumf %82, %83 : vector<8x32x4xf32>
        %c1_i32_51 = arith.constant 1 : i32
        %85 = arith.addi %75, %c1_i32_51 : i32
        %86 = arith.index_cast %85 : i32 to index
        %c1_52 = arith.constant 1 : index
        %c0_53 = arith.constant 0 : index
        %87 = vector.load %arg8[%86, %c1_52, %c0_53] : memref<34x34x4xf32, #tpu.memory_space<vmem>>, vector<8x32x4xf32>
        tpu.vector_store %arg8[%86, %c1_52, %c0_53], %84 {strides = array<i32>} : memref<34x34x4xf32, #tpu.memory_space<vmem>>, vector<8x32x4xf32>,
      }
      %c4_i32_45 = arith.constant 4 : i32
    } else {
    }
    %c8_i32 = arith.constant 8 : i32
    %3 = arith.muli %arg1, %c8_i32 : i32
    %4 = tpu.assume_multiple %3, 8 : i32
    %5 = arith.index_cast %4 : i32 to index
    %c0 = arith.constant 0 : index
    %c0_1 = arith.constant 0 : index
    %6 = vector.load %arg8[%5, %c0, %c0_1] : memref<34x34x4xf32, #tpu.memory_space<vmem>>, vector<10x34x4xf32>
    %7 = vector.extract_strided_slice %6 {offsets = [0, 0, 0], sizes = [8, 32, 4], strides = [1, 1, 1]} : vector<10x34x4xf32> to vector<8x32x4xf32>
    %8 = vector.extract_strided_slice %6 {offsets = [0, 1, 0], sizes = [8, 32, 4], strides = [1, 1, 1]} : vector<10x34x4xf32> to vector<8x32x4xf32>
    %9 = vector.extract_strided_slice %6 {offsets = [0, 2, 0], sizes = [8, 32, 4], strides = [1, 1, 1]} : vector<10x34x4xf32> to vector<8x32x4xf32>
    %10 = vector.extract_strided_slice %6 {offsets = [1, 0, 0], sizes = [8, 32, 4], strides = [1, 1, 1]} : vector<10x34x4xf32> to vector<8x32x4xf32>
    %11 = vector.extract_strided_slice %6 {offsets = [1, 1, 0], sizes = [8, 32, 4], strides = [1, 1, 1]} : vector<10x34x4xf32> to vector<8x32x4xf32>
    %12 = vector.extract_strided_slice %6 {offsets = [1, 2, 0], sizes = [8, 32, 4], strides = [1, 1, 1]} : vector<10x34x4xf32> to vector<8x32x4xf32>
    %13 = vector.extract_strided_slice %6 {offsets = [2, 0, 0], sizes = [8, 32, 4], strides = [1, 1, 1]} : vector<10x34x4xf32> to vector<8x32x4xf32>
    %14 = vector.extract_strided_slice %6 {offsets = [2, 1, 0], sizes = [8, 32, 4], strides = [1, 1, 1]} : vector<10x34x4xf32> to vector<8x32x4xf32>
    %15 = vector.extract_strided_slice %6 {offsets = [2, 2, 0], sizes = [8, 32, 4], strides = [1, 1, 1]} : vector<10x34x4xf32> to vector<8x32x4xf32>
    %cst = arith.constant 0.000000e+00 : f32
    %16 = vector.broadcast %cst : f32 to vector<256x4xf32>
    %17 = vector.shape_cast %7 : vector<8x32x4xf32> to vector<256x4xf32>
    %c0_2 = arith.constant 0 : index
    %c0_3 = arith.constant 0 : index
    %c0_4 = arith.constant 0 : index
    %18 = vector.load %arg5[%c0_2, %c0_3, %c0_4] : memref<9x4x4xf32, #tpu.memory_space<vmem>>, vector<1x4x4xf32>
    %19 = vector.shape_cast %18 : vector<1x4x4xf32> to vector<4x4xf32>
    %cst_5 = arith.constant dense<0.000000e+00> : vector<256x4xf32>
    %20 = tpu.matmul %17, %19, %cst_5 {dimension_numbers = #tpu.dot_dimension_numbers<[1], [0], [0], [1], [0, 0, 1, 1], [], []>} : vector<256x4xf32>, vector<4x4xf32>, vector<256x4xf32> -> vector<256x4xf32>
    %21 = arith.addf %16, %20 : vector<256x4xf32>
    %22 = vector.shape_cast %8 : vector<8x32x4xf32> to vector<256x4xf32>
    %c1 = arith.constant 1 : index
    %c0_6 = arith.constant 0 : index
    %c0_7 = arith.constant 0 : index
    %23 = vector.load %arg5[%c1, %c0_6, %c0_7] : memref<9x4x4xf32, #tpu.memory_space<vmem>>, vector<1x4x4xf32>
    %24 = vector.shape_cast %23 : vector<1x4x4xf32> to vector<4x4xf32>
    %cst_8 = arith.constant dense<0.000000e+00> : vector<256x4xf32>
    %25 = tpu.matmul %22, %24, %cst_8 {dimension_numbers = #tpu.dot_dimension_numbers<[1], [0], [0], [1], [0, 0, 1, 1], [], []>} : vector<256x4xf32>, vector<4x4xf32>, vector<256x4xf32> -> vector<256x4xf32>
    %26 = arith.addf %21, %25 : vector<256x4xf32>
    %27 = vector.shape_cast %9 : vector<8x32x4xf32> to vector<256x4xf32>
    %c2 = arith.constant 2 : index
    %c0_9 = arith.constant 0 : index
    %c0_10 = arith.constant 0 : index
    %28 = vector.load %arg5[%c2, %c0_9, %c0_10] : memref<9x4x4xf32, #tpu.memory_space<vmem>>, vector<1x4x4xf32>
    %29 = vector.shape_cast %28 : vector<1x4x4xf32> to vector<4x4xf32>
    %cst_11 = arith.constant dense<0.000000e+00> : vector<256x4xf32>
    %30 = tpu.matmul %27, %29, %cst_11 {dimension_numbers = #tpu.dot_dimension_numbers<[1], [0], [0], [1], [0, 0, 1, 1], [], []>} : vector<256x4xf32>, vector<4x4xf32>, vector<256x4xf32> -> vector<256x4xf32>
    %31 = arith.addf %26, %30 : vector<256x4xf32>
    %32 = vector.shape_cast %10 : vector<8x32x4xf32> to vector<256x4xf32>
    %c3 = arith.constant 3 : index
    %c0_12 = arith.constant 0 : index
    %c0_13 = arith.constant 0 : index
    %33 = vector.load %arg5[%c3, %c0_12, %c0_13] : memref<9x4x4xf32, #tpu.memory_space<vmem>>, vector<1x4x4xf32>
    %34 = vector.shape_cast %33 : vector<1x4x4xf32> to vector<4x4xf32>
    %cst_14 = arith.constant dense<0.000000e+00> : vector<256x4xf32>
    %35 = tpu.matmul %32, %34, %cst_14 {dimension_numbers = #tpu.dot_dimension_numbers<[1], [0], [0], [1], [0, 0, 1, 1], [], []>} : vector<256x4xf32>, vector<4x4xf32>, vector<256x4xf32> -> vector<256x4xf32>
    %36 = arith.addf %31, %35 : vector<256x4xf32>
    %37 = vector.shape_cast %11 : vector<8x32x4xf32> to vector<256x4xf32>
    %c4 = arith.constant 4 : index
    %c0_15 = arith.constant 0 : index
    %c0_16 = arith.constant 0 : index
    %38 = vector.load %arg5[%c4, %c0_15, %c0_16] : memref<9x4x4xf32, #tpu.memory_space<vmem>>, vector<1x4x4xf32>
    %39 = vector.shape_cast %38 : vector<1x4x4xf32> to vector<4x4xf32>
    %cst_17 = arith.constant dense<0.000000e+00> : vector<256x4xf32>
    %40 = tpu.matmul %37, %39, %cst_17 {dimension_numbers = #tpu.dot_dimension_numbers<[1], [0], [0], [1], [0, 0, 1, 1], [], []>} : vector<256x4xf32>, vector<4x4xf32>, vector<256x4xf32> -> vector<256x4xf32>
    %41 = arith.addf %36, %40 : vector<256x4xf32>
    %42 = vector.shape_cast %12 : vector<8x32x4xf32> to vector<256x4xf32>
    %c5 = arith.constant 5 : index
    %c0_18 = arith.constant 0 : index
    %c0_19 = arith.constant 0 : index
    %43 = vector.load %arg5[%c5, %c0_18, %c0_19] : memref<9x4x4xf32, #tpu.memory_space<vmem>>, vector<1x4x4xf32>
    %44 = vector.shape_cast %43 : vector<1x4x4xf32> to vector<4x4xf32>
    %cst_20 = arith.constant dense<0.000000e+00> : vector<256x4xf32>
    %45 = tpu.matmul %42, %44, %cst_20 {dimension_numbers = #tpu.dot_dimension_numbers<[1], [0], [0], [1], [0, 0, 1, 1], [], []>} : vector<256x4xf32>, vector<4x4xf32>, vector<256x4xf32> -> vector<256x4xf32>
    %46 = arith.addf %41, %45 : vector<256x4xf32>
    %47 = vector.shape_cast %13 : vector<8x32x4xf32> to vector<256x4xf32>
    %c6 = arith.constant 6 : index
    %c0_21 = arith.constant 0 : index
    %c0_22 = arith.constant 0 : index
    %48 = vector.load %arg5[%c6, %c0_21, %c0_22] : memref<9x4x4xf32, #tpu.memory_space<vmem>>, vector<1x4x4xf32>
    %49 = vector.shape_cast %48 : vector<1x4x4xf32> to vector<4x4xf32>
    %cst_23 = arith.constant dense<0.000000e+00> : vector<256x4xf32>
    %50 = tpu.matmul %47, %49, %cst_23 {dimension_numbers = #tpu.dot_dimension_numbers<[1], [0], [0], [1], [0, 0, 1, 1], [], []>} : vector<256x4xf32>, vector<4x4xf32>, vector<256x4xf32> -> vector<256x4xf32>
    %51 = arith.addf %46, %50 : vector<256x4xf32>
    %52 = vector.shape_cast %14 : vector<8x32x4xf32> to vector<256x4xf32>
    %c7 = arith.constant 7 : index
    %c0_24 = arith.constant 0 : index
    %c0_25 = arith.constant 0 : index
    %53 = vector.load %arg5[%c7, %c0_24, %c0_25] : memref<9x4x4xf32, #tpu.memory_space<vmem>>, vector<1x4x4xf32>
    %54 = vector.shape_cast %53 : vector<1x4x4xf32> to vector<4x4xf32>
    %cst_26 = arith.constant dense<0.000000e+00> : vector<256x4xf32>
    %55 = tpu.matmul %52, %54, %cst_26 {dimension_numbers = #tpu.dot_dimension_numbers<[1], [0], [0], [1], [0, 0, 1, 1], [], []>} : vector<256x4xf32>, vector<4x4xf32>, vector<256x4xf32> -> vector<256x4xf32>
    %56 = arith.addf %51, %55 : vector<256x4xf32>
    %57 = vector.shape_cast %15 : vector<8x32x4xf32> to vector<256x4xf32>
    %c8 = arith.constant 8 : index
    %c0_27 = arith.constant 0 : index
    %c0_28 = arith.constant 0 : index
    %58 = vector.load %arg5[%c8, %c0_27, %c0_28] : memref<9x4x4xf32, #tpu.memory_space<vmem>>, vector<1x4x4xf32>
    %59 = vector.shape_cast %58 : vector<1x4x4xf32> to vector<4x4xf32>
    %cst_29 = arith.constant dense<0.000000e+00> : vector<256x4xf32>
    %60 = tpu.matmul %57, %59, %cst_29 {dimension_numbers = #tpu.dot_dimension_numbers<[1], [0], [0], [1], [0, 0, 1, 1], [], []>} : vector<256x4xf32>, vector<4x4xf32>, vector<256x4xf32> -> vector<256x4xf32>
    %61 = arith.addf %56, %60 : vector<256x4xf32>
    %c0_30 = arith.constant 0 : index
    %c0_31 = arith.constant 0 : index
    %62 = vector.load %arg6[%c0_30, %c0_31] : memref<1x4xf32, #tpu.memory_space<vmem>>, vector<1x4xf32>
    %63 = vector.broadcast %62 : vector<1x4xf32> to vector<256x4xf32>
    %64 = arith.addf %61, %63 : vector<256x4xf32>
    %65 = vector.shape_cast %64 : vector<256x4xf32> to vector<1x8x32x4xf32>
    %c0_32 = arith.constant 0 : index
    %c0_33 = arith.constant 0 : index
    %c0_34 = arith.constant 0 : index
    %c0_35 = arith.constant 0 : index
    %66 = vector.load %arg7[%c0_32, %c0_33, %c0_34, %c0_35] : memref<1x8x32x4xf32, #tpu.memory_space<vmem>>, vector<1x8x32x4xf32>
    tpu.vector_store %arg7[%c0_32, %c0_33, %c0_34, %c0_35], %65 {strides = array<i32>} : memref<1x8x32x4xf32, #tpu.memory_space<vmem>>, vector<1x8x32x4xf32>,
    return
  }
  func.func @transform_0(%arg0: i32, %arg1: i32) -> (i32, i32, i32, i32) {
    %c0_i32 = arith.constant 0 : i32
    %c0_i32_0 = arith.constant 0 : i32
    %c0_i32_1 = arith.constant 0 : i32
    %c0_i32_2 = arith.constant 0 : i32
    return %arg0, %c0_i32, %c0_i32_0, %c0_i32_1 : i32, i32, i32, i32
  }
  func.func @transform_1(%arg0: i32, %arg1: i32) -> (i32, i32) {
    %c0_i32 = arith.constant 0 : i32
    %c0_i32_0 = arith.constant 0 : i32
    %c0_i32_1 = arith.constant 0 : i32
    return %c0_i32, %c0_i32_0 : i32, i32
  }
  func.func @transform_2(%arg0: i32, %arg1: i32) -> (i32, i32) {
    %c0_i32 = arith.constant 0 : i32
    %c0_i32_0 = arith.constant 0 : i32
    %c0_i32_1 = arith.constant 0 : i32
    return %c0_i32, %c0_i32_0 : i32, i32
  }
  func.func @transform_3(%arg0: i32, %arg1: i32) -> (i32, i32, i32) {
    %c0_i32 = arith.constant 0 : i32
    %c0_i32_0 = arith.constant 0 : i32
    %c0_i32_1 = arith.constant 0 : i32
    %c0_i32_2 = arith.constant 0 : i32
    return %c0_i32, %c0_i32_0, %c0_i32_1 : i32, i32, i32
  }
  func.func @transform_4(%arg0: i32, %arg1: i32) -> (i32, i32) {
    %c0_i32 = arith.constant 0 : i32
    %c0_i32_0 = arith.constant 0 : i32
    %c0_i32_1 = arith.constant 0 : i32
    return %c0_i32, %c0_i32_0 : i32, i32
  }
  func.func @transform_5(%arg0: i32, %arg1: i32) -> (i32, i32, i32, i32) {
    %c0_i32 = arith.constant 0 : i32
    %c0_i32_0 = arith.constant 0 : i32
    %c0_i32_1 = arith.constant 0 : i32
    return %arg0, %arg1, %c0_i32, %c0_i32_0 : i32, i32, i32, i32
  }
}

module attributes {stable_mosaic.version = 11 : i64} {
  func.func @_bn_stats_kernel(%arg0: i32, %arg1: memref<512x4xf32, #tpu.memory_space<vmem>>, %arg2: memref<1x4xf32, #tpu.memory_space<vmem>>, %arg3: memref<1x4xf32, #tpu.memory_space<vmem>>) attributes {dimension_semantics = [#tpu.dimension_semantics<arbitrary>], iteration_bounds = array<i64: 4>, scalar_prefetch = 0 : i64, scratch_operands = 0 : i64, tpu.core_type = #tpu.core_type<tc>, window_params = [{transform_indices = @transform_0, window_bounds = array<i64: 512, 4>}, {pipeline_mode = #tpu.pipeline_mode<synchronous>, transform_indices = @transform_1, window_bounds = array<i64: 1, 4>}, {pipeline_mode = #tpu.pipeline_mode<synchronous>, transform_indices = @transform_2, window_bounds = array<i64: 1, 4>}]} {
    %c0_i32 = arith.constant 0 : i32
    %0 = arith.cmpi eq, %arg0, %c0_i32 : i32
    %1 = arith.extui %0 : i1 to i32
    %c0_i32_0 = arith.constant 0 : i32
    %2 = arith.cmpi ne, %1, %c0_i32_0 : i32
    scf.if %2 {
      %cst_11 = arith.constant 0.000000e+00 : f32
      %15 = vector.broadcast %cst_11 : f32 to vector<1x4xf32>
      %c0_12 = arith.constant 0 : index
      %c0_13 = arith.constant 0 : index
      %16 = vector.load %arg2[%c0_12, %c0_13] : memref<1x4xf32, #tpu.memory_space<vmem>>, vector<1x4xf32>
      tpu.vector_store %arg2[%c0_12, %c0_13], %15 {strides = array<i32>} : memref<1x4xf32, #tpu.memory_space<vmem>>, vector<1x4xf32>,
      %cst_14 = arith.constant 0.000000e+00 : f32
      %17 = vector.broadcast %cst_14 : f32 to vector<1x4xf32>
      %c0_15 = arith.constant 0 : index
      %c0_16 = arith.constant 0 : index
      %18 = vector.load %arg3[%c0_15, %c0_16] : memref<1x4xf32, #tpu.memory_space<vmem>>, vector<1x4xf32>
      tpu.vector_store %arg3[%c0_15, %c0_16], %17 {strides = array<i32>} : memref<1x4xf32, #tpu.memory_space<vmem>>, vector<1x4xf32>,
    } else {
    }
    %c0 = arith.constant 0 : index
    %c0_1 = arith.constant 0 : index
    %3 = vector.load %arg1[%c0, %c0_1] : memref<512x4xf32, #tpu.memory_space<vmem>>, vector<512x4xf32>
    %c0_2 = arith.constant 0 : index
    %c0_3 = arith.constant 0 : index
    %4 = vector.load %arg2[%c0_2, %c0_3] : memref<1x4xf32, #tpu.memory_space<vmem>>, vector<1x4xf32>
    %cst = arith.constant dense<0.000000e+00> : vector<4xf32>
    %5 = vector.multi_reduction <add>, %3, %cst [0] : vector<512x4xf32> to vector<4xf32>
    %6 = vector.shape_cast %5 : vector<4xf32> to vector<1x4xf32>
    %7 = arith.addf %4, %6 : vector<1x4xf32>
    %c0_4 = arith.constant 0 : index
    %c0_5 = arith.constant 0 : index
    %8 = vector.load %arg2[%c0_4, %c0_5] : memref<1x4xf32, #tpu.memory_space<vmem>>, vector<1x4xf32>
    tpu.vector_store %arg2[%c0_4, %c0_5], %7 {strides = array<i32>} : memref<1x4xf32, #tpu.memory_space<vmem>>, vector<1x4xf32>,
    %c0_6 = arith.constant 0 : index
    %c0_7 = arith.constant 0 : index
    %9 = vector.load %arg3[%c0_6, %c0_7] : memref<1x4xf32, #tpu.memory_space<vmem>>, vector<1x4xf32>
    %10 = arith.mulf %3, %3 : vector<512x4xf32>
    %cst_8 = arith.constant dense<0.000000e+00> : vector<4xf32>
    %11 = vector.multi_reduction <add>, %10, %cst_8 [0] : vector<512x4xf32> to vector<4xf32>
    %12 = vector.shape_cast %11 : vector<4xf32> to vector<1x4xf32>
    %13 = arith.addf %9, %12 : vector<1x4xf32>
    %c0_9 = arith.constant 0 : index
    %c0_10 = arith.constant 0 : index
    %14 = vector.load %arg3[%c0_9, %c0_10] : memref<1x4xf32, #tpu.memory_space<vmem>>, vector<1x4xf32>
    tpu.vector_store %arg3[%c0_9, %c0_10], %13 {strides = array<i32>} : memref<1x4xf32, #tpu.memory_space<vmem>>, vector<1x4xf32>,
    return
  }
  func.func @transform_0(%arg0: i32) -> (i32, i32) {
    %c0_i32 = arith.constant 0 : i32
    %c0_i32_0 = arith.constant 0 : i32
    return %arg0, %c0_i32 : i32, i32
  }
  func.func @transform_1(%arg0: i32) -> (i32, i32) {
    %c0_i32 = arith.constant 0 : i32
    %c0_i32_0 = arith.constant 0 : i32
    %c0_i32_1 = arith.constant 0 : i32
    return %c0_i32, %c0_i32_0 : i32, i32
  }
  func.func @transform_2(%arg0: i32) -> (i32, i32) {
    %c0_i32 = arith.constant 0 : i32
    %c0_i32_0 = arith.constant 0 : i32
    %c0_i32_1 = arith.constant 0 : i32
    return %c0_i32, %c0_i32_0 : i32, i32
  }
}

module attributes {stable_mosaic.version = 11 : i64} {
  func.func @_fused_bn_relu_conv3x3_kernel(%arg0: i32, %arg1: i32, %arg2: memref<1x32x32x4xf32, #tpu.memory_space<vmem>>, %arg3: memref<1x4xf32, #tpu.memory_space<vmem>>, %arg4: memref<1x4xf32, #tpu.memory_space<vmem>>, %arg5: memref<9x4x8xf32, #tpu.memory_space<vmem>>, %arg6: memref<1x8xf32, #tpu.memory_space<vmem>>, %arg7: memref<1x8x32x4xf32, #tpu.memory_space<vmem>>, %arg8: memref<4x8xf32, #tpu.memory_space<vmem>>, %arg9: memref<1x8xf32, #tpu.memory_space<vmem>>, %arg10: memref<1x8x32x8xf32, #tpu.memory_space<vmem>>, %arg11: memref<34x34x4xf32, #tpu.memory_space<vmem>>) attributes {dimension_semantics = [#tpu.dimension_semantics<parallel>, #tpu.dimension_semantics<arbitrary>], iteration_bounds = array<i64: 2, 4>, scalar_prefetch = 0 : i64, scratch_operands = 1 : i64, tpu.core_type = #tpu.core_type<tc>, window_params = [{transform_indices = @transform_0, window_bounds = array<i64: 1, 32, 32, 4>}, {pipeline_mode = #tpu.pipeline_mode<synchronous>, transform_indices = @transform_1, window_bounds = array<i64: 1, 4>}, {pipeline_mode = #tpu.pipeline_mode<synchronous>, transform_indices = @transform_2, window_bounds = array<i64: 1, 4>}, {pipeline_mode = #tpu.pipeline_mode<synchronous>, transform_indices = @transform_3, window_bounds = array<i64: 9, 4, 8>}, {pipeline_mode = #tpu.pipeline_mode<synchronous>, transform_indices = @transform_4, window_bounds = array<i64: 1, 8>}, {transform_indices = @transform_5, window_bounds = array<i64: 1, 8, 32, 4>}, {pipeline_mode = #tpu.pipeline_mode<synchronous>, transform_indices = @transform_6, window_bounds = array<i64: 4, 8>}, {pipeline_mode = #tpu.pipeline_mode<synchronous>, transform_indices = @transform_7, window_bounds = array<i64: 1, 8>}, {transform_indices = @transform_8, window_bounds = array<i64: 1, 8, 32, 8>}]} {
    %c0_i32 = arith.constant 0 : i32
    %0 = arith.cmpi eq, %arg1, %c0_i32 : i32
    %1 = arith.extui %0 : i1 to i32
    %c0_i32_0 = arith.constant 0 : i32
    %2 = arith.cmpi ne, %1, %c0_i32_0 : i32
    scf.if %2 {
      %cst_45 = arith.constant 0.000000e+00 : f32
      %75 = vector.broadcast %cst_45 : f32 to vector<34x34x4xf32>
      %c0_46 = arith.constant 0 : index
      %c0_47 = arith.constant 0 : index
      %c0_48 = arith.constant 0 : index
      %76 = vector.load %arg11[%c0_46, %c0_47, %c0_48] : memref<34x34x4xf32, #tpu.memory_space<vmem>>, vector<34x34x4xf32>
      tpu.vector_store %arg11[%c0_46, %c0_47, %c0_48], %75 {strides = array<i32>} : memref<34x34x4xf32, #tpu.memory_space<vmem>>, vector<34x34x4xf32>,
      %c0_49 = arith.constant 0 : index
      %c0_50 = arith.constant 0 : index
      %77 = vector.load %arg3[%c0_49, %c0_50] : memref<1x4xf32, #tpu.memory_space<vmem>>, vector<1x4xf32>
      %78 = vector.shape_cast %77 : vector<1x4xf32> to vector<1x1x4xf32>
      %c0_51 = arith.constant 0 : index
      %c0_52 = arith.constant 0 : index
      %79 = vector.load %arg4[%c0_51, %c0_52] : memref<1x4xf32, #tpu.memory_space<vmem>>, vector<1x4xf32>
      %80 = vector.shape_cast %79 : vector<1x4xf32> to vector<1x1x4xf32>
      %c0_i32_53 = arith.constant 0 : i32
      %c4_i32 = arith.constant 4 : i32
      %81 = arith.addi %c0_i32_53, %c4_i32 : i32
      %c1_i32 = arith.constant 1 : i32
      scf.for %arg12 = %c0_i32_53 to %81 step %c1_i32  : i32 {
        %c8_i32_55 = arith.constant 8 : i32
        %82 = arith.muli %arg12, %c8_i32_55 : i32
        %83 = tpu.assume_multiple %82, 8 : i32
        %c0_56 = arith.constant 0 : index
        %84 = arith.index_cast %83 : i32 to index
        %c0_57 = arith.constant 0 : index
        %c0_58 = arith.constant 0 : index
        %85 = vector.load %arg2[%c0_56, %84, %c0_57, %c0_58] : memref<1x32x32x4xf32, #tpu.memory_space<vmem>>, vector<1x8x32x4xf32>
        %86 = vector.shape_cast %85 : vector<1x8x32x4xf32> to vector<8x32x4xf32>
        %87 = vector.broadcast %78 : vector<1x1x4xf32> to vector<8x32x4xf32>
        %88 = arith.mulf %86, %87 : vector<8x32x4xf32>
        %89 = vector.broadcast %80 : vector<1x1x4xf32> to vector<8x32x4xf32>
        %90 = arith.addf %88, %89 : vector<8x32x4xf32>
        %cst_59 = arith.constant 0.000000e+00 : f32
        %91 = vector.broadcast %cst_59 : f32 to vector<8x32x4xf32>
        %92 = arith.maximumf %90, %91 : vector<8x32x4xf32>
        %c1_i32_60 = arith.constant 1 : i32
        %93 = arith.addi %83, %c1_i32_60 : i32
        %94 = arith.index_cast %93 : i32 to index
        %c1_61 = arith.constant 1 : index
        %c0_62 = arith.constant 0 : index
        %95 = vector.load %arg11[%94, %c1_61, %c0_62] : memref<34x34x4xf32, #tpu.memory_space<vmem>>, vector<8x32x4xf32>
        tpu.vector_store %arg11[%94, %c1_61, %c0_62], %92 {strides = array<i32>} : memref<34x34x4xf32, #tpu.memory_space<vmem>>, vector<8x32x4xf32>,
      }
      %c4_i32_54 = arith.constant 4 : i32
    } else {
    }
    %c8_i32 = arith.constant 8 : i32
    %3 = arith.muli %arg1, %c8_i32 : i32
    %4 = tpu.assume_multiple %3, 8 : i32
    %5 = arith.index_cast %4 : i32 to index
    %c0 = arith.constant 0 : index
    %c0_1 = arith.constant 0 : index
    %6 = vector.load %arg11[%5, %c0, %c0_1] : memref<34x34x4xf32, #tpu.memory_space<vmem>>, vector<10x34x4xf32>
    %7 = vector.extract_strided_slice %6 {offsets = [0, 0, 0], sizes = [8, 32, 4], strides = [1, 1, 1]} : vector<10x34x4xf32> to vector<8x32x4xf32>
    %8 = vector.extract_strided_slice %6 {offsets = [0, 1, 0], sizes = [8, 32, 4], strides = [1, 1, 1]} : vector<10x34x4xf32> to vector<8x32x4xf32>
    %9 = vector.extract_strided_slice %6 {offsets = [0, 2, 0], sizes = [8, 32, 4], strides = [1, 1, 1]} : vector<10x34x4xf32> to vector<8x32x4xf32>
    %10 = vector.extract_strided_slice %6 {offsets = [1, 0, 0], sizes = [8, 32, 4], strides = [1, 1, 1]} : vector<10x34x4xf32> to vector<8x32x4xf32>
    %11 = vector.extract_strided_slice %6 {offsets = [1, 1, 0], sizes = [8, 32, 4], strides = [1, 1, 1]} : vector<10x34x4xf32> to vector<8x32x4xf32>
    %12 = vector.extract_strided_slice %6 {offsets = [1, 2, 0], sizes = [8, 32, 4], strides = [1, 1, 1]} : vector<10x34x4xf32> to vector<8x32x4xf32>
    %13 = vector.extract_strided_slice %6 {offsets = [2, 0, 0], sizes = [8, 32, 4], strides = [1, 1, 1]} : vector<10x34x4xf32> to vector<8x32x4xf32>
    %14 = vector.extract_strided_slice %6 {offsets = [2, 1, 0], sizes = [8, 32, 4], strides = [1, 1, 1]} : vector<10x34x4xf32> to vector<8x32x4xf32>
    %15 = vector.extract_strided_slice %6 {offsets = [2, 2, 0], sizes = [8, 32, 4], strides = [1, 1, 1]} : vector<10x34x4xf32> to vector<8x32x4xf32>
    %cst = arith.constant 0.000000e+00 : f32
    %16 = vector.broadcast %cst : f32 to vector<256x8xf32>
    %17 = vector.shape_cast %7 : vector<8x32x4xf32> to vector<256x4xf32>
    %c0_2 = arith.constant 0 : index
    %c0_3 = arith.constant 0 : index
    %c0_4 = arith.constant 0 : index
    %18 = vector.load %arg5[%c0_2, %c0_3, %c0_4] : memref<9x4x8xf32, #tpu.memory_space<vmem>>, vector<1x4x8xf32>
    %19 = vector.shape_cast %18 : vector<1x4x8xf32> to vector<4x8xf32>
    %cst_5 = arith.constant dense<0.000000e+00> : vector<256x8xf32>
    %20 = tpu.matmul %17, %19, %cst_5 {dimension_numbers = #tpu.dot_dimension_numbers<[1], [0], [0], [1], [0, 0, 1, 1], [], []>} : vector<256x4xf32>, vector<4x8xf32>, vector<256x8xf32> -> vector<256x8xf32>
    %21 = arith.addf %16, %20 : vector<256x8xf32>
    %22 = vector.shape_cast %8 : vector<8x32x4xf32> to vector<256x4xf32>
    %c1 = arith.constant 1 : index
    %c0_6 = arith.constant 0 : index
    %c0_7 = arith.constant 0 : index
    %23 = vector.load %arg5[%c1, %c0_6, %c0_7] : memref<9x4x8xf32, #tpu.memory_space<vmem>>, vector<1x4x8xf32>
    %24 = vector.shape_cast %23 : vector<1x4x8xf32> to vector<4x8xf32>
    %cst_8 = arith.constant dense<0.000000e+00> : vector<256x8xf32>
    %25 = tpu.matmul %22, %24, %cst_8 {dimension_numbers = #tpu.dot_dimension_numbers<[1], [0], [0], [1], [0, 0, 1, 1], [], []>} : vector<256x4xf32>, vector<4x8xf32>, vector<256x8xf32> -> vector<256x8xf32>
    %26 = arith.addf %21, %25 : vector<256x8xf32>
    %27 = vector.shape_cast %9 : vector<8x32x4xf32> to vector<256x4xf32>
    %c2 = arith.constant 2 : index
    %c0_9 = arith.constant 0 : index
    %c0_10 = arith.constant 0 : index
    %28 = vector.load %arg5[%c2, %c0_9, %c0_10] : memref<9x4x8xf32, #tpu.memory_space<vmem>>, vector<1x4x8xf32>
    %29 = vector.shape_cast %28 : vector<1x4x8xf32> to vector<4x8xf32>
    %cst_11 = arith.constant dense<0.000000e+00> : vector<256x8xf32>
    %30 = tpu.matmul %27, %29, %cst_11 {dimension_numbers = #tpu.dot_dimension_numbers<[1], [0], [0], [1], [0, 0, 1, 1], [], []>} : vector<256x4xf32>, vector<4x8xf32>, vector<256x8xf32> -> vector<256x8xf32>
    %31 = arith.addf %26, %30 : vector<256x8xf32>
    %32 = vector.shape_cast %10 : vector<8x32x4xf32> to vector<256x4xf32>
    %c3 = arith.constant 3 : index
    %c0_12 = arith.constant 0 : index
    %c0_13 = arith.constant 0 : index
    %33 = vector.load %arg5[%c3, %c0_12, %c0_13] : memref<9x4x8xf32, #tpu.memory_space<vmem>>, vector<1x4x8xf32>
    %34 = vector.shape_cast %33 : vector<1x4x8xf32> to vector<4x8xf32>
    %cst_14 = arith.constant dense<0.000000e+00> : vector<256x8xf32>
    %35 = tpu.matmul %32, %34, %cst_14 {dimension_numbers = #tpu.dot_dimension_numbers<[1], [0], [0], [1], [0, 0, 1, 1], [], []>} : vector<256x4xf32>, vector<4x8xf32>, vector<256x8xf32> -> vector<256x8xf32>
    %36 = arith.addf %31, %35 : vector<256x8xf32>
    %37 = vector.shape_cast %11 : vector<8x32x4xf32> to vector<256x4xf32>
    %c4 = arith.constant 4 : index
    %c0_15 = arith.constant 0 : index
    %c0_16 = arith.constant 0 : index
    %38 = vector.load %arg5[%c4, %c0_15, %c0_16] : memref<9x4x8xf32, #tpu.memory_space<vmem>>, vector<1x4x8xf32>
    %39 = vector.shape_cast %38 : vector<1x4x8xf32> to vector<4x8xf32>
    %cst_17 = arith.constant dense<0.000000e+00> : vector<256x8xf32>
    %40 = tpu.matmul %37, %39, %cst_17 {dimension_numbers = #tpu.dot_dimension_numbers<[1], [0], [0], [1], [0, 0, 1, 1], [], []>} : vector<256x4xf32>, vector<4x8xf32>, vector<256x8xf32> -> vector<256x8xf32>
    %41 = arith.addf %36, %40 : vector<256x8xf32>
    %42 = vector.shape_cast %12 : vector<8x32x4xf32> to vector<256x4xf32>
    %c5 = arith.constant 5 : index
    %c0_18 = arith.constant 0 : index
    %c0_19 = arith.constant 0 : index
    %43 = vector.load %arg5[%c5, %c0_18, %c0_19] : memref<9x4x8xf32, #tpu.memory_space<vmem>>, vector<1x4x8xf32>
    %44 = vector.shape_cast %43 : vector<1x4x8xf32> to vector<4x8xf32>
    %cst_20 = arith.constant dense<0.000000e+00> : vector<256x8xf32>
    %45 = tpu.matmul %42, %44, %cst_20 {dimension_numbers = #tpu.dot_dimension_numbers<[1], [0], [0], [1], [0, 0, 1, 1], [], []>} : vector<256x4xf32>, vector<4x8xf32>, vector<256x8xf32> -> vector<256x8xf32>
    %46 = arith.addf %41, %45 : vector<256x8xf32>
    %47 = vector.shape_cast %13 : vector<8x32x4xf32> to vector<256x4xf32>
    %c6 = arith.constant 6 : index
    %c0_21 = arith.constant 0 : index
    %c0_22 = arith.constant 0 : index
    %48 = vector.load %arg5[%c6, %c0_21, %c0_22] : memref<9x4x8xf32, #tpu.memory_space<vmem>>, vector<1x4x8xf32>
    %49 = vector.shape_cast %48 : vector<1x4x8xf32> to vector<4x8xf32>
    %cst_23 = arith.constant dense<0.000000e+00> : vector<256x8xf32>
    %50 = tpu.matmul %47, %49, %cst_23 {dimension_numbers = #tpu.dot_dimension_numbers<[1], [0], [0], [1], [0, 0, 1, 1], [], []>} : vector<256x4xf32>, vector<4x8xf32>, vector<256x8xf32> -> vector<256x8xf32>
    %51 = arith.addf %46, %50 : vector<256x8xf32>
    %52 = vector.shape_cast %14 : vector<8x32x4xf32> to vector<256x4xf32>
    %c7 = arith.constant 7 : index
    %c0_24 = arith.constant 0 : index
    %c0_25 = arith.constant 0 : index
    %53 = vector.load %arg5[%c7, %c0_24, %c0_25] : memref<9x4x8xf32, #tpu.memory_space<vmem>>, vector<1x4x8xf32>
    %54 = vector.shape_cast %53 : vector<1x4x8xf32> to vector<4x8xf32>
    %cst_26 = arith.constant dense<0.000000e+00> : vector<256x8xf32>
    %55 = tpu.matmul %52, %54, %cst_26 {dimension_numbers = #tpu.dot_dimension_numbers<[1], [0], [0], [1], [0, 0, 1, 1], [], []>} : vector<256x4xf32>, vector<4x8xf32>, vector<256x8xf32> -> vector<256x8xf32>
    %56 = arith.addf %51, %55 : vector<256x8xf32>
    %57 = vector.shape_cast %15 : vector<8x32x4xf32> to vector<256x4xf32>
    %c8 = arith.constant 8 : index
    %c0_27 = arith.constant 0 : index
    %c0_28 = arith.constant 0 : index
    %58 = vector.load %arg5[%c8, %c0_27, %c0_28] : memref<9x4x8xf32, #tpu.memory_space<vmem>>, vector<1x4x8xf32>
    %59 = vector.shape_cast %58 : vector<1x4x8xf32> to vector<4x8xf32>
    %cst_29 = arith.constant dense<0.000000e+00> : vector<256x8xf32>
    %60 = tpu.matmul %57, %59, %cst_29 {dimension_numbers = #tpu.dot_dimension_numbers<[1], [0], [0], [1], [0, 0, 1, 1], [], []>} : vector<256x4xf32>, vector<4x8xf32>, vector<256x8xf32> -> vector<256x8xf32>
    %61 = arith.addf %56, %60 : vector<256x8xf32>
    %c0_30 = arith.constant 0 : index
    %c0_31 = arith.constant 0 : index
    %62 = vector.load %arg6[%c0_30, %c0_31] : memref<1x8xf32, #tpu.memory_space<vmem>>, vector<1x8xf32>
    %63 = vector.broadcast %62 : vector<1x8xf32> to vector<256x8xf32>
    %64 = arith.addf %61, %63 : vector<256x8xf32>
    %c0_32 = arith.constant 0 : index
    %c0_33 = arith.constant 0 : index
    %c0_34 = arith.constant 0 : index
    %c0_35 = arith.constant 0 : index
    %65 = vector.load %arg7[%c0_32, %c0_33, %c0_34, %c0_35] : memref<1x8x32x4xf32, #tpu.memory_space<vmem>>, vector<1x8x32x4xf32>
    %66 = vector.shape_cast %65 : vector<1x8x32x4xf32> to vector<256x4xf32>
    %c0_36 = arith.constant 0 : index
    %c0_37 = arith.constant 0 : index
    %67 = vector.load %arg8[%c0_36, %c0_37] : memref<4x8xf32, #tpu.memory_space<vmem>>, vector<4x8xf32>
    %cst_38 = arith.constant dense<0.000000e+00> : vector<256x8xf32>
    %68 = tpu.matmul %66, %67, %cst_38 {dimension_numbers = #tpu.dot_dimension_numbers<[1], [0], [0], [1], [0, 0, 1, 1], [], []>} : vector<256x4xf32>, vector<4x8xf32>, vector<256x8xf32> -> vector<256x8xf32>
    %69 = arith.addf %64, %68 : vector<256x8xf32>
    %c0_39 = arith.constant 0 : index
    %c0_40 = arith.constant 0 : index
    %70 = vector.load %arg9[%c0_39, %c0_40] : memref<1x8xf32, #tpu.memory_space<vmem>>, vector<1x8xf32>
    %71 = vector.broadcast %70 : vector<1x8xf32> to vector<256x8xf32>
    %72 = arith.addf %69, %71 : vector<256x8xf32>
    %73 = vector.shape_cast %72 : vector<256x8xf32> to vector<1x8x32x8xf32>
    %c0_41 = arith.constant 0 : index
    %c0_42 = arith.constant 0 : index
    %c0_43 = arith.constant 0 : index
    %c0_44 = arith.constant 0 : index
    %74 = vector.load %arg10[%c0_41, %c0_42, %c0_43, %c0_44] : memref<1x8x32x8xf32, #tpu.memory_space<vmem>>, vector<1x8x32x8xf32>
    tpu.vector_store %arg10[%c0_41, %c0_42, %c0_43, %c0_44], %73 {strides = array<i32>} : memref<1x8x32x8xf32, #tpu.memory_space<vmem>>, vector<1x8x32x8xf32>,
    return
  }
  func.func @transform_0(%arg0: i32, %arg1: i32) -> (i32, i32, i32, i32) {
    %c0_i32 = arith.constant 0 : i32
    %c0_i32_0 = arith.constant 0 : i32
    %c0_i32_1 = arith.constant 0 : i32
    %c0_i32_2 = arith.constant 0 : i32
    return %arg0, %c0_i32, %c0_i32_0, %c0_i32_1 : i32, i32, i32, i32
  }
  func.func @transform_1(%arg0: i32, %arg1: i32) -> (i32, i32) {
    %c0_i32 = arith.constant 0 : i32
    %c0_i32_0 = arith.constant 0 : i32
    %c0_i32_1 = arith.constant 0 : i32
    return %c0_i32, %c0_i32_0 : i32, i32
  }
  func.func @transform_2(%arg0: i32, %arg1: i32) -> (i32, i32) {
    %c0_i32 = arith.constant 0 : i32
    %c0_i32_0 = arith.constant 0 : i32
    %c0_i32_1 = arith.constant 0 : i32
    return %c0_i32, %c0_i32_0 : i32, i32
  }
  func.func @transform_3(%arg0: i32, %arg1: i32) -> (i32, i32, i32) {
    %c0_i32 = arith.constant 0 : i32
    %c0_i32_0 = arith.constant 0 : i32
    %c0_i32_1 = arith.constant 0 : i32
    %c0_i32_2 = arith.constant 0 : i32
    return %c0_i32, %c0_i32_0, %c0_i32_1 : i32, i32, i32
  }
  func.func @transform_4(%arg0: i32, %arg1: i32) -> (i32, i32) {
    %c0_i32 = arith.constant 0 : i32
    %c0_i32_0 = arith.constant 0 : i32
    %c0_i32_1 = arith.constant 0 : i32
    return %c0_i32, %c0_i32_0 : i32, i32
  }
  func.func @transform_5(%arg0: i32, %arg1: i32) -> (i32, i32, i32, i32) {
    %c0_i32 = arith.constant 0 : i32
    %c0_i32_0 = arith.constant 0 : i32
    %c0_i32_1 = arith.constant 0 : i32
    return %arg0, %arg1, %c0_i32, %c0_i32_0 : i32, i32, i32, i32
  }
  func.func @transform_6(%arg0: i32, %arg1: i32) -> (i32, i32) {
    %c0_i32 = arith.constant 0 : i32
    %c0_i32_0 = arith.constant 0 : i32
    %c0_i32_1 = arith.constant 0 : i32
    return %c0_i32, %c0_i32_0 : i32, i32
  }
  func.func @transform_7(%arg0: i32, %arg1: i32) -> (i32, i32) {
    %c0_i32 = arith.constant 0 : i32
    %c0_i32_0 = arith.constant 0 : i32
    %c0_i32_1 = arith.constant 0 : i32
    return %c0_i32, %c0_i32_0 : i32, i32
  }
  func.func @transform_8(%arg0: i32, %arg1: i32) -> (i32, i32, i32, i32) {
    %c0_i32 = arith.constant 0 : i32
    %c0_i32_0 = arith.constant 0 : i32
    %c0_i32_1 = arith.constant 0 : i32
    return %arg0, %arg1, %c0_i32, %c0_i32_0 : i32, i32, i32, i32
  }
}

</mosaic_0001>

<llo_original>
// kernel: gblock_forward.4
$region0: #{gblock_forward.4}
  #allocation0 [shape = 'u32[]', space=smem, size = 0x4, offset = 0x4, fixed_abs, tag = 'smem constant byte address 0x4 - core index']
  #allocation1 [shape = 'u32[144,128]{1,0:T(1,128)}', space=vmem, size = 0x12000, scoped, tag = 'internal scratch']
  %s0 = inlined_call_operand.vmem [shape: f32[512,4], index: 0, kind: input, shape index: {}]
  %s1 = inlined_call_operand.vmem [shape: f32[1,4], index: 1, kind: output, shape index: {0}]
  %s2 = inlined_call_operand.vmem [shape: f32[1,4], index: 2, kind: output, shape index: {1}]
  %3 = xla_tuple %s1, %s2
  %s4 = sld [smem:[#allocation0]]
  $region26: #{gblock_forward.4} parent=0
    _
  %s6 = ssub.s32 1, %s4
  %s7 = scalar_select 0, %s6, %s4
  // Predicated region
  $region2: #{gblock_forward.4} parent=0 // pred_check
    _
  $region3: #{gblock_forward.4} parent=0 // pred_check_branch
    %9 = sbr.rel (0) target = $region5
  $region4: #{gblock_forward.4} parent=0 // pred_region
    _
  $region5: #{gblock_forward.4} parent=0 // pred_fallthru
    _
  %p10 = scmp.eq.s32.totalorder 0, 0
  // Predicated region
  $region6: #{gblock_forward.4} parent=0 // pred_check
    %p11 = pneg %p10
  $region7: #{gblock_forward.4} parent=0 // pred_check_branch
    %13 = sbr.rel (%p11) target = $region9
  $region8: #{gblock_forward.4} parent=0 // pred_region
    %vm14 = vcmask 24576
    %15 = vst.msk [vmem:[%s1] sm:$0x1] %vm14, 0.0
    %16 = vst.msk [vmem:[%s2] sm:$0x1] %vm14, 0.0
  $region9: #{gblock_forward.4} parent=0 // pred_fallthru
    _
  %v17 = vld [vmem:[%s0] sm:$0xff]
  %v18 = vld [vmem:[%s0 + $0x8] sm:$0xff]
  %v19 = vld [vmem:[%s0 + $0x10] sm:$0xff]
  %v20 = vld [vmem:[%s0 + $0x18] sm:$0xff]
  %v21 = vld [vmem:[%s0 + $0x20] sm:$0xff]
  %v22 = vld [vmem:[%s0 + $0x28] sm:$0xff]
  %v23 = vld [vmem:[%s0 + $0x30] sm:$0xff]
  %v24 = vld [vmem:[%s0 + $0x38] sm:$0xff]
  %v25 = vld [vmem:[%s0 + $0x40] sm:$0xff]
  %v26 = vld [vmem:[%s0 + $0x48] sm:$0xff]
  %v27 = vld [vmem:[%s0 + $0x50] sm:$0xff]
  %v28 = vld [vmem:[%s0 + $0x58] sm:$0xff]
  %v29 = vld [vmem:[%s0 + $0x60] sm:$0xff]
  %v30 = vld [vmem:[%s0 + $0x68] sm:$0xff]
  %v31 = vld [vmem:[%s0 + $0x70] sm:$0xff]
  %v32 = vld [vmem:[%s0 + $0x78] sm:$0xff]
  %v33 = vld [vmem:[%s0 + $0x80] sm:$0xff]
  %v34 = vld [vmem:[%s0 + $0x88] sm:$0xff]
  %v35 = vld [vmem:[%s0 + $0x90] sm:$0xff]
  %v36 = vld [vmem:[%s0 + $0x98] sm:$0xff]
  %v37 = vld [vmem:[%s0 + $0xa0] sm:$0xff]
  %v38 = vld [vmem:[%s0 + $0xa8] sm:$0xff]
  %v39 = vld [vmem:[%s0 + $0xb0] sm:$0xff]
  %v40 = vld [vmem:[%s0 + $0xb8] sm:$0xff]
  %v41 = vld [vmem:[%s0 + $0xc0] sm:$0xff]
  %v42 = vld [vmem:[%s0 + $0xc8] sm:$0xff]
  %v43 = vld [vmem:[%s0 + $0xd0] sm:$0xff]
  %v44 = vld [vmem:[%s0 + $0xd8] sm:$0xff]
  %v45 = vld [vmem:[%s0 + $0xe0] sm:$0xff]
  %v46 = vld [vmem:[%s0 + $0xe8] sm:$0xff]
  %v47 = vld [vmem:[%s0 + $0xf0] sm:$0xff]
  %v48 = vld [vmem:[%s0 + $0xf8] sm:$0xff]
  %v49 = vld [vmem:[%s0 + $0x100] sm:$0xff]
  %v50 = vld [vmem:[%s0 + $0x108] sm:$0xff]
  %v51 = vld [vmem:[%s0 + $0x110] sm:$0xff]
  %v52 = vld [vmem:[%s0 + $0x118] sm:$0xff]
  %v53 = vld [vmem:[%s0 + $0x120] sm:$0xff]
  %v54 = vld [vmem:[%s0 + $0x128] sm:$0xff]
  %v55 = vld [vmem:[%s0 + $0x130] sm:$0xff]
  %v56 = vld [vmem:[%s0 + $0x138] sm:$0xff]
  %v57 = vld [vmem:[%s0 + $0x140] sm:$0xff]
  %v58 = vld [vmem:[%s0 + $0x148] sm:$0xff]
  %v59 = vld [vmem:[%s0 + $0x150] sm:$0xff]
  %v60 = vld [vmem:[%s0 + $0x158] sm:$0xff]
  %v61 = vld [vmem:[%s0 + $0x160] sm:$0xff]
  %v62 = vld [vmem:[%s0 + $0x168] sm:$0xff]
  %v63 = vld [vmem:[%s0 + $0x170] sm:$0xff]
  %v64 = vld [vmem:[%s0 + $0x178] sm:$0xff]
  %v65 = vld [vmem:[%s0 + $0x180] sm:$0xff]
  %v66 = vld [vmem:[%s0 + $0x188] sm:$0xff]
  %v67 = vld [vmem:[%s0 + $0x190] sm:$0xff]
  %v68 = vld [vmem:[%s0 + $0x198] sm:$0xff]
  %v69 = vld [vmem:[%s0 + $0x1a0] sm:$0xff]
  %v70 = vld [vmem:[%s0 + $0x1a8] sm:$0xff]
  %v71 = vld [vmem:[%s0 + $0x1b0] sm:$0xff]
  %v72 = vld [vmem:[%s0 + $0x1b8] sm:$0xff]
  %v73 = vld [vmem:[%s0 + $0x1c0] sm:$0xff]
  %v74 = vld [vmem:[%s0 + $0x1c8] sm:$0xff]
  %v75 = vld [vmem:[%s0 + $0x1d0] sm:$0xff]
  %v76 = vld [vmem:[%s0 + $0x1d8] sm:$0xff]
  %v77 = vld [vmem:[%s0 + $0x1e0] sm:$0xff]
  %v78 = vld [vmem:[%s0 + $0x1e8] sm:$0xff]
  %v79 = vld [vmem:[%s0 + $0x1f0] sm:$0xff]
  %v80 = vld [vmem:[%s0 + $0x1f8] sm:$0xff]
  %v81 = vld [vmem:[%s1] sm:$0x1]
  %vm82 = vcmask 31744
  %v83 = vsel %vm82, %v17, 0.0
  %v84 = vsel %vm82, %v18, 0.0
  %v85 = vadd.f32 %v83, %v84
  %v86 = vsel %vm82, %v19, 0.0
  %v87 = vadd.f32 %v85, %v86
  %v88 = vsel %vm82, %v20, 0.0
  %v89 = vadd.f32 %v87, %v88
  %v90 = vsel %vm82, %v21, 0.0
  %v91 = vadd.f32 %v89, %v90
  %v92 = vsel %vm82, %v22, 0.0
  %v93 = vadd.f32 %v91, %v92
  %v94 = vsel %vm82, %v23, 0.0
  %v95 = vadd.f32 %v93, %v94
  %v96 = vsel %vm82, %v24, 0.0
  %v97 = vadd.f32 %v95, %v96
  %v98 = vsel %vm82, %v25, 0.0
  %v99 = vadd.f32 %v97, %v98
  %v100 = vsel %vm82, %v26, 0.0
  %v101 = vadd.f32 %v99, %v100
  %v102 = vsel %vm82, %v27, 0.0
  %v103 = vadd.f32 %v101, %v102
  %v104 = vsel %vm82, %v28, 0.0
  %v105 = vadd.f32 %v103, %v104
  %v106 = vsel %vm82, %v29, 0.0
  %v107 = vadd.f32 %v105, %v106
  %v108 = vsel %vm82, %v30, 0.0
  %v109 = vadd.f32 %v107, %v108
  %v110 = vsel %vm82, %v31, 0.0
  %v111 = vadd.f32 %v109, %v110
  %v112 = vsel %vm82, %v32, 0.0
  %v113 = vadd.f32 %v111, %v112
  %v114 = vsel %vm82, %v33, 0.0
  %v115 = vadd.f32 %v113, %v114
  %v116 = vsel %vm82, %v34, 0.0
  %v117 = vadd.f32 %v115, %v116
  %v118 = vsel %vm82, %v35, 0.0
  %v119 = vadd.f32 %v117, %v118
  %v120 = vsel %vm82, %v36, 0.0
  %v121 = vadd.f32 %v119, %v120
  %v122 = vsel %vm82, %v37, 0.0
  %v123 = vadd.f32 %v121, %v122
  %v124 = vsel %vm82, %v38, 0.0
  %v125 = vadd.f32 %v123, %v124
  %v126 = vsel %vm82, %v39, 0.0
  %v127 = vadd.f32 %v125, %v126
  %v128 = vsel %vm82, %v40, 0.0
  %v129 = vadd.f32 %v127, %v128
  %v130 = vsel %vm82, %v41, 0.0
  %v131 = vadd.f32 %v129, %v130
  %v132 = vsel %vm82, %v42, 0.0
  %v133 = vadd.f32 %v131, %v132
  %v134 = vsel %vm82, %v43, 0.0
  %v135 = vadd.f32 %v133, %v134
  %v136 = vsel %vm82, %v44, 0.0
  %v137 = vadd.f32 %v135, %v136
  %v138 = vsel %vm82, %v45, 0.0
  %v139 = vadd.f32 %v137, %v138
  %v140 = vsel %vm82, %v46, 0.0
  %v141 = vadd.f32 %v139, %v140
  %v142 = vsel %vm82, %v47, 0.0
  %v143 = vadd.f32 %v141, %v142
  %v144 = vsel %vm82, %v48, 0.0
  %v145 = vadd.f32 %v143, %v144
  %v146 = vsel %vm82, %v49, 0.0
  %v147 = vadd.f32 %v145, %v146
  %v148 = vsel %vm82, %v50, 0.0
  %v149 = vadd.f32 %v147, %v148
  %v150 = vsel %vm82, %v51, 0.0
  %v151 = vadd.f32 %v149, %v150
  %v152 = vsel %vm82, %v52, 0.0
  %v153 = vadd.f32 %v151, %v152
  %v154 = vsel %vm82, %v53, 0.0
  %v155 = vadd.f32 %v153, %v154
  %v156 = vsel %vm82, %v54, 0.0
  %v157 = vadd.f32 %v155, %v156
  %v158 = vsel %vm82, %v55, 0.0
  %v159 = vadd.f32 %v157, %v158
  %v160 = vsel %vm82, %v56, 0.0
  %v161 = vadd.f32 %v159, %v160
  %v162 = vsel %vm82, %v57, 0.0
  %v163 = vadd.f32 %v161, %v162
  %v164 = vsel %vm82, %v58, 0.0
  %v165 = vadd.f32 %v163, %v164
  %v166 = vsel %vm82, %v59, 0.0
  %v167 = vadd.f32 %v165, %v166
  %v168 = vsel %vm82, %v60, 0.0
  %v169 = vadd.f32 %v167, %v168
  %v170 = vsel %vm82, %v61, 0.0
  %v171 = vadd.f32 %v169, %v170
  %v172 = vsel %vm82, %v62, 0.0
  %v173 = vadd.f32 %v171, %v172
  %v174 = vsel %vm82, %v63, 0.0
  %v175 = vadd.f32 %v173, %v174
  %v176 = vsel %vm82, %v64, 0.0
  %v177 = vadd.f32 %v175, %v176
  %v178 = vsel %vm82, %v65, 0.0
  %v179 = vadd.f32 %v177, %v178
  %v180 = vsel %vm82, %v66, 0.0
  %v181 = vadd.f32 %v179, %v180
  %v182 = vsel %vm82, %v67, 0.0
  %v183 = vadd.f32 %v181, %v182
  %v184 = vsel %vm82, %v68, 0.0
  %v185 = vadd.f32 %v183, %v184
  %v186 = vsel %vm82, %v69, 0.0
  %v187 = vadd.f32 %v185, %v186
  %v188 = vsel %vm82, %v70, 0.0
  %v189 = vadd.f32 %v187, %v188
  %v190 = vsel %vm82, %v71, 0.0
  %v191 = vadd.f32 %v189, %v190
  %v192 = vsel %vm82, %v72, 0.0
  %v193 = vadd.f32 %v191, %v192
  %v194 = vsel %vm82, %v73, 0.0
  %v195 = vadd.f32 %v193, %v194
  %v196 = vsel %vm82, %v74, 0.0
  %v197 = vadd.f32 %v195, %v196
  %v198 = vsel %vm82, %v75, 0.0
  %v199 = vadd.f32 %v197, %v198
  %v200 = vsel %vm82, %v76, 0.0
  %v201 = vadd.f32 %v199, %v200
  %v202 = vsel %vm82, %v77, 0.0
  %v203 = vadd.f32 %v201, %v202
  %v204 = vsel %vm82, %v78, 0.0
  %v205 = vadd.f32 %v203, %v204
  %v206 = vsel %vm82, %v79, 0.0
  %v207 = vadd.f32 %v205, %v206
  %v208 = vsel %vm82, %v80, 0.0
  %v209 = vadd.f32 %v207, %v208
  %v210 = vrot.slane %v209, 4
  %v211 = vadd.f32 %v209, %v210
  %v212 = vrot.slane %v211, 2
  %v213 = vadd.f32 %v211, %v212
  %v214 = vrot.slane %v213, 1
  %v215 = vadd.f32 %v213, %v214
  %v216 = vadd.f32 %v81, %v215
  %vm217 = vcmask 24576
  %218 = vst.msk [vmem:[%s1] sm:$0x1] %vm217, %v216
  %v219 = vld [vmem:[%s2] sm:$0x1]
  %v220 = vmul.f32 %v17, %v17
  %v221 = vmul.f32 %v18, %v18
  %v222 = vmul.f32 %v19, %v19
  %v223 = vmul.f32 %v20, %v20
  %v224 = vmul.f32 %v21, %v21
  %v225 = vmul.f32 %v22, %v22
  %v226 = vmul.f32 %v23, %v23
  %v227 = vmul.f32 %v24, %v24
  %v228 = vmul.f32 %v25, %v25
  %v229 = vmul.f32 %v26, %v26
  %v230 = vmul.f32 %v27, %v27
  %v231 = vmul.f32 %v28, %v28
  %v232 = vmul.f32 %v29, %v29
  %v233 = vmul.f32 %v30, %v30
  %v234 = vmul.f32 %v31, %v31
  %v235 = vmul.f32 %v32, %v32
  %v236 = vmul.f32 %v33, %v33
  %v237 = vmul.f32 %v34, %v34
  %v238 = vmul.f32 %v35, %v35
  %v239 = vmul.f32 %v36, %v36
  %v240 = vmul.f32 %v37, %v37
  %v241 = vmul.f32 %v38, %v38
  %v242 = vmul.f32 %v39, %v39
  %v243 = vmul.f32 %v40, %v40
  %v244 = vmul.f32 %v41, %v41
  %v245 = vmul.f32 %v42, %v42
  %v246 = vmul.f32 %v43, %v43
  %v247 = vmul.f32 %v44, %v44
  %v248 = vmul.f32 %v45, %v45
  %v249 = vmul.f32 %v46, %v46
  %v250 = vmul.f32 %v47, %v47
  %v251 = vmul.f32 %v48, %v48
  %v252 = vmul.f32 %v49, %v49
  %v253 = vmul.f32 %v50, %v50
  %v254 = vmul.f32 %v51, %v51
  %v255 = vmul.f32 %v52, %v52
  %v256 = vmul.f32 %v53, %v53
  %v257 = vmul.f32 %v54, %v54
  %v258 = vmul.f32 %v55, %v55
  %v259 = vmul.f32 %v56, %v56
  %v260 = vmul.f32 %v57, %v57
  %v261 = vmul.f32 %v58, %v58
  %v262 = vmul.f32 %v59, %v59
  %v263 = vmul.f32 %v60, %v60
  %v264 = vmul.f32 %v61, %v61
  %v265 = vmul.f32 %v62, %v62
  %v266 = vmul.f32 %v63, %v63
  %v267 = vmul.f32 %v64, %v64
  %v268 = vmul.f32 %v65, %v65
  %v269 = vmul.f32 %v66, %v66
  %v270 = vmul.f32 %v67, %v67
  %v271 = vmul.f32 %v68, %v68
  %v272 = vmul.f32 %v69, %v69
  %v273 = vmul.f32 %v70, %v70
  %v274 = vmul.f32 %v71, %v71
  %v275 = vmul.f32 %v72, %v72
  %v276 = vmul.f32 %v73, %v73
  %v277 = vmul.f32 %v74, %v74
  %v278 = vmul.f32 %v75, %v75
  %v279 = vmul.f32 %v76, %v76
  %v280 = vmul.f32 %v77, %v77
  %v281 = vmul.f32 %v78, %v78
  %v282 = vmul.f32 %v79, %v79
  %v283 = vmul.f32 %v80, %v80
  %v284 = vsel %vm82, %v220, 0.0
  %v285 = vsel %vm82, %v221, 0.0
  %v286 = vadd.f32 %v284, %v285
  %v287 = vsel %vm82, %v222, 0.0
  %v288 = vadd.f32 %v286, %v287
  %v289 = vsel %vm82, %v223, 0.0
  %v290 = vadd.f32 %v288, %v289
  %v291 = vsel %vm82, %v224, 0.0
  %v292 = vadd.f32 %v290, %v291
  %v293 = vsel %vm82, %v225, 0.0
  %v294 = vadd.f32 %v292, %v293
  %v295 = vsel %vm82, %v226, 0.0
  %v296 = vadd.f32 %v294, %v295
  %v297 = vsel %vm82, %v227, 0.0
  %v298 = vadd.f32 %v296, %v297
  %v299 = vsel %vm82, %v228, 0.0
  %v300 = vadd.f32 %v298, %v299
  %v301 = vsel %vm82, %v229, 0.0
  %v302 = vadd.f32 %v300, %v301
  %v303 = vsel %vm82, %v230, 0.0
  %v304 = vadd.f32 %v302, %v303
  %v305 = vsel %vm82, %v231, 0.0
  %v306 = vadd.f32 %v304, %v305
  %v307 = vsel %vm82, %v232, 0.0
  %v308 = vadd.f32 %v306, %v307
  %v309 = vsel %vm82, %v233, 0.0
  %v310 = vadd.f32 %v308, %v309
  %v311 = vsel %vm82, %v234, 0.0
  %v312 = vadd.f32 %v310, %v311
  %v313 = vsel %vm82, %v235, 0.0
  %v314 = vadd.f32 %v312, %v313
  %v315 = vsel %vm82, %v236, 0.0
  %v316 = vadd.f32 %v314, %v315
  %v317 = vsel %vm82, %v237, 0.0
  %v318 = vadd.f32 %v316, %v317
  %v319 = vsel %vm82, %v238, 0.0
  %v320 = vadd.f32 %v318, %v319
  %v321 = vsel %vm82, %v239, 0.0
  %v322 = vadd.f32 %v320, %v321
  %v323 = vsel %vm82, %v240, 0.0
  %v324 = vadd.f32 %v322, %v323
  %v325 = vsel %vm82, %v241, 0.0
  %v326 = vadd.f32 %v324, %v325
  %v327 = vsel %vm82, %v242, 0.0
  %v328 = vadd.f32 %v326, %v327
  %v329 = vsel %vm82, %v243, 0.0
  %v330 = vadd.f32 %v328, %v329
  %v331 = vsel %vm82, %v244, 0.0
  %v332 = vadd.f32 %v330, %v331
  %v333 = vsel %vm82, %v245, 0.0
  %v334 = vadd.f32 %v332, %v333
  %v335 = vsel %vm82, %v246, 0.0
  %v336 = vadd.f32 %v334, %v335
  %v337 = vsel %vm82, %v247, 0.0
  %v338 = vadd.f32 %v336, %v337
  %v339 = vsel %vm82, %v248, 0.0
  %v340 = vadd.f32 %v338, %v339
  %v341 = vsel %vm82, %v249, 0.0
  %v342 = vadd.f32 %v340, %v341
  %v343 = vsel %vm82, %v250, 0.0
  %v344 = vadd.f32 %v342, %v343
  %v345 = vsel %vm82, %v251, 0.0
  %v346 = vadd.f32 %v344, %v345
  %v347 = vsel %vm82, %v252, 0.0
  %v348 = vadd.f32 %v346, %v347
  %v349 = vsel %vm82, %v253, 0.0
  %v350 = vadd.f32 %v348, %v349
  %v351 = vsel %vm82, %v254, 0.0
  %v352 = vadd.f32 %v350, %v351
  %v353 = vsel %vm82, %v255, 0.0
  %v354 = vadd.f32 %v352, %v353
  %v355 = vsel %vm82, %v256, 0.0
  %v356 = vadd.f32 %v354, %v355
  %v357 = vsel %vm82, %v257, 0.0
  %v358 = vadd.f32 %v356, %v357
  %v359 = vsel %vm82, %v258, 0.0
  %v360 = vadd.f32 %v358, %v359
  %v361 = vsel %vm82, %v259, 0.0
  %v362 = vadd.f32 %v360, %v361
  %v363 = vsel %vm82, %v260, 0.0
  %v364 = vadd.f32 %v362, %v363
  %v365 = vsel %vm82, %v261, 0.0
  %v366 = vadd.f32 %v364, %v365
  %v367 = vsel %vm82, %v262, 0.0
  %v368 = vadd.f32 %v366, %v367
  %v369 = vsel %vm82, %v263, 0.0
  %v370 = vadd.f32 %v368, %v369
  %v371 = vsel %vm82, %v264, 0.0
  %v372 = vadd.f32 %v370, %v371
  %v373 = vsel %vm82, %v265, 0.0
  %v374 = vadd.f32 %v372, %v373
  %v375 = vsel %vm82, %v266, 0.0
  %v376 = vadd.f32 %v374, %v375
  %v377 = vsel %vm82, %v267, 0.0
  %v378 = vadd.f32 %v376, %v377
  %v379 = vsel %vm82, %v268, 0.0
  %v380 = vadd.f32 %v378, %v379
  %v381 = vsel %vm82, %v269, 0.0
  %v382 = vadd.f32 %v380, %v381
  %v383 = vsel %vm82, %v270, 0.0
  %v384 = vadd.f32 %v382, %v383
  %v385 = vsel %vm82, %v271, 0.0
  %v386 = vadd.f32 %v384, %v385
  %v387 = vsel %vm82, %v272, 0.0
  %v388 = vadd.f32 %v386, %v387
  %v389 = vsel %vm82, %v273, 0.0
  %v390 = vadd.f32 %v388, %v389
  %v391 = vsel %vm82, %v274, 0.0
  %v392 = vadd.f32 %v390, %v391
  %v393 = vsel %vm82, %v275, 0.0
  %v394 = vadd.f32 %v392, %v393
  %v395 = vsel %vm82, %v276, 0.0
  %v396 = vadd.f32 %v394, %v395
  %v397 = vsel %vm82, %v277, 0.0
  %v398 = vadd.f32 %v396, %v397
  %v399 = vsel %vm82, %v278, 0.0
  %v400 = vadd.f32 %v398, %v399
  %v401 = vsel %vm82, %v279, 0.0
  %v402 = vadd.f32 %v400, %v401
  %v403 = vsel %vm82, %v280, 0.0
  %v404 = vadd.f32 %v402, %v403
  %v405 = vsel %vm82, %v281, 0.0
  %v406 = vadd.f32 %v404, %v405
  %v407 = vsel %vm82, %v282, 0.0
  %v408 = vadd.f32 %v406, %v407
  %v409 = vsel %vm82, %v283, 0.0
  %v410 = vadd.f32 %v408, %v409
  %v411 = vrot.slane %v410, 4
  %v412 = vadd.f32 %v410, %v411
  %v413 = vrot.slane %v412, 2
  %v414 = vadd.f32 %v412, %v413
  %v415 = vrot.slane %v414, 1
  %v416 = vadd.f32 %v414, %v415
  %v417 = vadd.f32 %v219, %v416
  %418 = vst.msk [vmem:[%s2] sm:$0x1] %vm217, %v417
  // Predicated region
  $region10: #{gblock_forward.4} parent=0 // pred_check
    _
  $region11: #{gblock_forward.4} parent=0 // pred_check_branch
    %420 = sbr.rel (0) target = $region13
  $region12: #{gblock_forward.4} parent=0 // pred_region
    _
  $region13: #{gblock_forward.4} parent=0 // pred_fallthru
    _
  // Predicated region
  $region14: #{gblock_forward.4} parent=0 // pred_check
    _
  $region15: #{gblock_forward.4} parent=0 // pred_check_branch
    %422 = sbr.rel (0) target = $region17
  $region16: #{gblock_forward.4} parent=0 // pred_region
    _
  $region17: #{gblock_forward.4} parent=0 // pred_fallthru
    _
  // Predicated region
  $region18: #{gblock_forward.4} parent=0 // pred_check
    _
  $region19: #{gblock_forward.4} parent=0 // pred_check_branch
    %424 = sbr.rel (0) target = $region21
  $region20: #{gblock_forward.4} parent=0 // pred_region
    _
  $region21: #{gblock_forward.4} parent=0 // pred_fallthru
    _
  // Predicated region
  $region22: #{gblock_forward.4} parent=0 // pred_check
    _
  $region23: #{gblock_forward.4} parent=0 // pred_check_branch
    %426 = sbr.rel (0) target = $region25
  $region24: #{gblock_forward.4} parent=0 // pred_region
    _
  $region25: #{gblock_forward.4} parent=0 // pred_fallthru
    _

// kernel: gblock_forward.6
$region0: #{gblock_forward.6}
  #allocation0 [shape = 'u32[]', space=smem, size = 0x4, offset = 0x4, fixed_abs, tag = 'smem constant byte address 0x4 - core index']
  #allocation1 [shape = 'u32[144,128]{1,0:T(1,128)}', space=vmem, size = 0x12000, scoped, tag = 'internal scratch']
  %s0 = inlined_call_operand.vmem [shape: f32[2048,4], index: 0, kind: input, shape index: {}]
  %s1 = inlined_call_operand.vmem [shape: f32[1,4], index: 1, kind: output, shape index: {0}]
  %s2 = inlined_call_operand.vmem [shape: f32[1,4], index: 2, kind: output, shape index: {1}]
  %3 = xla_tuple %s1, %s2
  %s4 = sld [smem:[#allocation0]]
  $region49: #{gblock_forward.6} parent=0
    _
  %s6 = ssub.s32 1, %s4
  %s7 = scalar_select 0, %s6, %s4
  loop: start=0, step=1, limit=6
  $region2: #{gblock_forward.6} parent=0 // loop_pre_header
    _
  $region3: #{gblock_forward.6} parent=0 // loop_header
    %s9 = sphi 0, %s13
    %p10 = scmp.ge.s32.totalorder %s9, 6
    %s19 = sphi 0, %s21
    %s22 = sphi 0, %s19
    %s23 = sphi 0, %s22
    %s39 = sphi 0, %s23
    %s43 = sphi 0, %s43
    %s45 = sphi 0, %s43
    %s46 = sphi 0, %s45
    %s60 = sphi 0, %s46
    %s64 = sphi 0, %s64
    %s66 = sphi 0, %s64
    %s67 = sphi 0, %s66
    %s81 = sphi 0, %s67
  $region4: #{gblock_forward.6} parent=0 // loop_header_branch
    %12 = sbr.rel (%p10) target = $region8
  $region5: #{gblock_forward.6} parent=0 // loop_body
    %s14 = ssub.s32 %s9, 1
    %s15 = ssub.s32 %s9, 2
    %s16 = sadd.s32 %s9, 1
    %s17 = ssub.s32 %s9, %s16
    %p18 = scmp.eq.s32.totalorder %s17, 0
    %s20 = sadd.s32 %s19, 1
    %s21 = scalar_select %p18, %s19, %s20
    %p24 = pneg %p18
    %p25 = scmp.eq.s32.totalorder %s9, 3
    %p26 = por %p24, %p25
    %p27 = scmp.ne.s32.totalorder %s19, %s22
    %p28 = scmp.eq.s32.totalorder %s9, 0
    %p29 = por %p27, %p28
    %p30 = scmp.ne.s32.totalorder %s19, %s22
    %p31 = scmp.eq.s32.totalorder %s14, 3
    %p32 = por %p30, %p31
    %p33 = scmp.ne.s32.totalorder %s22, %s23
    %p34 = scmp.eq.s32.totalorder %s14, 0
    %p35 = por %p33, %p34
    %p36 = scmp.ne.s32.totalorder %s22, %s23
    %p37 = scmp.eq.s32.totalorder %s15, 3
    %p38 = por %p36, %p37
    %p40 = scmp.ne.s32.totalorder %s23, %s39
    %p41 = scmp.eq.s32.totalorder %s15, 0
    %p42 = por %p40, %p41
    %s44 = sadd.s32 %s43, 1
    %p47 = scmp.eq.s32.totalorder %s9, 3
    %p48 = scmp.ne.s32.totalorder %s43, %s45
    %p49 = scmp.eq.s32.totalorder %s9, 0
    %p50 = por %p48, %p49
    %p51 = scmp.ne.s32.totalorder %s43, %s45
    %p52 = scmp.eq.s32.totalorder %s14, 3
    %p53 = por %p51, %p52
    %p54 = scmp.ne.s32.totalorder %s45, %s46
    %p55 = scmp.eq.s32.totalorder %s14, 0
    %p56 = por %p54, %p55
    %p57 = scmp.ne.s32.totalorder %s45, %s46
    %p58 = scmp.eq.s32.totalorder %s15, 3
    %p59 = por %p57, %p58
    %p61 = scmp.ne.s32.totalorder %s46, %s60
    %p62 = scmp.eq.s32.totalorder %s15, 0
    %p63 = por %p61, %p62
    %s65 = sadd.s32 %s64, 1
    %p68 = scmp.eq.s32.totalorder %s9, 3
    %p69 = scmp.ne.s32.totalorder %s64, %s66
    %p70 = scmp.eq.s32.totalorder %s9, 0
    %p71 = por %p69, %p70
    %p72 = scmp.ne.s32.totalorder %s64, %s66
    %p73 = scmp.eq.s32.totalorder %s14, 3
    %p74 = por %p72, %p73
    %p75 = scmp.ne.s32.totalorder %s66, %s67
    %p76 = scmp.eq.s32.totalorder %s14, 0
    %p77 = por %p75, %p76
    %p78 = scmp.ne.s32.totalorder %s66, %s67
    %p79 = scmp.eq.s32.totalorder %s15, 3
    %p80 = por %p78, %p79
    %p82 = scmp.ne.s32.totalorder %s67, %s81
    %p83 = scmp.eq.s32.totalorder %s15, 0
    %p84 = por %p82, %p83
    %p85 = scmp.le.s32.totalorder 1, %s9
    %p86 = scmp.lt.s32.totalorder %s9, 5
    %p87 = pnand %p85, %p86
    %p88 = pneg %p87
    // Predicated region
    $region9: #{gblock_forward.6} parent=5 // pred_check
      _
    $region10: #{gblock_forward.6} parent=5 // pred_check_branch
      %90 = sbr.rel (%p87) target = $region12
    $region11: #{gblock_forward.6} parent=5 // pred_region
      %s91 = ssub.s32 %s9, 1
    $region12: #{gblock_forward.6} parent=5 // pred_fallthru
      _
    %p92 = scmp.lt.s32.totalorder %s9, 4
    // Predicated region
    $region13: #{gblock_forward.6} parent=5 // pred_check
      %p93 = pneg %p92
    $region14: #{gblock_forward.6} parent=5 // pred_check_branch
      %95 = sbr.rel (%p93) target = $region16
    $region15: #{gblock_forward.6} parent=5 // pred_region
      // Predicated region
      $region17: #{gblock_forward.6} parent=15 // pred_check
        %p96 = pneg %p29
      $region18: #{gblock_forward.6} parent=15 // pred_check_branch
        %98 = sbr.rel (%p96) target = $region20
      $region19: #{gblock_forward.6} parent=15 // pred_region
        %s99 = smul.u32 64, %s9
        %p100 = scmp.lt.s32.totalorder %s99, 255
        %s101 = scalar_select %p100, %s99, 255
        %s102 = smul.addr %s101, 8
        %s103 = scalar_lea.vmem %s0, %s102
        %s104 = smul.u32 64, %s9
      $region20: #{gblock_forward.6} parent=15 // pred_fallthru
        _
    $region16: #{gblock_forward.6} parent=5 // pred_fallthru
      _
    %p105 = scmp.le.s32.totalorder 1, %s9
    %p106 = scmp.lt.s32.totalorder %s9, 5
    %p107 = pnand %p105, %p106
    %p108 = pneg %p107
    // Predicated region
    $region21: #{gblock_forward.6} parent=5 // pred_check
      _
    $region22: #{gblock_forward.6} parent=5 // pred_check_branch
      %110 = sbr.rel (%p107) target = $region24
    $region23: #{gblock_forward.6} parent=5 // pred_region
      %s111 = ssub.s32 %s9, 1
      %s112 = smul.u32 64, %s14
      %p113 = scmp.lt.s32.totalorder %s112, 255
      %s114 = scalar_select %p113, %s112, 255
      %s115 = smul.addr %s114, 8
      %s116 = scalar_lea.vmem %s0, %s115
      %p117 = pneg %p35
      %p118 = pneg %p32
      %p119 = pneg %p56
      %p120 = pneg %p53
      %p121 = pneg %p77
      %p122 = pneg %p74
      %s123 = smul.u32 64, %s14
      %p124 = scmp.lt.s32.totalorder %s123, 255
      %s125 = scalar_select %p124, %s123, 255
      %s126 = smul.addr %s125, 8
      %s127 = scalar_lea.vmem %s0, %s126
      %s128 = smul.u32 64, %s14
      %p129 = scmp.eq.s32.totalorder %s14, 0
      // Predicated region
      $region25: #{gblock_forward.6} parent=23 // pred_check
        %p130 = pneg %p129
      $region26: #{gblock_forward.6} parent=23 // pred_check_branch
        %132 = sbr.rel (%p130) target = $region28
      $region27: #{gblock_forward.6} parent=23 // pred_region
        %vm133 = vcmask 24576
        %134 = vst.msk [vmem:[%s1] sm:$0x1] %vm133, 0.0
        %135 = vst.msk [vmem:[%s2] sm:$0x1] %vm133, 0.0
      $region28: #{gblock_forward.6} parent=23 // pred_fallthru
        _
      %v136 = vld [vmem:[%s127] sm:$0xff]
      %v137 = vld [vmem:[%s127 + $0x8] sm:$0xff]
      %v138 = vld [vmem:[%s127 + $0x10] sm:$0xff]
      %v139 = vld [vmem:[%s127 + $0x18] sm:$0xff]
      %v140 = vld [vmem:[%s127 + $0x20] sm:$0xff]
      %v141 = vld [vmem:[%s127 + $0x28] sm:$0xff]
      %v142 = vld [vmem:[%s127 + $0x30] sm:$0xff]
      %v143 = vld [vmem:[%s127 + $0x38] sm:$0xff]
      %v144 = vld [vmem:[%s127 + $0x40] sm:$0xff]
      %v145 = vld [vmem:[%s127 + $0x48] sm:$0xff]
      %v146 = vld [vmem:[%s127 + $0x50] sm:$0xff]
      %v147 = vld [vmem:[%s127 + $0x58] sm:$0xff]
      %v148 = vld [vmem:[%s127 + $0x60] sm:$0xff]
      %v149 = vld [vmem:[%s127 + $0x68] sm:$0xff]
      %v150 = vld [vmem:[%s127 + $0x70] sm:$0xff]
      %v151 = vld [vmem:[%s127 + $0x78] sm:$0xff]
      %v152 = vld [vmem:[%s127 + $0x80] sm:$0xff]
      %v153 = vld [vmem:[%s127 + $0x88] sm:$0xff]
      %v154 = vld [vmem:[%s127 + $0x90] sm:$0xff]
      %v155 = vld [vmem:[%s127 + $0x98] sm:$0xff]
      %v156 = vld [vmem:[%s127 + $0xa0] sm:$0xff]
      %v157 = vld [vmem:[%s127 + $0xa8] sm:$0xff]
      %v158 = vld [vmem:[%s127 + $0xb0] sm:$0xff]
      %v159 = vld [vmem:[%s127 + $0xb8] sm:$0xff]
      %v160 = vld [vmem:[%s127 + $0xc0] sm:$0xff]
      %v161 = vld [vmem:[%s127 + $0xc8] sm:$0xff]
      %v162 = vld [vmem:[%s127 + $0xd0] sm:$0xff]
      %v163 = vld [vmem:[%s127 + $0xd8] sm:$0xff]
      %v164 = vld [vmem:[%s127 + $0xe0] sm:$0xff]
      %v165 = vld [vmem:[%s127 + $0xe8] sm:$0xff]
      %v166 = vld [vmem:[%s127 + $0xf0] sm:$0xff]
      %v167 = vld [vmem:[%s127 + $0xf8] sm:$0xff]
      %v168 = vld [vmem:[%s127 + $0x100] sm:$0xff]
      %v169 = vld [vmem:[%s127 + $0x108] sm:$0xff]
      %v170 = vld [vmem:[%s127 + $0x110] sm:$0xff]
      %v171 = vld [vmem:[%s127 + $0x118] sm:$0xff]
      %v172 = vld [vmem:[%s127 + $0x120] sm:$0xff]
      %v173 = vld [vmem:[%s127 + $0x128] sm:$0xff]
      %v174 = vld [vmem:[%s127 + $0x130] sm:$0xff]
      %v175 = vld [vmem:[%s127 + $0x138] sm:$0xff]
      %v176 = vld [vmem:[%s127 + $0x140] sm:$0xff]
      %v177 = vld [vmem:[%s127 + $0x148] sm:$0xff]
      %v178 = vld [vmem:[%s127 + $0x150] sm:$0xff]
      %v179 = vld [vmem:[%s127 + $0x158] sm:$0xff]
      %v180 = vld [vmem:[%s127 + $0x160] sm:$0xff]
      %v181 = vld [vmem:[%s127 + $0x168] sm:$0xff]
      %v182 = vld [vmem:[%s127 + $0x170] sm:$0xff]
      %v183 = vld [vmem:[%s127 + $0x178] sm:$0xff]
      %v184 = vld [vmem:[%s127 + $0x180] sm:$0xff]
      %v185 = vld [vmem:[%s127 + $0x188] sm:$0xff]
      %v186 = vld [vmem:[%s127 + $0x190] sm:$0xff]
      %v187 = vld [vmem:[%s127 + $0x198] sm:$0xff]
      %v188 = vld [vmem:[%s127 + $0x1a0] sm:$0xff]
      %v189 = vld [vmem:[%s127 + $0x1a8] sm:$0xff]
      %v190 = vld [vmem:[%s127 + $0x1b0] sm:$0xff]
      %v191 = vld [vmem:[%s127 + $0x1b8] sm:$0xff]
      %v192 = vld [vmem:[%s127 + $0x1c0] sm:$0xff]
      %v193 = vld [vmem:[%s127 + $0x1c8] sm:$0xff]
      %v194 = vld [vmem:[%s127 + $0x1d0] sm:$0xff]
      %v195 = vld [vmem:[%s127 + $0x1d8] sm:$0xff]
      %v196 = vld [vmem:[%s127 + $0x1e0] sm:$0xff]
      %v197 = vld [vmem:[%s127 + $0x1e8] sm:$0xff]
      %v198 = vld [vmem:[%s127 + $0x1f0] sm:$0xff]
      %v199 = vld [vmem:[%s127 + $0x1f8] sm:$0xff]
      %v200 = vld [vmem:[%s1] sm:$0x1]
      %vm201 = vcmask 31744
      %v202 = vsel %vm201, %v136, 0.0
      %v203 = vsel %vm201, %v137, 0.0
      %v204 = vadd.f32 %v202, %v203
      %v205 = vsel %vm201, %v138, 0.0
      %v206 = vadd.f32 %v204, %v205
      %v207 = vsel %vm201, %v139, 0.0
      %v208 = vadd.f32 %v206, %v207
      %v209 = vsel %vm201, %v140, 0.0
      %v210 = vadd.f32 %v208, %v209
      %v211 = vsel %vm201, %v141, 0.0
      %v212 = vadd.f32 %v210, %v211
      %v213 = vsel %vm201, %v142, 0.0
      %v214 = vadd.f32 %v212, %v213
      %v215 = vsel %vm201, %v143, 0.0
      %v216 = vadd.f32 %v214, %v215
      %v217 = vsel %vm201, %v144, 0.0
      %v218 = vadd.f32 %v216, %v217
      %v219 = vsel %vm201, %v145, 0.0
      %v220 = vadd.f32 %v218, %v219
      %v221 = vsel %vm201, %v146, 0.0
      %v222 = vadd.f32 %v220, %v221
      %v223 = vsel %vm201, %v147, 0.0
      %v224 = vadd.f32 %v222, %v223
      %v225 = vsel %vm201, %v148, 0.0
      %v226 = vadd.f32 %v224, %v225
      %v227 = vsel %vm201, %v149, 0.0
      %v228 = vadd.f32 %v226, %v227
      %v229 = vsel %vm201, %v150, 0.0
      %v230 = vadd.f32 %v228, %v229
      %v231 = vsel %vm201, %v151, 0.0
      %v232 = vadd.f32 %v230, %v231
      %v233 = vsel %vm201, %v152, 0.0
      %v234 = vadd.f32 %v232, %v233
      %v235 = vsel %vm201, %v153, 0.0
      %v236 = vadd.f32 %v234, %v235
      %v237 = vsel %vm201, %v154, 0.0
      %v238 = vadd.f32 %v236, %v237
      %v239 = vsel %vm201, %v155, 0.0
      %v240 = vadd.f32 %v238, %v239
      %v241 = vsel %vm201, %v156, 0.0
      %v242 = vadd.f32 %v240, %v241
      %v243 = vsel %vm201, %v157, 0.0
      %v244 = vadd.f32 %v242, %v243
      %v245 = vsel %vm201, %v158, 0.0
      %v246 = vadd.f32 %v244, %v245
      %v247 = vsel %vm201, %v159, 0.0
      %v248 = vadd.f32 %v246, %v247
      %v249 = vsel %vm201, %v160, 0.0
      %v250 = vadd.f32 %v248, %v249
      %v251 = vsel %vm201, %v161, 0.0
      %v252 = vadd.f32 %v250, %v251
      %v253 = vsel %vm201, %v162, 0.0
      %v254 = vadd.f32 %v252, %v253
      %v255 = vsel %vm201, %v163, 0.0
      %v256 = vadd.f32 %v254, %v255
      %v257 = vsel %vm201, %v164, 0.0
      %v258 = vadd.f32 %v256, %v257
      %v259 = vsel %vm201, %v165, 0.0
      %v260 = vadd.f32 %v258, %v259
      %v261 = vsel %vm201, %v166, 0.0
      %v262 = vadd.f32 %v260, %v261
      %v263 = vsel %vm201, %v167, 0.0
      %v264 = vadd.f32 %v262, %v263
      %v265 = vsel %vm201, %v168, 0.0
      %v266 = vadd.f32 %v264, %v265
      %v267 = vsel %vm201, %v169, 0.0
      %v268 = vadd.f32 %v266, %v267
      %v269 = vsel %vm201, %v170, 0.0
      %v270 = vadd.f32 %v268, %v269
      %v271 = vsel %vm201, %v171, 0.0
      %v272 = vadd.f32 %v270, %v271
      %v273 = vsel %vm201, %v172, 0.0
      %v274 = vadd.f32 %v272, %v273
      %v275 = vsel %vm201, %v173, 0.0
      %v276 = vadd.f32 %v274, %v275
      %v277 = vsel %vm201, %v174, 0.0
      %v278 = vadd.f32 %v276, %v277
      %v279 = vsel %vm201, %v175, 0.0
      %v280 = vadd.f32 %v278, %v279
      %v281 = vsel %vm201, %v176, 0.0
      %v282 = vadd.f32 %v280, %v281
      %v283 = vsel %vm201, %v177, 0.0
      %v284 = vadd.f32 %v282, %v283
      %v285 = vsel %vm201, %v178, 0.0
      %v286 = vadd.f32 %v284, %v285
      %v287 = vsel %vm201, %v179, 0.0
      %v288 = vadd.f32 %v286, %v287
      %v289 = vsel %vm201, %v180, 0.0
      %v290 = vadd.f32 %v288, %v289
      %v291 = vsel %vm201, %v181, 0.0
      %v292 = vadd.f32 %v290, %v291
      %v293 = vsel %vm201, %v182, 0.0
      %v294 = vadd.f32 %v292, %v293
      %v295 = vsel %vm201, %v183, 0.0
      %v296 = vadd.f32 %v294, %v295
      %v297 = vsel %vm201, %v184, 0.0
      %v298 = vadd.f32 %v296, %v297
      %v299 = vsel %vm201, %v185, 0.0
      %v300 = vadd.f32 %v298, %v299
      %v301 = vsel %vm201, %v186, 0.0
      %v302 = vadd.f32 %v300, %v301
      %v303 = vsel %vm201, %v187, 0.0
      %v304 = vadd.f32 %v302, %v303
      %v305 = vsel %vm201, %v188, 0.0
      %v306 = vadd.f32 %v304, %v305
      %v307 = vsel %vm201, %v189, 0.0
      %v308 = vadd.f32 %v306, %v307
      %v309 = vsel %vm201, %v190, 0.0
      %v310 = vadd.f32 %v308, %v309
      %v311 = vsel %vm201, %v191, 0.0
      %v312 = vadd.f32 %v310, %v311
      %v313 = vsel %vm201, %v192, 0.0
      %v314 = vadd.f32 %v312, %v313
      %v315 = vsel %vm201, %v193, 0.0
      %v316 = vadd.f32 %v314, %v315
      %v317 = vsel %vm201, %v194, 0.0
      %v318 = vadd.f32 %v316, %v317
      %v319 = vsel %vm201, %v195, 0.0
      %v320 = vadd.f32 %v318, %v319
      %v321 = vsel %vm201, %v196, 0.0
      %v322 = vadd.f32 %v320, %v321
      %v323 = vsel %vm201, %v197, 0.0
      %v324 = vadd.f32 %v322, %v323
      %v325 = vsel %vm201, %v198, 0.0
      %v326 = vadd.f32 %v324, %v325
      %v327 = vsel %vm201, %v199, 0.0
      %v328 = vadd.f32 %v326, %v327
      %v329 = vrot.slane %v328, 4
      %v330 = vadd.f32 %v328, %v329
      %v331 = vrot.slane %v330, 2
      %v332 = vadd.f32 %v330, %v331
      %v333 = vrot.slane %v332, 1
      %v334 = vadd.f32 %v332, %v333
      %v335 = vadd.f32 %v200, %v334
      %vm336 = vcmask 24576
      %337 = vst.msk [vmem:[%s1] sm:$0x1] %vm336, %v335
      %v338 = vld [vmem:[%s2] sm:$0x1]
      %v339 = vmul.f32 %v136, %v136
      %v340 = vmul.f32 %v137, %v137
      %v341 = vmul.f32 %v138, %v138
      %v342 = vmul.f32 %v139, %v139
      %v343 = vmul.f32 %v140, %v140
      %v344 = vmul.f32 %v141, %v141
      %v345 = vmul.f32 %v142, %v142
      %v346 = vmul.f32 %v143, %v143
      %v347 = vmul.f32 %v144, %v144
      %v348 = vmul.f32 %v145, %v145
      %v349 = vmul.f32 %v146, %v146
      %v350 = vmul.f32 %v147, %v147
      %v351 = vmul.f32 %v148, %v148
      %v352 = vmul.f32 %v149, %v149
      %v353 = vmul.f32 %v150, %v150
      %v354 = vmul.f32 %v151, %v151
      %v355 = vmul.f32 %v152, %v152
      %v356 = vmul.f32 %v153, %v153
      %v357 = vmul.f32 %v154, %v154
      %v358 = vmul.f32 %v155, %v155
      %v359 = vmul.f32 %v156, %v156
      %v360 = vmul.f32 %v157, %v157
      %v361 = vmul.f32 %v158, %v158
      %v362 = vmul.f32 %v159, %v159
      %v363 = vmul.f32 %v160, %v160
      %v364 = vmul.f32 %v161, %v161
      %v365 = vmul.f32 %v162, %v162
      %v366 = vmul.f32 %v163, %v163
      %v367 = vmul.f32 %v164, %v164
      %v368 = vmul.f32 %v165, %v165
      %v369 = vmul.f32 %v166, %v166
      %v370 = vmul.f32 %v167, %v167
      %v371 = vmul.f32 %v168, %v168
      %v372 = vmul.f32 %v169, %v169
      %v373 = vmul.f32 %v170, %v170
      %v374 = vmul.f32 %v171, %v171
      %v375 = vmul.f32 %v172, %v172
      %v376 = vmul.f32 %v173, %v173
      %v377 = vmul.f32 %v174, %v174
      %v378 = vmul.f32 %v175, %v175
      %v379 = vmul.f32 %v176, %v176
      %v380 = vmul.f32 %v177, %v177
      %v381 = vmul.f32 %v178, %v178
      %v382 = vmul.f32 %v179, %v179
      %v383 = vmul.f32 %v180, %v180
      %v384 = vmul.f32 %v181, %v181
      %v385 = vmul.f32 %v182, %v182
      %v386 = vmul.f32 %v183, %v183
      %v387 = vmul.f32 %v184, %v184
      %v388 = vmul.f32 %v185, %v185
      %v389 = vmul.f32 %v186, %v186
      %v390 = vmul.f32 %v187, %v187
      %v391 = vmul.f32 %v188, %v188
      %v392 = vmul.f32 %v189, %v189
      %v393 = vmul.f32 %v190, %v190
      %v394 = vmul.f32 %v191, %v191
      %v395 = vmul.f32 %v192, %v192
      %v396 = vmul.f32 %v193, %v193
      %v397 = vmul.f32 %v194, %v194
      %v398 = vmul.f32 %v195, %v195
      %v399 = vmul.f32 %v196, %v196
      %v400 = vmul.f32 %v197, %v197
      %v401 = vmul.f32 %v198, %v198
      %v402 = vmul.f32 %v199, %v199
      %v403 = vsel %vm201, %v339, 0.0
      %v404 = vsel %vm201, %v340, 0.0
      %v405 = vadd.f32 %v403, %v404
      %v406 = vsel %vm201, %v341, 0.0
      %v407 = vadd.f32 %v405, %v406
      %v408 = vsel %vm201, %v342, 0.0
      %v409 = vadd.f32 %v407, %v408
      %v410 = vsel %vm201, %v343, 0.0
      %v411 = vadd.f32 %v409, %v410
      %v412 = vsel %vm201, %v344, 0.0
      %v413 = vadd.f32 %v411, %v412
      %v414 = vsel %vm201, %v345, 0.0
      %v415 = vadd.f32 %v413, %v414
      %v416 = vsel %vm201, %v346, 0.0
      %v417 = vadd.f32 %v415, %v416
      %v418 = vsel %vm201, %v347, 0.0
      %v419 = vadd.f32 %v417, %v418
      %v420 = vsel %vm201, %v348, 0.0
      %v421 = vadd.f32 %v419, %v420
      %v422 = vsel %vm201, %v349, 0.0
      %v423 = vadd.f32 %v421, %v422
      %v424 = vsel %vm201, %v350, 0.0
      %v425 = vadd.f32 %v423, %v424
      %v426 = vsel %vm201, %v351, 0.0
      %v427 = vadd.f32 %v425, %v426
      %v428 = vsel %vm201, %v352, 0.0
      %v429 = vadd.f32 %v427, %v428
      %v430 = vsel %vm201, %v353, 0.0
      %v431 = vadd.f32 %v429, %v430
      %v432 = vsel %vm201, %v354, 0.0
      %v433 = vadd.f32 %v431, %v432
      %v434 = vsel %vm201, %v355, 0.0
      %v435 = vadd.f32 %v433, %v434
      %v436 = vsel %vm201, %v356, 0.0
      %v437 = vadd.f32 %v435, %v436
      %v438 = vsel %vm201, %v357, 0.0
      %v439 = vadd.f32 %v437, %v438
      %v440 = vsel %vm201, %v358, 0.0
      %v441 = vadd.f32 %v439, %v440
      %v442 = vsel %vm201, %v359, 0.0
      %v443 = vadd.f32 %v441, %v442
      %v444 = vsel %vm201, %v360, 0.0
      %v445 = vadd.f32 %v443, %v444
      %v446 = vsel %vm201, %v361, 0.0
      %v447 = vadd.f32 %v445, %v446
      %v448 = vsel %vm201, %v362, 0.0
      %v449 = vadd.f32 %v447, %v448
      %v450 = vsel %vm201, %v363, 0.0
      %v451 = vadd.f32 %v449, %v450
      %v452 = vsel %vm201, %v364, 0.0
      %v453 = vadd.f32 %v451, %v452
      %v454 = vsel %vm201, %v365, 0.0
      %v455 = vadd.f32 %v453, %v454
      %v456 = vsel %vm201, %v366, 0.0
      %v457 = vadd.f32 %v455, %v456
      %v458 = vsel %vm201, %v367, 0.0
      %v459 = vadd.f32 %v457, %v458
      %v460 = vsel %vm201, %v368, 0.0
      %v461 = vadd.f32 %v459, %v460
      %v462 = vsel %vm201, %v369, 0.0
      %v463 = vadd.f32 %v461, %v462
      %v464 = vsel %vm201, %v370, 0.0
      %v465 = vadd.f32 %v463, %v464
      %v466 = vsel %vm201, %v371, 0.0
      %v467 = vadd.f32 %v465, %v466
      %v468 = vsel %vm201, %v372, 0.0
      %v469 = vadd.f32 %v467, %v468
      %v470 = vsel %vm201, %v373, 0.0
      %v471 = vadd.f32 %v469, %v470
      %v472 = vsel %vm201, %v374, 0.0
      %v473 = vadd.f32 %v471, %v472
      %v474 = vsel %vm201, %v375, 0.0
      %v475 = vadd.f32 %v473, %v474
      %v476 = vsel %vm201, %v376, 0.0
      %v477 = vadd.f32 %v475, %v476
      %v478 = vsel %vm201, %v377, 0.0
      %v479 = vadd.f32 %v477, %v478
      %v480 = vsel %vm201, %v378, 0.0
      %v481 = vadd.f32 %v479, %v480
      %v482 = vsel %vm201, %v379, 0.0
      %v483 = vadd.f32 %v481, %v482
      %v484 = vsel %vm201, %v380, 0.0
      %v485 = vadd.f32 %v483, %v484
      %v486 = vsel %vm201, %v381, 0.0
      %v487 = vadd.f32 %v485, %v486
      %v488 = vsel %vm201, %v382, 0.0
      %v489 = vadd.f32 %v487, %v488
      %v490 = vsel %vm201, %v383, 0.0
      %v491 = vadd.f32 %v489, %v490
      %v492 = vsel %vm201, %v384, 0.0
      %v493 = vadd.f32 %v491, %v492
      %v494 = vsel %vm201, %v385, 0.0
      %v495 = vadd.f32 %v493, %v494
      %v496 = vsel %vm201, %v386, 0.0
      %v497 = vadd.f32 %v495, %v496
      %v498 = vsel %vm201, %v387, 0.0
      %v499 = vadd.f32 %v497, %v498
      %v500 = vsel %vm201, %v388, 0.0
      %v501 = vadd.f32 %v499, %v500
      %v502 = vsel %vm201, %v389, 0.0
      %v503 = vadd.f32 %v501, %v502
      %v504 = vsel %vm201, %v390, 0.0
      %v505 = vadd.f32 %v503, %v504
      %v506 = vsel %vm201, %v391, 0.0
      %v507 = vadd.f32 %v505, %v506
      %v508 = vsel %vm201, %v392, 0.0
      %v509 = vadd.f32 %v507, %v508
      %v510 = vsel %vm201, %v393, 0.0
      %v511 = vadd.f32 %v509, %v510
      %v512 = vsel %vm201, %v394, 0.0
      %v513 = vadd.f32 %v511, %v512
      %v514 = vsel %vm201, %v395, 0.0
      %v515 = vadd.f32 %v513, %v514
      %v516 = vsel %vm201, %v396, 0.0
      %v517 = vadd.f32 %v515, %v516
      %v518 = vsel %vm201, %v397, 0.0
      %v519 = vadd.f32 %v517, %v518
      %v520 = vsel %vm201, %v398, 0.0
      %v521 = vadd.f32 %v519, %v520
      %v522 = vsel %vm201, %v399, 0.0
      %v523 = vadd.f32 %v521, %v522
      %v524 = vsel %vm201, %v400, 0.0
      %v525 = vadd.f32 %v523, %v524
      %v526 = vsel %vm201, %v401, 0.0
      %v527 = vadd.f32 %v525, %v526
      %v528 = vsel %vm201, %v402, 0.0
      %v529 = vadd.f32 %v527, %v528
      %v530 = vrot.slane %v529, 4
      %v531 = vadd.f32 %v529, %v530
      %v532 = vrot.slane %v531, 2
      %v533 = vadd.f32 %v531, %v532
      %v534 = vrot.slane %v533, 1
      %v535 = vadd.f32 %v533, %v534
      %v536 = vadd.f32 %v338, %v535
      %537 = vst.msk [vmem:[%s2] sm:$0x1] %vm336, %v536
      // Predicated region
      $region29: #{gblock_forward.6} parent=23 // pred_check
        %p538 = pneg %p53
      $region30: #{gblock_forward.6} parent=23 // pred_check_branch
        %540 = sbr.rel (%p538) target = $region32
      $region31: #{gblock_forward.6} parent=23 // pred_region
        _
      $region32: #{gblock_forward.6} parent=23 // pred_fallthru
        _
      // Predicated region
      $region33: #{gblock_forward.6} parent=23 // pred_check
        %p541 = pneg %p74
      $region34: #{gblock_forward.6} parent=23 // pred_check_branch
        %543 = sbr.rel (%p541) target = $region36
      $region35: #{gblock_forward.6} parent=23 // pred_region
        _
      $region36: #{gblock_forward.6} parent=23 // pred_fallthru
        _
      // Predicated region
      $region37: #{gblock_forward.6} parent=23 // pred_check
        %p544 = pneg %p53
      $region38: #{gblock_forward.6} parent=23 // pred_check_branch
        %546 = sbr.rel (%p544) target = $region40
      $region39: #{gblock_forward.6} parent=23 // pred_region
        _
      $region40: #{gblock_forward.6} parent=23 // pred_fallthru
        _
      // Predicated region
      $region41: #{gblock_forward.6} parent=23 // pred_check
        %p547 = pneg %p74
      $region42: #{gblock_forward.6} parent=23 // pred_check_branch
        %549 = sbr.rel (%p547) target = $region44
      $region43: #{gblock_forward.6} parent=23 // pred_region
        _
      $region44: #{gblock_forward.6} parent=23 // pred_fallthru
        _
    $region24: #{gblock_forward.6} parent=5 // pred_fallthru
      _
    %p550 = scmp.le.s32.totalorder 2, %s9
    // Predicated region
    $region45: #{gblock_forward.6} parent=5 // pred_check
      %p551 = pneg %p550
    $region46: #{gblock_forward.6} parent=5 // pred_check_branch
      %553 = sbr.rel (%p551) target = $region48
    $region47: #{gblock_forward.6} parent=5 // pred_region
      %s554 = ssub.s32 %s9, 2
    $region48: #{gblock_forward.6} parent=5 // pred_fallthru
      _
  $region6: #{gblock_forward.6} parent=0 // loop_footer
    %s13 = sadd.s32 1, %s9
  $region7: #{gblock_forward.6} parent=0 // loop_footer_branch
    %8 = sbr.rel target = $region3
  $region8: #{gblock_forward.6} parent=0 // loop_exit
    _

// kernel: gblock_forward.5
$region0: #{gblock_forward.5}
  #allocation0 [shape = 'u32[]', space=smem, size = 0x4, offset = 0x4, fixed_abs, tag = 'smem constant byte address 0x4 - core index']
  #allocation1 [shape = 'u32[144,128]{1,0:T(1,128)}', space=vmem, size = 0x12000, scoped, tag = 'internal scratch']
  #allocation2 [shape = 'f32[34,34,4]{2,1,0:T(8,128)}', space=vmem, size = 0xaa000, scoped, tag = 'scratch operand']
  %s0 = inlined_call_operand.vmem [shape: f32[2,32,32,4], index: 0, kind: input, shape index: {}]
  %s1 = inlined_call_operand.vmem [shape: f32[1,4], index: 1, kind: input, shape index: {}]
  %s2 = inlined_call_operand.vmem [shape: f32[1,4], index: 2, kind: input, shape index: {}]
  %s3 = inlined_call_operand.vmem [shape: f32[9,4,4], index: 3, kind: input, shape index: {}]
  %s4 = inlined_call_operand.vmem [shape: f32[1,4], index: 4, kind: input, shape index: {}]
  %s5 = inlined_call_operand.vmem [shape: f32[2,32,32,4], index: 5, kind: output, shape index: {}]
  %s6 = sld [smem:[#allocation0]]
  $region64: #{gblock_forward.5} parent=0
    _
  %s8 = ssub.s32 1, %s6
  %s9 = scalar_select 0, %s8, %s6
  loop: start=0, step=1, limit=10
  $region2: #{gblock_forward.5} parent=0 // loop_pre_header
    _
  $region3: #{gblock_forward.5} parent=0 // loop_header
    %s11 = sphi 0, %s15
    %p12 = scmp.ge.s32.totalorder %s11, 10
    %s18 = sphi 0, %s30
    %s19 = sphi 0, %s26
    %s20 = sphi 0, %s18
    %s21 = sphi 0, %s19
    %s22 = sphi 0, %s20
    %s23 = sphi 0, %s21
    %s33 = sphi 0, %s35
    %s36 = sphi 0, %s33
    %s37 = sphi 0, %s36
    %s53 = sphi 0, %s37
    %s57 = sphi 0, %s57
    %s59 = sphi 0, %s57
    %s60 = sphi 0, %s59
    %s74 = sphi 0, %s60
    %s78 = sphi 0, %s78
    %s80 = sphi 0, %s78
    %s81 = sphi 0, %s80
    %s95 = sphi 0, %s81
    %s99 = sphi 0, %s99
    %s101 = sphi 0, %s99
    %s102 = sphi 0, %s101
    %s116 = sphi 0, %s102
    %s120 = sphi 0, %s120
    %s122 = sphi 0, %s120
    %s123 = sphi 0, %s122
    %s137 = sphi 0, %s123
    %s145 = sphi 0, %s147
    %s148 = sphi 0, %s145
    %s149 = sphi 0, %s148
    %s165 = sphi 0, %s149
  $region4: #{gblock_forward.5} parent=0 // loop_header_branch
    %14 = sbr.rel (%p12) target = $region8
  $region5: #{gblock_forward.5} parent=0 // loop_body
    %s16 = ssub.s32 %s11, 1
    %s17 = ssub.s32 %s11, 2
    %s24 = sadd.s32 1, %s19
    %p25 = scmp.ge.s32.totalorder %s24, 4
    %s26 = scalar_select %p25, 0, %s24
    %s27 = sadd.s32 1, %s18
    %s28 = scalar_select %p25, %s27, %s18
    %p29 = scmp.ge.s32.totalorder %s28, 2
    %s30 = scalar_select %p29, 0, %s28
    %s31 = ssub.s32 %s18, %s30
    %p32 = scmp.eq.s32.totalorder %s31, 0
    %s34 = sadd.s32 %s33, 1
    %s35 = scalar_select %p32, %s33, %s34
    %p38 = pneg %p32
    %p39 = scmp.eq.s32.totalorder %s11, 7
    %p40 = por %p38, %p39
    %p41 = scmp.ne.s32.totalorder %s33, %s36
    %p42 = scmp.eq.s32.totalorder %s11, 0
    %p43 = por %p41, %p42
    %p44 = scmp.ne.s32.totalorder %s33, %s36
    %p45 = scmp.eq.s32.totalorder %s16, 7
    %p46 = por %p44, %p45
    %p47 = scmp.ne.s32.totalorder %s36, %s37
    %p48 = scmp.eq.s32.totalorder %s16, 0
    %p49 = por %p47, %p48
    %p50 = scmp.ne.s32.totalorder %s36, %s37
    %p51 = scmp.eq.s32.totalorder %s17, 7
    %p52 = por %p50, %p51
    %p54 = scmp.ne.s32.totalorder %s37, %s53
    %p55 = scmp.eq.s32.totalorder %s17, 0
    %p56 = por %p54, %p55
    %s58 = sadd.s32 %s57, 1
    %p61 = scmp.eq.s32.totalorder %s11, 7
    %p62 = scmp.ne.s32.totalorder %s57, %s59
    %p63 = scmp.eq.s32.totalorder %s11, 0
    %p64 = por %p62, %p63
    %p65 = scmp.ne.s32.totalorder %s57, %s59
    %p66 = scmp.eq.s32.totalorder %s16, 7
    %p67 = por %p65, %p66
    %p68 = scmp.ne.s32.totalorder %s59, %s60
    %p69 = scmp.eq.s32.totalorder %s16, 0
    %p70 = por %p68, %p69
    %p71 = scmp.ne.s32.totalorder %s59, %s60
    %p72 = scmp.eq.s32.totalorder %s17, 7
    %p73 = por %p71, %p72
    %p75 = scmp.ne.s32.totalorder %s60, %s74
    %p76 = scmp.eq.s32.totalorder %s17, 0
    %p77 = por %p75, %p76
    %s79 = sadd.s32 %s78, 1
    %p82 = scmp.eq.s32.totalorder %s11, 7
    %p83 = scmp.ne.s32.totalorder %s78, %s80
    %p84 = scmp.eq.s32.totalorder %s11, 0
    %p85 = por %p83, %p84
    %p86 = scmp.ne.s32.totalorder %s78, %s80
    %p87 = scmp.eq.s32.totalorder %s16, 7
    %p88 = por %p86, %p87
    %p89 = scmp.ne.s32.totalorder %s80, %s81
    %p90 = scmp.eq.s32.totalorder %s16, 0
    %p91 = por %p89, %p90
    %p92 = scmp.ne.s32.totalorder %s80, %s81
    %p93 = scmp.eq.s32.totalorder %s17, 7
    %p94 = por %p92, %p93
    %p96 = scmp.ne.s32.totalorder %s81, %s95
    %p97 = scmp.eq.s32.totalorder %s17, 0
    %p98 = por %p96, %p97
    %s100 = sadd.s32 %s99, 1
    %p103 = scmp.eq.s32.totalorder %s11, 7
    %p104 = scmp.ne.s32.totalorder %s99, %s101
    %p105 = scmp.eq.s32.totalorder %s11, 0
    %p106 = por %p104, %p105
    %p107 = scmp.ne.s32.totalorder %s99, %s101
    %p108 = scmp.eq.s32.totalorder %s16, 7
    %p109 = por %p107, %p108
    %p110 = scmp.ne.s32.totalorder %s101, %s102
    %p111 = scmp.eq.s32.totalorder %s16, 0
    %p112 = por %p110, %p111
    %p113 = scmp.ne.s32.totalorder %s101, %s102
    %p114 = scmp.eq.s32.totalorder %s17, 7
    %p115 = por %p113, %p114
    %p117 = scmp.ne.s32.totalorder %s102, %s116
    %p118 = scmp.eq.s32.totalorder %s17, 0
    %p119 = por %p117, %p118
    %s121 = sadd.s32 %s120, 1
    %p124 = scmp.eq.s32.totalorder %s11, 7
    %p125 = scmp.ne.s32.totalorder %s120, %s122
    %p126 = scmp.eq.s32.totalorder %s11, 0
    %p127 = por %p125, %p126
    %p128 = scmp.ne.s32.totalorder %s120, %s122
    %p129 = scmp.eq.s32.totalorder %s16, 7
    %p130 = por %p128, %p129
    %p131 = scmp.ne.s32.totalorder %s122, %s123
    %p132 = scmp.eq.s32.totalorder %s16, 0
    %p133 = por %p131, %p132
    %p134 = scmp.ne.s32.totalorder %s122, %s123
    %p135 = scmp.eq.s32.totalorder %s17, 7
    %p136 = por %p134, %p135
    %p138 = scmp.ne.s32.totalorder %s123, %s137
    %p139 = scmp.eq.s32.totalorder %s17, 0
    %p140 = por %p138, %p139
    %s141 = ssub.s32 %s18, %s30
    %s142 = ssub.s32 %s19, %s26
    %s143 = sor.u32 %s141, %s142
    %p144 = scmp.eq.s32.totalorder %s143, 0
    %s146 = sadd.s32 %s145, 1
    %s147 = scalar_select %p144, %s145, %s146
    %p150 = pneg %p144
    %p151 = scmp.eq.s32.totalorder %s11, 7
    %p152 = por %p150, %p151
    %p153 = scmp.ne.s32.totalorder %s145, %s148
    %p154 = scmp.eq.s32.totalorder %s11, 0
    %p155 = por %p153, %p154
    %p156 = scmp.ne.s32.totalorder %s145, %s148
    %p157 = scmp.eq.s32.totalorder %s16, 7
    %p158 = por %p156, %p157
    %p159 = scmp.ne.s32.totalorder %s148, %s149
    %p160 = scmp.eq.s32.totalorder %s16, 0
    %p161 = por %p159, %p160
    %p162 = scmp.ne.s32.totalorder %s148, %s149
    %p163 = scmp.eq.s32.totalorder %s17, 7
    %p164 = por %p162, %p163
    %p166 = scmp.ne.s32.totalorder %s149, %s165
    %p167 = scmp.eq.s32.totalorder %s17, 0
    %p168 = por %p166, %p167
    %p169 = scmp.le.s32.totalorder 1, %s11
    %p170 = scmp.lt.s32.totalorder %s11, 9
    %p171 = pnand %p169, %p170
    %p172 = pneg %p171
    // Predicated region
    $region9: #{gblock_forward.5} parent=5 // pred_check
      _
    $region10: #{gblock_forward.5} parent=5 // pred_check_branch
      %174 = sbr.rel (%p171) target = $region12
    $region11: #{gblock_forward.5} parent=5 // pred_region
      %s175 = ssub.s32 %s11, 1
      // Predicated region
      $region13: #{gblock_forward.5} parent=11 // pred_check
        %p176 = pneg %p70
      $region14: #{gblock_forward.5} parent=11 // pred_check_branch
        %178 = sbr.rel (%p176) target = $region16
      $region15: #{gblock_forward.5} parent=11 // pred_region
        _
      $region16: #{gblock_forward.5} parent=11 // pred_fallthru
        _
      // Predicated region
      $region17: #{gblock_forward.5} parent=11 // pred_check
        %p179 = pneg %p91
      $region18: #{gblock_forward.5} parent=11 // pred_check_branch
        %181 = sbr.rel (%p179) target = $region20
      $region19: #{gblock_forward.5} parent=11 // pred_region
        _
      $region20: #{gblock_forward.5} parent=11 // pred_fallthru
        _
      // Predicated region
      $region21: #{gblock_forward.5} parent=11 // pred_check
        %p182 = pneg %p112
      $region22: #{gblock_forward.5} parent=11 // pred_check_branch
        %184 = sbr.rel (%p182) target = $region24
      $region23: #{gblock_forward.5} parent=11 // pred_region
        _
      $region24: #{gblock_forward.5} parent=11 // pred_fallthru
        _
      // Predicated region
      $region25: #{gblock_forward.5} parent=11 // pred_check
        %p185 = pneg %p133
      $region26: #{gblock_forward.5} parent=11 // pred_check_branch
        %187 = sbr.rel (%p185) target = $region28
      $region27: #{gblock_forward.5} parent=11 // pred_region
        _
      $region28: #{gblock_forward.5} parent=11 // pred_fallthru
        _
    $region12: #{gblock_forward.5} parent=5 // pred_fallthru
      _
    %p188 = scmp.lt.s32.totalorder %s11, 8
    // Predicated region
    $region29: #{gblock_forward.5} parent=5 // pred_check
      %p189 = pneg %p188
    $region30: #{gblock_forward.5} parent=5 // pred_check_branch
      %191 = sbr.rel (%p189) target = $region32
    $region31: #{gblock_forward.5} parent=5 // pred_region
      // Predicated region
      $region33: #{gblock_forward.5} parent=31 // pred_check
        %p192 = pneg %p43
      $region34: #{gblock_forward.5} parent=31 // pred_check_branch
        %194 = sbr.rel (%p192) target = $region36
      $region35: #{gblock_forward.5} parent=31 // pred_region
        %p195 = scmp.lt.s32.totalorder %s18, 1
        %s196 = scalar_select %p195, %s18, 1
        %s197 = smul.addr %s196, 128
        %s198 = smul.addr %s197, 8
        %s199 = scalar_lea.vmem %s0, %s198
      $region36: #{gblock_forward.5} parent=31 // pred_fallthru
        _
    $region32: #{gblock_forward.5} parent=5 // pred_fallthru
      _
    %p200 = scmp.le.s32.totalorder 1, %s11
    %p201 = scmp.lt.s32.totalorder %s11, 9
    %p202 = pnand %p200, %p201
    %p203 = pneg %p202
    // Predicated region
    $region37: #{gblock_forward.5} parent=5 // pred_check
      _
    $region38: #{gblock_forward.5} parent=5 // pred_check_branch
      %205 = sbr.rel (%p202) target = $region40
    $region39: #{gblock_forward.5} parent=5 // pred_region
      %s206 = ssub.s32 %s11, 1
      %p207 = scmp.lt.s32.totalorder %s20, 1
      %s208 = scalar_select %p207, %s20, 1
      %s209 = smul.addr %s208, 128
      %s210 = smul.addr %s209, 8
      %s211 = scalar_lea.vmem %s0, %s210
      %p212 = pneg %p49
      %p213 = pneg %p46
      %p214 = pneg %p70
      %p215 = pneg %p67
      %p216 = pneg %p91
      %p217 = pneg %p88
      %p218 = pneg %p112
      %p219 = pneg %p109
      %p220 = pneg %p133
      %p221 = pneg %p130
      %p222 = pneg %p161
      %p223 = pneg %p158
      %s224 = smul.u32 8, %s21
      %p225 = scmp.lt.s32.totalorder %s20, 1
      %s226 = scalar_select %p225, %s20, 1
      %p227 = scmp.lt.s32.totalorder %s224, 31
      %s228 = scalar_select %p227, %s224, 31
      %s229 = smul.addr %s228, 4
      %s230 = smul.addr %s226, 128
      %s231 = sadd.s32 %s229, %s230
      %s232 = smul.addr %s231, 8
      %s233 = scalar_lea.vmem %s5, %s232
      %p234 = scmp.lt.s32.totalorder %s20, 1
      %s235 = scalar_select %p234, %s20, 1
      %s236 = smul.addr %s235, 128
      %s237 = smul.addr %s236, 8
      %s238 = scalar_lea.vmem %s0, %s237
      %s239 = smul.u32 8, %s21
      %p240 = scmp.lt.s32.totalorder %s20, 1
      %s241 = scalar_select %p240, %s20, 1
      %p242 = scmp.lt.s32.totalorder %s239, 31
      %s243 = scalar_select %p242, %s239, 31
      %s244 = smul.addr %s243, 4
      %s245 = smul.addr %s241, 128
      %s246 = sadd.s32 %s244, %s245
      %s247 = smul.addr %s246, 8
      %s248 = scalar_lea.vmem %s5, %s247
      %s249 = smul.u32 8, %s21
      %p250 = scmp.eq.s32.totalorder %s21, 0
      // Predicated region
      $region41: #{gblock_forward.5} parent=39 // pred_check
        %p251 = pneg %p250
      $region42: #{gblock_forward.5} parent=39 // pred_check_branch
        %253 = sbr.rel (%p251) target = $region44
      $region43: #{gblock_forward.5} parent=39 // pred_region
        %vm254 = vcmask 31744
        %255 = vst.msk [vmem:[#allocation2] sm:$0xff] %vm254, 0.0
        %256 = vst.msk [vmem:[#allocation2 + $0x8] sm:$0xff] %vm254, 0.0
        %257 = vst.msk [vmem:[#allocation2 + $0x10] sm:$0xff] %vm254, 0.0
        %258 = vst.msk [vmem:[#allocation2 + $0x18] sm:$0xff] %vm254, 0.0
        %vm259 = vcmask 25600
        %260 = vst.msk [vmem:[#allocation2 + $0x20] sm:$0x3] %vm259, 0.0
        %261 = vst.msk [vmem:[#allocation2 + $0x28] sm:$0xff] %vm254, 0.0
        %262 = vst.msk [vmem:[#allocation2 + $0x30] sm:$0xff] %vm254, 0.0
        %263 = vst.msk [vmem:[#allocation2 + $0x38] sm:$0xff] %vm254, 0.0
        %264 = vst.msk [vmem:[#allocation2 + $0x40] sm:$0xff] %vm254, 0.0
        %265 = vst.msk [vmem:[#allocation2 + $0x48] sm:$0x3] %vm259, 0.0
        %266 = vst.msk [vmem:[#allocation2 + $0x50] sm:$0xff] %vm254, 0.0
        %267 = vst.msk [vmem:[#allocation2 + $0x58] sm:$0xff] %vm254, 0.0
        %268 = vst.msk [vmem:[#allocation2 + $0x60] sm:$0xff] %vm254, 0.0
        %269 = vst.msk [vmem:[#allocation2 + $0x68] sm:$0xff] %vm254, 0.0
        %270 = vst.msk [vmem:[#allocation2 + $0x70] sm:$0x3] %vm259, 0.0
        %271 = vst.msk [vmem:[#allocation2 + $0x78] sm:$0xff] %vm254, 0.0
        %272 = vst.msk [vmem:[#allocation2 + $0x80] sm:$0xff] %vm254, 0.0
        %273 = vst.msk [vmem:[#allocation2 + $0x88] sm:$0xff] %vm254, 0.0
        %274 = vst.msk [vmem:[#allocation2 + $0x90] sm:$0xff] %vm254, 0.0
        %275 = vst.msk [vmem:[#allocation2 + $0x98] sm:$0x3] %vm259, 0.0
        %276 = vst.msk [vmem:[#allocation2 + $0xa0] sm:$0xff] %vm254, 0.0
        %277 = vst.msk [vmem:[#allocation2 + $0xa8] sm:$0xff] %vm254, 0.0
        %278 = vst.msk [vmem:[#allocation2 + $0xb0] sm:$0xff] %vm254, 0.0
        %279 = vst.msk [vmem:[#allocation2 + $0xb8] sm:$0xff] %vm254, 0.0
        %280 = vst.msk [vmem:[#allocation2 + $0xc0] sm:$0x3] %vm259, 0.0
        %281 = vst.msk [vmem:[#allocation2 + $0xc8] sm:$0xff] %vm254, 0.0
        %282 = vst.msk [vmem:[#allocation2 + $0xd0] sm:$0xff] %vm254, 0.0
        %283 = vst.msk [vmem:[#allocation2 + $0xd8] sm:$0xff] %vm254, 0.0
        %284 = vst.msk [vmem:[#allocation2 + $0xe0] sm:$0xff] %vm254, 0.0
        %285 = vst.msk [vmem:[#allocation2 + $0xe8] sm:$0x3] %vm259, 0.0
        %286 = vst.msk [vmem:[#allocation2 + $0xf0] sm:$0xff] %vm254, 0.0
        %287 = vst.msk [vmem:[#allocation2 + $0xf8] sm:$0xff] %vm254, 0.0
        %288 = vst.msk [vmem:[#allocation2 + $0x100] sm:$0xff] %vm254, 0.0
        %289 = vst.msk [vmem:[#allocation2 + $0x108] sm:$0xff] %vm254, 0.0
        %290 = vst.msk [vmem:[#allocation2 + $0x110] sm:$0x3] %vm259, 0.0
        %291 = vst.msk [vmem:[#allocation2 + $0x118] sm:$0xff] %vm254, 0.0
        %292 = vst.msk [vmem:[#allocation2 + $0x120] sm:$0xff] %vm254, 0.0
        %293 = vst.msk [vmem:[#allocation2 + $0x128] sm:$0xff] %vm254, 0.0
        %294 = vst.msk [vmem:[#allocation2 + $0x130] sm:$0xff] %vm254, 0.0
        %295 = vst.msk [vmem:[#allocation2 + $0x138] sm:$0x3] %vm259, 0.0
        %296 = vst.msk [vmem:[#allocation2 + $0x140] sm:$0xff] %vm254, 0.0
        %297 = vst.msk [vmem:[#allocation2 + $0x148] sm:$0xff] %vm254, 0.0
        %298 = vst.msk [vmem:[#allocation2 + $0x150] sm:$0xff] %vm254, 0.0
        %299 = vst.msk [vmem:[#allocation2 + $0x158] sm:$0xff] %vm254, 0.0
        %300 = vst.msk [vmem:[#allocation2 + $0x160] sm:$0x3] %vm259, 0.0
        %301 = vst.msk [vmem:[#allocation2 + $0x168] sm:$0xff] %vm254, 0.0
        %302 = vst.msk [vmem:[#allocation2 + $0x170] sm:$0xff] %vm254, 0.0
        %303 = vst.msk [vmem:[#allocation2 + $0x178] sm:$0xff] %vm254, 0.0
        %304 = vst.msk [vmem:[#allocation2 + $0x180] sm:$0xff] %vm254, 0.0
        %305 = vst.msk [vmem:[#allocation2 + $0x188] sm:$0x3] %vm259, 0.0
        %306 = vst.msk [vmem:[#allocation2 + $0x190] sm:$0xff] %vm254, 0.0
        %307 = vst.msk [vmem:[#allocation2 + $0x198] sm:$0xff] %vm254, 0.0
        %308 = vst.msk [vmem:[#allocation2 + $0x1a0] sm:$0xff] %vm254, 0.0
        %309 = vst.msk [vmem:[#allocation2 + $0x1a8] sm:$0xff] %vm254, 0.0
        %310 = vst.msk [vmem:[#allocation2 + $0x1b0] sm:$0x3] %vm259, 0.0
        %311 = vst.msk [vmem:[#allocation2 + $0x1b8] sm:$0xff] %vm254, 0.0
        %312 = vst.msk [vmem:[#allocation2 + $0x1c0] sm:$0xff] %vm254, 0.0
        %313 = vst.msk [vmem:[#allocation2 + $0x1c8] sm:$0xff] %vm254, 0.0
        %314 = vst.msk [vmem:[#allocation2 + $0x1d0] sm:$0xff] %vm254, 0.0
        %315 = vst.msk [vmem:[#allocation2 + $0x1d8] sm:$0x3] %vm259, 0.0
        %316 = vst.msk [vmem:[#allocation2 + $0x1e0] sm:$0xff] %vm254, 0.0
        %317 = vst.msk [vmem:[#allocation2 + $0x1e8] sm:$0xff] %vm254, 0.0
        %318 = vst.msk [vmem:[#allocation2 + $0x1f0] sm:$0xff] %vm254, 0.0
        %319 = vst.msk [vmem:[#allocation2 + $0x1f8] sm:$0xff] %vm254, 0.0
        %320 = vst.msk [vmem:[#allocation2 + $0x200] sm:$0x3] %vm259, 0.0
        %321 = vst.msk [vmem:[#allocation2 + $0x208] sm:$0xff] %vm254, 0.0
        %322 = vst.msk [vmem:[#allocation2 + $0x210] sm:$0xff] %vm254, 0.0
        %323 = vst.msk [vmem:[#allocation2 + $0x218] sm:$0xff] %vm254, 0.0
        %324 = vst.msk [vmem:[#allocation2 + $0x220] sm:$0xff] %vm254, 0.0
        %325 = vst.msk [vmem:[#allocation2 + $0x228] sm:$0x3] %vm259, 0.0
        %326 = vst.msk [vmem:[#allocation2 + $0x230] sm:$0xff] %vm254, 0.0
        %327 = vst.msk [vmem:[#allocation2 + $0x238] sm:$0xff] %vm254, 0.0
        %328 = vst.msk [vmem:[#allocation2 + $0x240] sm:$0xff] %vm254, 0.0
        %329 = vst.msk [vmem:[#allocation2 + $0x248] sm:$0xff] %vm254, 0.0
        %330 = vst.msk [vmem:[#allocation2 + $0x250] sm:$0x3] %vm259, 0.0
        %331 = vst.msk [vmem:[#allocation2 + $0x258] sm:$0xff] %vm254, 0.0
        %332 = vst.msk [vmem:[#allocation2 + $0x260] sm:$0xff] %vm254, 0.0
        %333 = vst.msk [vmem:[#allocation2 + $0x268] sm:$0xff] %vm254, 0.0
        %334 = vst.msk [vmem:[#allocation2 + $0x270] sm:$0xff] %vm254, 0.0
        %335 = vst.msk [vmem:[#allocation2 + $0x278] sm:$0x3] %vm259, 0.0
        %336 = vst.msk [vmem:[#allocation2 + $0x280] sm:$0xff] %vm254, 0.0
        %337 = vst.msk [vmem:[#allocation2 + $0x288] sm:$0xff] %vm254, 0.0
        %338 = vst.msk [vmem:[#allocation2 + $0x290] sm:$0xff] %vm254, 0.0
        %339 = vst.msk [vmem:[#allocation2 + $0x298] sm:$0xff] %vm254, 0.0
        %340 = vst.msk [vmem:[#allocation2 + $0x2a0] sm:$0x3] %vm259, 0.0
        %341 = vst.msk [vmem:[#allocation2 + $0x2a8] sm:$0xff] %vm254, 0.0
        %342 = vst.msk [vmem:[#allocation2 + $0x2b0] sm:$0xff] %vm254, 0.0
        %343 = vst.msk [vmem:[#allocation2 + $0x2b8] sm:$0xff] %vm254, 0.0
        %344 = vst.msk [vmem:[#allocation2 + $0x2c0] sm:$0xff] %vm254, 0.0
        %345 = vst.msk [vmem:[#allocation2 + $0x2c8] sm:$0x3] %vm259, 0.0
        %346 = vst.msk [vmem:[#allocation2 + $0x2d0] sm:$0xff] %vm254, 0.0
        %347 = vst.msk [vmem:[#allocation2 + $0x2d8] sm:$0xff] %vm254, 0.0
        %348 = vst.msk [vmem:[#allocation2 + $0x2e0] sm:$0xff] %vm254, 0.0
        %349 = vst.msk [vmem:[#allocation2 + $0x2e8] sm:$0xff] %vm254, 0.0
        %350 = vst.msk [vmem:[#allocation2 + $0x2f0] sm:$0x3] %vm259, 0.0
        %351 = vst.msk [vmem:[#allocation2 + $0x2f8] sm:$0xff] %vm254, 0.0
        %352 = vst.msk [vmem:[#allocation2 + $0x300] sm:$0xff] %vm254, 0.0
        %353 = vst.msk [vmem:[#allocation2 + $0x308] sm:$0xff] %vm254, 0.0
        %354 = vst.msk [vmem:[#allocation2 + $0x310] sm:$0xff] %vm254, 0.0
        %355 = vst.msk [vmem:[#allocation2 + $0x318] sm:$0x3] %vm259, 0.0
        %356 = vst.msk [vmem:[#allocation2 + $0x320] sm:$0xff] %vm254, 0.0
        %357 = vst.msk [vmem:[#allocation2 + $0x328] sm:$0xff] %vm254, 0.0
        %358 = vst.msk [vmem:[#allocation2 + $0x330] sm:$0xff] %vm254, 0.0
        %359 = vst.msk [vmem:[#allocation2 + $0x338] sm:$0xff] %vm254, 0.0
        %360 = vst.msk [vmem:[#allocation2 + $0x340] sm:$0x3] %vm259, 0.0
        %361 = vst.msk [vmem:[#allocation2 + $0x348] sm:$0xff] %vm254, 0.0
        %362 = vst.msk [vmem:[#allocation2 + $0x350] sm:$0xff] %vm254, 0.0
        %363 = vst.msk [vmem:[#allocation2 + $0x358] sm:$0xff] %vm254, 0.0
        %364 = vst.msk [vmem:[#allocation2 + $0x360] sm:$0xff] %vm254, 0.0
        %365 = vst.msk [vmem:[#allocation2 + $0x368] sm:$0x3] %vm259, 0.0
        %366 = vst.msk [vmem:[#allocation2 + $0x370] sm:$0xff] %vm254, 0.0
        %367 = vst.msk [vmem:[#allocation2 + $0x378] sm:$0xff] %vm254, 0.0
        %368 = vst.msk [vmem:[#allocation2 + $0x380] sm:$0xff] %vm254, 0.0
        %369 = vst.msk [vmem:[#allocation2 + $0x388] sm:$0xff] %vm254, 0.0
        %370 = vst.msk [vmem:[#allocation2 + $0x390] sm:$0x3] %vm259, 0.0
        %371 = vst.msk [vmem:[#allocation2 + $0x398] sm:$0xff] %vm254, 0.0
        %372 = vst.msk [vmem:[#allocation2 + $0x3a0] sm:$0xff] %vm254, 0.0
        %373 = vst.msk [vmem:[#allocation2 + $0x3a8] sm:$0xff] %vm254, 0.0
        %374 = vst.msk [vmem:[#allocation2 + $0x3b0] sm:$0xff] %vm254, 0.0
        %375 = vst.msk [vmem:[#allocation2 + $0x3b8] sm:$0x3] %vm259, 0.0
        %376 = vst.msk [vmem:[#allocation2 + $0x3c0] sm:$0xff] %vm254, 0.0
        %377 = vst.msk [vmem:[#allocation2 + $0x3c8] sm:$0xff] %vm254, 0.0
        %378 = vst.msk [vmem:[#allocation2 + $0x3d0] sm:$0xff] %vm254, 0.0
        %379 = vst.msk [vmem:[#allocation2 + $0x3d8] sm:$0xff] %vm254, 0.0
        %380 = vst.msk [vmem:[#allocation2 + $0x3e0] sm:$0x3] %vm259, 0.0
        %381 = vst.msk [vmem:[#allocation2 + $0x3e8] sm:$0xff] %vm254, 0.0
        %382 = vst.msk [vmem:[#allocation2 + $0x3f0] sm:$0xff] %vm254, 0.0
        %383 = vst.msk [vmem:[#allocation2 + $0x3f8] sm:$0xff] %vm254, 0.0
        %384 = vst.msk [vmem:[#allocation2 + $0x400] sm:$0xff] %vm254, 0.0
        %385 = vst.msk [vmem:[#allocation2 + $0x408] sm:$0x3] %vm259, 0.0
        %386 = vst.msk [vmem:[#allocation2 + $0x410] sm:$0xff] %vm254, 0.0
        %387 = vst.msk [vmem:[#allocation2 + $0x418] sm:$0xff] %vm254, 0.0
        %388 = vst.msk [vmem:[#allocation2 + $0x420] sm:$0xff] %vm254, 0.0
        %389 = vst.msk [vmem:[#allocation2 + $0x428] sm:$0xff] %vm254, 0.0
        %390 = vst.msk [vmem:[#allocation2 + $0x430] sm:$0x3] %vm259, 0.0
        %391 = vst.msk [vmem:[#allocation2 + $0x438] sm:$0xff] %vm254, 0.0
        %392 = vst.msk [vmem:[#allocation2 + $0x440] sm:$0xff] %vm254, 0.0
        %393 = vst.msk [vmem:[#allocation2 + $0x448] sm:$0xff] %vm254, 0.0
        %394 = vst.msk [vmem:[#allocation2 + $0x450] sm:$0xff] %vm254, 0.0
        %395 = vst.msk [vmem:[#allocation2 + $0x458] sm:$0x3] %vm259, 0.0
        %396 = vst.msk [vmem:[#allocation2 + $0x460] sm:$0xff] %vm254, 0.0
        %397 = vst.msk [vmem:[#allocation2 + $0x468] sm:$0xff] %vm254, 0.0
        %398 = vst.msk [vmem:[#allocation2 + $0x470] sm:$0xff] %vm254, 0.0
        %399 = vst.msk [vmem:[#allocation2 + $0x478] sm:$0xff] %vm254, 0.0
        %400 = vst.msk [vmem:[#allocation2 + $0x480] sm:$0x3] %vm259, 0.0
        %401 = vst.msk [vmem:[#allocation2 + $0x488] sm:$0xff] %vm254, 0.0
        %402 = vst.msk [vmem:[#allocation2 + $0x490] sm:$0xff] %vm254, 0.0
        %403 = vst.msk [vmem:[#allocation2 + $0x498] sm:$0xff] %vm254, 0.0
        %404 = vst.msk [vmem:[#allocation2 + $0x4a0] sm:$0xff] %vm254, 0.0
        %405 = vst.msk [vmem:[#allocation2 + $0x4a8] sm:$0x3] %vm259, 0.0
        %406 = vst.msk [vmem:[#allocation2 + $0x4b0] sm:$0xff] %vm254, 0.0
        %407 = vst.msk [vmem:[#allocation2 + $0x4b8] sm:$0xff] %vm254, 0.0
        %408 = vst.msk [vmem:[#allocation2 + $0x4c0] sm:$0xff] %vm254, 0.0
        %409 = vst.msk [vmem:[#allocation2 + $0x4c8] sm:$0xff] %vm254, 0.0
        %410 = vst.msk [vmem:[#allocation2 + $0x4d0] sm:$0x3] %vm259, 0.0
        %411 = vst.msk [vmem:[#allocation2 + $0x4d8] sm:$0xff] %vm254, 0.0
        %412 = vst.msk [vmem:[#allocation2 + $0x4e0] sm:$0xff] %vm254, 0.0
        %413 = vst.msk [vmem:[#allocation2 + $0x4e8] sm:$0xff] %vm254, 0.0
        %414 = vst.msk [vmem:[#allocation2 + $0x4f0] sm:$0xff] %vm254, 0.0
        %415 = vst.msk [vmem:[#allocation2 + $0x4f8] sm:$0x3] %vm259, 0.0
        %416 = vst.msk [vmem:[#allocation2 + $0x500] sm:$0xff] %vm254, 0.0
        %417 = vst.msk [vmem:[#allocation2 + $0x508] sm:$0xff] %vm254, 0.0
        %418 = vst.msk [vmem:[#allocation2 + $0x510] sm:$0xff] %vm254, 0.0
        %419 = vst.msk [vmem:[#allocation2 + $0x518] sm:$0xff] %vm254, 0.0
        %420 = vst.msk [vmem:[#allocation2 + $0x520] sm:$0x3] %vm259, 0.0
        %421 = vst.msk [vmem:[#allocation2 + $0x528] sm:$0xff] %vm254, 0.0
        %422 = vst.msk [vmem:[#allocation2 + $0x530] sm:$0xff] %vm254, 0.0
        %423 = vst.msk [vmem:[#allocation2 + $0x538] sm:$0xff] %vm254, 0.0
        %424 = vst.msk [vmem:[#allocation2 + $0x540] sm:$0xff] %vm254, 0.0
        %425 = vst.msk [vmem:[#allocation2 + $0x548] sm:$0x3] %vm259, 0.0
        %v426 = vld [vmem:[%s1] sm:$0x1]
        %v427 = vld [vmem:[%s2] sm:$0x1]
        loop: start=0, step=1, limit=4
        $region45: #{gblock_forward.5} parent=43 // loop_pre_header
          _
        $region46: #{gblock_forward.5} parent=43 // loop_header
          %s429 = sphi 0, %s433
          %p430 = scmp.ge.s32.totalorder %s429, 4
        $region47: #{gblock_forward.5} parent=43 // loop_header_branch
          %432 = sbr.rel (%p430) target = $region51
        $region48: #{gblock_forward.5} parent=43 // loop_body
          %s434 = smul.u32 %s429, 8
          %s435 = smul.u32 %s434, 32
          %s436 = scalar_lea.vmem %s238, %s435
          %v437 = vld [vmem:[%s436] sm:$0xff]
          %v438 = vld [vmem:[%s436 + $0x8] sm:$0xff]
          %v439 = vld [vmem:[%s436 + $0x10] sm:$0xff]
          %v440 = vld [vmem:[%s436 + $0x18] sm:$0xff]
          %v441 = vld [vmem:[%s436 + $0x20] sm:$0xff]
          %v442 = vld [vmem:[%s436 + $0x28] sm:$0xff]
          %v443 = vld [vmem:[%s436 + $0x30] sm:$0xff]
          %v444 = vld [vmem:[%s436 + $0x38] sm:$0xff]
          %v445 = vld [vmem:[%s436 + $0x40] sm:$0xff]
          %v446 = vld [vmem:[%s436 + $0x48] sm:$0xff]
          %v447 = vld [vmem:[%s436 + $0x50] sm:$0xff]
          %v448 = vld [vmem:[%s436 + $0x58] sm:$0xff]
          %v449 = vld [vmem:[%s436 + $0x60] sm:$0xff]
          %v450 = vld [vmem:[%s436 + $0x68] sm:$0xff]
          %v451 = vld [vmem:[%s436 + $0x70] sm:$0xff]
          %v452 = vld [vmem:[%s436 + $0x78] sm:$0xff]
          %v453 = vld [vmem:[%s436 + $0x80] sm:$0xff]
          %v454 = vld [vmem:[%s436 + $0x88] sm:$0xff]
          %v455 = vld [vmem:[%s436 + $0x90] sm:$0xff]
          %v456 = vld [vmem:[%s436 + $0x98] sm:$0xff]
          %v457 = vld [vmem:[%s436 + $0xa0] sm:$0xff]
          %v458 = vld [vmem:[%s436 + $0xa8] sm:$0xff]
          %v459 = vld [vmem:[%s436 + $0xb0] sm:$0xff]
          %v460 = vld [vmem:[%s436 + $0xb8] sm:$0xff]
          %v461 = vld [vmem:[%s436 + $0xc0] sm:$0xff]
          %v462 = vld [vmem:[%s436 + $0xc8] sm:$0xff]
          %v463 = vld [vmem:[%s436 + $0xd0] sm:$0xff]
          %v464 = vld [vmem:[%s436 + $0xd8] sm:$0xff]
          %v465 = vld [vmem:[%s436 + $0xe0] sm:$0xff]
          %v466 = vld [vmem:[%s436 + $0xe8] sm:$0xff]
          %v467 = vld [vmem:[%s436 + $0xf0] sm:$0xff]
          %v468 = vld [vmem:[%s436 + $0xf8] sm:$0xff]
          %v470 = vlaneseq
          %v471 = vshrl.u32 %v470, 7
          %v472 = vsub.s32 0, %v471
          %v473 = vrot.slane %v426, %v472
          %v475 = vmul.f32 %v437, %v473
          %v476 = vmul.f32 %v438, %v473
          %v477 = vmul.f32 %v439, %v473
          %v478 = vmul.f32 %v440, %v473
          %v479 = vmul.f32 %v441, %v473
          %v480 = vmul.f32 %v442, %v473
          %v481 = vmul.f32 %v443, %v473
          %v482 = vmul.f32 %v444, %v473
          %v483 = vmul.f32 %v445, %v473
          %v484 = vmul.f32 %v446, %v473
          %v485 = vmul.f32 %v447, %v473
          %v486 = vmul.f32 %v448, %v473
          %v487 = vmul.f32 %v449, %v473
          %v488 = vmul.f32 %v450, %v473
          %v489 = vmul.f32 %v451, %v473
          %v490 = vmul.f32 %v452, %v473
          %v491 = vmul.f32 %v453, %v473
          %v492 = vmul.f32 %v454, %v473
          %v493 = vmul.f32 %v455, %v473
          %v494 = vmul.f32 %v456, %v473
          %v495 = vmul.f32 %v457, %v473
          %v496 = vmul.f32 %v458, %v473
          %v497 = vmul.f32 %v459, %v473
          %v498 = vmul.f32 %v460, %v473
          %v499 = vmul.f32 %v461, %v473
          %v500 = vmul.f32 %v462, %v473
          %v501 = vmul.f32 %v463, %v473
          %v502 = vmul.f32 %v464, %v473
          %v503 = vmul.f32 %v465, %v473
          %v504 = vmul.f32 %v466, %v473
          %v505 = vmul.f32 %v467, %v473
          %v506 = vmul.f32 %v468, %v473
          %v508 = vlaneseq
          %v509 = vshrl.u32 %v508, 7
          %v510 = vsub.s32 0, %v509
          %v511 = vrot.slane %v427, %v510
          %v513 = vadd.f32 %v475, %v511
          %v514 = vadd.f32 %v476, %v511
          %v515 = vadd.f32 %v477, %v511
          %v516 = vadd.f32 %v478, %v511
          %v517 = vadd.f32 %v479, %v511
          %v518 = vadd.f32 %v480, %v511
          %v519 = vadd.f32 %v481, %v511
          %v520 = vadd.f32 %v482, %v511
          %v521 = vadd.f32 %v483, %v511
          %v522 = vadd.f32 %v484, %v511
          %v523 = vadd.f32 %v485, %v511
          %v524 = vadd.f32 %v486, %v511
          %v525 = vadd.f32 %v487, %v511
          %v526 = vadd.f32 %v488, %v511
          %v527 = vadd.f32 %v489, %v511
          %v528 = vadd.f32 %v490, %v511
          %v529 = vadd.f32 %v491, %v511
          %v530 = vadd.f32 %v492, %v511
          %v531 = vadd.f32 %v493, %v511
          %v532 = vadd.f32 %v494, %v511
          %v533 = vadd.f32 %v495, %v511
          %v534 = vadd.f32 %v496, %v511
          %v535 = vadd.f32 %v497, %v511
          %v536 = vadd.f32 %v498, %v511
          %v537 = vadd.f32 %v499, %v511
          %v538 = vadd.f32 %v500, %v511
          %v539 = vadd.f32 %v501, %v511
          %v540 = vadd.f32 %v502, %v511
          %v541 = vadd.f32 %v503, %v511
          %v542 = vadd.f32 %v504, %v511
          %v543 = vadd.f32 %v505, %v511
          %v544 = vadd.f32 %v506, %v511
          %v545 = vmax.f32 %v513, 0.0
          %v546 = vmax.f32 %v514, 0.0
          %v547 = vmax.f32 %v515, 0.0
          %v548 = vmax.f32 %v516, 0.0
          %v549 = vmax.f32 %v517, 0.0
          %v550 = vmax.f32 %v518, 0.0
          %v551 = vmax.f32 %v519, 0.0
          %v552 = vmax.f32 %v520, 0.0
          %v553 = vmax.f32 %v521, 0.0
          %v554 = vmax.f32 %v522, 0.0
          %v555 = vmax.f32 %v523, 0.0
          %v556 = vmax.f32 %v524, 0.0
          %v557 = vmax.f32 %v525, 0.0
          %v558 = vmax.f32 %v526, 0.0
          %v559 = vmax.f32 %v527, 0.0
          %v560 = vmax.f32 %v528, 0.0
          %v561 = vmax.f32 %v529, 0.0
          %v562 = vmax.f32 %v530, 0.0
          %v563 = vmax.f32 %v531, 0.0
          %v564 = vmax.f32 %v532, 0.0
          %v565 = vmax.f32 %v533, 0.0
          %v566 = vmax.f32 %v534, 0.0
          %v567 = vmax.f32 %v535, 0.0
          %v568 = vmax.f32 %v536, 0.0
          %v569 = vmax.f32 %v537, 0.0
          %v570 = vmax.f32 %v538, 0.0
          %v571 = vmax.f32 %v539, 0.0
          %v572 = vmax.f32 %v540, 0.0
          %v573 = vmax.f32 %v541, 0.0
          %v574 = vmax.f32 %v542, 0.0
          %v575 = vmax.f32 %v543, 0.0
          %v576 = vmax.f32 %v544, 0.0
          %s577 = sadd.s32 %s434, 1
          %s578 = smul.u32 %s577, 40
          %s579 = scalar_lea.vmem [#allocation2], %s578
          %580 = vst.msk [vmem:[%s579 + $0x1] sm:$0xff] %vm254, %v545
          %581 = vst.msk [vmem:[%s579 + $0x9] sm:$0xff] %vm254, %v546
          %582 = vst.msk [vmem:[%s579 + $0x11] sm:$0xff] %vm254, %v547
          %583 = vst.msk [vmem:[%s579 + $0x19] sm:$0xff] %vm254, %v548
          %584 = vst.msk [vmem:[%s579 + $0x29] sm:$0xff] %vm254, %v549
          %585 = vst.msk [vmem:[%s579 + $0x31] sm:$0xff] %vm254, %v550
          %586 = vst.msk [vmem:[%s579 + $0x39] sm:$0xff] %vm254, %v551
          %587 = vst.msk [vmem:[%s579 + $0x41] sm:$0xff] %vm254, %v552
          %588 = vst.msk [vmem:[%s579 + $0x51] sm:$0xff] %vm254, %v553
          %589 = vst.msk [vmem:[%s579 + $0x59] sm:$0xff] %vm254, %v554
          %590 = vst.msk [vmem:[%s579 + $0x61] sm:$0xff] %vm254, %v555
          %591 = vst.msk [vmem:[%s579 + $0x69] sm:$0xff] %vm254, %v556
          %592 = vst.msk [vmem:[%s579 + $0x79] sm:$0xff] %vm254, %v557
          %593 = vst.msk [vmem:[%s579 + $0x81] sm:$0xff] %vm254, %v558
          %594 = vst.msk [vmem:[%s579 + $0x89] sm:$0xff] %vm254, %v559
          %595 = vst.msk [vmem:[%s579 + $0x91] sm:$0xff] %vm254, %v560
          %596 = vst.msk [vmem:[%s579 + $0xa1] sm:$0xff] %vm254, %v561
          %597 = vst.msk [vmem:[%s579 + $0xa9] sm:$0xff] %vm254, %v562
          %598 = vst.msk [vmem:[%s579 + $0xb1] sm:$0xff] %vm254, %v563
          %599 = vst.msk [vmem:[%s579 + $0xb9] sm:$0xff] %vm254, %v564
          %600 = vst.msk [vmem:[%s579 + $0xc9] sm:$0xff] %vm254, %v565
          %601 = vst.msk [vmem:[%s579 + $0xd1] sm:$0xff] %vm254, %v566
          %602 = vst.msk [vmem:[%s579 + $0xd9] sm:$0xff] %vm254, %v567
          %603 = vst.msk [vmem:[%s579 + $0xe1] sm:$0xff] %vm254, %v568
          %604 = vst.msk [vmem:[%s579 + $0xf1] sm:$0xff] %vm254, %v569
          %605 = vst.msk [vmem:[%s579 + $0xf9] sm:$0xff] %vm254, %v570
          %606 = vst.msk [vmem:[%s579 + $0x101] sm:$0xff] %vm254, %v571
          %607 = vst.msk [vmem:[%s579 + $0x109] sm:$0xff] %vm254, %v572
          %608 = vst.msk [vmem:[%s579 + $0x119] sm:$0xff] %vm254, %v573
          %609 = vst.msk [vmem:[%s579 + $0x121] sm:$0xff] %vm254, %v574
          %610 = vst.msk [vmem:[%s579 + $0x129] sm:$0xff] %vm254, %v575
          %611 = vst.msk [vmem:[%s579 + $0x131] sm:$0xff] %vm254, %v576
        $region49: #{gblock_forward.5} parent=43 // loop_footer
          %s433 = sadd.s32 1, %s429
        $region50: #{gblock_forward.5} parent=43 // loop_footer_branch
          %428 = sbr.rel target = $region46
        $region51: #{gblock_forward.5} parent=43 // loop_exit
          _
      $region44: #{gblock_forward.5} parent=39 // pred_fallthru
        _
      %s612 = smul.u32 %s21, 8
      %s613 = smul.u32 %s612, 40
      %s614 = scalar_lea.vmem [#allocation2], %s613
      %v615 = vld [vmem:[%s614] sm:$0xff]
      %v616 = vld [vmem:[%s614 + $0x8] sm:$0xff]
      %v617 = vld [vmem:[%s614 + $0x10] sm:$0xff]
      %v618 = vld [vmem:[%s614 + $0x18] sm:$0xff]
      %v619 = vld [vmem:[%s614 + $0x20] sm:$0x3]
      %v620 = vld [vmem:[%s614 + $0x28] sm:$0xff]
      %v621 = vld [vmem:[%s614 + $0x30] sm:$0xff]
      %v622 = vld [vmem:[%s614 + $0x38] sm:$0xff]
      %v623 = vld [vmem:[%s614 + $0x40] sm:$0xff]
      %v624 = vld [vmem:[%s614 + $0x48] sm:$0x3]
      %v625 = vld [vmem:[%s614 + $0x50] sm:$0xff]
      %v626 = vld [vmem:[%s614 + $0x58] sm:$0xff]
      %v627 = vld [vmem:[%s614 + $0x60] sm:$0xff]
      %v628 = vld [vmem:[%s614 + $0x68] sm:$0xff]
      %v629 = vld [vmem:[%s614 + $0x70] sm:$0x3]
      %v630 = vld [vmem:[%s614 + $0x78] sm:$0xff]
      %v631 = vld [vmem:[%s614 + $0x80] sm:$0xff]
      %v632 = vld [vmem:[%s614 + $0x88] sm:$0xff]
      %v633 = vld [vmem:[%s614 + $0x90] sm:$0xff]
      %v634 = vld [vmem:[%s614 + $0x98] sm:$0x3]
      %v635 = vld [vmem:[%s614 + $0xa0] sm:$0xff]
      %v636 = vld [vmem:[%s614 + $0xa8] sm:$0xff]
      %v637 = vld [vmem:[%s614 + $0xb0] sm:$0xff]
      %v638 = vld [vmem:[%s614 + $0xb8] sm:$0xff]
      %v639 = vld [vmem:[%s614 + $0xc0] sm:$0x3]
      %v640 = vld [vmem:[%s614 + $0xc8] sm:$0xff]
      %v641 = vld [vmem:[%s614 + $0xd0] sm:$0xff]
      %v642 = vld [vmem:[%s614 + $0xd8] sm:$0xff]
      %v643 = vld [vmem:[%s614 + $0xe0] sm:$0xff]
      %v644 = vld [vmem:[%s614 + $0xe8] sm:$0x3]
      %v645 = vld [vmem:[%s614 + $0xf0] sm:$0xff]
      %v646 = vld [vmem:[%s614 + $0xf8] sm:$0xff]
      %v647 = vld [vmem:[%s614 + $0x100] sm:$0xff]
      %v648 = vld [vmem:[%s614 + $0x108] sm:$0xff]
      %v649 = vld [vmem:[%s614 + $0x110] sm:$0x3]
      %v650 = vld [vmem:[%s614 + $0x118] sm:$0xff]
      %v651 = vld [vmem:[%s614 + $0x120] sm:$0xff]
      %v652 = vld [vmem:[%s614 + $0x128] sm:$0xff]
      %v653 = vld [vmem:[%s614 + $0x130] sm:$0xff]
      %v654 = vld [vmem:[%s614 + $0x138] sm:$0x3]
      %v655 = vld [vmem:[%s614 + $0x140] sm:$0xff]
      %v656 = vld [vmem:[%s614 + $0x148] sm:$0xff]
      %v657 = vld [vmem:[%s614 + $0x150] sm:$0xff]
      %v658 = vld [vmem:[%s614 + $0x158] sm:$0xff]
      %v659 = vld [vmem:[%s614 + $0x160] sm:$0x3]
      %v660 = vld [vmem:[%s614 + $0x168] sm:$0xff]
      %v661 = vld [vmem:[%s614 + $0x170] sm:$0xff]
      %v662 = vld [vmem:[%s614 + $0x178] sm:$0xff]
      %v663 = vld [vmem:[%s614 + $0x180] sm:$0xff]
      %v664 = vld [vmem:[%s614 + $0x188] sm:$0x3]
      %v665 = vld [vmem:[%s3] sm:$0xf]
      %vm706 = vcmask 1046528
      %v707 = vrot.slane %v615, 1
      %v708 = vrot.slane %v616, 1
      %v709 = vsel %vm706, %v707, %v708
      %v710 = vrot.slane %v617, 1
      %v711 = vsel %vm706, %v708, %v710
      %v712 = vrot.slane %v618, 1
      %v713 = vsel %vm706, %v710, %v712
      %v714 = vrot.slane %v619, 1
      %v715 = vsel %vm706, %v712, %v714
      %v716 = vrot.slane %v620, 1
      %v717 = vrot.slane %v621, 1
      %v718 = vsel %vm706, %v716, %v717
      %v719 = vrot.slane %v622, 1
      %v720 = vsel %vm706, %v717, %v719
      %v721 = vrot.slane %v623, 1
      %v722 = vsel %vm706, %v719, %v721
      %v723 = vrot.slane %v624, 1
      %v724 = vsel %vm706, %v721, %v723
      %v725 = vrot.slane %v625, 1
      %v726 = vrot.slane %v626, 1
      %v727 = vsel %vm706, %v725, %v726
      %v728 = vrot.slane %v627, 1
      %v729 = vsel %vm706, %v726, %v728
      %v730 = vrot.slane %v628, 1
      %v731 = vsel %vm706, %v728, %v730
      %v732 = vrot.slane %v629, 1
      %v733 = vsel %vm706, %v730, %v732
      %v734 = vrot.slane %v630, 1
      %v735 = vrot.slane %v631, 1
      %v736 = vsel %vm706, %v734, %v735
      %v737 = vrot.slane %v632, 1
      %v738 = vsel %vm706, %v735, %v737
      %v739 = vrot.slane %v633, 1
      %v740 = vsel %vm706, %v737, %v739
      %v741 = vrot.slane %v634, 1
      %v742 = vsel %vm706, %v739, %v741
      %v743 = vrot.slane %v635, 1
      %v744 = vrot.slane %v636, 1
      %v745 = vsel %vm706, %v743, %v744
      %v746 = vrot.slane %v637, 1
      %v747 = vsel %vm706, %v744, %v746
      %v748 = vrot.slane %v638, 1
      %v749 = vsel %vm706, %v746, %v748
      %v750 = vrot.slane %v639, 1
      %v751 = vsel %vm706, %v748, %v750
      %v752 = vrot.slane %v640, 1
      %v753 = vrot.slane %v641, 1
      %v754 = vsel %vm706, %v752, %v753
      %v755 = vrot.slane %v642, 1
      %v756 = vsel %vm706, %v753, %v755
      %v757 = vrot.slane %v643, 1
      %v758 = vsel %vm706, %v755, %v757
      %v759 = vrot.slane %v644, 1
      %v760 = vsel %vm706, %v757, %v759
      %v761 = vrot.slane %v645, 1
      %v762 = vrot.slane %v646, 1
      %v763 = vsel %vm706, %v761, %v762
      %v764 = vrot.slane %v647, 1
      %v765 = vsel %vm706, %v762, %v764
      %v766 = vrot.slane %v648, 1
      %v767 = vsel %vm706, %v764, %v766
      %v768 = vrot.slane %v649, 1
      %v769 = vsel %vm706, %v766, %v768
      %v770 = vrot.slane %v650, 1
      %v771 = vrot.slane %v651, 1
      %v772 = vsel %vm706, %v770, %v771
      %v773 = vrot.slane %v652, 1
      %v774 = vsel %vm706, %v771, %v773
      %v775 = vrot.slane %v653, 1
      %v776 = vsel %vm706, %v773, %v775
      %v777 = vrot.slane %v654, 1
      %v778 = vsel %vm706, %v775, %v777
      %s779 = scalar_lea.vmem %s3, 4
      %v780 = vld [vmem:[%s779] sm:$0xf]
      %vm781 = vcmask 31744
      %v782 = vsel %vm781, %v709, 0
      %v784 = vsel %vm781, %v711, 0
      %v786 = vsel %vm781, %v713, 0
      %v788 = vsel %vm781, %v715, 0
      %v790 = vsel %vm781, %v718, 0
      %v792 = vsel %vm781, %v720, 0
      %v794 = vsel %vm781, %v722, 0
      %v796 = vsel %vm781, %v724, 0
      %v798 = vsel %vm781, %v727, 0
      %v800 = vsel %vm781, %v729, 0
      %v802 = vsel %vm781, %v731, 0
      %v804 = vsel %vm781, %v733, 0
      %v806 = vsel %vm781, %v736, 0
      %v808 = vsel %vm781, %v738, 0
      %v810 = vsel %vm781, %v740, 0
      %v812 = vsel %vm781, %v742, 0
      %v814 = vsel %vm781, %v745, 0
      %v816 = vsel %vm781, %v747, 0
      %v818 = vsel %vm781, %v749, 0
      %v820 = vsel %vm781, %v751, 0
      %v822 = vsel %vm781, %v754, 0
      %v824 = vsel %vm781, %v756, 0
      %v826 = vsel %vm781, %v758, 0
      %v828 = vsel %vm781, %v760, 0
      %v830 = vsel %vm781, %v763, 0
      %v832 = vsel %vm781, %v765, 0
      %v834 = vsel %vm781, %v767, 0
      %v836 = vsel %vm781, %v769, 0
      %v838 = vsel %vm781, %v772, 0
      %v840 = vsel %vm781, %v774, 0
      %v842 = vsel %vm781, %v776, 0
      %v844 = vsel %vm781, %v778, 0
      %vm846 = vcmask 1043456
      %v848 = vsel %vm846, %v780, 0
      %850 = vmatprep.subr.mxu0 0.0
      %851 = vmatpush1.msra.mxu0 0.0
      %852 = vmatprep.subr.mxu0 0.0
      %853 = vmatpush1.msra.mxu0 0.0
      %854 = vmatprep.subr.mxu0 0.0
      %855 = vmatpush1.msra.mxu0 0.0
      %856 = vmatprep.subr.mxu0 0.0
      %857 = vmatpush1.msra.mxu0 0.0
      %858 = vmatprep.subr.mxu0 0.0
      %859 = vmatpush1.msra.mxu0 0.0
      %860 = vmatprep.subr.mxu0 0.0
      %861 = vmatpush1.msra.mxu0 0.0
      %862 = vmatprep.subr.mxu0 0.0
      %863 = vmatpush1.msra.mxu0 0.0
      %864 = vmatprep.subr.mxu0 0.0
      %865 = vmatpush1.msra.mxu0 0.0
      %866 = vmatprep.subr.mxu0 0.0
      %867 = vmatpush1.msra.mxu0 0.0
      %868 = vmatprep.subr.mxu0 0.0
      %869 = vmatpush1.msra.mxu0 0.0
      %870 = vmatprep.subr.mxu0 0.0
      %871 = vmatpush1.msra.mxu0 0.0
      %872 = vmatprep.subr.mxu0 0.0
      %873 = vmatpush1.msra.mxu0 0.0
      %874 = vmatprep.subr.mxu0 0.0
      %875 = vmatpush1.msra.mxu0 0.0
      %876 = vmatprep.subr.mxu0 0.0
      %877 = vmatpush1.msra.mxu0 0.0
      %878 = vmatprep.subr.mxu0 0.0
      %879 = vmatpush1.msra.mxu0 0.0
      %880 = vmatprep.subr.mxu0 0.0
      %881 = vmatpush1.msra.mxu0 %v848
      %882 = vmatprep.subr.mxu0 0.0
      %883 = vmatpush2.msra.mxu0 0.0
      %884 = vmatprep.subr.mxu0 0.0
      %885 = vmatpush2.msra.mxu0 0.0
      %886 = vmatprep.subr.mxu0 0.0
      %887 = vmatpush2.msra.mxu0 0.0
      %888 = vmatprep.subr.mxu0 0.0
      %889 = vmatpush2.msra.mxu0 0.0
      %890 = vmatprep.subr.mxu0 0.0
      %891 = vmatpush2.msra.mxu0 0.0
      %892 = vmatprep.subr.mxu0 0.0
      %893 = vmatpush2.msra.mxu0 0.0
      %894 = vmatprep.subr.mxu0 0.0
      %895 = vmatpush2.msra.mxu0 0.0
      %896 = vmatprep.subr.mxu0 0.0
      %897 = vmatpush2.msra.mxu0 0.0
      %898 = vmatprep.subr.mxu0 0.0
      %899 = vmatpush2.msra.mxu0 0.0
      %900 = vmatprep.subr.mxu0 0.0
      %901 = vmatpush2.msra.mxu0 0.0
      %902 = vmatprep.subr.mxu0 0.0
      %903 = vmatpush2.msra.mxu0 0.0
      %904 = vmatprep.subr.mxu0 0.0
      %905 = vmatpush2.msra.mxu0 0.0
      %906 = vmatprep.subr.mxu0 0.0
      %907 = vmatpush2.msra.mxu0 0.0
      %908 = vmatprep.subr.mxu0 0.0
      %909 = vmatpush2.msra.mxu0 0.0
      %910 = vmatprep.subr.mxu0 0.0
      %911 = vmatpush2.msra.mxu0 0.0
      %912 = vmatprep.subr.mxu0 0.0
      %913 = vmatpush2.msra.mxu0 0.0
      %914 = vmatprep.mubr.f32.mxu0 0.0
      %915 = vmatmul.mubr.f32.gmra.mxu0 %v782
      %v916 = vpop.f32.mrf.mxu0
      %v917 = vadd.f32 0.0, %v916
      %v918 = vpop.f32.mrf.mxu0
      %919 = vmatprep.mubr.f32.mxu0 0.0
      %920 = vmatmul.mubr.f32.gmra.mxu0 %v784
      %v921 = vpop.f32.mrf.mxu0
      %v922 = vadd.f32 0.0, %v921
      %v923 = vpop.f32.mrf.mxu0
      %924 = vmatprep.mubr.f32.mxu0 0.0
      %925 = vmatmul.mubr.f32.gmra.mxu0 %v786
      %v926 = vpop.f32.mrf.mxu0
      %v927 = vadd.f32 0.0, %v926
      %v928 = vpop.f32.mrf.mxu0
      %929 = vmatprep.mubr.f32.mxu0 0.0
      %930 = vmatmul.mubr.f32.gmra.mxu0 %v788
      %v931 = vpop.f32.mrf.mxu0
      %v932 = vadd.f32 0.0, %v931
      %v933 = vpop.f32.mrf.mxu0
      %934 = vmatprep.mubr.f32.mxu0 0.0
      %935 = vmatmul.mubr.f32.gmra.mxu0 %v790
      %v936 = vpop.f32.mrf.mxu0
      %v937 = vadd.f32 0.0, %v936
      %v938 = vpop.f32.mrf.mxu0
      %939 = vmatprep.mubr.f32.mxu0 0.0
      %940 = vmatmul.mubr.f32.gmra.mxu0 %v792
      %v941 = vpop.f32.mrf.mxu0
      %v942 = vadd.f32 0.0, %v941
      %v943 = vpop.f32.mrf.mxu0
      %944 = vmatprep.mubr.f32.mxu0 0.0
      %945 = vmatmul.mubr.f32.gmra.mxu0 %v794
      %v946 = vpop.f32.mrf.mxu0
      %v947 = vadd.f32 0.0, %v946
      %v948 = vpop.f32.mrf.mxu0
      %949 = vmatprep.mubr.f32.mxu0 0.0
      %950 = vmatmul.mubr.f32.gmra.mxu0 %v796
      %v951 = vpop.f32.mrf.mxu0
      %v952 = vadd.f32 0.0, %v951
      %v953 = vpop.f32.mrf.mxu0
      %954 = vmatprep.mubr.f32.mxu0 0.0
      %955 = vmatmul.mubr.f32.gmra.mxu0 %v798
      %v956 = vpop.f32.mrf.mxu0
      %v957 = vadd.f32 0.0, %v956
      %v958 = vpop.f32.mrf.mxu0
      %959 = vmatprep.mubr.f32.mxu0 0.0
      %960 = vmatmul.mubr.f32.gmra.mxu0 %v800
      %v961 = vpop.f32.mrf.mxu0
      %v962 = vadd.f32 0.0, %v961
      %v963 = vpop.f32.mrf.mxu0
      %964 = vmatprep.mubr.f32.mxu0 0.0
      %965 = vmatmul.mubr.f32.gmra.mxu0 %v802
      %v966 = vpop.f32.mrf.mxu0
      %v967 = vadd.f32 0.0, %v966
      %v968 = vpop.f32.mrf.mxu0
      %969 = vmatprep.mubr.f32.mxu0 0.0
      %970 = vmatmul.mubr.f32.gmra.mxu0 %v804
      %v971 = vpop.f32.mrf.mxu0
      %v972 = vadd.f32 0.0, %v971
      %v973 = vpop.f32.mrf.mxu0
      %974 = vmatprep.mubr.f32.mxu0 0.0
      %975 = vmatmul.mubr.f32.gmra.mxu0 %v806
      %v976 = vpop.f32.mrf.mxu0
      %v977 = vadd.f32 0.0, %v976
      %v978 = vpop.f32.mrf.mxu0
      %979 = vmatprep.mubr.f32.mxu0 0.0
      %980 = vmatmul.mubr.f32.gmra.mxu0 %v808
      %v981 = vpop.f32.mrf.mxu0
      %v982 = vadd.f32 0.0, %v981
      %v983 = vpop.f32.mrf.mxu0
      %984 = vmatprep.mubr.f32.mxu0 0.0
      %985 = vmatmul.mubr.f32.gmra.mxu0 %v810
      %v986 = vpop.f32.mrf.mxu0
      %v987 = vadd.f32 0.0, %v986
      %v988 = vpop.f32.mrf.mxu0
      %989 = vmatprep.mubr.f32.mxu0 0.0
      %990 = vmatmul.mubr.f32.gmra.mxu0 %v812
      %v991 = vpop.f32.mrf.mxu0
      %v992 = vadd.f32 0.0, %v991
      %v993 = vpop.f32.mrf.mxu0
      %994 = vmatprep.mubr.f32.mxu0 0.0
      %995 = vmatmul.mubr.f32.gmra.mxu0 %v814
      %v996 = vpop.f32.mrf.mxu0
      %v997 = vadd.f32 0.0, %v996
      %v998 = vpop.f32.mrf.mxu0
      %999 = vmatprep.mubr.f32.mxu0 0.0
      %1000 = vmatmul.mubr.f32.gmra.mxu0 %v816
      %v1001 = vpop.f32.mrf.mxu0
      %v1002 = vadd.f32 0.0, %v1001
      %v1003 = vpop.f32.mrf.mxu0
      %1004 = vmatprep.mubr.f32.mxu0 0.0
      %1005 = vmatmul.mubr.f32.gmra.mxu0 %v818
      %v1006 = vpop.f32.mrf.mxu0
      %v1007 = vadd.f32 0.0, %v1006
      %v1008 = vpop.f32.mrf.mxu0
      %1009 = vmatprep.mubr.f32.mxu0 0.0
      %1010 = vmatmul.mubr.f32.gmra.mxu0 %v820
      %v1011 = vpop.f32.mrf.mxu0
      %v1012 = vadd.f32 0.0, %v1011
      %v1013 = vpop.f32.mrf.mxu0
      %1014 = vmatprep.mubr.f32.mxu0 0.0
      %1015 = vmatmul.mubr.f32.gmra.mxu0 %v822
      %v1016 = vpop.f32.mrf.mxu0
      %v1017 = vadd.f32 0.0, %v1016
      %v1018 = vpop.f32.mrf.mxu0
      %1019 = vmatprep.mubr.f32.mxu0 0.0
      %1020 = vmatmul.mubr.f32.gmra.mxu0 %v824
      %v1021 = vpop.f32.mrf.mxu0
      %v1022 = vadd.f32 0.0, %v1021
      %v1023 = vpop.f32.mrf.mxu0
      %1024 = vmatprep.mubr.f32.mxu0 0.0
      %1025 = vmatmul.mubr.f32.gmra.mxu0 %v826
      %v1026 = vpop.f32.mrf.mxu0
      %v1027 = vadd.f32 0.0, %v1026
      %v1028 = vpop.f32.mrf.mxu0
      %1029 = vmatprep.mubr.f32.mxu0 0.0
      %1030 = vmatmul.mubr.f32.gmra.mxu0 %v828
      %v1031 = vpop.f32.mrf.mxu0
      %v1032 = vadd.f32 0.0, %v1031
      %v1033 = vpop.f32.mrf.mxu0
      %1034 = vmatprep.mubr.f32.mxu0 0.0
      %1035 = vmatmul.mubr.f32.gmra.mxu0 %v830
      %v1036 = vpop.f32.mrf.mxu0
      %v1037 = vadd.f32 0.0, %v1036
      %v1038 = vpop.f32.mrf.mxu0
      %1039 = vmatprep.mubr.f32.mxu0 0.0
      %1040 = vmatmul.mubr.f32.gmra.mxu0 %v832
      %v1041 = vpop.f32.mrf.mxu0
      %v1042 = vadd.f32 0.0, %v1041
      %v1043 = vpop.f32.mrf.mxu0
      %1044 = vmatprep.mubr.f32.mxu0 0.0
      %1045 = vmatmul.mubr.f32.gmra.mxu0 %v834
      %v1046 = vpop.f32.mrf.mxu0
      %v1047 = vadd.f32 0.0, %v1046
      %v1048 = vpop.f32.mrf.mxu0
      %1049 = vmatprep.mubr.f32.mxu0 0.0
      %1050 = vmatmul.mubr.f32.gmra.mxu0 %v836
      %v1051 = vpop.f32.mrf.mxu0
      %v1052 = vadd.f32 0.0, %v1051
      %v1053 = vpop.f32.mrf.mxu0
      %1054 = vmatprep.mubr.f32.mxu0 0.0
      %1055 = vmatmul.mubr.f32.gmra.mxu0 %v838
      %v1056 = vpop.f32.mrf.mxu0
      %v1057 = vadd.f32 0.0, %v1056
      %v1058 = vpop.f32.mrf.mxu0
      %1059 = vmatprep.mubr.f32.mxu0 0.0
      %1060 = vmatmul.mubr.f32.gmra.mxu0 %v840
      %v1061 = vpop.f32.mrf.mxu0
      %v1062 = vadd.f32 0.0, %v1061
      %v1063 = vpop.f32.mrf.mxu0
      %1064 = vmatprep.mubr.f32.mxu0 0.0
      %1065 = vmatmul.mubr.f32.gmra.mxu0 %v842
      %v1066 = vpop.f32.mrf.mxu0
      %v1067 = vadd.f32 0.0, %v1066
      %v1068 = vpop.f32.mrf.mxu0
      %1069 = vmatprep.mubr.f32.mxu0 0.0
      %1070 = vmatmul.mubr.f32.gmra.mxu0 %v844
      %v1071 = vpop.f32.mrf.mxu0
      %v1072 = vadd.f32 0.0, %v1071
      %v1073 = vpop.f32.mrf.mxu0
      %1074 = vdwg.mxu0
      %v1075 = vsel %vm781, %v615, 0
      %v1077 = vsel %vm781, %v616, 0
      %v1079 = vsel %vm781, %v617, 0
      %v1081 = vsel %vm781, %v618, 0
      %v1083 = vsel %vm781, %v620, 0
      %v1085 = vsel %vm781, %v621, 0
      %v1087 = vsel %vm781, %v622, 0
      %v1089 = vsel %vm781, %v623, 0
      %v1091 = vsel %vm781, %v625, 0
      %v1093 = vsel %vm781, %v626, 0
      %v1095 = vsel %vm781, %v627, 0
      %v1097 = vsel %vm781, %v628, 0
      %v1099 = vsel %vm781, %v630, 0
      %v1101 = vsel %vm781, %v631, 0
      %v1103 = vsel %vm781, %v632, 0
      %v1105 = vsel %vm781, %v633, 0
      %v1107 = vsel %vm781, %v635, 0
      %v1109 = vsel %vm781, %v636, 0
      %v1111 = vsel %vm781, %v637, 0
      %v1113 = vsel %vm781, %v638, 0
      %v1115 = vsel %vm781, %v640, 0
      %v1117 = vsel %vm781, %v641, 0
      %v1119 = vsel %vm781, %v642, 0
      %v1121 = vsel %vm781, %v643, 0
      %v1123 = vsel %vm781, %v645, 0
      %v1125 = vsel %vm781, %v646, 0
      %v1127 = vsel %vm781, %v647, 0
      %v1129 = vsel %vm781, %v648, 0
      %v1131 = vsel %vm781, %v650, 0
      %v1133 = vsel %vm781, %v651, 0
      %v1135 = vsel %vm781, %v652, 0
      %v1137 = vsel %vm781, %v653, 0
      %v1140 = vsel %vm846, %v665, 0
      %1142 = vmatprep.subr.mxu0 0.0
      %1143 = vmatpush1.msra.mxu0 0.0
      %1144 = vmatprep.subr.mxu0 0.0
      %1145 = vmatpush1.msra.mxu0 0.0
      %1146 = vmatprep.subr.mxu0 0.0
      %1147 = vmatpush1.msra.mxu0 0.0
      %1148 = vmatprep.subr.mxu0 0.0
      %1149 = vmatpush1.msra.mxu0 0.0
      %1150 = vmatprep.subr.mxu0 0.0
      %1151 = vmatpush1.msra.mxu0 0.0
      %1152 = vmatprep.subr.mxu0 0.0
      %1153 = vmatpush1.msra.mxu0 0.0
      %1154 = vmatprep.subr.mxu0 0.0
      %1155 = vmatpush1.msra.mxu0 0.0
      %1156 = vmatprep.subr.mxu0 0.0
      %1157 = vmatpush1.msra.mxu0 0.0
      %1158 = vmatprep.subr.mxu0 0.0
      %1159 = vmatpush1.msra.mxu0 0.0
      %1160 = vmatprep.subr.mxu0 0.0
      %1161 = vmatpush1.msra.mxu0 0.0
      %1162 = vmatprep.subr.mxu0 0.0
      %1163 = vmatpush1.msra.mxu0 0.0
      %1164 = vmatprep.subr.mxu0 0.0
      %1165 = vmatpush1.msra.mxu0 0.0
      %1166 = vmatprep.subr.mxu0 0.0
      %1167 = vmatpush1.msra.mxu0 0.0
      %1168 = vmatprep.subr.mxu0 0.0
      %1169 = vmatpush1.msra.mxu0 0.0
      %1170 = vmatprep.subr.mxu0 0.0
      %1171 = vmatpush1.msra.mxu0 0.0
      %1172 = vmatprep.subr.mxu0 0.0
      %1173 = vmatpush1.msra.mxu0 %v1140
      %1174 = vmatprep.subr.mxu0 0.0
      %1175 = vmatpush2.msra.mxu0 0.0
      %1176 = vmatprep.subr.mxu0 0.0
      %1177 = vmatpush2.msra.mxu0 0.0
      %1178 = vmatprep.subr.mxu0 0.0
      %1179 = vmatpush2.msra.mxu0 0.0
      %1180 = vmatprep.subr.mxu0 0.0
      %1181 = vmatpush2.msra.mxu0 0.0
      %1182 = vmatprep.subr.mxu0 0.0
      %1183 = vmatpush2.msra.mxu0 0.0
      %1184 = vmatprep.subr.mxu0 0.0
      %1185 = vmatpush2.msra.mxu0 0.0
      %1186 = vmatprep.subr.mxu0 0.0
      %1187 = vmatpush2.msra.mxu0 0.0
      %1188 = vmatprep.subr.mxu0 0.0
      %1189 = vmatpush2.msra.mxu0 0.0
      %1190 = vmatprep.subr.mxu0 0.0
      %1191 = vmatpush2.msra.mxu0 0.0
      %1192 = vmatprep.subr.mxu0 0.0
      %1193 = vmatpush2.msra.mxu0 0.0
      %1194 = vmatprep.subr.mxu0 0.0
      %1195 = vmatpush2.msra.mxu0 0.0
      %1196 = vmatprep.subr.mxu0 0.0
      %1197 = vmatpush2.msra.mxu0 0.0
      %1198 = vmatprep.subr.mxu0 0.0
      %1199 = vmatpush2.msra.mxu0 0.0
      %1200 = vmatprep.subr.mxu0 0.0
      %1201 = vmatpush2.msra.mxu0 0.0
      %1202 = vmatprep.subr.mxu0 0.0
      %1203 = vmatpush2.msra.mxu0 0.0
      %1204 = vmatprep.subr.mxu0 0.0
      %1205 = vmatpush2.msra.mxu0 0.0
      %1206 = vmatprep.mubr.f32.mxu0 0.0
      %1207 = vmatmul.mubr.f32.gmra.mxu0 %v1075
      %v1208 = vpop.f32.mrf.mxu0
      %v1209 = vadd.f32 %v917, %v1208
      %v1210 = vpop.f32.mrf.mxu0
      %1211 = vmatprep.mubr.f32.mxu0 0.0
      %1212 = vmatmul.mubr.f32.gmra.mxu0 %v1077
      %v1213 = vpop.f32.mrf.mxu0
      %v1214 = vadd.f32 %v922, %v1213
      %v1215 = vpop.f32.mrf.mxu0
      %1216 = vmatprep.mubr.f32.mxu0 0.0
      %1217 = vmatmul.mubr.f32.gmra.mxu0 %v1079
      %v1218 = vpop.f32.mrf.mxu0
      %v1219 = vadd.f32 %v927, %v1218
      %v1220 = vpop.f32.mrf.mxu0
      %1221 = vmatprep.mubr.f32.mxu0 0.0
      %1222 = vmatmul.mubr.f32.gmra.mxu0 %v1081
      %v1223 = vpop.f32.mrf.mxu0
      %v1224 = vadd.f32 %v932, %v1223
      %v1225 = vpop.f32.mrf.mxu0
      %1226 = vmatprep.mubr.f32.mxu0 0.0
      %1227 = vmatmul.mubr.f32.gmra.mxu0 %v1083
      %v1228 = vpop.f32.mrf.mxu0
      %v1229 = vadd.f32 %v937, %v1228
      %v1230 = vpop.f32.mrf.mxu0
      %1231 = vmatprep.mubr.f32.mxu0 0.0
      %1232 = vmatmul.mubr.f32.gmra.mxu0 %v1085
      %v1233 = vpop.f32.mrf.mxu0
      %v1234 = vadd.f32 %v942, %v1233
      %v1235 = vpop.f32.mrf.mxu0
      %1236 = vmatprep.mubr.f32.mxu0 0.0
      %1237 = vmatmul.mubr.f32.gmra.mxu0 %v1087
      %v1238 = vpop.f32.mrf.mxu0
      %v1239 = vadd.f32 %v947, %v1238
      %v1240 = vpop.f32.mrf.mxu0
      %1241 = vmatprep.mubr.f32.mxu0 0.0
      %1242 = vmatmul.mubr.f32.gmra.mxu0 %v1089
      %v1243 = vpop.f32.mrf.mxu0
      %v1244 = vadd.f32 %v952, %v1243
      %v1245 = vpop.f32.mrf.mxu0
      %1246 = vmatprep.mubr.f32.mxu0 0.0
      %1247 = vmatmul.mubr.f32.gmra.mxu0 %v1091
      %v1248 = vpop.f32.mrf.mxu0
      %v1249 = vadd.f32 %v957, %v1248
      %v1250 = vpop.f32.mrf.mxu0
      %1251 = vmatprep.mubr.f32.mxu0 0.0
      %1252 = vmatmul.mubr.f32.gmra.mxu0 %v1093
      %v1253 = vpop.f32.mrf.mxu0
      %v1254 = vadd.f32 %v962, %v1253
      %v1255 = vpop.f32.mrf.mxu0
      %1256 = vmatprep.mubr.f32.mxu0 0.0
      %1257 = vmatmul.mubr.f32.gmra.mxu0 %v1095
      %v1258 = vpop.f32.mrf.mxu0
      %v1259 = vadd.f32 %v967, %v1258
      %v1260 = vpop.f32.mrf.mxu0
      %1261 = vmatprep.mubr.f32.mxu0 0.0
      %1262 = vmatmul.mubr.f32.gmra.mxu0 %v1097
      %v1263 = vpop.f32.mrf.mxu0
      %v1264 = vadd.f32 %v972, %v1263
      %v1265 = vpop.f32.mrf.mxu0
      %1266 = vmatprep.mubr.f32.mxu0 0.0
      %1267 = vmatmul.mubr.f32.gmra.mxu0 %v1099
      %v1268 = vpop.f32.mrf.mxu0
      %v1269 = vadd.f32 %v977, %v1268
      %v1270 = vpop.f32.mrf.mxu0
      %1271 = vmatprep.mubr.f32.mxu0 0.0
      %1272 = vmatmul.mubr.f32.gmra.mxu0 %v1101
      %v1273 = vpop.f32.mrf.mxu0
      %v1274 = vadd.f32 %v982, %v1273
      %v1275 = vpop.f32.mrf.mxu0
      %1276 = vmatprep.mubr.f32.mxu0 0.0
      %1277 = vmatmul.mubr.f32.gmra.mxu0 %v1103
      %v1278 = vpop.f32.mrf.mxu0
      %v1279 = vadd.f32 %v987, %v1278
      %v1280 = vpop.f32.mrf.mxu0
      %1281 = vmatprep.mubr.f32.mxu0 0.0
      %1282 = vmatmul.mubr.f32.gmra.mxu0 %v1105
      %v1283 = vpop.f32.mrf.mxu0
      %v1284 = vadd.f32 %v992, %v1283
      %v1285 = vpop.f32.mrf.mxu0
      %1286 = vmatprep.mubr.f32.mxu0 0.0
      %1287 = vmatmul.mubr.f32.gmra.mxu0 %v1107
      %v1288 = vpop.f32.mrf.mxu0
      %v1289 = vadd.f32 %v997, %v1288
      %v1290 = vpop.f32.mrf.mxu0
      %1291 = vmatprep.mubr.f32.mxu0 0.0
      %1292 = vmatmul.mubr.f32.gmra.mxu0 %v1109
      %v1293 = vpop.f32.mrf.mxu0
      %v1294 = vadd.f32 %v1002, %v1293
      %v1295 = vpop.f32.mrf.mxu0
      %1296 = vmatprep.mubr.f32.mxu0 0.0
      %1297 = vmatmul.mubr.f32.gmra.mxu0 %v1111
      %v1298 = vpop.f32.mrf.mxu0
      %v1299 = vadd.f32 %v1007, %v1298
      %v1300 = vpop.f32.mrf.mxu0
      %1301 = vmatprep.mubr.f32.mxu0 0.0
      %1302 = vmatmul.mubr.f32.gmra.mxu0 %v1113
      %v1303 = vpop.f32.mrf.mxu0
      %v1304 = vadd.f32 %v1012, %v1303
      %v1305 = vpop.f32.mrf.mxu0
      %1306 = vmatprep.mubr.f32.mxu0 0.0
      %1307 = vmatmul.mubr.f32.gmra.mxu0 %v1115
      %v1308 = vpop.f32.mrf.mxu0
      %v1309 = vadd.f32 %v1017, %v1308
      %v1310 = vpop.f32.mrf.mxu0
      %1311 = vmatprep.mubr.f32.mxu0 0.0
      %1312 = vmatmul.mubr.f32.gmra.mxu0 %v1117
      %v1313 = vpop.f32.mrf.mxu0
      %v1314 = vadd.f32 %v1022, %v1313
      %v1315 = vpop.f32.mrf.mxu0
      %1316 = vmatprep.mubr.f32.mxu0 0.0
      %1317 = vmatmul.mubr.f32.gmra.mxu0 %v1119
      %v1318 = vpop.f32.mrf.mxu0
      %v1319 = vadd.f32 %v1027, %v1318
      %v1320 = vpop.f32.mrf.mxu0
      %1321 = vmatprep.mubr.f32.mxu0 0.0
      %1322 = vmatmul.mubr.f32.gmra.mxu0 %v1121
      %v1323 = vpop.f32.mrf.mxu0
      %v1324 = vadd.f32 %v1032, %v1323
      %v1325 = vpop.f32.mrf.mxu0
      %1326 = vmatprep.mubr.f32.mxu0 0.0
      %1327 = vmatmul.mubr.f32.gmra.mxu0 %v1123
      %v1328 = vpop.f32.mrf.mxu0
      %v1329 = vadd.f32 %v1037, %v1328
      %v1330 = vpop.f32.mrf.mxu0
      %1331 = vmatprep.mubr.f32.mxu0 0.0
      %1332 = vmatmul.mubr.f32.gmra.mxu0 %v1125
      %v1333 = vpop.f32.mrf.mxu0
      %v1334 = vadd.f32 %v1042, %v1333
      %v1335 = vpop.f32.mrf.mxu0
      %1336 = vmatprep.mubr.f32.mxu0 0.0
      %1337 = vmatmul.mubr.f32.gmra.mxu0 %v1127
      %v1338 = vpop.f32.mrf.mxu0
      %v1339 = vadd.f32 %v1047, %v1338
      %v1340 = vpop.f32.mrf.mxu0
      %1341 = vmatprep.mubr.f32.mxu0 0.0
      %1342 = vmatmul.mubr.f32.gmra.mxu0 %v1129
      %v1343 = vpop.f32.mrf.mxu0
      %v1344 = vadd.f32 %v1052, %v1343
      %v1345 = vpop.f32.mrf.mxu0
      %1346 = vmatprep.mubr.f32.mxu0 0.0
      %1347 = vmatmul.mubr.f32.gmra.mxu0 %v1131
      %v1348 = vpop.f32.mrf.mxu0
      %v1349 = vadd.f32 %v1057, %v1348
      %v1350 = vpop.f32.mrf.mxu0
      %1351 = vmatprep.mubr.f32.mxu0 0.0
      %1352 = vmatmul.mubr.f32.gmra.mxu0 %v1133
      %v1353 = vpop.f32.mrf.mxu0
      %v1354 = vadd.f32 %v1062, %v1353
      %v1355 = vpop.f32.mrf.mxu0
      %1356 = vmatprep.mubr.f32.mxu0 0.0
      %1357 = vmatmul.mubr.f32.gmra.mxu0 %v1135
      %v1358 = vpop.f32.mrf.mxu0
      %v1359 = vadd.f32 %v1067, %v1358
      %v1360 = vpop.f32.mrf.mxu0
      %1361 = vmatprep.mubr.f32.mxu0 0.0
      %1362 = vmatmul.mubr.f32.gmra.mxu0 %v1137
      %v1363 = vpop.f32.mrf.mxu0
      %v1364 = vadd.f32 %v1072, %v1363
      %v1365 = vpop.f32.mrf.mxu0
      %1366 = vdwg.mxu0
      %vm1367 = vcmask 1045504
      %v1368 = vrot.slane %v615, 2
      %v1369 = vrot.slane %v616, 2
      %v1370 = vsel %vm1367, %v1368, %v1369
      %v1371 = vrot.slane %v617, 2
      %v1372 = vsel %vm1367, %v1369, %v1371
      %v1373 = vrot.slane %v618, 2
      %v1374 = vsel %vm1367, %v1371, %v1373
      %v1375 = vrot.slane %v619, 2
      %v1376 = vsel %vm1367, %v1373, %v1375
      %v1377 = vrot.slane %v620, 2
      %v1378 = vrot.slane %v621, 2
      %v1379 = vsel %vm1367, %v1377, %v1378
      %v1380 = vrot.slane %v622, 2
      %v1381 = vsel %vm1367, %v1378, %v1380
      %v1382 = vrot.slane %v623, 2
      %v1383 = vsel %vm1367, %v1380, %v1382
      %v1384 = vrot.slane %v624, 2
      %v1385 = vsel %vm1367, %v1382, %v1384
      %v1386 = vrot.slane %v625, 2
      %v1387 = vrot.slane %v626, 2
      %v1388 = vsel %vm1367, %v1386, %v1387
      %v1389 = vrot.slane %v627, 2
      %v1390 = vsel %vm1367, %v1387, %v1389
      %v1391 = vrot.slane %v628, 2
      %v1392 = vsel %vm1367, %v1389, %v1391
      %v1393 = vrot.slane %v629, 2
      %v1394 = vsel %vm1367, %v1391, %v1393
      %v1395 = vrot.slane %v630, 2
      %v1396 = vrot.slane %v631, 2
      %v1397 = vsel %vm1367, %v1395, %v1396
      %v1398 = vrot.slane %v632, 2
      %v1399 = vsel %vm1367, %v1396, %v1398
      %v1400 = vrot.slane %v633, 2
      %v1401 = vsel %vm1367, %v1398, %v1400
      %v1402 = vrot.slane %v634, 2
      %v1403 = vsel %vm1367, %v1400, %v1402
      %v1404 = vrot.slane %v635, 2
      %v1405 = vrot.slane %v636, 2
      %v1406 = vsel %vm1367, %v1404, %v1405
      %v1407 = vrot.slane %v637, 2
      %v1408 = vsel %vm1367, %v1405, %v1407
      %v1409 = vrot.slane %v638, 2
      %v1410 = vsel %vm1367, %v1407, %v1409
      %v1411 = vrot.slane %v639, 2
      %v1412 = vsel %vm1367, %v1409, %v1411
      %v1413 = vrot.slane %v640, 2
      %v1414 = vrot.slane %v641, 2
      %v1415 = vsel %vm1367, %v1413, %v1414
      %v1416 = vrot.slane %v642, 2
      %v1417 = vsel %vm1367, %v1414, %v1416
      %v1418 = vrot.slane %v643, 2
      %v1419 = vsel %vm1367, %v1416, %v1418
      %v1420 = vrot.slane %v644, 2
      %v1421 = vsel %vm1367, %v1418, %v1420
      %v1422 = vrot.slane %v645, 2
      %v1423 = vrot.slane %v646, 2
      %v1424 = vsel %vm1367, %v1422, %v1423
      %v1425 = vrot.slane %v647, 2
      %v1426 = vsel %vm1367, %v1423, %v1425
      %v1427 = vrot.slane %v648, 2
      %v1428 = vsel %vm1367, %v1425, %v1427
      %v1429 = vrot.slane %v649, 2
      %v1430 = vsel %vm1367, %v1427, %v1429
      %v1431 = vrot.slane %v650, 2
      %v1432 = vrot.slane %v651, 2
      %v1433 = vsel %vm1367, %v1431, %v1432
      %v1434 = vrot.slane %v652, 2
      %v1435 = vsel %vm1367, %v1432, %v1434
      %v1436 = vrot.slane %v653, 2
      %v1437 = vsel %vm1367, %v1434, %v1436
      %v1438 = vrot.slane %v654, 2
      %v1439 = vsel %vm1367, %v1436, %v1438
      %s1440 = scalar_lea.vmem %s3, 8
      %v1441 = vld [vmem:[%s1440] sm:$0xf]
      %v1442 = vsel %vm781, %v1370, 0
      %v1444 = vsel %vm781, %v1372, 0
      %v1446 = vsel %vm781, %v1374, 0
      %v1448 = vsel %vm781, %v1376, 0
      %v1450 = vsel %vm781, %v1379, 0
      %v1452 = vsel %vm781, %v1381, 0
      %v1454 = vsel %vm781, %v1383, 0
      %v1456 = vsel %vm781, %v1385, 0
      %v1458 = vsel %vm781, %v1388, 0
      %v1460 = vsel %vm781, %v1390, 0
      %v1462 = vsel %vm781, %v1392, 0
      %v1464 = vsel %vm781, %v1394, 0
      %v1466 = vsel %vm781, %v1397, 0
      %v1468 = vsel %vm781, %v1399, 0
      %v1470 = vsel %vm781, %v1401, 0
      %v1472 = vsel %vm781, %v1403, 0
      %v1474 = vsel %vm781, %v1406, 0
      %v1476 = vsel %vm781, %v1408, 0
      %v1478 = vsel %vm781, %v1410, 0
      %v1480 = vsel %vm781, %v1412, 0
      %v1482 = vsel %vm781, %v1415, 0
      %v1484 = vsel %vm781, %v1417, 0
      %v1486 = vsel %vm781, %v1419, 0
      %v1488 = vsel %vm781, %v1421, 0
      %v1490 = vsel %vm781, %v1424, 0
      %v1492 = vsel %vm781, %v1426, 0
      %v1494 = vsel %vm781, %v1428, 0
      %v1496 = vsel %vm781, %v1430, 0
      %v1498 = vsel %vm781, %v1433, 0
      %v1500 = vsel %vm781, %v1435, 0
      %v1502 = vsel %vm781, %v1437, 0
      %v1504 = vsel %vm781, %v1439, 0
      %v1507 = vsel %vm846, %v1441, 0
      %1509 = vmatprep.subr.mxu0 0.0
      %1510 = vmatpush1.msra.mxu0 0.0
      %1511 = vmatprep.subr.mxu0 0.0
      %1512 = vmatpush1.msra.mxu0 0.0
      %1513 = vmatprep.subr.mxu0 0.0
      %1514 = vmatpush1.msra.mxu0 0.0
      %1515 = vmatprep.subr.mxu0 0.0
      %1516 = vmatpush1.msra.mxu0 0.0
      %1517 = vmatprep.subr.mxu0 0.0
      %1518 = vmatpush1.msra.mxu0 0.0
      %1519 = vmatprep.subr.mxu0 0.0
      %1520 = vmatpush1.msra.mxu0 0.0
      %1521 = vmatprep.subr.mxu0 0.0
      %1522 = vmatpush1.msra.mxu0 0.0
      %1523 = vmatprep.subr.mxu0 0.0
      %1524 = vmatpush1.msra.mxu0 0.0
      %1525 = vmatprep.subr.mxu0 0.0
      %1526 = vmatpush1.msra.mxu0 0.0
      %1527 = vmatprep.subr.mxu0 0.0
      %1528 = vmatpush1.msra.mxu0 0.0
      %1529 = vmatprep.subr.mxu0 0.0
      %1530 = vmatpush1.msra.mxu0 0.0
      %1531 = vmatprep.subr.mxu0 0.0
      %1532 = vmatpush1.msra.mxu0 0.0
      %1533 = vmatprep.subr.mxu0 0.0
      %1534 = vmatpush1.msra.mxu0 0.0
      %1535 = vmatprep.subr.mxu0 0.0
      %1536 = vmatpush1.msra.mxu0 0.0
      %1537 = vmatprep.subr.mxu0 0.0
      %1538 = vmatpush1.msra.mxu0 0.0
      %1539 = vmatprep.subr.mxu0 0.0
      %1540 = vmatpush1.msra.mxu0 %v1507
      %1541 = vmatprep.subr.mxu0 0.0
      %1542 = vmatpush2.msra.mxu0 0.0
      %1543 = vmatprep.subr.mxu0 0.0
      %1544 = vmatpush2.msra.mxu0 0.0
      %1545 = vmatprep.subr.mxu0 0.0
      %1546 = vmatpush2.msra.mxu0 0.0
      %1547 = vmatprep.subr.mxu0 0.0
      %1548 = vmatpush2.msra.mxu0 0.0
      %1549 = vmatprep.subr.mxu0 0.0
      %1550 = vmatpush2.msra.mxu0 0.0
      %1551 = vmatprep.subr.mxu0 0.0
      %1552 = vmatpush2.msra.mxu0 0.0
      %1553 = vmatprep.subr.mxu0 0.0
      %1554 = vmatpush2.msra.mxu0 0.0
      %1555 = vmatprep.subr.mxu0 0.0
      %1556 = vmatpush2.msra.mxu0 0.0
      %1557 = vmatprep.subr.mxu0 0.0
      %1558 = vmatpush2.msra.mxu0 0.0
      %1559 = vmatprep.subr.mxu0 0.0
      %1560 = vmatpush2.msra.mxu0 0.0
      %1561 = vmatprep.subr.mxu0 0.0
      %1562 = vmatpush2.msra.mxu0 0.0
      %1563 = vmatprep.subr.mxu0 0.0
      %1564 = vmatpush2.msra.mxu0 0.0
      %1565 = vmatprep.subr.mxu0 0.0
      %1566 = vmatpush2.msra.mxu0 0.0
      %1567 = vmatprep.subr.mxu0 0.0
      %1568 = vmatpush2.msra.mxu0 0.0
      %1569 = vmatprep.subr.mxu0 0.0
      %1570 = vmatpush2.msra.mxu0 0.0
      %1571 = vmatprep.subr.mxu0 0.0
      %1572 = vmatpush2.msra.mxu0 0.0
      %1573 = vmatprep.mubr.f32.mxu0 0.0
      %1574 = vmatmul.mubr.f32.gmra.mxu0 %v1442
      %v1575 = vpop.f32.mrf.mxu0
      %v1576 = vadd.f32 0.0, %v1575
      %v1577 = vpop.f32.mrf.mxu0
      %1578 = vmatprep.mubr.f32.mxu0 0.0
      %1579 = vmatmul.mubr.f32.gmra.mxu0 %v1444
      %v1580 = vpop.f32.mrf.mxu0
      %v1581 = vadd.f32 0.0, %v1580
      %v1582 = vpop.f32.mrf.mxu0
      %1583 = vmatprep.mubr.f32.mxu0 0.0
      %1584 = vmatmul.mubr.f32.gmra.mxu0 %v1446
      %v1585 = vpop.f32.mrf.mxu0
      %v1586 = vadd.f32 0.0, %v1585
      %v1587 = vpop.f32.mrf.mxu0
      %1588 = vmatprep.mubr.f32.mxu0 0.0
      %1589 = vmatmul.mubr.f32.gmra.mxu0 %v1448
      %v1590 = vpop.f32.mrf.mxu0
      %v1591 = vadd.f32 0.0, %v1590
      %v1592 = vpop.f32.mrf.mxu0
      %1593 = vmatprep.mubr.f32.mxu0 0.0
      %1594 = vmatmul.mubr.f32.gmra.mxu0 %v1450
      %v1595 = vpop.f32.mrf.mxu0
      %v1596 = vadd.f32 0.0, %v1595
      %v1597 = vpop.f32.mrf.mxu0
      %1598 = vmatprep.mubr.f32.mxu0 0.0
      %1599 = vmatmul.mubr.f32.gmra.mxu0 %v1452
      %v1600 = vpop.f32.mrf.mxu0
      %v1601 = vadd.f32 0.0, %v1600
      %v1602 = vpop.f32.mrf.mxu0
      %1603 = vmatprep.mubr.f32.mxu0 0.0
      %1604 = vmatmul.mubr.f32.gmra.mxu0 %v1454
      %v1605 = vpop.f32.mrf.mxu0
      %v1606 = vadd.f32 0.0, %v1605
      %v1607 = vpop.f32.mrf.mxu0
      %1608 = vmatprep.mubr.f32.mxu0 0.0
      %1609 = vmatmul.mubr.f32.gmra.mxu0 %v1456
      %v1610 = vpop.f32.mrf.mxu0
      %v1611 = vadd.f32 0.0, %v1610
      %v1612 = vpop.f32.mrf.mxu0
      %1613 = vmatprep.mubr.f32.mxu0 0.0
      %1614 = vmatmul.mubr.f32.gmra.mxu0 %v1458
      %v1615 = vpop.f32.mrf.mxu0
      %v1616 = vadd.f32 0.0, %v1615
      %v1617 = vpop.f32.mrf.mxu0
      %1618 = vmatprep.mubr.f32.mxu0 0.0
      %1619 = vmatmul.mubr.f32.gmra.mxu0 %v1460
      %v1620 = vpop.f32.mrf.mxu0
      %v1621 = vadd.f32 0.0, %v1620
      %v1622 = vpop.f32.mrf.mxu0
      %1623 = vmatprep.mubr.f32.mxu0 0.0
      %1624 = vmatmul.mubr.f32.gmra.mxu0 %v1462
      %v1625 = vpop.f32.mrf.mxu0
      %v1626 = vadd.f32 0.0, %v1625
      %v1627 = vpop.f32.mrf.mxu0
      %1628 = vmatprep.mubr.f32.mxu0 0.0
      %1629 = vmatmul.mubr.f32.gmra.mxu0 %v1464
      %v1630 = vpop.f32.mrf.mxu0
      %v1631 = vadd.f32 0.0, %v1630
      %v1632 = vpop.f32.mrf.mxu0
      %1633 = vmatprep.mubr.f32.mxu0 0.0
      %1634 = vmatmul.mubr.f32.gmra.mxu0 %v1466
      %v1635 = vpop.f32.mrf.mxu0
      %v1636 = vadd.f32 0.0, %v1635
      %v1637 = vpop.f32.mrf.mxu0
      %1638 = vmatprep.mubr.f32.mxu0 0.0
      %1639 = vmatmul.mubr.f32.gmra.mxu0 %v1468
      %v1640 = vpop.f32.mrf.mxu0
      %v1641 = vadd.f32 0.0, %v1640
      %v1642 = vpop.f32.mrf.mxu0
      %1643 = vmatprep.mubr.f32.mxu0 0.0
      %1644 = vmatmul.mubr.f32.gmra.mxu0 %v1470
      %v1645 = vpop.f32.mrf.mxu0
      %v1646 = vadd.f32 0.0, %v1645
      %v1647 = vpop.f32.mrf.mxu0
      %1648 = vmatprep.mubr.f32.mxu0 0.0
      %1649 = vmatmul.mubr.f32.gmra.mxu0 %v1472
      %v1650 = vpop.f32.mrf.mxu0
      %v1651 = vadd.f32 0.0, %v1650
      %v1652 = vpop.f32.mrf.mxu0
      %1653 = vmatprep.mubr.f32.mxu0 0.0
      %1654 = vmatmul.mubr.f32.gmra.mxu0 %v1474
      %v1655 = vpop.f32.mrf.mxu0
      %v1656 = vadd.f32 0.0, %v1655
      %v1657 = vpop.f32.mrf.mxu0
      %1658 = vmatprep.mubr.f32.mxu0 0.0
      %1659 = vmatmul.mubr.f32.gmra.mxu0 %v1476
      %v1660 = vpop.f32.mrf.mxu0
      %v1661 = vadd.f32 0.0, %v1660
      %v1662 = vpop.f32.mrf.mxu0
      %1663 = vmatprep.mubr.f32.mxu0 0.0
      %1664 = vmatmul.mubr.f32.gmra.mxu0 %v1478
      %v1665 = vpop.f32.mrf.mxu0
      %v1666 = vadd.f32 0.0, %v1665
      %v1667 = vpop.f32.mrf.mxu0
      %1668 = vmatprep.mubr.f32.mxu0 0.0
      %1669 = vmatmul.mubr.f32.gmra.mxu0 %v1480
      %v1670 = vpop.f32.mrf.mxu0
      %v1671 = vadd.f32 0.0, %v1670
      %v1672 = vpop.f32.mrf.mxu0
      %1673 = vmatprep.mubr.f32.mxu0 0.0
      %1674 = vmatmul.mubr.f32.gmra.mxu0 %v1482
      %v1675 = vpop.f32.mrf.mxu0
      %v1676 = vadd.f32 0.0, %v1675
      %v1677 = vpop.f32.mrf.mxu0
      %1678 = vmatprep.mubr.f32.mxu0 0.0
      %1679 = vmatmul.mubr.f32.gmra.mxu0 %v1484
      %v1680 = vpop.f32.mrf.mxu0
      %v1681 = vadd.f32 0.0, %v1680
      %v1682 = vpop.f32.mrf.mxu0
      %1683 = vmatprep.mubr.f32.mxu0 0.0
      %1684 = vmatmul.mubr.f32.gmra.mxu0 %v1486
      %v1685 = vpop.f32.mrf.mxu0
      %v1686 = vadd.f32 0.0, %v1685
      %v1687 = vpop.f32.mrf.mxu0
      %1688 = vmatprep.mubr.f32.mxu0 0.0
      %1689 = vmatmul.mubr.f32.gmra.mxu0 %v1488
      %v1690 = vpop.f32.mrf.mxu0
      %v1691 = vadd.f32 0.0, %v1690
      %v1692 = vpop.f32.mrf.mxu0
      %1693 = vmatprep.mubr.f32.mxu0 0.0
      %1694 = vmatmul.mubr.f32.gmra.mxu0 %v1490
      %v1695 = vpop.f32.mrf.mxu0
      %v1696 = vadd.f32 0.0, %v1695
      %v1697 = vpop.f32.mrf.mxu0
      %1698 = vmatprep.mubr.f32.mxu0 0.0
      %1699 = vmatmul.mubr.f32.gmra.mxu0 %v1492
      %v1700 = vpop.f32.mrf.mxu0
      %v1701 = vadd.f32 0.0, %v1700
      %v1702 = vpop.f32.mrf.mxu0
      %1703 = vmatprep.mubr.f32.mxu0 0.0
      %1704 = vmatmul.mubr.f32.gmra.mxu0 %v1494
      %v1705 = vpop.f32.mrf.mxu0
      %v1706 = vadd.f32 0.0, %v1705
      %v1707 = vpop.f32.mrf.mxu0
      %1708 = vmatprep.mubr.f32.mxu0 0.0
      %1709 = vmatmul.mubr.f32.gmra.mxu0 %v1496
      %v1710 = vpop.f32.mrf.mxu0
      %v1711 = vadd.f32 0.0, %v1710
      %v1712 = vpop.f32.mrf.mxu0
      %1713 = vmatprep.mubr.f32.mxu0 0.0
      %1714 = vmatmul.mubr.f32.gmra.mxu0 %v1498
      %v1715 = vpop.f32.mrf.mxu0
      %v1716 = vadd.f32 0.0, %v1715
      %v1717 = vpop.f32.mrf.mxu0
      %1718 = vmatprep.mubr.f32.mxu0 0.0
      %1719 = vmatmul.mubr.f32.gmra.mxu0 %v1500
      %v1720 = vpop.f32.mrf.mxu0
      %v1721 = vadd.f32 0.0, %v1720
      %v1722 = vpop.f32.mrf.mxu0
      %1723 = vmatprep.mubr.f32.mxu0 0.0
      %1724 = vmatmul.mubr.f32.gmra.mxu0 %v1502
      %v1725 = vpop.f32.mrf.mxu0
      %v1726 = vadd.f32 0.0, %v1725
      %v1727 = vpop.f32.mrf.mxu0
      %1728 = vmatprep.mubr.f32.mxu0 0.0
      %1729 = vmatmul.mubr.f32.gmra.mxu0 %v1504
      %v1730 = vpop.f32.mrf.mxu0
      %v1731 = vadd.f32 0.0, %v1730
      %v1732 = vpop.f32.mrf.mxu0
      %1733 = vdwg.mxu0
      %v1734 = vadd.f32 %v1209, %v1576
      %v1735 = vadd.f32 %v1214, %v1581
      %v1736 = vadd.f32 %v1219, %v1586
      %v1737 = vadd.f32 %v1224, %v1591
      %v1738 = vadd.f32 %v1229, %v1596
      %v1739 = vadd.f32 %v1234, %v1601
      %v1740 = vadd.f32 %v1239, %v1606
      %v1741 = vadd.f32 %v1244, %v1611
      %v1742 = vadd.f32 %v1249, %v1616
      %v1743 = vadd.f32 %v1254, %v1621
      %v1744 = vadd.f32 %v1259, %v1626
      %v1745 = vadd.f32 %v1264, %v1631
      %v1746 = vadd.f32 %v1269, %v1636
      %v1747 = vadd.f32 %v1274, %v1641
      %v1748 = vadd.f32 %v1279, %v1646
      %v1749 = vadd.f32 %v1284, %v1651
      %v1750 = vadd.f32 %v1289, %v1656
      %v1751 = vadd.f32 %v1294, %v1661
      %v1752 = vadd.f32 %v1299, %v1666
      %v1753 = vadd.f32 %v1304, %v1671
      %v1754 = vadd.f32 %v1309, %v1676
      %v1755 = vadd.f32 %v1314, %v1681
      %v1756 = vadd.f32 %v1319, %v1686
      %v1757 = vadd.f32 %v1324, %v1691
      %v1758 = vadd.f32 %v1329, %v1696
      %v1759 = vadd.f32 %v1334, %v1701
      %v1760 = vadd.f32 %v1339, %v1706
      %v1761 = vadd.f32 %v1344, %v1711
      %v1762 = vadd.f32 %v1349, %v1716
      %v1763 = vadd.f32 %v1354, %v1721
      %v1764 = vadd.f32 %v1359, %v1726
      %v1765 = vadd.f32 %v1364, %v1731
      %s1766 = scalar_lea.vmem %s3, 12
      %v1767 = vld [vmem:[%s1766] sm:$0xf]
      %v1769 = vsel %vm781, %v655, 0
      %v1772 = vsel %vm781, %v656, 0
      %v1775 = vsel %vm781, %v657, 0
      %v1778 = vsel %vm781, %v658, 0
      %v1781 = vsel %vm846, %v1767, 0
      %1783 = vmatprep.subr.mxu0 0.0
      %1784 = vmatpush1.msra.mxu0 0.0
      %1785 = vmatprep.subr.mxu0 0.0
      %1786 = vmatpush1.msra.mxu0 0.0
      %1787 = vmatprep.subr.mxu0 0.0
      %1788 = vmatpush1.msra.mxu0 0.0
      %1789 = vmatprep.subr.mxu0 0.0
      %1790 = vmatpush1.msra.mxu0 0.0
      %1791 = vmatprep.subr.mxu0 0.0
      %1792 = vmatpush1.msra.mxu0 0.0
      %1793 = vmatprep.subr.mxu0 0.0
      %1794 = vmatpush1.msra.mxu0 0.0
      %1795 = vmatprep.subr.mxu0 0.0
      %1796 = vmatpush1.msra.mxu0 0.0
      %1797 = vmatprep.subr.mxu0 0.0
      %1798 = vmatpush1.msra.mxu0 0.0
      %1799 = vmatprep.subr.mxu0 0.0
      %1800 = vmatpush1.msra.mxu0 0.0
      %1801 = vmatprep.subr.mxu0 0.0
      %1802 = vmatpush1.msra.mxu0 0.0
      %1803 = vmatprep.subr.mxu0 0.0
      %1804 = vmatpush1.msra.mxu0 0.0
      %1805 = vmatprep.subr.mxu0 0.0
      %1806 = vmatpush1.msra.mxu0 0.0
      %1807 = vmatprep.subr.mxu0 0.0
      %1808 = vmatpush1.msra.mxu0 0.0
      %1809 = vmatprep.subr.mxu0 0.0
      %1810 = vmatpush1.msra.mxu0 0.0
      %1811 = vmatprep.subr.mxu0 0.0
      %1812 = vmatpush1.msra.mxu0 0.0
      %1813 = vmatprep.subr.mxu0 0.0
      %1814 = vmatpush1.msra.mxu0 %v1781
      %1815 = vmatprep.subr.mxu0 0.0
      %1816 = vmatpush2.msra.mxu0 0.0
      %1817 = vmatprep.subr.mxu0 0.0
      %1818 = vmatpush2.msra.mxu0 0.0
      %1819 = vmatprep.subr.mxu0 0.0
      %1820 = vmatpush2.msra.mxu0 0.0
      %1821 = vmatprep.subr.mxu0 0.0
      %1822 = vmatpush2.msra.mxu0 0.0
      %1823 = vmatprep.subr.mxu0 0.0
      %1824 = vmatpush2.msra.mxu0 0.0
      %1825 = vmatprep.subr.mxu0 0.0
      %1826 = vmatpush2.msra.mxu0 0.0
      %1827 = vmatprep.subr.mxu0 0.0
      %1828 = vmatpush2.msra.mxu0 0.0
      %1829 = vmatprep.subr.mxu0 0.0
      %1830 = vmatpush2.msra.mxu0 0.0
      %1831 = vmatprep.subr.mxu0 0.0
      %1832 = vmatpush2.msra.mxu0 0.0
      %1833 = vmatprep.subr.mxu0 0.0
      %1834 = vmatpush2.msra.mxu0 0.0
      %1835 = vmatprep.subr.mxu0 0.0
      %1836 = vmatpush2.msra.mxu0 0.0
      %1837 = vmatprep.subr.mxu0 0.0
      %1838 = vmatpush2.msra.mxu0 0.0
      %1839 = vmatprep.subr.mxu0 0.0
      %1840 = vmatpush2.msra.mxu0 0.0
      %1841 = vmatprep.subr.mxu0 0.0
      %1842 = vmatpush2.msra.mxu0 0.0
      %1843 = vmatprep.subr.mxu0 0.0
      %1844 = vmatpush2.msra.mxu0 0.0
      %1845 = vmatprep.subr.mxu0 0.0
      %1846 = vmatpush2.msra.mxu0 0.0
      %1847 = vmatprep.mubr.f32.mxu0 0.0
      %1848 = vmatmul.mubr.f32.gmra.mxu0 %v1083
      %v1849 = vpop.f32.mrf.mxu0
      %v1850 = vadd.f32 0.0, %v1849
      %v1851 = vpop.f32.mrf.mxu0
      %1852 = vmatprep.mubr.f32.mxu0 0.0
      %1853 = vmatmul.mubr.f32.gmra.mxu0 %v1085
      %v1854 = vpop.f32.mrf.mxu0
      %v1855 = vadd.f32 0.0, %v1854
      %v1856 = vpop.f32.mrf.mxu0
      %1857 = vmatprep.mubr.f32.mxu0 0.0
      %1858 = vmatmul.mubr.f32.gmra.mxu0 %v1087
      %v1859 = vpop.f32.mrf.mxu0
      %v1860 = vadd.f32 0.0, %v1859
      %v1861 = vpop.f32.mrf.mxu0
      %1862 = vmatprep.mubr.f32.mxu0 0.0
      %1863 = vmatmul.mubr.f32.gmra.mxu0 %v1089
      %v1864 = vpop.f32.mrf.mxu0
      %v1865 = vadd.f32 0.0, %v1864
      %v1866 = vpop.f32.mrf.mxu0
      %1867 = vmatprep.mubr.f32.mxu0 0.0
      %1868 = vmatmul.mubr.f32.gmra.mxu0 %v1091
      %v1869 = vpop.f32.mrf.mxu0
      %v1870 = vadd.f32 0.0, %v1869
      %v1871 = vpop.f32.mrf.mxu0
      %1872 = vmatprep.mubr.f32.mxu0 0.0
      %1873 = vmatmul.mubr.f32.gmra.mxu0 %v1093
      %v1874 = vpop.f32.mrf.mxu0
      %v1875 = vadd.f32 0.0, %v1874
      %v1876 = vpop.f32.mrf.mxu0
      %1877 = vmatprep.mubr.f32.mxu0 0.0
      %1878 = vmatmul.mubr.f32.gmra.mxu0 %v1095
      %v1879 = vpop.f32.mrf.mxu0
      %v1880 = vadd.f32 0.0, %v1879
      %v1881 = vpop.f32.mrf.mxu0
      %1882 = vmatprep.mubr.f32.mxu0 0.0
      %1883 = vmatmul.mubr.f32.gmra.mxu0 %v1097
      %v1884 = vpop.f32.mrf.mxu0
      %v1885 = vadd.f32 0.0, %v1884
      %v1886 = vpop.f32.mrf.mxu0
      %1887 = vmatprep.mubr.f32.mxu0 0.0
      %1888 = vmatmul.mubr.f32.gmra.mxu0 %v1099
      %v1889 = vpop.f32.mrf.mxu0
      %v1890 = vadd.f32 0.0, %v1889
      %v1891 = vpop.f32.mrf.mxu0
      %1892 = vmatprep.mubr.f32.mxu0 0.0
      %1893 = vmatmul.mubr.f32.gmra.mxu0 %v1101
      %v1894 = vpop.f32.mrf.mxu0
      %v1895 = vadd.f32 0.0, %v1894
      %v1896 = vpop.f32.mrf.mxu0
      %1897 = vmatprep.mubr.f32.mxu0 0.0
      %1898 = vmatmul.mubr.f32.gmra.mxu0 %v1103
      %v1899 = vpop.f32.mrf.mxu0
      %v1900 = vadd.f32 0.0, %v1899
      %v1901 = vpop.f32.mrf.mxu0
      %1902 = vmatprep.mubr.f32.mxu0 0.0
      %1903 = vmatmul.mubr.f32.gmra.mxu0 %v1105
      %v1904 = vpop.f32.mrf.mxu0
      %v1905 = vadd.f32 0.0, %v1904
      %v1906 = vpop.f32.mrf.mxu0
      %1907 = vmatprep.mubr.f32.mxu0 0.0
      %1908 = vmatmul.mubr.f32.gmra.mxu0 %v1107
      %v1909 = vpop.f32.mrf.mxu0
      %v1910 = vadd.f32 0.0, %v1909
      %v1911 = vpop.f32.mrf.mxu0
      %1912 = vmatprep.mubr.f32.mxu0 0.0
      %1913 = vmatmul.mubr.f32.gmra.mxu0 %v1109
      %v1914 = vpop.f32.mrf.mxu0
      %v1915 = vadd.f32 0.0, %v1914
      %v1916 = vpop.f32.mrf.mxu0
      %1917 = vmatprep.mubr.f32.mxu0 0.0
      %1918 = vmatmul.mubr.f32.gmra.mxu0 %v1111
      %v1919 = vpop.f32.mrf.mxu0
      %v1920 = vadd.f32 0.0, %v1919
      %v1921 = vpop.f32.mrf.mxu0
      %1922 = vmatprep.mubr.f32.mxu0 0.0
      %1923 = vmatmul.mubr.f32.gmra.mxu0 %v1113
      %v1924 = vpop.f32.mrf.mxu0
      %v1925 = vadd.f32 0.0, %v1924
      %v1926 = vpop.f32.mrf.mxu0
      %1927 = vmatprep.mubr.f32.mxu0 0.0
      %1928 = vmatmul.mubr.f32.gmra.mxu0 %v1115
      %v1929 = vpop.f32.mrf.mxu0
      %v1930 = vadd.f32 0.0, %v1929
      %v1931 = vpop.f32.mrf.mxu0
      %1932 = vmatprep.mubr.f32.mxu0 0.0
      %1933 = vmatmul.mubr.f32.gmra.mxu0 %v1117
      %v1934 = vpop.f32.mrf.mxu0
      %v1935 = vadd.f32 0.0, %v1934
      %v1936 = vpop.f32.mrf.mxu0
      %1937 = vmatprep.mubr.f32.mxu0 0.0
      %1938 = vmatmul.mubr.f32.gmra.mxu0 %v1119
      %v1939 = vpop.f32.mrf.mxu0
      %v1940 = vadd.f32 0.0, %v1939
      %v1941 = vpop.f32.mrf.mxu0
      %1942 = vmatprep.mubr.f32.mxu0 0.0
      %1943 = vmatmul.mubr.f32.gmra.mxu0 %v1121
      %v1944 = vpop.f32.mrf.mxu0
      %v1945 = vadd.f32 0.0, %v1944
      %v1946 = vpop.f32.mrf.mxu0
      %1947 = vmatprep.mubr.f32.mxu0 0.0
      %1948 = vmatmul.mubr.f32.gmra.mxu0 %v1123
      %v1949 = vpop.f32.mrf.mxu0
      %v1950 = vadd.f32 0.0, %v1949
      %v1951 = vpop.f32.mrf.mxu0
      %1952 = vmatprep.mubr.f32.mxu0 0.0
      %1953 = vmatmul.mubr.f32.gmra.mxu0 %v1125
      %v1954 = vpop.f32.mrf.mxu0
      %v1955 = vadd.f32 0.0, %v1954
      %v1956 = vpop.f32.mrf.mxu0
      %1957 = vmatprep.mubr.f32.mxu0 0.0
      %1958 = vmatmul.mubr.f32.gmra.mxu0 %v1127
      %v1959 = vpop.f32.mrf.mxu0
      %v1960 = vadd.f32 0.0, %v1959
      %v1961 = vpop.f32.mrf.mxu0
      %1962 = vmatprep.mubr.f32.mxu0 0.0
      %1963 = vmatmul.mubr.f32.gmra.mxu0 %v1129
      %v1964 = vpop.f32.mrf.mxu0
      %v1965 = vadd.f32 0.0, %v1964
      %v1966 = vpop.f32.mrf.mxu0
      %1967 = vmatprep.mubr.f32.mxu0 0.0
      %1968 = vmatmul.mubr.f32.gmra.mxu0 %v1131
      %v1969 = vpop.f32.mrf.mxu0
      %v1970 = vadd.f32 0.0, %v1969
      %v1971 = vpop.f32.mrf.mxu0
      %1972 = vmatprep.mubr.f32.mxu0 0.0
      %1973 = vmatmul.mubr.f32.gmra.mxu0 %v1133
      %v1974 = vpop.f32.mrf.mxu0
      %v1975 = vadd.f32 0.0, %v1974
      %v1976 = vpop.f32.mrf.mxu0
      %1977 = vmatprep.mubr.f32.mxu0 0.0
      %1978 = vmatmul.mubr.f32.gmra.mxu0 %v1135
      %v1979 = vpop.f32.mrf.mxu0
      %v1980 = vadd.f32 0.0, %v1979
      %v1981 = vpop.f32.mrf.mxu0
      %1982 = vmatprep.mubr.f32.mxu0 0.0
      %1983 = vmatmul.mubr.f32.gmra.mxu0 %v1137
      %v1984 = vpop.f32.mrf.mxu0
      %v1985 = vadd.f32 0.0, %v1984
      %v1986 = vpop.f32.mrf.mxu0
      %1987 = vmatprep.mubr.f32.mxu0 0.0
      %1988 = vmatmul.mubr.f32.gmra.mxu0 %v1769
      %v1989 = vpop.f32.mrf.mxu0
      %v1990 = vadd.f32 0.0, %v1989
      %v1991 = vpop.f32.mrf.mxu0
      %1992 = vmatprep.mubr.f32.mxu0 0.0
      %1993 = vmatmul.mubr.f32.gmra.mxu0 %v1772
      %v1994 = vpop.f32.mrf.mxu0
      %v1995 = vadd.f32 0.0, %v1994
      %v1996 = vpop.f32.mrf.mxu0
      %1997 = vmatprep.mubr.f32.mxu0 0.0
      %1998 = vmatmul.mubr.f32.gmra.mxu0 %v1775
      %v1999 = vpop.f32.mrf.mxu0
      %v2000 = vadd.f32 0.0, %v1999
      %v2001 = vpop.f32.mrf.mxu0
      %2002 = vmatprep.mubr.f32.mxu0 0.0
      %2003 = vmatmul.mubr.f32.gmra.mxu0 %v1778
      %v2004 = vpop.f32.mrf.mxu0
      %v2005 = vadd.f32 0.0, %v2004
      %v2006 = vpop.f32.mrf.mxu0
      %2007 = vdwg.mxu0
      %v2008 = vadd.f32 %v1734, %v1850
      %v2009 = vadd.f32 %v1735, %v1855
      %v2010 = vadd.f32 %v1736, %v1860
      %v2011 = vadd.f32 %v1737, %v1865
      %v2012 = vadd.f32 %v1738, %v1870
      %v2013 = vadd.f32 %v1739, %v1875
      %v2014 = vadd.f32 %v1740, %v1880
      %v2015 = vadd.f32 %v1741, %v1885
      %v2016 = vadd.f32 %v1742, %v1890
      %v2017 = vadd.f32 %v1743, %v1895
      %v2018 = vadd.f32 %v1744, %v1900
      %v2019 = vadd.f32 %v1745, %v1905
      %v2020 = vadd.f32 %v1746, %v1910
      %v2021 = vadd.f32 %v1747, %v1915
      %v2022 = vadd.f32 %v1748, %v1920
      %v2023 = vadd.f32 %v1749, %v1925
      %v2024 = vadd.f32 %v1750, %v1930
      %v2025 = vadd.f32 %v1751, %v1935
      %v2026 = vadd.f32 %v1752, %v1940
      %v2027 = vadd.f32 %v1753, %v1945
      %v2028 = vadd.f32 %v1754, %v1950
      %v2029 = vadd.f32 %v1755, %v1955
      %v2030 = vadd.f32 %v1756, %v1960
      %v2031 = vadd.f32 %v1757, %v1965
      %v2032 = vadd.f32 %v1758, %v1970
      %v2033 = vadd.f32 %v1759, %v1975
      %v2034 = vadd.f32 %v1760, %v1980
      %v2035 = vadd.f32 %v1761, %v1985
      %v2036 = vadd.f32 %v1762, %v1990
      %v2037 = vadd.f32 %v1763, %v1995
      %v2038 = vadd.f32 %v1764, %v2000
      %v2039 = vadd.f32 %v1765, %v2005
      %v2041 = vrot.slane %v655, 1
      %v2042 = vrot.slane %v656, 1
      %v2043 = vsel %vm706, %v2041, %v2042
      %v2044 = vrot.slane %v657, 1
      %v2045 = vsel %vm706, %v2042, %v2044
      %v2046 = vrot.slane %v658, 1
      %v2047 = vsel %vm706, %v2044, %v2046
      %v2048 = vrot.slane %v659, 1
      %v2049 = vsel %vm706, %v2046, %v2048
      %s2050 = scalar_lea.vmem %s3, 16
      %v2051 = vld [vmem:[%s2050] sm:$0xf]
      %v2052 = vsel %vm781, %v2043, 0
      %v2054 = vsel %vm781, %v2045, 0
      %v2056 = vsel %vm781, %v2047, 0
      %v2058 = vsel %vm781, %v2049, 0
      %v2061 = vsel %vm846, %v2051, 0
      %2063 = vmatprep.subr.mxu0 0.0
      %2064 = vmatpush1.msra.mxu0 0.0
      %2065 = vmatprep.subr.mxu0 0.0
      %2066 = vmatpush1.msra.mxu0 0.0
      %2067 = vmatprep.subr.mxu0 0.0
      %2068 = vmatpush1.msra.mxu0 0.0
      %2069 = vmatprep.subr.mxu0 0.0
      %2070 = vmatpush1.msra.mxu0 0.0
      %2071 = vmatprep.subr.mxu0 0.0
      %2072 = vmatpush1.msra.mxu0 0.0
      %2073 = vmatprep.subr.mxu0 0.0
      %2074 = vmatpush1.msra.mxu0 0.0
      %2075 = vmatprep.subr.mxu0 0.0
      %2076 = vmatpush1.msra.mxu0 0.0
      %2077 = vmatprep.subr.mxu0 0.0
      %2078 = vmatpush1.msra.mxu0 0.0
      %2079 = vmatprep.subr.mxu0 0.0
      %2080 = vmatpush1.msra.mxu0 0.0
      %2081 = vmatprep.subr.mxu0 0.0
      %2082 = vmatpush1.msra.mxu0 0.0
      %2083 = vmatprep.subr.mxu0 0.0
      %2084 = vmatpush1.msra.mxu0 0.0
      %2085 = vmatprep.subr.mxu0 0.0
      %2086 = vmatpush1.msra.mxu0 0.0
      %2087 = vmatprep.subr.mxu0 0.0
      %2088 = vmatpush1.msra.mxu0 0.0
      %2089 = vmatprep.subr.mxu0 0.0
      %2090 = vmatpush1.msra.mxu0 0.0
      %2091 = vmatprep.subr.mxu0 0.0
      %2092 = vmatpush1.msra.mxu0 0.0
      %2093 = vmatprep.subr.mxu0 0.0
      %2094 = vmatpush1.msra.mxu0 %v2061
      %2095 = vmatprep.subr.mxu0 0.0
      %2096 = vmatpush2.msra.mxu0 0.0
      %2097 = vmatprep.subr.mxu0 0.0
      %2098 = vmatpush2.msra.mxu0 0.0
      %2099 = vmatprep.subr.mxu0 0.0
      %2100 = vmatpush2.msra.mxu0 0.0
      %2101 = vmatprep.subr.mxu0 0.0
      %2102 = vmatpush2.msra.mxu0 0.0
      %2103 = vmatprep.subr.mxu0 0.0
      %2104 = vmatpush2.msra.mxu0 0.0
      %2105 = vmatprep.subr.mxu0 0.0
      %2106 = vmatpush2.msra.mxu0 0.0
      %2107 = vmatprep.subr.mxu0 0.0
      %2108 = vmatpush2.msra.mxu0 0.0
      %2109 = vmatprep.subr.mxu0 0.0
      %2110 = vmatpush2.msra.mxu0 0.0
      %2111 = vmatprep.subr.mxu0 0.0
      %2112 = vmatpush2.msra.mxu0 0.0
      %2113 = vmatprep.subr.mxu0 0.0
      %2114 = vmatpush2.msra.mxu0 0.0
      %2115 = vmatprep.subr.mxu0 0.0
      %2116 = vmatpush2.msra.mxu0 0.0
      %2117 = vmatprep.subr.mxu0 0.0
      %2118 = vmatpush2.msra.mxu0 0.0
      %2119 = vmatprep.subr.mxu0 0.0
      %2120 = vmatpush2.msra.mxu0 0.0
      %2121 = vmatprep.subr.mxu0 0.0
      %2122 = vmatpush2.msra.mxu0 0.0
      %2123 = vmatprep.subr.mxu0 0.0
      %2124 = vmatpush2.msra.mxu0 0.0
      %2125 = vmatprep.subr.mxu0 0.0
      %2126 = vmatpush2.msra.mxu0 0.0
      %2127 = vmatprep.mubr.f32.mxu0 0.0
      %2128 = vmatmul.mubr.f32.gmra.mxu0 %v790
      %v2129 = vpop.f32.mrf.mxu0
      %v2130 = vadd.f32 0.0, %v2129
      %v2131 = vpop.f32.mrf.mxu0
      %2132 = vmatprep.mubr.f32.mxu0 0.0
      %2133 = vmatmul.mubr.f32.gmra.mxu0 %v792
      %v2134 = vpop.f32.mrf.mxu0
      %v2135 = vadd.f32 0.0, %v2134
      %v2136 = vpop.f32.mrf.mxu0
      %2137 = vmatprep.mubr.f32.mxu0 0.0
      %2138 = vmatmul.mubr.f32.gmra.mxu0 %v794
      %v2139 = vpop.f32.mrf.mxu0
      %v2140 = vadd.f32 0.0, %v2139
      %v2141 = vpop.f32.mrf.mxu0
      %2142 = vmatprep.mubr.f32.mxu0 0.0
      %2143 = vmatmul.mubr.f32.gmra.mxu0 %v796
      %v2144 = vpop.f32.mrf.mxu0
      %v2145 = vadd.f32 0.0, %v2144
      %v2146 = vpop.f32.mrf.mxu0
      %2147 = vmatprep.mubr.f32.mxu0 0.0
      %2148 = vmatmul.mubr.f32.gmra.mxu0 %v798
      %v2149 = vpop.f32.mrf.mxu0
      %v2150 = vadd.f32 0.0, %v2149
      %v2151 = vpop.f32.mrf.mxu0
      %2152 = vmatprep.mubr.f32.mxu0 0.0
      %2153 = vmatmul.mubr.f32.gmra.mxu0 %v800
      %v2154 = vpop.f32.mrf.mxu0
      %v2155 = vadd.f32 0.0, %v2154
      %v2156 = vpop.f32.mrf.mxu0
      %2157 = vmatprep.mubr.f32.mxu0 0.0
      %2158 = vmatmul.mubr.f32.gmra.mxu0 %v802
      %v2159 = vpop.f32.mrf.mxu0
      %v2160 = vadd.f32 0.0, %v2159
      %v2161 = vpop.f32.mrf.mxu0
      %2162 = vmatprep.mubr.f32.mxu0 0.0
      %2163 = vmatmul.mubr.f32.gmra.mxu0 %v804
      %v2164 = vpop.f32.mrf.mxu0
      %v2165 = vadd.f32 0.0, %v2164
      %v2166 = vpop.f32.mrf.mxu0
      %2167 = vmatprep.mubr.f32.mxu0 0.0
      %2168 = vmatmul.mubr.f32.gmra.mxu0 %v806
      %v2169 = vpop.f32.mrf.mxu0
      %v2170 = vadd.f32 0.0, %v2169
      %v2171 = vpop.f32.mrf.mxu0
      %2172 = vmatprep.mubr.f32.mxu0 0.0
      %2173 = vmatmul.mubr.f32.gmra.mxu0 %v808
      %v2174 = vpop.f32.mrf.mxu0
      %v2175 = vadd.f32 0.0, %v2174
      %v2176 = vpop.f32.mrf.mxu0
      %2177 = vmatprep.mubr.f32.mxu0 0.0
      %2178 = vmatmul.mubr.f32.gmra.mxu0 %v810
      %v2179 = vpop.f32.mrf.mxu0
      %v2180 = vadd.f32 0.0, %v2179
      %v2181 = vpop.f32.mrf.mxu0
      %2182 = vmatprep.mubr.f32.mxu0 0.0
      %2183 = vmatmul.mubr.f32.gmra.mxu0 %v812
      %v2184 = vpop.f32.mrf.mxu0
      %v2185 = vadd.f32 0.0, %v2184
      %v2186 = vpop.f32.mrf.mxu0
      %2187 = vmatprep.mubr.f32.mxu0 0.0
      %2188 = vmatmul.mubr.f32.gmra.mxu0 %v814
      %v2189 = vpop.f32.mrf.mxu0
      %v2190 = vadd.f32 0.0, %v2189
      %v2191 = vpop.f32.mrf.mxu0
      %2192 = vmatprep.mubr.f32.mxu0 0.0
      %2193 = vmatmul.mubr.f32.gmra.mxu0 %v816
      %v2194 = vpop.f32.mrf.mxu0
      %v2195 = vadd.f32 0.0, %v2194
      %v2196 = vpop.f32.mrf.mxu0
      %2197 = vmatprep.mubr.f32.mxu0 0.0
      %2198 = vmatmul.mubr.f32.gmra.mxu0 %v818
      %v2199 = vpop.f32.mrf.mxu0
      %v2200 = vadd.f32 0.0, %v2199
      %v2201 = vpop.f32.mrf.mxu0
      %2202 = vmatprep.mubr.f32.mxu0 0.0
      %2203 = vmatmul.mubr.f32.gmra.mxu0 %v820
      %v2204 = vpop.f32.mrf.mxu0
      %v2205 = vadd.f32 0.0, %v2204
      %v2206 = vpop.f32.mrf.mxu0
      %2207 = vmatprep.mubr.f32.mxu0 0.0
      %2208 = vmatmul.mubr.f32.gmra.mxu0 %v822
      %v2209 = vpop.f32.mrf.mxu0
      %v2210 = vadd.f32 0.0, %v2209
      %v2211 = vpop.f32.mrf.mxu0
      %2212 = vmatprep.mubr.f32.mxu0 0.0
      %2213 = vmatmul.mubr.f32.gmra.mxu0 %v824
      %v2214 = vpop.f32.mrf.mxu0
      %v2215 = vadd.f32 0.0, %v2214
      %v2216 = vpop.f32.mrf.mxu0
      %2217 = vmatprep.mubr.f32.mxu0 0.0
      %2218 = vmatmul.mubr.f32.gmra.mxu0 %v826
      %v2219 = vpop.f32.mrf.mxu0
      %v2220 = vadd.f32 0.0, %v2219
      %v2221 = vpop.f32.mrf.mxu0
      %2222 = vmatprep.mubr.f32.mxu0 0.0
      %2223 = vmatmul.mubr.f32.gmra.mxu0 %v828
      %v2224 = vpop.f32.mrf.mxu0
      %v2225 = vadd.f32 0.0, %v2224
      %v2226 = vpop.f32.mrf.mxu0
      %2227 = vmatprep.mubr.f32.mxu0 0.0
      %2228 = vmatmul.mubr.f32.gmra.mxu0 %v830
      %v2229 = vpop.f32.mrf.mxu0
      %v2230 = vadd.f32 0.0, %v2229
      %v2231 = vpop.f32.mrf.mxu0
      %2232 = vmatprep.mubr.f32.mxu0 0.0
      %2233 = vmatmul.mubr.f32.gmra.mxu0 %v832
      %v2234 = vpop.f32.mrf.mxu0
      %v2235 = vadd.f32 0.0, %v2234
      %v2236 = vpop.f32.mrf.mxu0
      %2237 = vmatprep.mubr.f32.mxu0 0.0
      %2238 = vmatmul.mubr.f32.gmra.mxu0 %v834
      %v2239 = vpop.f32.mrf.mxu0
      %v2240 = vadd.f32 0.0, %v2239
      %v2241 = vpop.f32.mrf.mxu0
      %2242 = vmatprep.mubr.f32.mxu0 0.0
      %2243 = vmatmul.mubr.f32.gmra.mxu0 %v836
      %v2244 = vpop.f32.mrf.mxu0
      %v2245 = vadd.f32 0.0, %v2244
      %v2246 = vpop.f32.mrf.mxu0
      %2247 = vmatprep.mubr.f32.mxu0 0.0
      %2248 = vmatmul.mubr.f32.gmra.mxu0 %v838
      %v2249 = vpop.f32.mrf.mxu0
      %v2250 = vadd.f32 0.0, %v2249
      %v2251 = vpop.f32.mrf.mxu0
      %2252 = vmatprep.mubr.f32.mxu0 0.0
      %2253 = vmatmul.mubr.f32.gmra.mxu0 %v840
      %v2254 = vpop.f32.mrf.mxu0
      %v2255 = vadd.f32 0.0, %v2254
      %v2256 = vpop.f32.mrf.mxu0
      %2257 = vmatprep.mubr.f32.mxu0 0.0
      %2258 = vmatmul.mubr.f32.gmra.mxu0 %v842
      %v2259 = vpop.f32.mrf.mxu0
      %v2260 = vadd.f32 0.0, %v2259
      %v2261 = vpop.f32.mrf.mxu0
      %2262 = vmatprep.mubr.f32.mxu0 0.0
      %2263 = vmatmul.mubr.f32.gmra.mxu0 %v844
      %v2264 = vpop.f32.mrf.mxu0
      %v2265 = vadd.f32 0.0, %v2264
      %v2266 = vpop.f32.mrf.mxu0
      %2267 = vmatprep.mubr.f32.mxu0 0.0
      %2268 = vmatmul.mubr.f32.gmra.mxu0 %v2052
      %v2269 = vpop.f32.mrf.mxu0
      %v2270 = vadd.f32 0.0, %v2269
      %v2271 = vpop.f32.mrf.mxu0
      %2272 = vmatprep.mubr.f32.mxu0 0.0
      %2273 = vmatmul.mubr.f32.gmra.mxu0 %v2054
      %v2274 = vpop.f32.mrf.mxu0
      %v2275 = vadd.f32 0.0, %v2274
      %v2276 = vpop.f32.mrf.mxu0
      %2277 = vmatprep.mubr.f32.mxu0 0.0
      %2278 = vmatmul.mubr.f32.gmra.mxu0 %v2056
      %v2279 = vpop.f32.mrf.mxu0
      %v2280 = vadd.f32 0.0, %v2279
      %v2281 = vpop.f32.mrf.mxu0
      %2282 = vmatprep.mubr.f32.mxu0 0.0
      %2283 = vmatmul.mubr.f32.gmra.mxu0 %v2058
      %v2284 = vpop.f32.mrf.mxu0
      %v2285 = vadd.f32 0.0, %v2284
      %v2286 = vpop.f32.mrf.mxu0
      %2287 = vdwg.mxu0
      %v2288 = vadd.f32 %v2008, %v2130
      %v2289 = vadd.f32 %v2009, %v2135
      %v2290 = vadd.f32 %v2010, %v2140
      %v2291 = vadd.f32 %v2011, %v2145
      %v2292 = vadd.f32 %v2012, %v2150
      %v2293 = vadd.f32 %v2013, %v2155
      %v2294 = vadd.f32 %v2014, %v2160
      %v2295 = vadd.f32 %v2015, %v2165
      %v2296 = vadd.f32 %v2016, %v2170
      %v2297 = vadd.f32 %v2017, %v2175
      %v2298 = vadd.f32 %v2018, %v2180
      %v2299 = vadd.f32 %v2019, %v2185
      %v2300 = vadd.f32 %v2020, %v2190
      %v2301 = vadd.f32 %v2021, %v2195
      %v2302 = vadd.f32 %v2022, %v2200
      %v2303 = vadd.f32 %v2023, %v2205
      %v2304 = vadd.f32 %v2024, %v2210
      %v2305 = vadd.f32 %v2025, %v2215
      %v2306 = vadd.f32 %v2026, %v2220
      %v2307 = vadd.f32 %v2027, %v2225
      %v2308 = vadd.f32 %v2028, %v2230
      %v2309 = vadd.f32 %v2029, %v2235
      %v2310 = vadd.f32 %v2030, %v2240
      %v2311 = vadd.f32 %v2031, %v2245
      %v2312 = vadd.f32 %v2032, %v2250
      %v2313 = vadd.f32 %v2033, %v2255
      %v2314 = vadd.f32 %v2034, %v2260
      %v2315 = vadd.f32 %v2035, %v2265
      %v2316 = vadd.f32 %v2036, %v2270
      %v2317 = vadd.f32 %v2037, %v2275
      %v2318 = vadd.f32 %v2038, %v2280
      %v2319 = vadd.f32 %v2039, %v2285
      %v2320 = vrot.slane %v655, 2
      %v2321 = vrot.slane %v656, 2
      %v2322 = vsel %vm1367, %v2320, %v2321
      %v2323 = vrot.slane %v657, 2
      %v2324 = vsel %vm1367, %v2321, %v2323
      %v2325 = vrot.slane %v658, 2
      %v2326 = vsel %vm1367, %v2323, %v2325
      %v2327 = vrot.slane %v659, 2
      %v2328 = vsel %vm1367, %v2325, %v2327
      %s2329 = scalar_lea.vmem %s3, 20
      %v2330 = vld [vmem:[%s2329] sm:$0xf]
      %v2331 = vsel %vm781, %v2322, 0
      %v2333 = vsel %vm781, %v2324, 0
      %v2335 = vsel %vm781, %v2326, 0
      %v2337 = vsel %vm781, %v2328, 0
      %v2340 = vsel %vm846, %v2330, 0
      %2342 = vmatprep.subr.mxu0 0.0
      %2343 = vmatpush1.msra.mxu0 0.0
      %2344 = vmatprep.subr.mxu0 0.0
      %2345 = vmatpush1.msra.mxu0 0.0
      %2346 = vmatprep.subr.mxu0 0.0
      %2347 = vmatpush1.msra.mxu0 0.0
      %2348 = vmatprep.subr.mxu0 0.0
      %2349 = vmatpush1.msra.mxu0 0.0
      %2350 = vmatprep.subr.mxu0 0.0
      %2351 = vmatpush1.msra.mxu0 0.0
      %2352 = vmatprep.subr.mxu0 0.0
      %2353 = vmatpush1.msra.mxu0 0.0
      %2354 = vmatprep.subr.mxu0 0.0
      %2355 = vmatpush1.msra.mxu0 0.0
      %2356 = vmatprep.subr.mxu0 0.0
      %2357 = vmatpush1.msra.mxu0 0.0
      %2358 = vmatprep.subr.mxu0 0.0
      %2359 = vmatpush1.msra.mxu0 0.0
      %2360 = vmatprep.subr.mxu0 0.0
      %2361 = vmatpush1.msra.mxu0 0.0
      %2362 = vmatprep.subr.mxu0 0.0
      %2363 = vmatpush1.msra.mxu0 0.0
      %2364 = vmatprep.subr.mxu0 0.0
      %2365 = vmatpush1.msra.mxu0 0.0
      %2366 = vmatprep.subr.mxu0 0.0
      %2367 = vmatpush1.msra.mxu0 0.0
      %2368 = vmatprep.subr.mxu0 0.0
      %2369 = vmatpush1.msra.mxu0 0.0
      %2370 = vmatprep.subr.mxu0 0.0
      %2371 = vmatpush1.msra.mxu0 0.0
      %2372 = vmatprep.subr.mxu0 0.0
      %2373 = vmatpush1.msra.mxu0 %v2340
      %2374 = vmatprep.subr.mxu0 0.0
      %2375 = vmatpush2.msra.mxu0 0.0
      %2376 = vmatprep.subr.mxu0 0.0
      %2377 = vmatpush2.msra.mxu0 0.0
      %2378 = vmatprep.subr.mxu0 0.0
      %2379 = vmatpush2.msra.mxu0 0.0
      %2380 = vmatprep.subr.mxu0 0.0
      %2381 = vmatpush2.msra.mxu0 0.0
      %2382 = vmatprep.subr.mxu0 0.0
      %2383 = vmatpush2.msra.mxu0 0.0
      %2384 = vmatprep.subr.mxu0 0.0
      %2385 = vmatpush2.msra.mxu0 0.0
      %2386 = vmatprep.subr.mxu0 0.0
      %2387 = vmatpush2.msra.mxu0 0.0
      %2388 = vmatprep.subr.mxu0 0.0
      %2389 = vmatpush2.msra.mxu0 0.0
      %2390 = vmatprep.subr.mxu0 0.0
      %2391 = vmatpush2.msra.mxu0 0.0
      %2392 = vmatprep.subr.mxu0 0.0
      %2393 = vmatpush2.msra.mxu0 0.0
      %2394 = vmatprep.subr.mxu0 0.0
      %2395 = vmatpush2.msra.mxu0 0.0
      %2396 = vmatprep.subr.mxu0 0.0
      %2397 = vmatpush2.msra.mxu0 0.0
      %2398 = vmatprep.subr.mxu0 0.0
      %2399 = vmatpush2.msra.mxu0 0.0
      %2400 = vmatprep.subr.mxu0 0.0
      %2401 = vmatpush2.msra.mxu0 0.0
      %2402 = vmatprep.subr.mxu0 0.0
      %2403 = vmatpush2.msra.mxu0 0.0
      %2404 = vmatprep.subr.mxu0 0.0
      %2405 = vmatpush2.msra.mxu0 0.0
      %2406 = vmatprep.mubr.f32.mxu0 0.0
      %2407 = vmatmul.mubr.f32.gmra.mxu0 %v1450
      %v2408 = vpop.f32.mrf.mxu0
      %v2409 = vadd.f32 0.0, %v2408
      %v2410 = vpop.f32.mrf.mxu0
      %2411 = vmatprep.mubr.f32.mxu0 0.0
      %2412 = vmatmul.mubr.f32.gmra.mxu0 %v1452
      %v2413 = vpop.f32.mrf.mxu0
      %v2414 = vadd.f32 0.0, %v2413
      %v2415 = vpop.f32.mrf.mxu0
      %2416 = vmatprep.mubr.f32.mxu0 0.0
      %2417 = vmatmul.mubr.f32.gmra.mxu0 %v1454
      %v2418 = vpop.f32.mrf.mxu0
      %v2419 = vadd.f32 0.0, %v2418
      %v2420 = vpop.f32.mrf.mxu0
      %2421 = vmatprep.mubr.f32.mxu0 0.0
      %2422 = vmatmul.mubr.f32.gmra.mxu0 %v1456
      %v2423 = vpop.f32.mrf.mxu0
      %v2424 = vadd.f32 0.0, %v2423
      %v2425 = vpop.f32.mrf.mxu0
      %2426 = vmatprep.mubr.f32.mxu0 0.0
      %2427 = vmatmul.mubr.f32.gmra.mxu0 %v1458
      %v2428 = vpop.f32.mrf.mxu0
      %v2429 = vadd.f32 0.0, %v2428
      %v2430 = vpop.f32.mrf.mxu0
      %2431 = vmatprep.mubr.f32.mxu0 0.0
      %2432 = vmatmul.mubr.f32.gmra.mxu0 %v1460
      %v2433 = vpop.f32.mrf.mxu0
      %v2434 = vadd.f32 0.0, %v2433
      %v2435 = vpop.f32.mrf.mxu0
      %2436 = vmatprep.mubr.f32.mxu0 0.0
      %2437 = vmatmul.mubr.f32.gmra.mxu0 %v1462
      %v2438 = vpop.f32.mrf.mxu0
      %v2439 = vadd.f32 0.0, %v2438
      %v2440 = vpop.f32.mrf.mxu0
      %2441 = vmatprep.mubr.f32.mxu0 0.0
      %2442 = vmatmul.mubr.f32.gmra.mxu0 %v1464
      %v2443 = vpop.f32.mrf.mxu0
      %v2444 = vadd.f32 0.0, %v2443
      %v2445 = vpop.f32.mrf.mxu0
      %2446 = vmatprep.mubr.f32.mxu0 0.0
      %2447 = vmatmul.mubr.f32.gmra.mxu0 %v1466
      %v2448 = vpop.f32.mrf.mxu0
      %v2449 = vadd.f32 0.0, %v2448
      %v2450 = vpop.f32.mrf.mxu0
      %2451 = vmatprep.mubr.f32.mxu0 0.0
      %2452 = vmatmul.mubr.f32.gmra.mxu0 %v1468
      %v2453 = vpop.f32.mrf.mxu0
      %v2454 = vadd.f32 0.0, %v2453
      %v2455 = vpop.f32.mrf.mxu0
      %2456 = vmatprep.mubr.f32.mxu0 0.0
      %2457 = vmatmul.mubr.f32.gmra.mxu0 %v1470
      %v2458 = vpop.f32.mrf.mxu0
      %v2459 = vadd.f32 0.0, %v2458
      %v2460 = vpop.f32.mrf.mxu0
      %2461 = vmatprep.mubr.f32.mxu0 0.0
      %2462 = vmatmul.mubr.f32.gmra.mxu0 %v1472
      %v2463 = vpop.f32.mrf.mxu0
      %v2464 = vadd.f32 0.0, %v2463
      %v2465 = vpop.f32.mrf.mxu0
      %2466 = vmatprep.mubr.f32.mxu0 0.0
      %2467 = vmatmul.mubr.f32.gmra.mxu0 %v1474
      %v2468 = vpop.f32.mrf.mxu0
      %v2469 = vadd.f32 0.0, %v2468
      %v2470 = vpop.f32.mrf.mxu0
      %2471 = vmatprep.mubr.f32.mxu0 0.0
      %2472 = vmatmul.mubr.f32.gmra.mxu0 %v1476
      %v2473 = vpop.f32.mrf.mxu0
      %v2474 = vadd.f32 0.0, %v2473
      %v2475 = vpop.f32.mrf.mxu0
      %2476 = vmatprep.mubr.f32.mxu0 0.0
      %2477 = vmatmul.mubr.f32.gmra.mxu0 %v1478
      %v2478 = vpop.f32.mrf.mxu0
      %v2479 = vadd.f32 0.0, %v2478
      %v2480 = vpop.f32.mrf.mxu0
      %2481 = vmatprep.mubr.f32.mxu0 0.0
      %2482 = vmatmul.mubr.f32.gmra.mxu0 %v1480
      %v2483 = vpop.f32.mrf.mxu0
      %v2484 = vadd.f32 0.0, %v2483
      %v2485 = vpop.f32.mrf.mxu0
      %2486 = vmatprep.mubr.f32.mxu0 0.0
      %2487 = vmatmul.mubr.f32.gmra.mxu0 %v1482
      %v2488 = vpop.f32.mrf.mxu0
      %v2489 = vadd.f32 0.0, %v2488
      %v2490 = vpop.f32.mrf.mxu0
      %2491 = vmatprep.mubr.f32.mxu0 0.0
      %2492 = vmatmul.mubr.f32.gmra.mxu0 %v1484
      %v2493 = vpop.f32.mrf.mxu0
      %v2494 = vadd.f32 0.0, %v2493
      %v2495 = vpop.f32.mrf.mxu0
      %2496 = vmatprep.mubr.f32.mxu0 0.0
      %2497 = vmatmul.mubr.f32.gmra.mxu0 %v1486
      %v2498 = vpop.f32.mrf.mxu0
      %v2499 = vadd.f32 0.0, %v2498
      %v2500 = vpop.f32.mrf.mxu0
      %2501 = vmatprep.mubr.f32.mxu0 0.0
      %2502 = vmatmul.mubr.f32.gmra.mxu0 %v1488
      %v2503 = vpop.f32.mrf.mxu0
      %v2504 = vadd.f32 0.0, %v2503
      %v2505 = vpop.f32.mrf.mxu0
      %2506 = vmatprep.mubr.f32.mxu0 0.0
      %2507 = vmatmul.mubr.f32.gmra.mxu0 %v1490
      %v2508 = vpop.f32.mrf.mxu0
      %v2509 = vadd.f32 0.0, %v2508
      %v2510 = vpop.f32.mrf.mxu0
      %2511 = vmatprep.mubr.f32.mxu0 0.0
      %2512 = vmatmul.mubr.f32.gmra.mxu0 %v1492
      %v2513 = vpop.f32.mrf.mxu0
      %v2514 = vadd.f32 0.0, %v2513
      %v2515 = vpop.f32.mrf.mxu0
      %2516 = vmatprep.mubr.f32.mxu0 0.0
      %2517 = vmatmul.mubr.f32.gmra.mxu0 %v1494
      %v2518 = vpop.f32.mrf.mxu0
      %v2519 = vadd.f32 0.0, %v2518
      %v2520 = vpop.f32.mrf.mxu0
      %2521 = vmatprep.mubr.f32.mxu0 0.0
      %2522 = vmatmul.mubr.f32.gmra.mxu0 %v1496
      %v2523 = vpop.f32.mrf.mxu0
      %v2524 = vadd.f32 0.0, %v2523
      %v2525 = vpop.f32.mrf.mxu0
      %2526 = vmatprep.mubr.f32.mxu0 0.0
      %2527 = vmatmul.mubr.f32.gmra.mxu0 %v1498
      %v2528 = vpop.f32.mrf.mxu0
      %v2529 = vadd.f32 0.0, %v2528
      %v2530 = vpop.f32.mrf.mxu0
      %2531 = vmatprep.mubr.f32.mxu0 0.0
      %2532 = vmatmul.mubr.f32.gmra.mxu0 %v1500
      %v2533 = vpop.f32.mrf.mxu0
      %v2534 = vadd.f32 0.0, %v2533
      %v2535 = vpop.f32.mrf.mxu0
      %2536 = vmatprep.mubr.f32.mxu0 0.0
      %2537 = vmatmul.mubr.f32.gmra.mxu0 %v1502
      %v2538 = vpop.f32.mrf.mxu0
      %v2539 = vadd.f32 0.0, %v2538
      %v2540 = vpop.f32.mrf.mxu0
      %2541 = vmatprep.mubr.f32.mxu0 0.0
      %2542 = vmatmul.mubr.f32.gmra.mxu0 %v1504
      %v2543 = vpop.f32.mrf.mxu0
      %v2544 = vadd.f32 0.0, %v2543
      %v2545 = vpop.f32.mrf.mxu0
      %2546 = vmatprep.mubr.f32.mxu0 0.0
      %2547 = vmatmul.mubr.f32.gmra.mxu0 %v2331
      %v2548 = vpop.f32.mrf.mxu0
      %v2549 = vadd.f32 0.0, %v2548
      %v2550 = vpop.f32.mrf.mxu0
      %2551 = vmatprep.mubr.f32.mxu0 0.0
      %2552 = vmatmul.mubr.f32.gmra.mxu0 %v2333
      %v2553 = vpop.f32.mrf.mxu0
      %v2554 = vadd.f32 0.0, %v2553
      %v2555 = vpop.f32.mrf.mxu0
      %2556 = vmatprep.mubr.f32.mxu0 0.0
      %2557 = vmatmul.mubr.f32.gmra.mxu0 %v2335
      %v2558 = vpop.f32.mrf.mxu0
      %v2559 = vadd.f32 0.0, %v2558
      %v2560 = vpop.f32.mrf.mxu0
      %2561 = vmatprep.mubr.f32.mxu0 0.0
      %2562 = vmatmul.mubr.f32.gmra.mxu0 %v2337
      %v2563 = vpop.f32.mrf.mxu0
      %v2564 = vadd.f32 0.0, %v2563
      %v2565 = vpop.f32.mrf.mxu0
      %2566 = vdwg.mxu0
      %v2567 = vadd.f32 %v2288, %v2409
      %v2568 = vadd.f32 %v2289, %v2414
      %v2569 = vadd.f32 %v2290, %v2419
      %v2570 = vadd.f32 %v2291, %v2424
      %v2571 = vadd.f32 %v2292, %v2429
      %v2572 = vadd.f32 %v2293, %v2434
      %v2573 = vadd.f32 %v2294, %v2439
      %v2574 = vadd.f32 %v2295, %v2444
      %v2575 = vadd.f32 %v2296, %v2449
      %v2576 = vadd.f32 %v2297, %v2454
      %v2577 = vadd.f32 %v2298, %v2459
      %v2578 = vadd.f32 %v2299, %v2464
      %v2579 = vadd.f32 %v2300, %v2469
      %v2580 = vadd.f32 %v2301, %v2474
      %v2581 = vadd.f32 %v2302, %v2479
      %v2582 = vadd.f32 %v2303, %v2484
      %v2583 = vadd.f32 %v2304, %v2489
      %v2584 = vadd.f32 %v2305, %v2494
      %v2585 = vadd.f32 %v2306, %v2499
      %v2586 = vadd.f32 %v2307, %v2504
      %v2587 = vadd.f32 %v2308, %v2509
      %v2588 = vadd.f32 %v2309, %v2514
      %v2589 = vadd.f32 %v2310, %v2519
      %v2590 = vadd.f32 %v2311, %v2524
      %v2591 = vadd.f32 %v2312, %v2529
      %v2592 = vadd.f32 %v2313, %v2534
      %v2593 = vadd.f32 %v2314, %v2539
      %v2594 = vadd.f32 %v2315, %v2544
      %v2595 = vadd.f32 %v2316, %v2549
      %v2596 = vadd.f32 %v2317, %v2554
      %v2597 = vadd.f32 %v2318, %v2559
      %v2598 = vadd.f32 %v2319, %v2564
      %s2599 = scalar_lea.vmem %s3, 24
      %v2600 = vld [vmem:[%s2599] sm:$0xf]
      %v2602 = vsel %vm781, %v660, 0
      %v2605 = vsel %vm781, %v661, 0
      %v2608 = vsel %vm781, %v662, 0
      %v2611 = vsel %vm781, %v663, 0
      %v2614 = vsel %vm846, %v2600, 0
      %2616 = vmatprep.subr.mxu0 0.0
      %2617 = vmatpush1.msra.mxu0 0.0
      %2618 = vmatprep.subr.mxu0 0.0
      %2619 = vmatpush1.msra.mxu0 0.0
      %2620 = vmatprep.subr.mxu0 0.0
      %2621 = vmatpush1.msra.mxu0 0.0
      %2622 = vmatprep.subr.mxu0 0.0
      %2623 = vmatpush1.msra.mxu0 0.0
      %2624 = vmatprep.subr.mxu0 0.0
      %2625 = vmatpush1.msra.mxu0 0.0
      %2626 = vmatprep.subr.mxu0 0.0
      %2627 = vmatpush1.msra.mxu0 0.0
      %2628 = vmatprep.subr.mxu0 0.0
      %2629 = vmatpush1.msra.mxu0 0.0
      %2630 = vmatprep.subr.mxu0 0.0
      %2631 = vmatpush1.msra.mxu0 0.0
      %2632 = vmatprep.subr.mxu0 0.0
      %2633 = vmatpush1.msra.mxu0 0.0
      %2634 = vmatprep.subr.mxu0 0.0
      %2635 = vmatpush1.msra.mxu0 0.0
      %2636 = vmatprep.subr.mxu0 0.0
      %2637 = vmatpush1.msra.mxu0 0.0
      %2638 = vmatprep.subr.mxu0 0.0
      %2639 = vmatpush1.msra.mxu0 0.0
      %2640 = vmatprep.subr.mxu0 0.0
      %2641 = vmatpush1.msra.mxu0 0.0
      %2642 = vmatprep.subr.mxu0 0.0
      %2643 = vmatpush1.msra.mxu0 0.0
      %2644 = vmatprep.subr.mxu0 0.0
      %2645 = vmatpush1.msra.mxu0 0.0
      %2646 = vmatprep.subr.mxu0 0.0
      %2647 = vmatpush1.msra.mxu0 %v2614
      %2648 = vmatprep.subr.mxu0 0.0
      %2649 = vmatpush2.msra.mxu0 0.0
      %2650 = vmatprep.subr.mxu0 0.0
      %2651 = vmatpush2.msra.mxu0 0.0
      %2652 = vmatprep.subr.mxu0 0.0
      %2653 = vmatpush2.msra.mxu0 0.0
      %2654 = vmatprep.subr.mxu0 0.0
      %2655 = vmatpush2.msra.mxu0 0.0
      %2656 = vmatprep.subr.mxu0 0.0
      %2657 = vmatpush2.msra.mxu0 0.0
      %2658 = vmatprep.subr.mxu0 0.0
      %2659 = vmatpush2.msra.mxu0 0.0
      %2660 = vmatprep.subr.mxu0 0.0
      %2661 = vmatpush2.msra.mxu0 0.0
      %2662 = vmatprep.subr.mxu0 0.0
      %2663 = vmatpush2.msra.mxu0 0.0
      %2664 = vmatprep.subr.mxu0 0.0
      %2665 = vmatpush2.msra.mxu0 0.0
      %2666 = vmatprep.subr.mxu0 0.0
      %2667 = vmatpush2.msra.mxu0 0.0
      %2668 = vmatprep.subr.mxu0 0.0
      %2669 = vmatpush2.msra.mxu0 0.0
      %2670 = vmatprep.subr.mxu0 0.0
      %2671 = vmatpush2.msra.mxu0 0.0
      %2672 = vmatprep.subr.mxu0 0.0
      %2673 = vmatpush2.msra.mxu0 0.0
      %2674 = vmatprep.subr.mxu0 0.0
      %2675 = vmatpush2.msra.mxu0 0.0
      %2676 = vmatprep.subr.mxu0 0.0
      %2677 = vmatpush2.msra.mxu0 0.0
      %2678 = vmatprep.subr.mxu0 0.0
      %2679 = vmatpush2.msra.mxu0 0.0
      %2680 = vmatprep.mubr.f32.mxu0 0.0
      %2681 = vmatmul.mubr.f32.gmra.mxu0 %v1091
      %v2682 = vpop.f32.mrf.mxu0
      %v2683 = vadd.f32 0.0, %v2682
      %v2684 = vpop.f32.mrf.mxu0
      %2685 = vmatprep.mubr.f32.mxu0 0.0
      %2686 = vmatmul.mubr.f32.gmra.mxu0 %v1093
      %v2687 = vpop.f32.mrf.mxu0
      %v2688 = vadd.f32 0.0, %v2687
      %v2689 = vpop.f32.mrf.mxu0
      %2690 = vmatprep.mubr.f32.mxu0 0.0
      %2691 = vmatmul.mubr.f32.gmra.mxu0 %v1095
      %v2692 = vpop.f32.mrf.mxu0
      %v2693 = vadd.f32 0.0, %v2692
      %v2694 = vpop.f32.mrf.mxu0
      %2695 = vmatprep.mubr.f32.mxu0 0.0
      %2696 = vmatmul.mubr.f32.gmra.mxu0 %v1097
      %v2697 = vpop.f32.mrf.mxu0
      %v2698 = vadd.f32 0.0, %v2697
      %v2699 = vpop.f32.mrf.mxu0
      %2700 = vmatprep.mubr.f32.mxu0 0.0
      %2701 = vmatmul.mubr.f32.gmra.mxu0 %v1099
      %v2702 = vpop.f32.mrf.mxu0
      %v2703 = vadd.f32 0.0, %v2702
      %v2704 = vpop.f32.mrf.mxu0
      %2705 = vmatprep.mubr.f32.mxu0 0.0
      %2706 = vmatmul.mubr.f32.gmra.mxu0 %v1101
      %v2707 = vpop.f32.mrf.mxu0
      %v2708 = vadd.f32 0.0, %v2707
      %v2709 = vpop.f32.mrf.mxu0
      %2710 = vmatprep.mubr.f32.mxu0 0.0
      %2711 = vmatmul.mubr.f32.gmra.mxu0 %v1103
      %v2712 = vpop.f32.mrf.mxu0
      %v2713 = vadd.f32 0.0, %v2712
      %v2714 = vpop.f32.mrf.mxu0
      %2715 = vmatprep.mubr.f32.mxu0 0.0
      %2716 = vmatmul.mubr.f32.gmra.mxu0 %v1105
      %v2717 = vpop.f32.mrf.mxu0
      %v2718 = vadd.f32 0.0, %v2717
      %v2719 = vpop.f32.mrf.mxu0
      %2720 = vmatprep.mubr.f32.mxu0 0.0
      %2721 = vmatmul.mubr.f32.gmra.mxu0 %v1107
      %v2722 = vpop.f32.mrf.mxu0
      %v2723 = vadd.f32 0.0, %v2722
      %v2724 = vpop.f32.mrf.mxu0
      %2725 = vmatprep.mubr.f32.mxu0 0.0
      %2726 = vmatmul.mubr.f32.gmra.mxu0 %v1109
      %v2727 = vpop.f32.mrf.mxu0
      %v2728 = vadd.f32 0.0, %v2727
      %v2729 = vpop.f32.mrf.mxu0
      %2730 = vmatprep.mubr.f32.mxu0 0.0
      %2731 = vmatmul.mubr.f32.gmra.mxu0 %v1111
      %v2732 = vpop.f32.mrf.mxu0
      %v2733 = vadd.f32 0.0, %v2732
      %v2734 = vpop.f32.mrf.mxu0
      %2735 = vmatprep.mubr.f32.mxu0 0.0
      %2736 = vmatmul.mubr.f32.gmra.mxu0 %v1113
      %v2737 = vpop.f32.mrf.mxu0
      %v2738 = vadd.f32 0.0, %v2737
      %v2739 = vpop.f32.mrf.mxu0
      %2740 = vmatprep.mubr.f32.mxu0 0.0
      %2741 = vmatmul.mubr.f32.gmra.mxu0 %v1115
      %v2742 = vpop.f32.mrf.mxu0
      %v2743 = vadd.f32 0.0, %v2742
      %v2744 = vpop.f32.mrf.mxu0
      %2745 = vmatprep.mubr.f32.mxu0 0.0
      %2746 = vmatmul.mubr.f32.gmra.mxu0 %v1117
      %v2747 = vpop.f32.mrf.mxu0
      %v2748 = vadd.f32 0.0, %v2747
      %v2749 = vpop.f32.mrf.mxu0
      %2750 = vmatprep.mubr.f32.mxu0 0.0
      %2751 = vmatmul.mubr.f32.gmra.mxu0 %v1119
      %v2752 = vpop.f32.mrf.mxu0
      %v2753 = vadd.f32 0.0, %v2752
      %v2754 = vpop.f32.mrf.mxu0
      %2755 = vmatprep.mubr.f32.mxu0 0.0
      %2756 = vmatmul.mubr.f32.gmra.mxu0 %v1121
      %v2757 = vpop.f32.mrf.mxu0
      %v2758 = vadd.f32 0.0, %v2757
      %v2759 = vpop.f32.mrf.mxu0
      %2760 = vmatprep.mubr.f32.mxu0 0.0
      %2761 = vmatmul.mubr.f32.gmra.mxu0 %v1123
      %v2762 = vpop.f32.mrf.mxu0
      %v2763 = vadd.f32 0.0, %v2762
      %v2764 = vpop.f32.mrf.mxu0
      %2765 = vmatprep.mubr.f32.mxu0 0.0
      %2766 = vmatmul.mubr.f32.gmra.mxu0 %v1125
      %v2767 = vpop.f32.mrf.mxu0
      %v2768 = vadd.f32 0.0, %v2767
      %v2769 = vpop.f32.mrf.mxu0
      %2770 = vmatprep.mubr.f32.mxu0 0.0
      %2771 = vmatmul.mubr.f32.gmra.mxu0 %v1127
      %v2772 = vpop.f32.mrf.mxu0
      %v2773 = vadd.f32 0.0, %v2772
      %v2774 = vpop.f32.mrf.mxu0
      %2775 = vmatprep.mubr.f32.mxu0 0.0
      %2776 = vmatmul.mubr.f32.gmra.mxu0 %v1129
      %v2777 = vpop.f32.mrf.mxu0
      %v2778 = vadd.f32 0.0, %v2777
      %v2779 = vpop.f32.mrf.mxu0
      %2780 = vmatprep.mubr.f32.mxu0 0.0
      %2781 = vmatmul.mubr.f32.gmra.mxu0 %v1131
      %v2782 = vpop.f32.mrf.mxu0
      %v2783 = vadd.f32 0.0, %v2782
      %v2784 = vpop.f32.mrf.mxu0
      %2785 = vmatprep.mubr.f32.mxu0 0.0
      %2786 = vmatmul.mubr.f32.gmra.mxu0 %v1133
      %v2787 = vpop.f32.mrf.mxu0
      %v2788 = vadd.f32 0.0, %v2787
      %v2789 = vpop.f32.mrf.mxu0
      %2790 = vmatprep.mubr.f32.mxu0 0.0
      %2791 = vmatmul.mubr.f32.gmra.mxu0 %v1135
      %v2792 = vpop.f32.mrf.mxu0
      %v2793 = vadd.f32 0.0, %v2792
      %v2794 = vpop.f32.mrf.mxu0
      %2795 = vmatprep.mubr.f32.mxu0 0.0
      %2796 = vmatmul.mubr.f32.gmra.mxu0 %v1137
      %v2797 = vpop.f32.mrf.mxu0
      %v2798 = vadd.f32 0.0, %v2797
      %v2799 = vpop.f32.mrf.mxu0
      %2800 = vmatprep.mubr.f32.mxu0 0.0
      %2801 = vmatmul.mubr.f32.gmra.mxu0 %v1769
      %v2802 = vpop.f32.mrf.mxu0
      %v2803 = vadd.f32 0.0, %v2802
      %v2804 = vpop.f32.mrf.mxu0
      %2805 = vmatprep.mubr.f32.mxu0 0.0
      %2806 = vmatmul.mubr.f32.gmra.mxu0 %v1772
      %v2807 = vpop.f32.mrf.mxu0
      %v2808 = vadd.f32 0.0, %v2807
      %v2809 = vpop.f32.mrf.mxu0
      %2810 = vmatprep.mubr.f32.mxu0 0.0
      %2811 = vmatmul.mubr.f32.gmra.mxu0 %v1775
      %v2812 = vpop.f32.mrf.mxu0
      %v2813 = vadd.f32 0.0, %v2812
      %v2814 = vpop.f32.mrf.mxu0
      %2815 = vmatprep.mubr.f32.mxu0 0.0
      %2816 = vmatmul.mubr.f32.gmra.mxu0 %v1778
      %v2817 = vpop.f32.mrf.mxu0
      %v2818 = vadd.f32 0.0, %v2817
      %v2819 = vpop.f32.mrf.mxu0
      %2820 = vmatprep.mubr.f32.mxu0 0.0
      %2821 = vmatmul.mubr.f32.gmra.mxu0 %v2602
      %v2822 = vpop.f32.mrf.mxu0
      %v2823 = vadd.f32 0.0, %v2822
      %v2824 = vpop.f32.mrf.mxu0
      %2825 = vmatprep.mubr.f32.mxu0 0.0
      %2826 = vmatmul.mubr.f32.gmra.mxu0 %v2605
      %v2827 = vpop.f32.mrf.mxu0
      %v2828 = vadd.f32 0.0, %v2827
      %v2829 = vpop.f32.mrf.mxu0
      %2830 = vmatprep.mubr.f32.mxu0 0.0
      %2831 = vmatmul.mubr.f32.gmra.mxu0 %v2608
      %v2832 = vpop.f32.mrf.mxu0
      %v2833 = vadd.f32 0.0, %v2832
      %v2834 = vpop.f32.mrf.mxu0
      %2835 = vmatprep.mubr.f32.mxu0 0.0
      %2836 = vmatmul.mubr.f32.gmra.mxu0 %v2611
      %v2837 = vpop.f32.mrf.mxu0
      %v2838 = vadd.f32 0.0, %v2837
      %v2839 = vpop.f32.mrf.mxu0
      %2840 = vdwg.mxu0
      %v2841 = vadd.f32 %v2567, %v2683
      %v2842 = vadd.f32 %v2568, %v2688
      %v2843 = vadd.f32 %v2569, %v2693
      %v2844 = vadd.f32 %v2570, %v2698
      %v2845 = vadd.f32 %v2571, %v2703
      %v2846 = vadd.f32 %v2572, %v2708
      %v2847 = vadd.f32 %v2573, %v2713
      %v2848 = vadd.f32 %v2574, %v2718
      %v2849 = vadd.f32 %v2575, %v2723
      %v2850 = vadd.f32 %v2576, %v2728
      %v2851 = vadd.f32 %v2577, %v2733
      %v2852 = vadd.f32 %v2578, %v2738
      %v2853 = vadd.f32 %v2579, %v2743
      %v2854 = vadd.f32 %v2580, %v2748
      %v2855 = vadd.f32 %v2581, %v2753
      %v2856 = vadd.f32 %v2582, %v2758
      %v2857 = vadd.f32 %v2583, %v2763
      %v2858 = vadd.f32 %v2584, %v2768
      %v2859 = vadd.f32 %v2585, %v2773
      %v2860 = vadd.f32 %v2586, %v2778
      %v2861 = vadd.f32 %v2587, %v2783
      %v2862 = vadd.f32 %v2588, %v2788
      %v2863 = vadd.f32 %v2589, %v2793
      %v2864 = vadd.f32 %v2590, %v2798
      %v2865 = vadd.f32 %v2591, %v2803
      %v2866 = vadd.f32 %v2592, %v2808
      %v2867 = vadd.f32 %v2593, %v2813
      %v2868 = vadd.f32 %v2594, %v2818
      %v2869 = vadd.f32 %v2595, %v2823
      %v2870 = vadd.f32 %v2596, %v2828
      %v2871 = vadd.f32 %v2597, %v2833
      %v2872 = vadd.f32 %v2598, %v2838
      %v2874 = vrot.slane %v660, 1
      %v2875 = vrot.slane %v661, 1
      %v2876 = vsel %vm706, %v2874, %v2875
      %v2877 = vrot.slane %v662, 1
      %v2878 = vsel %vm706, %v2875, %v2877
      %v2879 = vrot.slane %v663, 1
      %v2880 = vsel %vm706, %v2877, %v2879
      %v2881 = vrot.slane %v664, 1
      %v2882 = vsel %vm706, %v2879, %v2881
      %s2883 = scalar_lea.vmem %s3, 28
      %v2884 = vld [vmem:[%s2883] sm:$0xf]
      %v2885 = vsel %vm781, %v2876, 0
      %v2887 = vsel %vm781, %v2878, 0
      %v2889 = vsel %vm781, %v2880, 0
      %v2891 = vsel %vm781, %v2882, 0
      %v2894 = vsel %vm846, %v2884, 0
      %2896 = vmatprep.subr.mxu0 0.0
      %2897 = vmatpush1.msra.mxu0 0.0
      %2898 = vmatprep.subr.mxu0 0.0
      %2899 = vmatpush1.msra.mxu0 0.0
      %2900 = vmatprep.subr.mxu0 0.0
      %2901 = vmatpush1.msra.mxu0 0.0
      %2902 = vmatprep.subr.mxu0 0.0
      %2903 = vmatpush1.msra.mxu0 0.0
      %2904 = vmatprep.subr.mxu0 0.0
      %2905 = vmatpush1.msra.mxu0 0.0
      %2906 = vmatprep.subr.mxu0 0.0
      %2907 = vmatpush1.msra.mxu0 0.0
      %2908 = vmatprep.subr.mxu0 0.0
      %2909 = vmatpush1.msra.mxu0 0.0
      %2910 = vmatprep.subr.mxu0 0.0
      %2911 = vmatpush1.msra.mxu0 0.0
      %2912 = vmatprep.subr.mxu0 0.0
      %2913 = vmatpush1.msra.mxu0 0.0
      %2914 = vmatprep.subr.mxu0 0.0
      %2915 = vmatpush1.msra.mxu0 0.0
      %2916 = vmatprep.subr.mxu0 0.0
      %2917 = vmatpush1.msra.mxu0 0.0
      %2918 = vmatprep.subr.mxu0 0.0
      %2919 = vmatpush1.msra.mxu0 0.0
      %2920 = vmatprep.subr.mxu0 0.0
      %2921 = vmatpush1.msra.mxu0 0.0
      %2922 = vmatprep.subr.mxu0 0.0
      %2923 = vmatpush1.msra.mxu0 0.0
      %2924 = vmatprep.subr.mxu0 0.0
      %2925 = vmatpush1.msra.mxu0 0.0
      %2926 = vmatprep.subr.mxu0 0.0
      %2927 = vmatpush1.msra.mxu0 %v2894
      %2928 = vmatprep.subr.mxu0 0.0
      %2929 = vmatpush2.msra.mxu0 0.0
      %2930 = vmatprep.subr.mxu0 0.0
      %2931 = vmatpush2.msra.mxu0 0.0
      %2932 = vmatprep.subr.mxu0 0.0
      %2933 = vmatpush2.msra.mxu0 0.0
      %2934 = vmatprep.subr.mxu0 0.0
      %2935 = vmatpush2.msra.mxu0 0.0
      %2936 = vmatprep.subr.mxu0 0.0
      %2937 = vmatpush2.msra.mxu0 0.0
      %2938 = vmatprep.subr.mxu0 0.0
      %2939 = vmatpush2.msra.mxu0 0.0
      %2940 = vmatprep.subr.mxu0 0.0
      %2941 = vmatpush2.msra.mxu0 0.0
      %2942 = vmatprep.subr.mxu0 0.0
      %2943 = vmatpush2.msra.mxu0 0.0
      %2944 = vmatprep.subr.mxu0 0.0
      %2945 = vmatpush2.msra.mxu0 0.0
      %2946 = vmatprep.subr.mxu0 0.0
      %2947 = vmatpush2.msra.mxu0 0.0
      %2948 = vmatprep.subr.mxu0 0.0
      %2949 = vmatpush2.msra.mxu0 0.0
      %2950 = vmatprep.subr.mxu0 0.0
      %2951 = vmatpush2.msra.mxu0 0.0
      %2952 = vmatprep.subr.mxu0 0.0
      %2953 = vmatpush2.msra.mxu0 0.0
      %2954 = vmatprep.subr.mxu0 0.0
      %2955 = vmatpush2.msra.mxu0 0.0
      %2956 = vmatprep.subr.mxu0 0.0
      %2957 = vmatpush2.msra.mxu0 0.0
      %2958 = vmatprep.subr.mxu0 0.0
      %2959 = vmatpush2.msra.mxu0 0.0
      %2960 = vmatprep.mubr.f32.mxu0 0.0
      %2961 = vmatmul.mubr.f32.gmra.mxu0 %v798
      %v2962 = vpop.f32.mrf.mxu0
      %v2963 = vadd.f32 0.0, %v2962
      %v2964 = vpop.f32.mrf.mxu0
      %2965 = vmatprep.mubr.f32.mxu0 0.0
      %2966 = vmatmul.mubr.f32.gmra.mxu0 %v800
      %v2967 = vpop.f32.mrf.mxu0
      %v2968 = vadd.f32 0.0, %v2967
      %v2969 = vpop.f32.mrf.mxu0
      %2970 = vmatprep.mubr.f32.mxu0 0.0
      %2971 = vmatmul.mubr.f32.gmra.mxu0 %v802
      %v2972 = vpop.f32.mrf.mxu0
      %v2973 = vadd.f32 0.0, %v2972
      %v2974 = vpop.f32.mrf.mxu0
      %2975 = vmatprep.mubr.f32.mxu0 0.0
      %2976 = vmatmul.mubr.f32.gmra.mxu0 %v804
      %v2977 = vpop.f32.mrf.mxu0
      %v2978 = vadd.f32 0.0, %v2977
      %v2979 = vpop.f32.mrf.mxu0
      %2980 = vmatprep.mubr.f32.mxu0 0.0
      %2981 = vmatmul.mubr.f32.gmra.mxu0 %v806
      %v2982 = vpop.f32.mrf.mxu0
      %v2983 = vadd.f32 0.0, %v2982
      %v2984 = vpop.f32.mrf.mxu0
      %2985 = vmatprep.mubr.f32.mxu0 0.0
      %2986 = vmatmul.mubr.f32.gmra.mxu0 %v808
      %v2987 = vpop.f32.mrf.mxu0
      %v2988 = vadd.f32 0.0, %v2987
      %v2989 = vpop.f32.mrf.mxu0
      %2990 = vmatprep.mubr.f32.mxu0 0.0
      %2991 = vmatmul.mubr.f32.gmra.mxu0 %v810
      %v2992 = vpop.f32.mrf.mxu0
      %v2993 = vadd.f32 0.0, %v2992
      %v2994 = vpop.f32.mrf.mxu0
      %2995 = vmatprep.mubr.f32.mxu0 0.0
      %2996 = vmatmul.mubr.f32.gmra.mxu0 %v812
      %v2997 = vpop.f32.mrf.mxu0
      %v2998 = vadd.f32 0.0, %v2997
      %v2999 = vpop.f32.mrf.mxu0
      %3000 = vmatprep.mubr.f32.mxu0 0.0
      %3001 = vmatmul.mubr.f32.gmra.mxu0 %v814
      %v3002 = vpop.f32.mrf.mxu0
      %v3003 = vadd.f32 0.0, %v3002
      %v3004 = vpop.f32.mrf.mxu0
      %3005 = vmatprep.mubr.f32.mxu0 0.0
      %3006 = vmatmul.mubr.f32.gmra.mxu0 %v816
      %v3007 = vpop.f32.mrf.mxu0
      %v3008 = vadd.f32 0.0, %v3007
      %v3009 = vpop.f32.mrf.mxu0
      %3010 = vmatprep.mubr.f32.mxu0 0.0
      %3011 = vmatmul.mubr.f32.gmra.mxu0 %v818
      %v3012 = vpop.f32.mrf.mxu0
      %v3013 = vadd.f32 0.0, %v3012
      %v3014 = vpop.f32.mrf.mxu0
      %3015 = vmatprep.mubr.f32.mxu0 0.0
      %3016 = vmatmul.mubr.f32.gmra.mxu0 %v820
      %v3017 = vpop.f32.mrf.mxu0
      %v3018 = vadd.f32 0.0, %v3017
      %v3019 = vpop.f32.mrf.mxu0
      %3020 = vmatprep.mubr.f32.mxu0 0.0
      %3021 = vmatmul.mubr.f32.gmra.mxu0 %v822
      %v3022 = vpop.f32.mrf.mxu0
      %v3023 = vadd.f32 0.0, %v3022
      %v3024 = vpop.f32.mrf.mxu0
      %3025 = vmatprep.mubr.f32.mxu0 0.0
      %3026 = vmatmul.mubr.f32.gmra.mxu0 %v824
      %v3027 = vpop.f32.mrf.mxu0
      %v3028 = vadd.f32 0.0, %v3027
      %v3029 = vpop.f32.mrf.mxu0
      %3030 = vmatprep.mubr.f32.mxu0 0.0
      %3031 = vmatmul.mubr.f32.gmra.mxu0 %v826
      %v3032 = vpop.f32.mrf.mxu0
      %v3033 = vadd.f32 0.0, %v3032
      %v3034 = vpop.f32.mrf.mxu0
      %3035 = vmatprep.mubr.f32.mxu0 0.0
      %3036 = vmatmul.mubr.f32.gmra.mxu0 %v828
      %v3037 = vpop.f32.mrf.mxu0
      %v3038 = vadd.f32 0.0, %v3037
      %v3039 = vpop.f32.mrf.mxu0
      %3040 = vmatprep.mubr.f32.mxu0 0.0
      %3041 = vmatmul.mubr.f32.gmra.mxu0 %v830
      %v3042 = vpop.f32.mrf.mxu0
      %v3043 = vadd.f32 0.0, %v3042
      %v3044 = vpop.f32.mrf.mxu0
      %3045 = vmatprep.mubr.f32.mxu0 0.0
      %3046 = vmatmul.mubr.f32.gmra.mxu0 %v832
      %v3047 = vpop.f32.mrf.mxu0
      %v3048 = vadd.f32 0.0, %v3047
      %v3049 = vpop.f32.mrf.mxu0
      %3050 = vmatprep.mubr.f32.mxu0 0.0
      %3051 = vmatmul.mubr.f32.gmra.mxu0 %v834
      %v3052 = vpop.f32.mrf.mxu0
      %v3053 = vadd.f32 0.0, %v3052
      %v3054 = vpop.f32.mrf.mxu0
      %3055 = vmatprep.mubr.f32.mxu0 0.0
      %3056 = vmatmul.mubr.f32.gmra.mxu0 %v836
      %v3057 = vpop.f32.mrf.mxu0
      %v3058 = vadd.f32 0.0, %v3057
      %v3059 = vpop.f32.mrf.mxu0
      %3060 = vmatprep.mubr.f32.mxu0 0.0
      %3061 = vmatmul.mubr.f32.gmra.mxu0 %v838
      %v3062 = vpop.f32.mrf.mxu0
      %v3063 = vadd.f32 0.0, %v3062
      %v3064 = vpop.f32.mrf.mxu0
      %3065 = vmatprep.mubr.f32.mxu0 0.0
      %3066 = vmatmul.mubr.f32.gmra.mxu0 %v840
      %v3067 = vpop.f32.mrf.mxu0
      %v3068 = vadd.f32 0.0, %v3067
      %v3069 = vpop.f32.mrf.mxu0
      %3070 = vmatprep.mubr.f32.mxu0 0.0
      %3071 = vmatmul.mubr.f32.gmra.mxu0 %v842
      %v3072 = vpop.f32.mrf.mxu0
      %v3073 = vadd.f32 0.0, %v3072
      %v3074 = vpop.f32.mrf.mxu0
      %3075 = vmatprep.mubr.f32.mxu0 0.0
      %3076 = vmatmul.mubr.f32.gmra.mxu0 %v844
      %v3077 = vpop.f32.mrf.mxu0
      %v3078 = vadd.f32 0.0, %v3077
      %v3079 = vpop.f32.mrf.mxu0
      %3080 = vmatprep.mubr.f32.mxu0 0.0
      %3081 = vmatmul.mubr.f32.gmra.mxu0 %v2052
      %v3082 = vpop.f32.mrf.mxu0
      %v3083 = vadd.f32 0.0, %v3082
      %v3084 = vpop.f32.mrf.mxu0
      %3085 = vmatprep.mubr.f32.mxu0 0.0
      %3086 = vmatmul.mubr.f32.gmra.mxu0 %v2054
      %v3087 = vpop.f32.mrf.mxu0
      %v3088 = vadd.f32 0.0, %v3087
      %v3089 = vpop.f32.mrf.mxu0
      %3090 = vmatprep.mubr.f32.mxu0 0.0
      %3091 = vmatmul.mubr.f32.gmra.mxu0 %v2056
      %v3092 = vpop.f32.mrf.mxu0
      %v3093 = vadd.f32 0.0, %v3092
      %v3094 = vpop.f32.mrf.mxu0
      %3095 = vmatprep.mubr.f32.mxu0 0.0
      %3096 = vmatmul.mubr.f32.gmra.mxu0 %v2058
      %v3097 = vpop.f32.mrf.mxu0
      %v3098 = vadd.f32 0.0, %v3097
      %v3099 = vpop.f32.mrf.mxu0
      %3100 = vmatprep.mubr.f32.mxu0 0.0
      %3101 = vmatmul.mubr.f32.gmra.mxu0 %v2885
      %v3102 = vpop.f32.mrf.mxu0
      %v3103 = vadd.f32 0.0, %v3102
      %v3104 = vpop.f32.mrf.mxu0
      %3105 = vmatprep.mubr.f32.mxu0 0.0
      %3106 = vmatmul.mubr.f32.gmra.mxu0 %v2887
      %v3107 = vpop.f32.mrf.mxu0
      %v3108 = vadd.f32 0.0, %v3107
      %v3109 = vpop.f32.mrf.mxu0
      %3110 = vmatprep.mubr.f32.mxu0 0.0
      %3111 = vmatmul.mubr.f32.gmra.mxu0 %v2889
      %v3112 = vpop.f32.mrf.mxu0
      %v3113 = vadd.f32 0.0, %v3112
      %v3114 = vpop.f32.mrf.mxu0
      %3115 = vmatprep.mubr.f32.mxu0 0.0
      %3116 = vmatmul.mubr.f32.gmra.mxu0 %v2891
      %v3117 = vpop.f32.mrf.mxu0
      %v3118 = vadd.f32 0.0, %v3117
      %v3119 = vpop.f32.mrf.mxu0
      %3120 = vdwg.mxu0
      %v3121 = vadd.f32 %v2841, %v2963
      %v3122 = vadd.f32 %v2842, %v2968
      %v3123 = vadd.f32 %v2843, %v2973
      %v3124 = vadd.f32 %v2844, %v2978
      %v3125 = vadd.f32 %v2845, %v2983
      %v3126 = vadd.f32 %v2846, %v2988
      %v3127 = vadd.f32 %v2847, %v2993
      %v3128 = vadd.f32 %v2848, %v2998
      %v3129 = vadd.f32 %v2849, %v3003
      %v3130 = vadd.f32 %v2850, %v3008
      %v3131 = vadd.f32 %v2851, %v3013
      %v3132 = vadd.f32 %v2852, %v3018
      %v3133 = vadd.f32 %v2853, %v3023
      %v3134 = vadd.f32 %v2854, %v3028
      %v3135 = vadd.f32 %v2855, %v3033
      %v3136 = vadd.f32 %v2856, %v3038
      %v3137 = vadd.f32 %v2857, %v3043
      %v3138 = vadd.f32 %v2858, %v3048
      %v3139 = vadd.f32 %v2859, %v3053
      %v3140 = vadd.f32 %v2860, %v3058
      %v3141 = vadd.f32 %v2861, %v3063
      %v3142 = vadd.f32 %v2862, %v3068
      %v3143 = vadd.f32 %v2863, %v3073
      %v3144 = vadd.f32 %v2864, %v3078
      %v3145 = vadd.f32 %v2865, %v3083
      %v3146 = vadd.f32 %v2866, %v3088
      %v3147 = vadd.f32 %v2867, %v3093
      %v3148 = vadd.f32 %v2868, %v3098
      %v3149 = vadd.f32 %v2869, %v3103
      %v3150 = vadd.f32 %v2870, %v3108
      %v3151 = vadd.f32 %v2871, %v3113
      %v3152 = vadd.f32 %v2872, %v3118
      %v3153 = vrot.slane %v660, 2
      %v3154 = vrot.slane %v661, 2
      %v3155 = vsel %vm1367, %v3153, %v3154
      %v3156 = vrot.slane %v662, 2
      %v3157 = vsel %vm1367, %v3154, %v3156
      %v3158 = vrot.slane %v663, 2
      %v3159 = vsel %vm1367, %v3156, %v3158
      %v3160 = vrot.slane %v664, 2
      %v3161 = vsel %vm1367, %v3158, %v3160
      %s3162 = scalar_lea.vmem %s3, 32
      %v3163 = vld [vmem:[%s3162] sm:$0xf]
      %v3164 = vsel %vm781, %v3155, 0
      %v3166 = vsel %vm781, %v3157, 0
      %v3168 = vsel %vm781, %v3159, 0
      %v3170 = vsel %vm781, %v3161, 0
      %v3173 = vsel %vm846, %v3163, 0
      %3175 = vmatprep.subr.mxu0 0.0
      %3176 = vmatpush1.msra.mxu0 0.0
      %3177 = vmatprep.subr.mxu0 0.0
      %3178 = vmatpush1.msra.mxu0 0.0
      %3179 = vmatprep.subr.mxu0 0.0
      %3180 = vmatpush1.msra.mxu0 0.0
      %3181 = vmatprep.subr.mxu0 0.0
      %3182 = vmatpush1.msra.mxu0 0.0
      %3183 = vmatprep.subr.mxu0 0.0
      %3184 = vmatpush1.msra.mxu0 0.0
      %3185 = vmatprep.subr.mxu0 0.0
      %3186 = vmatpush1.msra.mxu0 0.0
      %3187 = vmatprep.subr.mxu0 0.0
      %3188 = vmatpush1.msra.mxu0 0.0
      %3189 = vmatprep.subr.mxu0 0.0
      %3190 = vmatpush1.msra.mxu0 0.0
      %3191 = vmatprep.subr.mxu0 0.0
      %3192 = vmatpush1.msra.mxu0 0.0
      %3193 = vmatprep.subr.mxu0 0.0
      %3194 = vmatpush1.msra.mxu0 0.0
      %3195 = vmatprep.subr.mxu0 0.0
      %3196 = vmatpush1.msra.mxu0 0.0
      %3197 = vmatprep.subr.mxu0 0.0
      %3198 = vmatpush1.msra.mxu0 0.0
      %3199 = vmatprep.subr.mxu0 0.0
      %3200 = vmatpush1.msra.mxu0 0.0
      %3201 = vmatprep.subr.mxu0 0.0
      %3202 = vmatpush1.msra.mxu0 0.0
      %3203 = vmatprep.subr.mxu0 0.0
      %3204 = vmatpush1.msra.mxu0 0.0
      %3205 = vmatprep.subr.mxu0 0.0
      %3206 = vmatpush1.msra.mxu0 %v3173
      %3207 = vmatprep.subr.mxu0 0.0
      %3208 = vmatpush2.msra.mxu0 0.0
      %3209 = vmatprep.subr.mxu0 0.0
      %3210 = vmatpush2.msra.mxu0 0.0
      %3211 = vmatprep.subr.mxu0 0.0
      %3212 = vmatpush2.msra.mxu0 0.0
      %3213 = vmatprep.subr.mxu0 0.0
      %3214 = vmatpush2.msra.mxu0 0.0
      %3215 = vmatprep.subr.mxu0 0.0
      %3216 = vmatpush2.msra.mxu0 0.0
      %3217 = vmatprep.subr.mxu0 0.0
      %3218 = vmatpush2.msra.mxu0 0.0
      %3219 = vmatprep.subr.mxu0 0.0
      %3220 = vmatpush2.msra.mxu0 0.0
      %3221 = vmatprep.subr.mxu0 0.0
      %3222 = vmatpush2.msra.mxu0 0.0
      %3223 = vmatprep.subr.mxu0 0.0
      %3224 = vmatpush2.msra.mxu0 0.0
      %3225 = vmatprep.subr.mxu0 0.0
      %3226 = vmatpush2.msra.mxu0 0.0
      %3227 = vmatprep.subr.mxu0 0.0
      %3228 = vmatpush2.msra.mxu0 0.0
      %3229 = vmatprep.subr.mxu0 0.0
      %3230 = vmatpush2.msra.mxu0 0.0
      %3231 = vmatprep.subr.mxu0 0.0
      %3232 = vmatpush2.msra.mxu0 0.0
      %3233 = vmatprep.subr.mxu0 0.0
      %3234 = vmatpush2.msra.mxu0 0.0
      %3235 = vmatprep.subr.mxu0 0.0
      %3236 = vmatpush2.msra.mxu0 0.0
      %3237 = vmatprep.subr.mxu0 0.0
      %3238 = vmatpush2.msra.mxu0 0.0
      %3239 = vmatprep.mubr.f32.mxu0 0.0
      %3240 = vmatmul.mubr.f32.gmra.mxu0 %v1458
      %v3241 = vpop.f32.mrf.mxu0
      %v3242 = vadd.f32 0.0, %v3241
      %v3243 = vpop.f32.mrf.mxu0
      %3244 = vmatprep.mubr.f32.mxu0 0.0
      %3245 = vmatmul.mubr.f32.gmra.mxu0 %v1460
      %v3246 = vpop.f32.mrf.mxu0
      %v3247 = vadd.f32 0.0, %v3246
      %v3248 = vpop.f32.mrf.mxu0
      %3249 = vmatprep.mubr.f32.mxu0 0.0
      %3250 = vmatmul.mubr.f32.gmra.mxu0 %v1462
      %v3251 = vpop.f32.mrf.mxu0
      %v3252 = vadd.f32 0.0, %v3251
      %v3253 = vpop.f32.mrf.mxu0
      %3254 = vmatprep.mubr.f32.mxu0 0.0
      %3255 = vmatmul.mubr.f32.gmra.mxu0 %v1464
      %v3256 = vpop.f32.mrf.mxu0
      %v3257 = vadd.f32 0.0, %v3256
      %v3258 = vpop.f32.mrf.mxu0
      %3259 = vmatprep.mubr.f32.mxu0 0.0
      %3260 = vmatmul.mubr.f32.gmra.mxu0 %v1466
      %v3261 = vpop.f32.mrf.mxu0
      %v3262 = vadd.f32 0.0, %v3261
      %v3263 = vpop.f32.mrf.mxu0
      %3264 = vmatprep.mubr.f32.mxu0 0.0
      %3265 = vmatmul.mubr.f32.gmra.mxu0 %v1468
      %v3266 = vpop.f32.mrf.mxu0
      %v3267 = vadd.f32 0.0, %v3266
      %v3268 = vpop.f32.mrf.mxu0
      %3269 = vmatprep.mubr.f32.mxu0 0.0
      %3270 = vmatmul.mubr.f32.gmra.mxu0 %v1470
      %v3271 = vpop.f32.mrf.mxu0
      %v3272 = vadd.f32 0.0, %v3271
      %v3273 = vpop.f32.mrf.mxu0
      %3274 = vmatprep.mubr.f32.mxu0 0.0
      %3275 = vmatmul.mubr.f32.gmra.mxu0 %v1472
      %v3276 = vpop.f32.mrf.mxu0
      %v3277 = vadd.f32 0.0, %v3276
      %v3278 = vpop.f32.mrf.mxu0
      %3279 = vmatprep.mubr.f32.mxu0 0.0
      %3280 = vmatmul.mubr.f32.gmra.mxu0 %v1474
      %v3281 = vpop.f32.mrf.mxu0
      %v3282 = vadd.f32 0.0, %v3281
      %v3283 = vpop.f32.mrf.mxu0
      %3284 = vmatprep.mubr.f32.mxu0 0.0
      %3285 = vmatmul.mubr.f32.gmra.mxu0 %v1476
      %v3286 = vpop.f32.mrf.mxu0
      %v3287 = vadd.f32 0.0, %v3286
      %v3288 = vpop.f32.mrf.mxu0
      %3289 = vmatprep.mubr.f32.mxu0 0.0
      %3290 = vmatmul.mubr.f32.gmra.mxu0 %v1478
      %v3291 = vpop.f32.mrf.mxu0
      %v3292 = vadd.f32 0.0, %v3291
      %v3293 = vpop.f32.mrf.mxu0
      %3294 = vmatprep.mubr.f32.mxu0 0.0
      %3295 = vmatmul.mubr.f32.gmra.mxu0 %v1480
      %v3296 = vpop.f32.mrf.mxu0
      %v3297 = vadd.f32 0.0, %v3296
      %v3298 = vpop.f32.mrf.mxu0
      %3299 = vmatprep.mubr.f32.mxu0 0.0
      %3300 = vmatmul.mubr.f32.gmra.mxu0 %v1482
      %v3301 = vpop.f32.mrf.mxu0
      %v3302 = vadd.f32 0.0, %v3301
      %v3303 = vpop.f32.mrf.mxu0
      %3304 = vmatprep.mubr.f32.mxu0 0.0
      %3305 = vmatmul.mubr.f32.gmra.mxu0 %v1484
      %v3306 = vpop.f32.mrf.mxu0
      %v3307 = vadd.f32 0.0, %v3306
      %v3308 = vpop.f32.mrf.mxu0
      %3309 = vmatprep.mubr.f32.mxu0 0.0
      %3310 = vmatmul.mubr.f32.gmra.mxu0 %v1486
      %v3311 = vpop.f32.mrf.mxu0
      %v3312 = vadd.f32 0.0, %v3311
      %v3313 = vpop.f32.mrf.mxu0
      %3314 = vmatprep.mubr.f32.mxu0 0.0
      %3315 = vmatmul.mubr.f32.gmra.mxu0 %v1488
      %v3316 = vpop.f32.mrf.mxu0
      %v3317 = vadd.f32 0.0, %v3316
      %v3318 = vpop.f32.mrf.mxu0
      %3319 = vmatprep.mubr.f32.mxu0 0.0
      %3320 = vmatmul.mubr.f32.gmra.mxu0 %v1490
      %v3321 = vpop.f32.mrf.mxu0
      %v3322 = vadd.f32 0.0, %v3321
      %v3323 = vpop.f32.mrf.mxu0
      %3324 = vmatprep.mubr.f32.mxu0 0.0
      %3325 = vmatmul.mubr.f32.gmra.mxu0 %v1492
      %v3326 = vpop.f32.mrf.mxu0
      %v3327 = vadd.f32 0.0, %v3326
      %v3328 = vpop.f32.mrf.mxu0
      %3329 = vmatprep.mubr.f32.mxu0 0.0
      %3330 = vmatmul.mubr.f32.gmra.mxu0 %v1494
      %v3331 = vpop.f32.mrf.mxu0
      %v3332 = vadd.f32 0.0, %v3331
      %v3333 = vpop.f32.mrf.mxu0
      %3334 = vmatprep.mubr.f32.mxu0 0.0
      %3335 = vmatmul.mubr.f32.gmra.mxu0 %v1496
      %v3336 = vpop.f32.mrf.mxu0
      %v3337 = vadd.f32 0.0, %v3336
      %v3338 = vpop.f32.mrf.mxu0
      %3339 = vmatprep.mubr.f32.mxu0 0.0
      %3340 = vmatmul.mubr.f32.gmra.mxu0 %v1498
      %v3341 = vpop.f32.mrf.mxu0
      %v3342 = vadd.f32 0.0, %v3341
      %v3343 = vpop.f32.mrf.mxu0
      %3344 = vmatprep.mubr.f32.mxu0 0.0
      %3345 = vmatmul.mubr.f32.gmra.mxu0 %v1500
      %v3346 = vpop.f32.mrf.mxu0
      %v3347 = vadd.f32 0.0, %v3346
      %v3348 = vpop.f32.mrf.mxu0
      %3349 = vmatprep.mubr.f32.mxu0 0.0
      %3350 = vmatmul.mubr.f32.gmra.mxu0 %v1502
      %v3351 = vpop.f32.mrf.mxu0
      %v3352 = vadd.f32 0.0, %v3351
      %v3353 = vpop.f32.mrf.mxu0
      %3354 = vmatprep.mubr.f32.mxu0 0.0
      %3355 = vmatmul.mubr.f32.gmra.mxu0 %v1504
      %v3356 = vpop.f32.mrf.mxu0
      %v3357 = vadd.f32 0.0, %v3356
      %v3358 = vpop.f32.mrf.mxu0
      %3359 = vmatprep.mubr.f32.mxu0 0.0
      %3360 = vmatmul.mubr.f32.gmra.mxu0 %v2331
      %v3361 = vpop.f32.mrf.mxu0
      %v3362 = vadd.f32 0.0, %v3361
      %v3363 = vpop.f32.mrf.mxu0
      %3364 = vmatprep.mubr.f32.mxu0 0.0
      %3365 = vmatmul.mubr.f32.gmra.mxu0 %v2333
      %v3366 = vpop.f32.mrf.mxu0
      %v3367 = vadd.f32 0.0, %v3366
      %v3368 = vpop.f32.mrf.mxu0
      %3369 = vmatprep.mubr.f32.mxu0 0.0
      %3370 = vmatmul.mubr.f32.gmra.mxu0 %v2335
      %v3371 = vpop.f32.mrf.mxu0
      %v3372 = vadd.f32 0.0, %v3371
      %v3373 = vpop.f32.mrf.mxu0
      %3374 = vmatprep.mubr.f32.mxu0 0.0
      %3375 = vmatmul.mubr.f32.gmra.mxu0 %v2337
      %v3376 = vpop.f32.mrf.mxu0
      %v3377 = vadd.f32 0.0, %v3376
      %v3378 = vpop.f32.mrf.mxu0
      %3379 = vmatprep.mubr.f32.mxu0 0.0
      %3380 = vmatmul.mubr.f32.gmra.mxu0 %v3164
      %v3381 = vpop.f32.mrf.mxu0
      %v3382 = vadd.f32 0.0, %v3381
      %v3383 = vpop.f32.mrf.mxu0
      %3384 = vmatprep.mubr.f32.mxu0 0.0
      %3385 = vmatmul.mubr.f32.gmra.mxu0 %v3166
      %v3386 = vpop.f32.mrf.mxu0
      %v3387 = vadd.f32 0.0, %v3386
      %v3388 = vpop.f32.mrf.mxu0
      %3389 = vmatprep.mubr.f32.mxu0 0.0
      %3390 = vmatmul.mubr.f32.gmra.mxu0 %v3168
      %v3391 = vpop.f32.mrf.mxu0
      %v3392 = vadd.f32 0.0, %v3391
      %v3393 = vpop.f32.mrf.mxu0
      %3394 = vmatprep.mubr.f32.mxu0 0.0
      %3395 = vmatmul.mubr.f32.gmra.mxu0 %v3170
      %v3396 = vpop.f32.mrf.mxu0
      %v3397 = vadd.f32 0.0, %v3396
      %v3398 = vpop.f32.mrf.mxu0
      %3399 = vdwg.mxu0
      %v3400 = vadd.f32 %v3121, %v3242
      %v3401 = vadd.f32 %v3122, %v3247
      %v3402 = vadd.f32 %v3123, %v3252
      %v3403 = vadd.f32 %v3124, %v3257
      %v3404 = vadd.f32 %v3125, %v3262
      %v3405 = vadd.f32 %v3126, %v3267
      %v3406 = vadd.f32 %v3127, %v3272
      %v3407 = vadd.f32 %v3128, %v3277
      %v3408 = vadd.f32 %v3129, %v3282
      %v3409 = vadd.f32 %v3130, %v3287
      %v3410 = vadd.f32 %v3131, %v3292
      %v3411 = vadd.f32 %v3132, %v3297
      %v3412 = vadd.f32 %v3133, %v3302
      %v3413 = vadd.f32 %v3134, %v3307
      %v3414 = vadd.f32 %v3135, %v3312
      %v3415 = vadd.f32 %v3136, %v3317
      %v3416 = vadd.f32 %v3137, %v3322
      %v3417 = vadd.f32 %v3138, %v3327
      %v3418 = vadd.f32 %v3139, %v3332
      %v3419 = vadd.f32 %v3140, %v3337
      %v3420 = vadd.f32 %v3141, %v3342
      %v3421 = vadd.f32 %v3142, %v3347
      %v3422 = vadd.f32 %v3143, %v3352
      %v3423 = vadd.f32 %v3144, %v3357
      %v3424 = vadd.f32 %v3145, %v3362
      %v3425 = vadd.f32 %v3146, %v3367
      %v3426 = vadd.f32 %v3147, %v3372
      %v3427 = vadd.f32 %v3148, %v3377
      %v3428 = vadd.f32 %v3149, %v3382
      %v3429 = vadd.f32 %v3150, %v3387
      %v3430 = vadd.f32 %v3151, %v3392
      %v3431 = vadd.f32 %v3152, %v3397
      %v3432 = vld [vmem:[%s4] sm:$0x1]
      %v3434 = vlaneseq
      %v3435 = vshrl.u32 %v3434, 7
      %v3436 = vsub.s32 0, %v3435
      %v3437 = vrot.slane %v3432, %v3436
      %v3439 = vadd.f32 %v3400, %v3437
      %v3440 = vadd.f32 %v3401, %v3437
      %v3441 = vadd.f32 %v3402, %v3437
      %v3442 = vadd.f32 %v3403, %v3437
      %v3443 = vadd.f32 %v3404, %v3437
      %v3444 = vadd.f32 %v3405, %v3437
      %v3445 = vadd.f32 %v3406, %v3437
      %v3446 = vadd.f32 %v3407, %v3437
      %v3447 = vadd.f32 %v3408, %v3437
      %v3448 = vadd.f32 %v3409, %v3437
      %v3449 = vadd.f32 %v3410, %v3437
      %v3450 = vadd.f32 %v3411, %v3437
      %v3451 = vadd.f32 %v3412, %v3437
      %v3452 = vadd.f32 %v3413, %v3437
      %v3453 = vadd.f32 %v3414, %v3437
      %v3454 = vadd.f32 %v3415, %v3437
      %v3455 = vadd.f32 %v3416, %v3437
      %v3456 = vadd.f32 %v3417, %v3437
      %v3457 = vadd.f32 %v3418, %v3437
      %v3458 = vadd.f32 %v3419, %v3437
      %v3459 = vadd.f32 %v3420, %v3437
      %v3460 = vadd.f32 %v3421, %v3437
      %v3461 = vadd.f32 %v3422, %v3437
      %v3462 = vadd.f32 %v3423, %v3437
      %v3463 = vadd.f32 %v3424, %v3437
      %v3464 = vadd.f32 %v3425, %v3437
      %v3465 = vadd.f32 %v3426, %v3437
      %v3466 = vadd.f32 %v3427, %v3437
      %v3467 = vadd.f32 %v3428, %v3437
      %v3468 = vadd.f32 %v3429, %v3437
      %v3469 = vadd.f32 %v3430, %v3437
      %v3470 = vadd.f32 %v3431, %v3437
      %3471 = vst.msk [vmem:[%s248] sm:$0xff] %vm781, %v3439
      %3472 = vst.msk [vmem:[%s248 + $0x8] sm:$0xff] %vm781, %v3440
      %3473 = vst.msk [vmem:[%s248 + $0x10] sm:$0xff] %vm781, %v3441
      %3474 = vst.msk [vmem:[%s248 + $0x18] sm:$0xff] %vm781, %v3442
      %3475 = vst.msk [vmem:[%s248 + $0x20] sm:$0xff] %vm781, %v3443
      %3476 = vst.msk [vmem:[%s248 + $0x28] sm:$0xff] %vm781, %v3444
      %3477 = vst.msk [vmem:[%s248 + $0x30] sm:$0xff] %vm781, %v3445
      %3478 = vst.msk [vmem:[%s248 + $0x38] sm:$0xff] %vm781, %v3446
      %3479 = vst.msk [vmem:[%s248 + $0x40] sm:$0xff] %vm781, %v3447
      %3480 = vst.msk [vmem:[%s248 + $0x48] sm:$0xff] %vm781, %v3448
      %3481 = vst.msk [vmem:[%s248 + $0x50] sm:$0xff] %vm781, %v3449
      %3482 = vst.msk [vmem:[%s248 + $0x58] sm:$0xff] %vm781, %v3450
      %3483 = vst.msk [vmem:[%s248 + $0x60] sm:$0xff] %vm781, %v3451
      %3484 = vst.msk [vmem:[%s248 + $0x68] sm:$0xff] %vm781, %v3452
      %3485 = vst.msk [vmem:[%s248 + $0x70] sm:$0xff] %vm781, %v3453
      %3486 = vst.msk [vmem:[%s248 + $0x78] sm:$0xff] %vm781, %v3454
      %3487 = vst.msk [vmem:[%s248 + $0x80] sm:$0xff] %vm781, %v3455
      %3488 = vst.msk [vmem:[%s248 + $0x88] sm:$0xff] %vm781, %v3456
      %3489 = vst.msk [vmem:[%s248 + $0x90] sm:$0xff] %vm781, %v3457
      %3490 = vst.msk [vmem:[%s248 + $0x98] sm:$0xff] %vm781, %v3458
      %3491 = vst.msk [vmem:[%s248 + $0xa0] sm:$0xff] %vm781, %v3459
      %3492 = vst.msk [vmem:[%s248 + $0xa8] sm:$0xff] %vm781, %v3460
      %3493 = vst.msk [vmem:[%s248 + $0xb0] sm:$0xff] %vm781, %v3461
      %3494 = vst.msk [vmem:[%s248 + $0xb8] sm:$0xff] %vm781, %v3462
      %3495 = vst.msk [vmem:[%s248 + $0xc0] sm:$0xff] %vm781, %v3463
      %3496 = vst.msk [vmem:[%s248 + $0xc8] sm:$0xff] %vm781, %v3464
      %3497 = vst.msk [vmem:[%s248 + $0xd0] sm:$0xff] %vm781, %v3465
      %3498 = vst.msk [vmem:[%s248 + $0xd8] sm:$0xff] %vm781, %v3466
      %3499 = vst.msk [vmem:[%s248 + $0xe0] sm:$0xff] %vm781, %v3467
      %3500 = vst.msk [vmem:[%s248 + $0xe8] sm:$0xff] %vm781, %v3468
      %3501 = vst.msk [vmem:[%s248 + $0xf0] sm:$0xff] %vm781, %v3469
      %3502 = vst.msk [vmem:[%s248 + $0xf8] sm:$0xff] %vm781, %v3470
      %s3503 = smul.u32 8, %s21
      %p3504 = scmp.lt.s32.totalorder %s20, 1
      %s3505 = scalar_select %p3504, %s20, 1
      %p3506 = scmp.lt.s32.totalorder %s3503, 31
      %s3507 = scalar_select %p3506, %s3503, 31
      %s3508 = smul.addr %s3507, 4
      %s3509 = smul.addr %s3505, 128
      %s3510 = sadd.s32 %s3508, %s3509
      %s3511 = smul.addr %s3510, 8
      %s3512 = scalar_lea.vmem %s5, %s3511
      // Predicated region
      $region52: #{gblock_forward.5} parent=39 // pred_check
        %p3513 = pneg %p158
      $region53: #{gblock_forward.5} parent=39 // pred_check_branch
        %3515 = sbr.rel (%p3513) target = $region55
      $region54: #{gblock_forward.5} parent=39 // pred_region
        %s3516 = smul.u32 8, %s21
      $region55: #{gblock_forward.5} parent=39 // pred_fallthru
        _
    $region40: #{gblock_forward.5} parent=5 // pred_fallthru
      _
    %p3517 = scmp.le.s32.totalorder 2, %s11
    // Predicated region
    $region56: #{gblock_forward.5} parent=5 // pred_check
      %p3518 = pneg %p3517
    $region57: #{gblock_forward.5} parent=5 // pred_check_branch
      %3520 = sbr.rel (%p3518) target = $region59
    $region58: #{gblock_forward.5} parent=5 // pred_region
      %s3521 = ssub.s32 %s11, 2
      // Predicated region
      $region60: #{gblock_forward.5} parent=58 // pred_check
        %p3522 = pneg %p164
      $region61: #{gblock_forward.5} parent=58 // pred_check_branch
        %3524 = sbr.rel (%p3522) target = $region63
      $region62: #{gblock_forward.5} parent=58 // pred_region
        %s3525 = smul.u32 8, %s23
        %p3526 = scmp.lt.s32.totalorder %s22, 1
        %s3527 = scalar_select %p3526, %s22, 1
        %p3528 = scmp.lt.s32.totalorder %s3525, 31
        %s3529 = scalar_select %p3528, %s3525, 31
        %s3530 = smul.addr %s3529, 4
        %s3531 = smul.addr %s3527, 128
        %s3532 = sadd.s32 %s3530, %s3531
        %s3533 = smul.addr %s3532, 8
        %s3534 = scalar_lea.vmem %s5, %s3533
      $region63: #{gblock_forward.5} parent=58 // pred_fallthru
        _
    $region59: #{gblock_forward.5} parent=5 // pred_fallthru
      _
  $region6: #{gblock_forward.5} parent=0 // loop_footer
    %s15 = sadd.s32 1, %s11
  $region7: #{gblock_forward.5} parent=0 // loop_footer_branch
    %10 = sbr.rel target = $region3
  $region8: #{gblock_forward.5} parent=0 // loop_exit
    _

// kernel: gblock_forward.7
$region0: #{gblock_forward.7}
  #allocation0 [shape = 'u32[]', space=smem, size = 0x4, offset = 0x4, fixed_abs, tag = 'smem constant byte address 0x4 - core index']
  #allocation1 [shape = 'u32[144,128]{1,0:T(1,128)}', space=vmem, size = 0x12000, scoped, tag = 'internal scratch']
  #allocation2 [shape = 'f32[34,34,4]{2,1,0:T(8,128)}', space=vmem, size = 0xaa000, scoped, tag = 'scratch operand']
  %s0 = inlined_call_operand.vmem [shape: f32[2,32,32,4], index: 0, kind: input, shape index: {}]
  %s1 = inlined_call_operand.vmem [shape: f32[1,4], index: 1, kind: input, shape index: {}]
  %s2 = inlined_call_operand.vmem [shape: f32[1,4], index: 2, kind: input, shape index: {}]
  %s3 = inlined_call_operand.vmem [shape: f32[9,4,8], index: 3, kind: input, shape index: {}]
  %s4 = inlined_call_operand.vmem [shape: f32[1,8], index: 4, kind: input, shape index: {}]
  %s5 = inlined_call_operand.vmem [shape: f32[2,32,32,4], index: 5, kind: input, shape index: {}]
  %s6 = inlined_call_operand.vmem [shape: f32[4,8], index: 6, kind: input, shape index: {}]
  %s7 = inlined_call_operand.vmem [shape: f32[1,8], index: 7, kind: input, shape index: {}]
  %s8 = inlined_call_operand.vmem [shape: f32[2,32,32,8], index: 8, kind: output, shape index: {}]
  %s9 = sld [smem:[#allocation0]]
  $region76: #{gblock_forward.7} parent=0
    _
  %s11 = ssub.s32 1, %s9
  %s12 = scalar_select 0, %s11, %s9
  loop: start=0, step=1, limit=10
  $region2: #{gblock_forward.7} parent=0 // loop_pre_header
    _
  $region3: #{gblock_forward.7} parent=0 // loop_header
    %s14 = sphi 0, %s18
    %p15 = scmp.ge.s32.totalorder %s14, 10
    %s21 = sphi 0, %s33
    %s22 = sphi 0, %s29
    %s23 = sphi 0, %s21
    %s24 = sphi 0, %s22
    %s25 = sphi 0, %s23
    %s26 = sphi 0, %s24
    %s36 = sphi 0, %s38
    %s39 = sphi 0, %s36
    %s40 = sphi 0, %s39
    %s56 = sphi 0, %s40
    %s60 = sphi 0, %s60
    %s62 = sphi 0, %s60
    %s63 = sphi 0, %s62
    %s77 = sphi 0, %s63
    %s81 = sphi 0, %s81
    %s83 = sphi 0, %s81
    %s84 = sphi 0, %s83
    %s98 = sphi 0, %s84
    %s102 = sphi 0, %s102
    %s104 = sphi 0, %s102
    %s105 = sphi 0, %s104
    %s119 = sphi 0, %s105
    %s123 = sphi 0, %s123
    %s125 = sphi 0, %s123
    %s126 = sphi 0, %s125
    %s140 = sphi 0, %s126
    %s148 = sphi 0, %s150
    %s151 = sphi 0, %s148
    %s152 = sphi 0, %s151
    %s168 = sphi 0, %s152
    %s172 = sphi 0, %s172
    %s174 = sphi 0, %s172
    %s175 = sphi 0, %s174
    %s189 = sphi 0, %s175
    %s193 = sphi 0, %s193
    %s195 = sphi 0, %s193
    %s196 = sphi 0, %s195
    %s210 = sphi 0, %s196
    %s218 = sphi 0, %s220
    %s221 = sphi 0, %s218
    %s222 = sphi 0, %s221
    %s238 = sphi 0, %s222
  $region4: #{gblock_forward.7} parent=0 // loop_header_branch
    %17 = sbr.rel (%p15) target = $region8
  $region5: #{gblock_forward.7} parent=0 // loop_body
    %s19 = ssub.s32 %s14, 1
    %s20 = ssub.s32 %s14, 2
    %s27 = sadd.s32 1, %s22
    %p28 = scmp.ge.s32.totalorder %s27, 4
    %s29 = scalar_select %p28, 0, %s27
    %s30 = sadd.s32 1, %s21
    %s31 = scalar_select %p28, %s30, %s21
    %p32 = scmp.ge.s32.totalorder %s31, 2
    %s33 = scalar_select %p32, 0, %s31
    %s34 = ssub.s32 %s21, %s33
    %p35 = scmp.eq.s32.totalorder %s34, 0
    %s37 = sadd.s32 %s36, 1
    %s38 = scalar_select %p35, %s36, %s37
    %p41 = pneg %p35
    %p42 = scmp.eq.s32.totalorder %s14, 7
    %p43 = por %p41, %p42
    %p44 = scmp.ne.s32.totalorder %s36, %s39
    %p45 = scmp.eq.s32.totalorder %s14, 0
    %p46 = por %p44, %p45
    %p47 = scmp.ne.s32.totalorder %s36, %s39
    %p48 = scmp.eq.s32.totalorder %s19, 7
    %p49 = por %p47, %p48
    %p50 = scmp.ne.s32.totalorder %s39, %s40
    %p51 = scmp.eq.s32.totalorder %s19, 0
    %p52 = por %p50, %p51
    %p53 = scmp.ne.s32.totalorder %s39, %s40
    %p54 = scmp.eq.s32.totalorder %s20, 7
    %p55 = por %p53, %p54
    %p57 = scmp.ne.s32.totalorder %s40, %s56
    %p58 = scmp.eq.s32.totalorder %s20, 0
    %p59 = por %p57, %p58
    %s61 = sadd.s32 %s60, 1
    %p64 = scmp.eq.s32.totalorder %s14, 7
    %p65 = scmp.ne.s32.totalorder %s60, %s62
    %p66 = scmp.eq.s32.totalorder %s14, 0
    %p67 = por %p65, %p66
    %p68 = scmp.ne.s32.totalorder %s60, %s62
    %p69 = scmp.eq.s32.totalorder %s19, 7
    %p70 = por %p68, %p69
    %p71 = scmp.ne.s32.totalorder %s62, %s63
    %p72 = scmp.eq.s32.totalorder %s19, 0
    %p73 = por %p71, %p72
    %p74 = scmp.ne.s32.totalorder %s62, %s63
    %p75 = scmp.eq.s32.totalorder %s20, 7
    %p76 = por %p74, %p75
    %p78 = scmp.ne.s32.totalorder %s63, %s77
    %p79 = scmp.eq.s32.totalorder %s20, 0
    %p80 = por %p78, %p79
    %s82 = sadd.s32 %s81, 1
    %p85 = scmp.eq.s32.totalorder %s14, 7
    %p86 = scmp.ne.s32.totalorder %s81, %s83
    %p87 = scmp.eq.s32.totalorder %s14, 0
    %p88 = por %p86, %p87
    %p89 = scmp.ne.s32.totalorder %s81, %s83
    %p90 = scmp.eq.s32.totalorder %s19, 7
    %p91 = por %p89, %p90
    %p92 = scmp.ne.s32.totalorder %s83, %s84
    %p93 = scmp.eq.s32.totalorder %s19, 0
    %p94 = por %p92, %p93
    %p95 = scmp.ne.s32.totalorder %s83, %s84
    %p96 = scmp.eq.s32.totalorder %s20, 7
    %p97 = por %p95, %p96
    %p99 = scmp.ne.s32.totalorder %s84, %s98
    %p100 = scmp.eq.s32.totalorder %s20, 0
    %p101 = por %p99, %p100
    %s103 = sadd.s32 %s102, 1
    %p106 = scmp.eq.s32.totalorder %s14, 7
    %p107 = scmp.ne.s32.totalorder %s102, %s104
    %p108 = scmp.eq.s32.totalorder %s14, 0
    %p109 = por %p107, %p108
    %p110 = scmp.ne.s32.totalorder %s102, %s104
    %p111 = scmp.eq.s32.totalorder %s19, 7
    %p112 = por %p110, %p111
    %p113 = scmp.ne.s32.totalorder %s104, %s105
    %p114 = scmp.eq.s32.totalorder %s19, 0
    %p115 = por %p113, %p114
    %p116 = scmp.ne.s32.totalorder %s104, %s105
    %p117 = scmp.eq.s32.totalorder %s20, 7
    %p118 = por %p116, %p117
    %p120 = scmp.ne.s32.totalorder %s105, %s119
    %p121 = scmp.eq.s32.totalorder %s20, 0
    %p122 = por %p120, %p121
    %s124 = sadd.s32 %s123, 1
    %p127 = scmp.eq.s32.totalorder %s14, 7
    %p128 = scmp.ne.s32.totalorder %s123, %s125
    %p129 = scmp.eq.s32.totalorder %s14, 0
    %p130 = por %p128, %p129
    %p131 = scmp.ne.s32.totalorder %s123, %s125
    %p132 = scmp.eq.s32.totalorder %s19, 7
    %p133 = por %p131, %p132
    %p134 = scmp.ne.s32.totalorder %s125, %s126
    %p135 = scmp.eq.s32.totalorder %s19, 0
    %p136 = por %p134, %p135
    %p137 = scmp.ne.s32.totalorder %s125, %s126
    %p138 = scmp.eq.s32.totalorder %s20, 7
    %p139 = por %p137, %p138
    %p141 = scmp.ne.s32.totalorder %s126, %s140
    %p142 = scmp.eq.s32.totalorder %s20, 0
    %p143 = por %p141, %p142
    %s144 = ssub.s32 %s21, %s33
    %s145 = ssub.s32 %s22, %s29
    %s146 = sor.u32 %s144, %s145
    %p147 = scmp.eq.s32.totalorder %s146, 0
    %s149 = sadd.s32 %s148, 1
    %s150 = scalar_select %p147, %s148, %s149
    %p153 = pneg %p147
    %p154 = scmp.eq.s32.totalorder %s14, 7
    %p155 = por %p153, %p154
    %p156 = scmp.ne.s32.totalorder %s148, %s151
    %p157 = scmp.eq.s32.totalorder %s14, 0
    %p158 = por %p156, %p157
    %p159 = scmp.ne.s32.totalorder %s148, %s151
    %p160 = scmp.eq.s32.totalorder %s19, 7
    %p161 = por %p159, %p160
    %p162 = scmp.ne.s32.totalorder %s151, %s152
    %p163 = scmp.eq.s32.totalorder %s19, 0
    %p164 = por %p162, %p163
    %p165 = scmp.ne.s32.totalorder %s151, %s152
    %p166 = scmp.eq.s32.totalorder %s20, 7
    %p167 = por %p165, %p166
    %p169 = scmp.ne.s32.totalorder %s152, %s168
    %p170 = scmp.eq.s32.totalorder %s20, 0
    %p171 = por %p169, %p170
    %s173 = sadd.s32 %s172, 1
    %p176 = scmp.eq.s32.totalorder %s14, 7
    %p177 = scmp.ne.s32.totalorder %s172, %s174
    %p178 = scmp.eq.s32.totalorder %s14, 0
    %p179 = por %p177, %p178
    %p180 = scmp.ne.s32.totalorder %s172, %s174
    %p181 = scmp.eq.s32.totalorder %s19, 7
    %p182 = por %p180, %p181
    %p183 = scmp.ne.s32.totalorder %s174, %s175
    %p184 = scmp.eq.s32.totalorder %s19, 0
    %p185 = por %p183, %p184
    %p186 = scmp.ne.s32.totalorder %s174, %s175
    %p187 = scmp.eq.s32.totalorder %s20, 7
    %p188 = por %p186, %p187
    %p190 = scmp.ne.s32.totalorder %s175, %s189
    %p191 = scmp.eq.s32.totalorder %s20, 0
    %p192 = por %p190, %p191
    %s194 = sadd.s32 %s193, 1
    %p197 = scmp.eq.s32.totalorder %s14, 7
    %p198 = scmp.ne.s32.totalorder %s193, %s195
    %p199 = scmp.eq.s32.totalorder %s14, 0
    %p200 = por %p198, %p199
    %p201 = scmp.ne.s32.totalorder %s193, %s195
    %p202 = scmp.eq.s32.totalorder %s19, 7
    %p203 = por %p201, %p202
    %p204 = scmp.ne.s32.totalorder %s195, %s196
    %p205 = scmp.eq.s32.totalorder %s19, 0
    %p206 = por %p204, %p205
    %p207 = scmp.ne.s32.totalorder %s195, %s196
    %p208 = scmp.eq.s32.totalorder %s20, 7
    %p209 = por %p207, %p208
    %p211 = scmp.ne.s32.totalorder %s196, %s210
    %p212 = scmp.eq.s32.totalorder %s20, 0
    %p213 = por %p211, %p212
    %s214 = ssub.s32 %s21, %s33
    %s215 = ssub.s32 %s22, %s29
    %s216 = sor.u32 %s214, %s215
    %p217 = scmp.eq.s32.totalorder %s216, 0
    %s219 = sadd.s32 %s218, 1
    %s220 = scalar_select %p217, %s218, %s219
    %p223 = pneg %p217
    %p224 = scmp.eq.s32.totalorder %s14, 7
    %p225 = por %p223, %p224
    %p226 = scmp.ne.s32.totalorder %s218, %s221
    %p227 = scmp.eq.s32.totalorder %s14, 0
    %p228 = por %p226, %p227
    %p229 = scmp.ne.s32.totalorder %s218, %s221
    %p230 = scmp.eq.s32.totalorder %s19, 7
    %p231 = por %p229, %p230
    %p232 = scmp.ne.s32.totalorder %s221, %s222
    %p233 = scmp.eq.s32.totalorder %s19, 0
    %p234 = por %p232, %p233
    %p235 = scmp.ne.s32.totalorder %s221, %s222
    %p236 = scmp.eq.s32.totalorder %s20, 7
    %p237 = por %p235, %p236
    %p239 = scmp.ne.s32.totalorder %s222, %s238
    %p240 = scmp.eq.s32.totalorder %s20, 0
    %p241 = por %p239, %p240
    %p242 = scmp.le.s32.totalorder 1, %s14
    %p243 = scmp.lt.s32.totalorder %s14, 9
    %p244 = pnand %p242, %p243
    %p245 = pneg %p244
    // Predicated region
    $region9: #{gblock_forward.7} parent=5 // pred_check
      _
    $region10: #{gblock_forward.7} parent=5 // pred_check_branch
      %247 = sbr.rel (%p244) target = $region12
    $region11: #{gblock_forward.7} parent=5 // pred_region
      %s248 = ssub.s32 %s14, 1
      // Predicated region
      $region13: #{gblock_forward.7} parent=11 // pred_check
        %p249 = pneg %p73
      $region14: #{gblock_forward.7} parent=11 // pred_check_branch
        %251 = sbr.rel (%p249) target = $region16
      $region15: #{gblock_forward.7} parent=11 // pred_region
        _
      $region16: #{gblock_forward.7} parent=11 // pred_fallthru
        _
      // Predicated region
      $region17: #{gblock_forward.7} parent=11 // pred_check
        %p252 = pneg %p94
      $region18: #{gblock_forward.7} parent=11 // pred_check_branch
        %254 = sbr.rel (%p252) target = $region20
      $region19: #{gblock_forward.7} parent=11 // pred_region
        _
      $region20: #{gblock_forward.7} parent=11 // pred_fallthru
        _
      // Predicated region
      $region21: #{gblock_forward.7} parent=11 // pred_check
        %p255 = pneg %p115
      $region22: #{gblock_forward.7} parent=11 // pred_check_branch
        %257 = sbr.rel (%p255) target = $region24
      $region23: #{gblock_forward.7} parent=11 // pred_region
        _
      $region24: #{gblock_forward.7} parent=11 // pred_fallthru
        _
      // Predicated region
      $region25: #{gblock_forward.7} parent=11 // pred_check
        %p258 = pneg %p136
      $region26: #{gblock_forward.7} parent=11 // pred_check_branch
        %260 = sbr.rel (%p258) target = $region28
      $region27: #{gblock_forward.7} parent=11 // pred_region
        _
      $region28: #{gblock_forward.7} parent=11 // pred_fallthru
        _
      // Predicated region
      $region29: #{gblock_forward.7} parent=11 // pred_check
        %p261 = pneg %p185
      $region30: #{gblock_forward.7} parent=11 // pred_check_branch
        %263 = sbr.rel (%p261) target = $region32
      $region31: #{gblock_forward.7} parent=11 // pred_region
        _
      $region32: #{gblock_forward.7} parent=11 // pred_fallthru
        _
      // Predicated region
      $region33: #{gblock_forward.7} parent=11 // pred_check
        %p264 = pneg %p206
      $region34: #{gblock_forward.7} parent=11 // pred_check_branch
        %266 = sbr.rel (%p264) target = $region36
      $region35: #{gblock_forward.7} parent=11 // pred_region
        _
      $region36: #{gblock_forward.7} parent=11 // pred_fallthru
        _
    $region12: #{gblock_forward.7} parent=5 // pred_fallthru
      _
    %p267 = scmp.lt.s32.totalorder %s14, 8
    // Predicated region
    $region37: #{gblock_forward.7} parent=5 // pred_check
      %p268 = pneg %p267
    $region38: #{gblock_forward.7} parent=5 // pred_check_branch
      %270 = sbr.rel (%p268) target = $region40
    $region39: #{gblock_forward.7} parent=5 // pred_region
      // Predicated region
      $region41: #{gblock_forward.7} parent=39 // pred_check
        %p271 = pneg %p46
      $region42: #{gblock_forward.7} parent=39 // pred_check_branch
        %273 = sbr.rel (%p271) target = $region44
      $region43: #{gblock_forward.7} parent=39 // pred_region
        %p274 = scmp.lt.s32.totalorder %s21, 1
        %s275 = scalar_select %p274, %s21, 1
        %s276 = smul.addr %s275, 128
        %s277 = smul.addr %s276, 8
        %s278 = scalar_lea.vmem %s0, %s277
      $region44: #{gblock_forward.7} parent=39 // pred_fallthru
        _
      // Predicated region
      $region45: #{gblock_forward.7} parent=39 // pred_check
        %p279 = pneg %p158
      $region46: #{gblock_forward.7} parent=39 // pred_check_branch
        %281 = sbr.rel (%p279) target = $region48
      $region47: #{gblock_forward.7} parent=39 // pred_region
        %s282 = smul.u32 8, %s22
        %p283 = scmp.lt.s32.totalorder %s21, 1
        %s284 = scalar_select %p283, %s21, 1
        %p285 = scmp.lt.s32.totalorder %s282, 31
        %s286 = scalar_select %p285, %s282, 31
        %s287 = smul.addr %s286, 4
        %s288 = smul.addr %s284, 128
        %s289 = sadd.s32 %s287, %s288
        %s290 = smul.addr %s289, 8
        %s291 = scalar_lea.vmem %s5, %s290
        %s292 = smul.u32 8, %s22
      $region48: #{gblock_forward.7} parent=39 // pred_fallthru
        _
    $region40: #{gblock_forward.7} parent=5 // pred_fallthru
      _
    %p293 = scmp.le.s32.totalorder 1, %s14
    %p294 = scmp.lt.s32.totalorder %s14, 9
    %p295 = pnand %p293, %p294
    %p296 = pneg %p295
    // Predicated region
    $region49: #{gblock_forward.7} parent=5 // pred_check
      _
    $region50: #{gblock_forward.7} parent=5 // pred_check_branch
      %298 = sbr.rel (%p295) target = $region52
    $region51: #{gblock_forward.7} parent=5 // pred_region
      %s299 = ssub.s32 %s14, 1
      %p300 = scmp.lt.s32.totalorder %s23, 1
      %s301 = scalar_select %p300, %s23, 1
      %s302 = smul.addr %s301, 128
      %s303 = smul.addr %s302, 8
      %s304 = scalar_lea.vmem %s0, %s303
      %p305 = pneg %p52
      %p306 = pneg %p49
      %p307 = pneg %p73
      %p308 = pneg %p70
      %p309 = pneg %p94
      %p310 = pneg %p91
      %p311 = pneg %p115
      %p312 = pneg %p112
      %p313 = pneg %p136
      %p314 = pneg %p133
      %s315 = smul.u32 8, %s24
      %p316 = scmp.lt.s32.totalorder %s23, 1
      %s317 = scalar_select %p316, %s23, 1
      %p318 = scmp.lt.s32.totalorder %s315, 31
      %s319 = scalar_select %p318, %s315, 31
      %s320 = smul.addr %s319, 4
      %s321 = smul.addr %s317, 128
      %s322 = sadd.s32 %s320, %s321
      %s323 = smul.addr %s322, 8
      %s324 = scalar_lea.vmem %s5, %s323
      %p325 = pneg %p164
      %p326 = pneg %p161
      %p327 = pneg %p185
      %p328 = pneg %p182
      %p329 = pneg %p206
      %p330 = pneg %p203
      %p331 = pneg %p234
      %p332 = pneg %p231
      %s333 = smul.u32 8, %s24
      %p334 = scmp.lt.s32.totalorder %s23, 1
      %s335 = scalar_select %p334, %s23, 1
      %p336 = scmp.lt.s32.totalorder %s333, 31
      %s337 = scalar_select %p336, %s333, 31
      %s338 = smul.addr %s337, 4
      %s339 = smul.addr %s335, 128
      %s340 = sadd.s32 %s338, %s339
      %s341 = smul.addr %s340, 8
      %s342 = scalar_lea.vmem %s8, %s341
      %p343 = scmp.lt.s32.totalorder %s23, 1
      %s344 = scalar_select %p343, %s23, 1
      %s345 = smul.addr %s344, 128
      %s346 = smul.addr %s345, 8
      %s347 = scalar_lea.vmem %s0, %s346
      %s348 = smul.u32 8, %s24
      %p349 = scmp.lt.s32.totalorder %s23, 1
      %s350 = scalar_select %p349, %s23, 1
      %p351 = scmp.lt.s32.totalorder %s348, 31
      %s352 = scalar_select %p351, %s348, 31
      %s353 = smul.addr %s352, 4
      %s354 = smul.addr %s350, 128
      %s355 = sadd.s32 %s353, %s354
      %s356 = smul.addr %s355, 8
      %s357 = scalar_lea.vmem %s5, %s356
      %s358 = smul.u32 8, %s24
      %s359 = smul.u32 8, %s24
      %p360 = scmp.lt.s32.totalorder %s23, 1
      %s361 = scalar_select %p360, %s23, 1
      %p362 = scmp.lt.s32.totalorder %s359, 31
      %s363 = scalar_select %p362, %s359, 31
      %s364 = smul.addr %s363, 4
      %s365 = smul.addr %s361, 128
      %s366 = sadd.s32 %s364, %s365
      %s367 = smul.addr %s366, 8
      %s368 = scalar_lea.vmem %s8, %s367
      %s369 = smul.u32 8, %s24
      %p370 = scmp.eq.s32.totalorder %s24, 0
      // Predicated region
      $region53: #{gblock_forward.7} parent=51 // pred_check
        %p371 = pneg %p370
      $region54: #{gblock_forward.7} parent=51 // pred_check_branch
        %373 = sbr.rel (%p371) target = $region56
      $region55: #{gblock_forward.7} parent=51 // pred_region
        %vm374 = vcmask 31744
        %375 = vst.msk [vmem:[#allocation2] sm:$0xff] %vm374, 0.0
        %376 = vst.msk [vmem:[#allocation2 + $0x8] sm:$0xff] %vm374, 0.0
        %377 = vst.msk [vmem:[#allocation2 + $0x10] sm:$0xff] %vm374, 0.0
        %378 = vst.msk [vmem:[#allocation2 + $0x18] sm:$0xff] %vm374, 0.0
        %vm379 = vcmask 25600
        %380 = vst.msk [vmem:[#allocation2 + $0x20] sm:$0x3] %vm379, 0.0
        %381 = vst.msk [vmem:[#allocation2 + $0x28] sm:$0xff] %vm374, 0.0
        %382 = vst.msk [vmem:[#allocation2 + $0x30] sm:$0xff] %vm374, 0.0
        %383 = vst.msk [vmem:[#allocation2 + $0x38] sm:$0xff] %vm374, 0.0
        %384 = vst.msk [vmem:[#allocation2 + $0x40] sm:$0xff] %vm374, 0.0
        %385 = vst.msk [vmem:[#allocation2 + $0x48] sm:$0x3] %vm379, 0.0
        %386 = vst.msk [vmem:[#allocation2 + $0x50] sm:$0xff] %vm374, 0.0
        %387 = vst.msk [vmem:[#allocation2 + $0x58] sm:$0xff] %vm374, 0.0
        %388 = vst.msk [vmem:[#allocation2 + $0x60] sm:$0xff] %vm374, 0.0
        %389 = vst.msk [vmem:[#allocation2 + $0x68] sm:$0xff] %vm374, 0.0
        %390 = vst.msk [vmem:[#allocation2 + $0x70] sm:$0x3] %vm379, 0.0
        %391 = vst.msk [vmem:[#allocation2 + $0x78] sm:$0xff] %vm374, 0.0
        %392 = vst.msk [vmem:[#allocation2 + $0x80] sm:$0xff] %vm374, 0.0
        %393 = vst.msk [vmem:[#allocation2 + $0x88] sm:$0xff] %vm374, 0.0
        %394 = vst.msk [vmem:[#allocation2 + $0x90] sm:$0xff] %vm374, 0.0
        %395 = vst.msk [vmem:[#allocation2 + $0x98] sm:$0x3] %vm379, 0.0
        %396 = vst.msk [vmem:[#allocation2 + $0xa0] sm:$0xff] %vm374, 0.0
        %397 = vst.msk [vmem:[#allocation2 + $0xa8] sm:$0xff] %vm374, 0.0
        %398 = vst.msk [vmem:[#allocation2 + $0xb0] sm:$0xff] %vm374, 0.0
        %399 = vst.msk [vmem:[#allocation2 + $0xb8] sm:$0xff] %vm374, 0.0
        %400 = vst.msk [vmem:[#allocation2 + $0xc0] sm:$0x3] %vm379, 0.0
        %401 = vst.msk [vmem:[#allocation2 + $0xc8] sm:$0xff] %vm374, 0.0
        %402 = vst.msk [vmem:[#allocation2 + $0xd0] sm:$0xff] %vm374, 0.0
        %403 = vst.msk [vmem:[#allocation2 + $0xd8] sm:$0xff] %vm374, 0.0
        %404 = vst.msk [vmem:[#allocation2 + $0xe0] sm:$0xff] %vm374, 0.0
        %405 = vst.msk [vmem:[#allocation2 + $0xe8] sm:$0x3] %vm379, 0.0
        %406 = vst.msk [vmem:[#allocation2 + $0xf0] sm:$0xff] %vm374, 0.0
        %407 = vst.msk [vmem:[#allocation2 + $0xf8] sm:$0xff] %vm374, 0.0
        %408 = vst.msk [vmem:[#allocation2 + $0x100] sm:$0xff] %vm374, 0.0
        %409 = vst.msk [vmem:[#allocation2 + $0x108] sm:$0xff] %vm374, 0.0
        %410 = vst.msk [vmem:[#allocation2 + $0x110] sm:$0x3] %vm379, 0.0
        %411 = vst.msk [vmem:[#allocation2 + $0x118] sm:$0xff] %vm374, 0.0
        %412 = vst.msk [vmem:[#allocation2 + $0x120] sm:$0xff] %vm374, 0.0
        %413 = vst.msk [vmem:[#allocation2 + $0x128] sm:$0xff] %vm374, 0.0
        %414 = vst.msk [vmem:[#allocation2 + $0x130] sm:$0xff] %vm374, 0.0
        %415 = vst.msk [vmem:[#allocation2 + $0x138] sm:$0x3] %vm379, 0.0
        %416 = vst.msk [vmem:[#allocation2 + $0x140] sm:$0xff] %vm374, 0.0
        %417 = vst.msk [vmem:[#allocation2 + $0x148] sm:$0xff] %vm374, 0.0
        %418 = vst.msk [vmem:[#allocation2 + $0x150] sm:$0xff] %vm374, 0.0
        %419 = vst.msk [vmem:[#allocation2 + $0x158] sm:$0xff] %vm374, 0.0
        %420 = vst.msk [vmem:[#allocation2 + $0x160] sm:$0x3] %vm379, 0.0
        %421 = vst.msk [vmem:[#allocation2 + $0x168] sm:$0xff] %vm374, 0.0
        %422 = vst.msk [vmem:[#allocation2 + $0x170] sm:$0xff] %vm374, 0.0
        %423 = vst.msk [vmem:[#allocation2 + $0x178] sm:$0xff] %vm374, 0.0
        %424 = vst.msk [vmem:[#allocation2 + $0x180] sm:$0xff] %vm374, 0.0
        %425 = vst.msk [vmem:[#allocation2 + $0x188] sm:$0x3] %vm379, 0.0
        %426 = vst.msk [vmem:[#allocation2 + $0x190] sm:$0xff] %vm374, 0.0
        %427 = vst.msk [vmem:[#allocation2 + $0x198] sm:$0xff] %vm374, 0.0
        %428 = vst.msk [vmem:[#allocation2 + $0x1a0] sm:$0xff] %vm374, 0.0
        %429 = vst.msk [vmem:[#allocation2 + $0x1a8] sm:$0xff] %vm374, 0.0
        %430 = vst.msk [vmem:[#allocation2 + $0x1b0] sm:$0x3] %vm379, 0.0
        %431 = vst.msk [vmem:[#allocation2 + $0x1b8] sm:$0xff] %vm374, 0.0
        %432 = vst.msk [vmem:[#allocation2 + $0x1c0] sm:$0xff] %vm374, 0.0
        %433 = vst.msk [vmem:[#allocation2 + $0x1c8] sm:$0xff] %vm374, 0.0
        %434 = vst.msk [vmem:[#allocation2 + $0x1d0] sm:$0xff] %vm374, 0.0
        %435 = vst.msk [vmem:[#allocation2 + $0x1d8] sm:$0x3] %vm379, 0.0
        %436 = vst.msk [vmem:[#allocation2 + $0x1e0] sm:$0xff] %vm374, 0.0
        %437 = vst.msk [vmem:[#allocation2 + $0x1e8] sm:$0xff] %vm374, 0.0
        %438 = vst.msk [vmem:[#allocation2 + $0x1f0] sm:$0xff] %vm374, 0.0
        %439 = vst.msk [vmem:[#allocation2 + $0x1f8] sm:$0xff] %vm374, 0.0
        %440 = vst.msk [vmem:[#allocation2 + $0x200] sm:$0x3] %vm379, 0.0
        %441 = vst.msk [vmem:[#allocation2 + $0x208] sm:$0xff] %vm374, 0.0
        %442 = vst.msk [vmem:[#allocation2 + $0x210] sm:$0xff] %vm374, 0.0
        %443 = vst.msk [vmem:[#allocation2 + $0x218] sm:$0xff] %vm374, 0.0
        %444 = vst.msk [vmem:[#allocation2 + $0x220] sm:$0xff] %vm374, 0.0
        %445 = vst.msk [vmem:[#allocation2 + $0x228] sm:$0x3] %vm379, 0.0
        %446 = vst.msk [vmem:[#allocation2 + $0x230] sm:$0xff] %vm374, 0.0
        %447 = vst.msk [vmem:[#allocation2 + $0x238] sm:$0xff] %vm374, 0.0
        %448 = vst.msk [vmem:[#allocation2 + $0x240] sm:$0xff] %vm374, 0.0
        %449 = vst.msk [vmem:[#allocation2 + $0x248] sm:$0xff] %vm374, 0.0
        %450 = vst.msk [vmem:[#allocation2 + $0x250] sm:$0x3] %vm379, 0.0
        %451 = vst.msk [vmem:[#allocation2 + $0x258] sm:$0xff] %vm374, 0.0
        %452 = vst.msk [vmem:[#allocation2 + $0x260] sm:$0xff] %vm374, 0.0
        %453 = vst.msk [vmem:[#allocation2 + $0x268] sm:$0xff] %vm374, 0.0
        %454 = vst.msk [vmem:[#allocation2 + $0x270] sm:$0xff] %vm374, 0.0
        %455 = vst.msk [vmem:[#allocation2 + $0x278] sm:$0x3] %vm379, 0.0
        %456 = vst.msk [vmem:[#allocation2 + $0x280] sm:$0xff] %vm374, 0.0
        %457 = vst.msk [vmem:[#allocation2 + $0x288] sm:$0xff] %vm374, 0.0
        %458 = vst.msk [vmem:[#allocation2 + $0x290] sm:$0xff] %vm374, 0.0
        %459 = vst.msk [vmem:[#allocation2 + $0x298] sm:$0xff] %vm374, 0.0
        %460 = vst.msk [vmem:[#allocation2 + $0x2a0] sm:$0x3] %vm379, 0.0
        %461 = vst.msk [vmem:[#allocation2 + $0x2a8] sm:$0xff] %vm374, 0.0
        %462 = vst.msk [vmem:[#allocation2 + $0x2b0] sm:$0xff] %vm374, 0.0
        %463 = vst.msk [vmem:[#allocation2 + $0x2b8] sm:$0xff] %vm374, 0.0
        %464 = vst.msk [vmem:[#allocation2 + $0x2c0] sm:$0xff] %vm374, 0.0
        %465 = vst.msk [vmem:[#allocation2 + $0x2c8] sm:$0x3] %vm379, 0.0
        %466 = vst.msk [vmem:[#allocation2 + $0x2d0] sm:$0xff] %vm374, 0.0
        %467 = vst.msk [vmem:[#allocation2 + $0x2d8] sm:$0xff] %vm374, 0.0
        %468 = vst.msk [vmem:[#allocation2 + $0x2e0] sm:$0xff] %vm374, 0.0
        %469 = vst.msk [vmem:[#allocation2 + $0x2e8] sm:$0xff] %vm374, 0.0
        %470 = vst.msk [vmem:[#allocation2 + $0x2f0] sm:$0x3] %vm379, 0.0
        %471 = vst.msk [vmem:[#allocation2 + $0x2f8] sm:$0xff] %vm374, 0.0
        %472 = vst.msk [vmem:[#allocation2 + $0x300] sm:$0xff] %vm374, 0.0
        %473 = vst.msk [vmem:[#allocation2 + $0x308] sm:$0xff] %vm374, 0.0
        %474 = vst.msk [vmem:[#allocation2 + $0x310] sm:$0xff] %vm374, 0.0
        %475 = vst.msk [vmem:[#allocation2 + $0x318] sm:$0x3] %vm379, 0.0
        %476 = vst.msk [vmem:[#allocation2 + $0x320] sm:$0xff] %vm374, 0.0
        %477 = vst.msk [vmem:[#allocation2 + $0x328] sm:$0xff] %vm374, 0.0
        %478 = vst.msk [vmem:[#allocation2 + $0x330] sm:$0xff] %vm374, 0.0
        %479 = vst.msk [vmem:[#allocation2 + $0x338] sm:$0xff] %vm374, 0.0
        %480 = vst.msk [vmem:[#allocation2 + $0x340] sm:$0x3] %vm379, 0.0
        %481 = vst.msk [vmem:[#allocation2 + $0x348] sm:$0xff] %vm374, 0.0
        %482 = vst.msk [vmem:[#allocation2 + $0x350] sm:$0xff] %vm374, 0.0
        %483 = vst.msk [vmem:[#allocation2 + $0x358] sm:$0xff] %vm374, 0.0
        %484 = vst.msk [vmem:[#allocation2 + $0x360] sm:$0xff] %vm374, 0.0
        %485 = vst.msk [vmem:[#allocation2 + $0x368] sm:$0x3] %vm379, 0.0
        %486 = vst.msk [vmem:[#allocation2 + $0x370] sm:$0xff] %vm374, 0.0
        %487 = vst.msk [vmem:[#allocation2 + $0x378] sm:$0xff] %vm374, 0.0
        %488 = vst.msk [vmem:[#allocation2 + $0x380] sm:$0xff] %vm374, 0.0
        %489 = vst.msk [vmem:[#allocation2 + $0x388] sm:$0xff] %vm374, 0.0
        %490 = vst.msk [vmem:[#allocation2 + $0x390] sm:$0x3] %vm379, 0.0
        %491 = vst.msk [vmem:[#allocation2 + $0x398] sm:$0xff] %vm374, 0.0
        %492 = vst.msk [vmem:[#allocation2 + $0x3a0] sm:$0xff] %vm374, 0.0
        %493 = vst.msk [vmem:[#allocation2 + $0x3a8] sm:$0xff] %vm374, 0.0
        %494 = vst.msk [vmem:[#allocation2 + $0x3b0] sm:$0xff] %vm374, 0.0
        %495 = vst.msk [vmem:[#allocation2 + $0x3b8] sm:$0x3] %vm379, 0.0
        %496 = vst.msk [vmem:[#allocation2 + $0x3c0] sm:$0xff] %vm374, 0.0
        %497 = vst.msk [vmem:[#allocation2 + $0x3c8] sm:$0xff] %vm374, 0.0
        %498 = vst.msk [vmem:[#allocation2 + $0x3d0] sm:$0xff] %vm374, 0.0
        %499 = vst.msk [vmem:[#allocation2 + $0x3d8] sm:$0xff] %vm374, 0.0
        %500 = vst.msk [vmem:[#allocation2 + $0x3e0] sm:$0x3] %vm379, 0.0
        %501 = vst.msk [vmem:[#allocation2 + $0x3e8] sm:$0xff] %vm374, 0.0
        %502 = vst.msk [vmem:[#allocation2 + $0x3f0] sm:$0xff] %vm374, 0.0
        %503 = vst.msk [vmem:[#allocation2 + $0x3f8] sm:$0xff] %vm374, 0.0
        %504 = vst.msk [vmem:[#allocation2 + $0x400] sm:$0xff] %vm374, 0.0
        %505 = vst.msk [vmem:[#allocation2 + $0x408] sm:$0x3] %vm379, 0.0
        %506 = vst.msk [vmem:[#allocation2 + $0x410] sm:$0xff] %vm374, 0.0
        %507 = vst.msk [vmem:[#allocation2 + $0x418] sm:$0xff] %vm374, 0.0
        %508 = vst.msk [vmem:[#allocation2 + $0x420] sm:$0xff] %vm374, 0.0
        %509 = vst.msk [vmem:[#allocation2 + $0x428] sm:$0xff] %vm374, 0.0
        %510 = vst.msk [vmem:[#allocation2 + $0x430] sm:$0x3] %vm379, 0.0
        %511 = vst.msk [vmem:[#allocation2 + $0x438] sm:$0xff] %vm374, 0.0
        %512 = vst.msk [vmem:[#allocation2 + $0x440] sm:$0xff] %vm374, 0.0
        %513 = vst.msk [vmem:[#allocation2 + $0x448] sm:$0xff] %vm374, 0.0
        %514 = vst.msk [vmem:[#allocation2 + $0x450] sm:$0xff] %vm374, 0.0
        %515 = vst.msk [vmem:[#allocation2 + $0x458] sm:$0x3] %vm379, 0.0
        %516 = vst.msk [vmem:[#allocation2 + $0x460] sm:$0xff] %vm374, 0.0
        %517 = vst.msk [vmem:[#allocation2 + $0x468] sm:$0xff] %vm374, 0.0
        %518 = vst.msk [vmem:[#allocation2 + $0x470] sm:$0xff] %vm374, 0.0
        %519 = vst.msk [vmem:[#allocation2 + $0x478] sm:$0xff] %vm374, 0.0
        %520 = vst.msk [vmem:[#allocation2 + $0x480] sm:$0x3] %vm379, 0.0
        %521 = vst.msk [vmem:[#allocation2 + $0x488] sm:$0xff] %vm374, 0.0
        %522 = vst.msk [vmem:[#allocation2 + $0x490] sm:$0xff] %vm374, 0.0
        %523 = vst.msk [vmem:[#allocation2 + $0x498] sm:$0xff] %vm374, 0.0
        %524 = vst.msk [vmem:[#allocation2 + $0x4a0] sm:$0xff] %vm374, 0.0
        %525 = vst.msk [vmem:[#allocation2 + $0x4a8] sm:$0x3] %vm379, 0.0
        %526 = vst.msk [vmem:[#allocation2 + $0x4b0] sm:$0xff] %vm374, 0.0
        %527 = vst.msk [vmem:[#allocation2 + $0x4b8] sm:$0xff] %vm374, 0.0
        %528 = vst.msk [vmem:[#allocation2 + $0x4c0] sm:$0xff] %vm374, 0.0
        %529 = vst.msk [vmem:[#allocation2 + $0x4c8] sm:$0xff] %vm374, 0.0
        %530 = vst.msk [vmem:[#allocation2 + $0x4d0] sm:$0x3] %vm379, 0.0
        %531 = vst.msk [vmem:[#allocation2 + $0x4d8] sm:$0xff] %vm374, 0.0
        %532 = vst.msk [vmem:[#allocation2 + $0x4e0] sm:$0xff] %vm374, 0.0
        %533 = vst.msk [vmem:[#allocation2 + $0x4e8] sm:$0xff] %vm374, 0.0
        %534 = vst.msk [vmem:[#allocation2 + $0x4f0] sm:$0xff] %vm374, 0.0
        %535 = vst.msk [vmem:[#allocation2 + $0x4f8] sm:$0x3] %vm379, 0.0
        %536 = vst.msk [vmem:[#allocation2 + $0x500] sm:$0xff] %vm374, 0.0
        %537 = vst.msk [vmem:[#allocation2 + $0x508] sm:$0xff] %vm374, 0.0
        %538 = vst.msk [vmem:[#allocation2 + $0x510] sm:$0xff] %vm374, 0.0
        %539 = vst.msk [vmem:[#allocation2 + $0x518] sm:$0xff] %vm374, 0.0
        %540 = vst.msk [vmem:[#allocation2 + $0x520] sm:$0x3] %vm379, 0.0
        %541 = vst.msk [vmem:[#allocation2 + $0x528] sm:$0xff] %vm374, 0.0
        %542 = vst.msk [vmem:[#allocation2 + $0x530] sm:$0xff] %vm374, 0.0
        %543 = vst.msk [vmem:[#allocation2 + $0x538] sm:$0xff] %vm374, 0.0
        %544 = vst.msk [vmem:[#allocation2 + $0x540] sm:$0xff] %vm374, 0.0
        %545 = vst.msk [vmem:[#allocation2 + $0x548] sm:$0x3] %vm379, 0.0
        %v546 = vld [vmem:[%s1] sm:$0x1]
        %v547 = vld [vmem:[%s2] sm:$0x1]
        loop: start=0, step=1, limit=4
        $region57: #{gblock_forward.7} parent=55 // loop_pre_header
          _
        $region58: #{gblock_forward.7} parent=55 // loop_header
          %s549 = sphi 0, %s553
          %p550 = scmp.ge.s32.totalorder %s549, 4
        $region59: #{gblock_forward.7} parent=55 // loop_header_branch
          %552 = sbr.rel (%p550) target = $region63
        $region60: #{gblock_forward.7} parent=55 // loop_body
          %s554 = smul.u32 %s549, 8
          %s555 = smul.u32 %s554, 32
          %s556 = scalar_lea.vmem %s347, %s555
          %v557 = vld [vmem:[%s556] sm:$0xff]
          %v558 = vld [vmem:[%s556 + $0x8] sm:$0xff]
          %v559 = vld [vmem:[%s556 + $0x10] sm:$0xff]
          %v560 = vld [vmem:[%s556 + $0x18] sm:$0xff]
          %v561 = vld [vmem:[%s556 + $0x20] sm:$0xff]
          %v562 = vld [vmem:[%s556 + $0x28] sm:$0xff]
          %v563 = vld [vmem:[%s556 + $0x30] sm:$0xff]
          %v564 = vld [vmem:[%s556 + $0x38] sm:$0xff]
          %v565 = vld [vmem:[%s556 + $0x40] sm:$0xff]
          %v566 = vld [vmem:[%s556 + $0x48] sm:$0xff]
          %v567 = vld [vmem:[%s556 + $0x50] sm:$0xff]
          %v568 = vld [vmem:[%s556 + $0x58] sm:$0xff]
          %v569 = vld [vmem:[%s556 + $0x60] sm:$0xff]
          %v570 = vld [vmem:[%s556 + $0x68] sm:$0xff]
          %v571 = vld [vmem:[%s556 + $0x70] sm:$0xff]
          %v572 = vld [vmem:[%s556 + $0x78] sm:$0xff]
          %v573 = vld [vmem:[%s556 + $0x80] sm:$0xff]
          %v574 = vld [vmem:[%s556 + $0x88] sm:$0xff]
          %v575 = vld [vmem:[%s556 + $0x90] sm:$0xff]
          %v576 = vld [vmem:[%s556 + $0x98] sm:$0xff]
          %v577 = vld [vmem:[%s556 + $0xa0] sm:$0xff]
          %v578 = vld [vmem:[%s556 + $0xa8] sm:$0xff]
          %v579 = vld [vmem:[%s556 + $0xb0] sm:$0xff]
          %v580 = vld [vmem:[%s556 + $0xb8] sm:$0xff]
          %v581 = vld [vmem:[%s556 + $0xc0] sm:$0xff]
          %v582 = vld [vmem:[%s556 + $0xc8] sm:$0xff]
          %v583 = vld [vmem:[%s556 + $0xd0] sm:$0xff]
          %v584 = vld [vmem:[%s556 + $0xd8] sm:$0xff]
          %v585 = vld [vmem:[%s556 + $0xe0] sm:$0xff]
          %v586 = vld [vmem:[%s556 + $0xe8] sm:$0xff]
          %v587 = vld [vmem:[%s556 + $0xf0] sm:$0xff]
          %v588 = vld [vmem:[%s556 + $0xf8] sm:$0xff]
          %v590 = vlaneseq
          %v591 = vshrl.u32 %v590, 7
          %v592 = vsub.s32 0, %v591
          %v593 = vrot.slane %v546, %v592
          %v595 = vmul.f32 %v557, %v593
          %v596 = vmul.f32 %v558, %v593
          %v597 = vmul.f32 %v559, %v593
          %v598 = vmul.f32 %v560, %v593
          %v599 = vmul.f32 %v561, %v593
          %v600 = vmul.f32 %v562, %v593
          %v601 = vmul.f32 %v563, %v593
          %v602 = vmul.f32 %v564, %v593
          %v603 = vmul.f32 %v565, %v593
          %v604 = vmul.f32 %v566, %v593
          %v605 = vmul.f32 %v567, %v593
          %v606 = vmul.f32 %v568, %v593
          %v607 = vmul.f32 %v569, %v593
          %v608 = vmul.f32 %v570, %v593
          %v609 = vmul.f32 %v571, %v593
          %v610 = vmul.f32 %v572, %v593
          %v611 = vmul.f32 %v573, %v593
          %v612 = vmul.f32 %v574, %v593
          %v613 = vmul.f32 %v575, %v593
          %v614 = vmul.f32 %v576, %v593
          %v615 = vmul.f32 %v577, %v593
          %v616 = vmul.f32 %v578, %v593
          %v617 = vmul.f32 %v579, %v593
          %v618 = vmul.f32 %v580, %v593
          %v619 = vmul.f32 %v581, %v593
          %v620 = vmul.f32 %v582, %v593
          %v621 = vmul.f32 %v583, %v593
          %v622 = vmul.f32 %v584, %v593
          %v623 = vmul.f32 %v585, %v593
          %v624 = vmul.f32 %v586, %v593
          %v625 = vmul.f32 %v587, %v593
          %v626 = vmul.f32 %v588, %v593
          %v628 = vlaneseq
          %v629 = vshrl.u32 %v628, 7
          %v630 = vsub.s32 0, %v629
          %v631 = vrot.slane %v547, %v630
          %v633 = vadd.f32 %v595, %v631
          %v634 = vadd.f32 %v596, %v631
          %v635 = vadd.f32 %v597, %v631
          %v636 = vadd.f32 %v598, %v631
          %v637 = vadd.f32 %v599, %v631
          %v638 = vadd.f32 %v600, %v631
          %v639 = vadd.f32 %v601, %v631
          %v640 = vadd.f32 %v602, %v631
          %v641 = vadd.f32 %v603, %v631
          %v642 = vadd.f32 %v604, %v631
          %v643 = vadd.f32 %v605, %v631
          %v644 = vadd.f32 %v606, %v631
          %v645 = vadd.f32 %v607, %v631
          %v646 = vadd.f32 %v608, %v631
          %v647 = vadd.f32 %v609, %v631
          %v648 = vadd.f32 %v610, %v631
          %v649 = vadd.f32 %v611, %v631
          %v650 = vadd.f32 %v612, %v631
          %v651 = vadd.f32 %v613, %v631
          %v652 = vadd.f32 %v614, %v631
          %v653 = vadd.f32 %v615, %v631
          %v654 = vadd.f32 %v616, %v631
          %v655 = vadd.f32 %v617, %v631
          %v656 = vadd.f32 %v618, %v631
          %v657 = vadd.f32 %v619, %v631
          %v658 = vadd.f32 %v620, %v631
          %v659 = vadd.f32 %v621, %v631
          %v660 = vadd.f32 %v622, %v631
          %v661 = vadd.f32 %v623, %v631
          %v662 = vadd.f32 %v624, %v631
          %v663 = vadd.f32 %v625, %v631
          %v664 = vadd.f32 %v626, %v631
          %v665 = vmax.f32 %v633, 0.0
          %v666 = vmax.f32 %v634, 0.0
          %v667 = vmax.f32 %v635, 0.0
          %v668 = vmax.f32 %v636, 0.0
          %v669 = vmax.f32 %v637, 0.0
          %v670 = vmax.f32 %v638, 0.0
          %v671 = vmax.f32 %v639, 0.0
          %v672 = vmax.f32 %v640, 0.0
          %v673 = vmax.f32 %v641, 0.0
          %v674 = vmax.f32 %v642, 0.0
          %v675 = vmax.f32 %v643, 0.0
          %v676 = vmax.f32 %v644, 0.0
          %v677 = vmax.f32 %v645, 0.0
          %v678 = vmax.f32 %v646, 0.0
          %v679 = vmax.f32 %v647, 0.0
          %v680 = vmax.f32 %v648, 0.0
          %v681 = vmax.f32 %v649, 0.0
          %v682 = vmax.f32 %v650, 0.0
          %v683 = vmax.f32 %v651, 0.0
          %v684 = vmax.f32 %v652, 0.0
          %v685 = vmax.f32 %v653, 0.0
          %v686 = vmax.f32 %v654, 0.0
          %v687 = vmax.f32 %v655, 0.0
          %v688 = vmax.f32 %v656, 0.0
          %v689 = vmax.f32 %v657, 0.0
          %v690 = vmax.f32 %v658, 0.0
          %v691 = vmax.f32 %v659, 0.0
          %v692 = vmax.f32 %v660, 0.0
          %v693 = vmax.f32 %v661, 0.0
          %v694 = vmax.f32 %v662, 0.0
          %v695 = vmax.f32 %v663, 0.0
          %v696 = vmax.f32 %v664, 0.0
          %s697 = sadd.s32 %s554, 1
          %s698 = smul.u32 %s697, 40
          %s699 = scalar_lea.vmem [#allocation2], %s698
          %700 = vst.msk [vmem:[%s699 + $0x1] sm:$0xff] %vm374, %v665
          %701 = vst.msk [vmem:[%s699 + $0x9] sm:$0xff] %vm374, %v666
          %702 = vst.msk [vmem:[%s699 + $0x11] sm:$0xff] %vm374, %v667
          %703 = vst.msk [vmem:[%s699 + $0x19] sm:$0xff] %vm374, %v668
          %704 = vst.msk [vmem:[%s699 + $0x29] sm:$0xff] %vm374, %v669
          %705 = vst.msk [vmem:[%s699 + $0x31] sm:$0xff] %vm374, %v670
          %706 = vst.msk [vmem:[%s699 + $0x39] sm:$0xff] %vm374, %v671
          %707 = vst.msk [vmem:[%s699 + $0x41] sm:$0xff] %vm374, %v672
          %708 = vst.msk [vmem:[%s699 + $0x51] sm:$0xff] %vm374, %v673
          %709 = vst.msk [vmem:[%s699 + $0x59] sm:$0xff] %vm374, %v674
          %710 = vst.msk [vmem:[%s699 + $0x61] sm:$0xff] %vm374, %v675
          %711 = vst.msk [vmem:[%s699 + $0x69] sm:$0xff] %vm374, %v676
          %712 = vst.msk [vmem:[%s699 + $0x79] sm:$0xff] %vm374, %v677
          %713 = vst.msk [vmem:[%s699 + $0x81] sm:$0xff] %vm374, %v678
          %714 = vst.msk [vmem:[%s699 + $0x89] sm:$0xff] %vm374, %v679
          %715 = vst.msk [vmem:[%s699 + $0x91] sm:$0xff] %vm374, %v680
          %716 = vst.msk [vmem:[%s699 + $0xa1] sm:$0xff] %vm374, %v681
          %717 = vst.msk [vmem:[%s699 + $0xa9] sm:$0xff] %vm374, %v682
          %718 = vst.msk [vmem:[%s699 + $0xb1] sm:$0xff] %vm374, %v683
          %719 = vst.msk [vmem:[%s699 + $0xb9] sm:$0xff] %vm374, %v684
          %720 = vst.msk [vmem:[%s699 + $0xc9] sm:$0xff] %vm374, %v685
          %721 = vst.msk [vmem:[%s699 + $0xd1] sm:$0xff] %vm374, %v686
          %722 = vst.msk [vmem:[%s699 + $0xd9] sm:$0xff] %vm374, %v687
          %723 = vst.msk [vmem:[%s699 + $0xe1] sm:$0xff] %vm374, %v688
          %724 = vst.msk [vmem:[%s699 + $0xf1] sm:$0xff] %vm374, %v689
          %725 = vst.msk [vmem:[%s699 + $0xf9] sm:$0xff] %vm374, %v690
          %726 = vst.msk [vmem:[%s699 + $0x101] sm:$0xff] %vm374, %v691
          %727 = vst.msk [vmem:[%s699 + $0x109] sm:$0xff] %vm374, %v692
          %728 = vst.msk [vmem:[%s699 + $0x119] sm:$0xff] %vm374, %v693
          %729 = vst.msk [vmem:[%s699 + $0x121] sm:$0xff] %vm374, %v694
          %730 = vst.msk [vmem:[%s699 + $0x129] sm:$0xff] %vm374, %v695
          %731 = vst.msk [vmem:[%s699 + $0x131] sm:$0xff] %vm374, %v696
        $region61: #{gblock_forward.7} parent=55 // loop_footer
          %s553 = sadd.s32 1, %s549
        $region62: #{gblock_forward.7} parent=55 // loop_footer_branch
          %548 = sbr.rel target = $region58
        $region63: #{gblock_forward.7} parent=55 // loop_exit
          _
      $region56: #{gblock_forward.7} parent=51 // pred_fallthru
        _
      %s732 = smul.u32 %s24, 8
      %s733 = smul.u32 %s732, 40
      %s734 = scalar_lea.vmem [#allocation2], %s733
      %v735 = vld [vmem:[%s734] sm:$0xff]
      %v736 = vld [vmem:[%s734 + $0x8] sm:$0xff]
      %v737 = vld [vmem:[%s734 + $0x10] sm:$0xff]
      %v738 = vld [vmem:[%s734 + $0x18] sm:$0xff]
      %v739 = vld [vmem:[%s734 + $0x20] sm:$0x3]
      %v740 = vld [vmem:[%s734 + $0x28] sm:$0xff]
      %v741 = vld [vmem:[%s734 + $0x30] sm:$0xff]
      %v742 = vld [vmem:[%s734 + $0x38] sm:$0xff]
      %v743 = vld [vmem:[%s734 + $0x40] sm:$0xff]
      %v744 = vld [vmem:[%s734 + $0x48] sm:$0x3]
      %v745 = vld [vmem:[%s734 + $0x50] sm:$0xff]
      %v746 = vld [vmem:[%s734 + $0x58] sm:$0xff]
      %v747 = vld [vmem:[%s734 + $0x60] sm:$0xff]
      %v748 = vld [vmem:[%s734 + $0x68] sm:$0xff]
      %v749 = vld [vmem:[%s734 + $0x70] sm:$0x3]
      %v750 = vld [vmem:[%s734 + $0x78] sm:$0xff]
      %v751 = vld [vmem:[%s734 + $0x80] sm:$0xff]
      %v752 = vld [vmem:[%s734 + $0x88] sm:$0xff]
      %v753 = vld [vmem:[%s734 + $0x90] sm:$0xff]
      %v754 = vld [vmem:[%s734 + $0x98] sm:$0x3]
      %v755 = vld [vmem:[%s734 + $0xa0] sm:$0xff]
      %v756 = vld [vmem:[%s734 + $0xa8] sm:$0xff]
      %v757 = vld [vmem:[%s734 + $0xb0] sm:$0xff]
      %v758 = vld [vmem:[%s734 + $0xb8] sm:$0xff]
      %v759 = vld [vmem:[%s734 + $0xc0] sm:$0x3]
      %v760 = vld [vmem:[%s734 + $0xc8] sm:$0xff]
      %v761 = vld [vmem:[%s734 + $0xd0] sm:$0xff]
      %v762 = vld [vmem:[%s734 + $0xd8] sm:$0xff]
      %v763 = vld [vmem:[%s734 + $0xe0] sm:$0xff]
      %v764 = vld [vmem:[%s734 + $0xe8] sm:$0x3]
      %v765 = vld [vmem:[%s734 + $0xf0] sm:$0xff]
      %v766 = vld [vmem:[%s734 + $0xf8] sm:$0xff]
      %v767 = vld [vmem:[%s734 + $0x100] sm:$0xff]
      %v768 = vld [vmem:[%s734 + $0x108] sm:$0xff]
      %v769 = vld [vmem:[%s734 + $0x110] sm:$0x3]
      %v770 = vld [vmem:[%s734 + $0x118] sm:$0xff]
      %v771 = vld [vmem:[%s734 + $0x120] sm:$0xff]
      %v772 = vld [vmem:[%s734 + $0x128] sm:$0xff]
      %v773 = vld [vmem:[%s734 + $0x130] sm:$0xff]
      %v774 = vld [vmem:[%s734 + $0x138] sm:$0x3]
      %v775 = vld [vmem:[%s734 + $0x140] sm:$0xff]
      %v776 = vld [vmem:[%s734 + $0x148] sm:$0xff]
      %v777 = vld [vmem:[%s734 + $0x150] sm:$0xff]
      %v778 = vld [vmem:[%s734 + $0x158] sm:$0xff]
      %v779 = vld [vmem:[%s734 + $0x160] sm:$0x3]
      %v780 = vld [vmem:[%s734 + $0x168] sm:$0xff]
      %v781 = vld [vmem:[%s734 + $0x170] sm:$0xff]
      %v782 = vld [vmem:[%s734 + $0x178] sm:$0xff]
      %v783 = vld [vmem:[%s734 + $0x180] sm:$0xff]
      %v784 = vld [vmem:[%s734 + $0x188] sm:$0x3]
      %v785 = vld [vmem:[%s3] sm:$0xf]
      %vm826 = vcmask 1046528
      %v827 = vrot.slane %v735, 1
      %v828 = vrot.slane %v736, 1
      %v829 = vsel %vm826, %v827, %v828
      %v830 = vrot.slane %v737, 1
      %v831 = vsel %vm826, %v828, %v830
      %v832 = vrot.slane %v738, 1
      %v833 = vsel %vm826, %v830, %v832
      %v834 = vrot.slane %v739, 1
      %v835 = vsel %vm826, %v832, %v834
      %v836 = vrot.slane %v740, 1
      %v837 = vrot.slane %v741, 1
      %v838 = vsel %vm826, %v836, %v837
      %v839 = vrot.slane %v742, 1
      %v840 = vsel %vm826, %v837, %v839
      %v841 = vrot.slane %v743, 1
      %v842 = vsel %vm826, %v839, %v841
      %v843 = vrot.slane %v744, 1
      %v844 = vsel %vm826, %v841, %v843
      %v845 = vrot.slane %v745, 1
      %v846 = vrot.slane %v746, 1
      %v847 = vsel %vm826, %v845, %v846
      %v848 = vrot.slane %v747, 1
      %v849 = vsel %vm826, %v846, %v848
      %v850 = vrot.slane %v748, 1
      %v851 = vsel %vm826, %v848, %v850
      %v852 = vrot.slane %v749, 1
      %v853 = vsel %vm826, %v850, %v852
      %v854 = vrot.slane %v750, 1
      %v855 = vrot.slane %v751, 1
      %v856 = vsel %vm826, %v854, %v855
      %v857 = vrot.slane %v752, 1
      %v858 = vsel %vm826, %v855, %v857
      %v859 = vrot.slane %v753, 1
      %v860 = vsel %vm826, %v857, %v859
      %v861 = vrot.slane %v754, 1
      %v862 = vsel %vm826, %v859, %v861
      %v863 = vrot.slane %v755, 1
      %v864 = vrot.slane %v756, 1
      %v865 = vsel %vm826, %v863, %v864
      %v866 = vrot.slane %v757, 1
      %v867 = vsel %vm826, %v864, %v866
      %v868 = vrot.slane %v758, 1
      %v869 = vsel %vm826, %v866, %v868
      %v870 = vrot.slane %v759, 1
      %v871 = vsel %vm826, %v868, %v870
      %v872 = vrot.slane %v760, 1
      %v873 = vrot.slane %v761, 1
      %v874 = vsel %vm826, %v872, %v873
      %v875 = vrot.slane %v762, 1
      %v876 = vsel %vm826, %v873, %v875
      %v877 = vrot.slane %v763, 1
      %v878 = vsel %vm826, %v875, %v877
      %v879 = vrot.slane %v764, 1
      %v880 = vsel %vm826, %v877, %v879
      %v881 = vrot.slane %v765, 1
      %v882 = vrot.slane %v766, 1
      %v883 = vsel %vm826, %v881, %v882
      %v884 = vrot.slane %v767, 1
      %v885 = vsel %vm826, %v882, %v884
      %v886 = vrot.slane %v768, 1
      %v887 = vsel %vm826, %v884, %v886
      %v888 = vrot.slane %v769, 1
      %v889 = vsel %vm826, %v886, %v888
      %v890 = vrot.slane %v770, 1
      %v891 = vrot.slane %v771, 1
      %v892 = vsel %vm826, %v890, %v891
      %v893 = vrot.slane %v772, 1
      %v894 = vsel %vm826, %v891, %v893
      %v895 = vrot.slane %v773, 1
      %v896 = vsel %vm826, %v893, %v895
      %v897 = vrot.slane %v774, 1
      %v898 = vsel %vm826, %v895, %v897
      %s899 = scalar_lea.vmem %s3, 4
      %v900 = vld [vmem:[%s899] sm:$0xf]
      %vm901 = vcmask 31744
      %v902 = vsel %vm901, %v829, 0
      %v904 = vsel %vm901, %v831, 0
      %v906 = vsel %vm901, %v833, 0
      %v908 = vsel %vm901, %v835, 0
      %v910 = vsel %vm901, %v838, 0
      %v912 = vsel %vm901, %v840, 0
      %v914 = vsel %vm901, %v842, 0
      %v916 = vsel %vm901, %v844, 0
      %v918 = vsel %vm901, %v847, 0
      %v920 = vsel %vm901, %v849, 0
      %v922 = vsel %vm901, %v851, 0
      %v924 = vsel %vm901, %v853, 0
      %v926 = vsel %vm901, %v856, 0
      %v928 = vsel %vm901, %v858, 0
      %v930 = vsel %vm901, %v860, 0
      %v932 = vsel %vm901, %v862, 0
      %v934 = vsel %vm901, %v865, 0
      %v936 = vsel %vm901, %v867, 0
      %v938 = vsel %vm901, %v869, 0
      %v940 = vsel %vm901, %v871, 0
      %v942 = vsel %vm901, %v874, 0
      %v944 = vsel %vm901, %v876, 0
      %v946 = vsel %vm901, %v878, 0
      %v948 = vsel %vm901, %v880, 0
      %v950 = vsel %vm901, %v883, 0
      %v952 = vsel %vm901, %v885, 0
      %v954 = vsel %vm901, %v887, 0
      %v956 = vsel %vm901, %v889, 0
      %v958 = vsel %vm901, %v892, 0
      %v960 = vsel %vm901, %v894, 0
      %v962 = vsel %vm901, %v896, 0
      %v964 = vsel %vm901, %v898, 0
      %vm966 = vcmask 1043456
      %v968 = vsel %vm966, %v900, 0
      %970 = vmatprep.subr.mxu0 0.0
      %971 = vmatpush1.msra.mxu0 0.0
      %972 = vmatprep.subr.mxu0 0.0
      %973 = vmatpush1.msra.mxu0 0.0
      %974 = vmatprep.subr.mxu0 0.0
      %975 = vmatpush1.msra.mxu0 0.0
      %976 = vmatprep.subr.mxu0 0.0
      %977 = vmatpush1.msra.mxu0 0.0
      %978 = vmatprep.subr.mxu0 0.0
      %979 = vmatpush1.msra.mxu0 0.0
      %980 = vmatprep.subr.mxu0 0.0
      %981 = vmatpush1.msra.mxu0 0.0
      %982 = vmatprep.subr.mxu0 0.0
      %983 = vmatpush1.msra.mxu0 0.0
      %984 = vmatprep.subr.mxu0 0.0
      %985 = vmatpush1.msra.mxu0 0.0
      %986 = vmatprep.subr.mxu0 0.0
      %987 = vmatpush1.msra.mxu0 0.0
      %988 = vmatprep.subr.mxu0 0.0
      %989 = vmatpush1.msra.mxu0 0.0
      %990 = vmatprep.subr.mxu0 0.0
      %991 = vmatpush1.msra.mxu0 0.0
      %992 = vmatprep.subr.mxu0 0.0
      %993 = vmatpush1.msra.mxu0 0.0
      %994 = vmatprep.subr.mxu0 0.0
      %995 = vmatpush1.msra.mxu0 0.0
      %996 = vmatprep.subr.mxu0 0.0
      %997 = vmatpush1.msra.mxu0 0.0
      %998 = vmatprep.subr.mxu0 0.0
      %999 = vmatpush1.msra.mxu0 0.0
      %1000 = vmatprep.subr.mxu0 0.0
      %1001 = vmatpush1.msra.mxu0 %v968
      %1002 = vmatprep.subr.mxu0 0.0
      %1003 = vmatpush2.msra.mxu0 0.0
      %1004 = vmatprep.subr.mxu0 0.0
      %1005 = vmatpush2.msra.mxu0 0.0
      %1006 = vmatprep.subr.mxu0 0.0
      %1007 = vmatpush2.msra.mxu0 0.0
      %1008 = vmatprep.subr.mxu0 0.0
      %1009 = vmatpush2.msra.mxu0 0.0
      %1010 = vmatprep.subr.mxu0 0.0
      %1011 = vmatpush2.msra.mxu0 0.0
      %1012 = vmatprep.subr.mxu0 0.0
      %1013 = vmatpush2.msra.mxu0 0.0
      %1014 = vmatprep.subr.mxu0 0.0
      %1015 = vmatpush2.msra.mxu0 0.0
      %1016 = vmatprep.subr.mxu0 0.0
      %1017 = vmatpush2.msra.mxu0 0.0
      %1018 = vmatprep.subr.mxu0 0.0
      %1019 = vmatpush2.msra.mxu0 0.0
      %1020 = vmatprep.subr.mxu0 0.0
      %1021 = vmatpush2.msra.mxu0 0.0
      %1022 = vmatprep.subr.mxu0 0.0
      %1023 = vmatpush2.msra.mxu0 0.0
      %1024 = vmatprep.subr.mxu0 0.0
      %1025 = vmatpush2.msra.mxu0 0.0
      %1026 = vmatprep.subr.mxu0 0.0
      %1027 = vmatpush2.msra.mxu0 0.0
      %1028 = vmatprep.subr.mxu0 0.0
      %1029 = vmatpush2.msra.mxu0 0.0
      %1030 = vmatprep.subr.mxu0 0.0
      %1031 = vmatpush2.msra.mxu0 0.0
      %1032 = vmatprep.subr.mxu0 0.0
      %1033 = vmatpush2.msra.mxu0 0.0
      %1034 = vmatprep.mubr.f32.mxu0 0.0
      %1035 = vmatmul.mubr.f32.gmra.mxu0 %v902
      %v1036 = vpop.f32.mrf.mxu0
      %v1037 = vadd.f32 0.0, %v1036
      %v1038 = vpop.f32.mrf.mxu0
      %1039 = vmatprep.mubr.f32.mxu0 0.0
      %1040 = vmatmul.mubr.f32.gmra.mxu0 %v904
      %v1041 = vpop.f32.mrf.mxu0
      %v1042 = vadd.f32 0.0, %v1041
      %v1043 = vpop.f32.mrf.mxu0
      %1044 = vmatprep.mubr.f32.mxu0 0.0
      %1045 = vmatmul.mubr.f32.gmra.mxu0 %v906
      %v1046 = vpop.f32.mrf.mxu0
      %v1047 = vadd.f32 0.0, %v1046
      %v1048 = vpop.f32.mrf.mxu0
      %1049 = vmatprep.mubr.f32.mxu0 0.0
      %1050 = vmatmul.mubr.f32.gmra.mxu0 %v908
      %v1051 = vpop.f32.mrf.mxu0
      %v1052 = vadd.f32 0.0, %v1051
      %v1053 = vpop.f32.mrf.mxu0
      %1054 = vmatprep.mubr.f32.mxu0 0.0
      %1055 = vmatmul.mubr.f32.gmra.mxu0 %v910
      %v1056 = vpop.f32.mrf.mxu0
      %v1057 = vadd.f32 0.0, %v1056
      %v1058 = vpop.f32.mrf.mxu0
      %1059 = vmatprep.mubr.f32.mxu0 0.0
      %1060 = vmatmul.mubr.f32.gmra.mxu0 %v912
      %v1061 = vpop.f32.mrf.mxu0
      %v1062 = vadd.f32 0.0, %v1061
      %v1063 = vpop.f32.mrf.mxu0
      %1064 = vmatprep.mubr.f32.mxu0 0.0
      %1065 = vmatmul.mubr.f32.gmra.mxu0 %v914
      %v1066 = vpop.f32.mrf.mxu0
      %v1067 = vadd.f32 0.0, %v1066
      %v1068 = vpop.f32.mrf.mxu0
      %1069 = vmatprep.mubr.f32.mxu0 0.0
      %1070 = vmatmul.mubr.f32.gmra.mxu0 %v916
      %v1071 = vpop.f32.mrf.mxu0
      %v1072 = vadd.f32 0.0, %v1071
      %v1073 = vpop.f32.mrf.mxu0
      %1074 = vmatprep.mubr.f32.mxu0 0.0
      %1075 = vmatmul.mubr.f32.gmra.mxu0 %v918
      %v1076 = vpop.f32.mrf.mxu0
      %v1077 = vadd.f32 0.0, %v1076
      %v1078 = vpop.f32.mrf.mxu0
      %1079 = vmatprep.mubr.f32.mxu0 0.0
      %1080 = vmatmul.mubr.f32.gmra.mxu0 %v920
      %v1081 = vpop.f32.mrf.mxu0
      %v1082 = vadd.f32 0.0, %v1081
      %v1083 = vpop.f32.mrf.mxu0
      %1084 = vmatprep.mubr.f32.mxu0 0.0
      %1085 = vmatmul.mubr.f32.gmra.mxu0 %v922
      %v1086 = vpop.f32.mrf.mxu0
      %v1087 = vadd.f32 0.0, %v1086
      %v1088 = vpop.f32.mrf.mxu0
      %1089 = vmatprep.mubr.f32.mxu0 0.0
      %1090 = vmatmul.mubr.f32.gmra.mxu0 %v924
      %v1091 = vpop.f32.mrf.mxu0
      %v1092 = vadd.f32 0.0, %v1091
      %v1093 = vpop.f32.mrf.mxu0
      %1094 = vmatprep.mubr.f32.mxu0 0.0
      %1095 = vmatmul.mubr.f32.gmra.mxu0 %v926
      %v1096 = vpop.f32.mrf.mxu0
      %v1097 = vadd.f32 0.0, %v1096
      %v1098 = vpop.f32.mrf.mxu0
      %1099 = vmatprep.mubr.f32.mxu0 0.0
      %1100 = vmatmul.mubr.f32.gmra.mxu0 %v928
      %v1101 = vpop.f32.mrf.mxu0
      %v1102 = vadd.f32 0.0, %v1101
      %v1103 = vpop.f32.mrf.mxu0
      %1104 = vmatprep.mubr.f32.mxu0 0.0
      %1105 = vmatmul.mubr.f32.gmra.mxu0 %v930
      %v1106 = vpop.f32.mrf.mxu0
      %v1107 = vadd.f32 0.0, %v1106
      %v1108 = vpop.f32.mrf.mxu0
      %1109 = vmatprep.mubr.f32.mxu0 0.0
      %1110 = vmatmul.mubr.f32.gmra.mxu0 %v932
      %v1111 = vpop.f32.mrf.mxu0
      %v1112 = vadd.f32 0.0, %v1111
      %v1113 = vpop.f32.mrf.mxu0
      %1114 = vmatprep.mubr.f32.mxu0 0.0
      %1115 = vmatmul.mubr.f32.gmra.mxu0 %v934
      %v1116 = vpop.f32.mrf.mxu0
      %v1117 = vadd.f32 0.0, %v1116
      %v1118 = vpop.f32.mrf.mxu0
      %1119 = vmatprep.mubr.f32.mxu0 0.0
      %1120 = vmatmul.mubr.f32.gmra.mxu0 %v936
      %v1121 = vpop.f32.mrf.mxu0
      %v1122 = vadd.f32 0.0, %v1121
      %v1123 = vpop.f32.mrf.mxu0
      %1124 = vmatprep.mubr.f32.mxu0 0.0
      %1125 = vmatmul.mubr.f32.gmra.mxu0 %v938
      %v1126 = vpop.f32.mrf.mxu0
      %v1127 = vadd.f32 0.0, %v1126
      %v1128 = vpop.f32.mrf.mxu0
      %1129 = vmatprep.mubr.f32.mxu0 0.0
      %1130 = vmatmul.mubr.f32.gmra.mxu0 %v940
      %v1131 = vpop.f32.mrf.mxu0
      %v1132 = vadd.f32 0.0, %v1131
      %v1133 = vpop.f32.mrf.mxu0
      %1134 = vmatprep.mubr.f32.mxu0 0.0
      %1135 = vmatmul.mubr.f32.gmra.mxu0 %v942
      %v1136 = vpop.f32.mrf.mxu0
      %v1137 = vadd.f32 0.0, %v1136
      %v1138 = vpop.f32.mrf.mxu0
      %1139 = vmatprep.mubr.f32.mxu0 0.0
      %1140 = vmatmul.mubr.f32.gmra.mxu0 %v944
      %v1141 = vpop.f32.mrf.mxu0
      %v1142 = vadd.f32 0.0, %v1141
      %v1143 = vpop.f32.mrf.mxu0
      %1144 = vmatprep.mubr.f32.mxu0 0.0
      %1145 = vmatmul.mubr.f32.gmra.mxu0 %v946
      %v1146 = vpop.f32.mrf.mxu0
      %v1147 = vadd.f32 0.0, %v1146
      %v1148 = vpop.f32.mrf.mxu0
      %1149 = vmatprep.mubr.f32.mxu0 0.0
      %1150 = vmatmul.mubr.f32.gmra.mxu0 %v948
      %v1151 = vpop.f32.mrf.mxu0
      %v1152 = vadd.f32 0.0, %v1151
      %v1153 = vpop.f32.mrf.mxu0
      %1154 = vmatprep.mubr.f32.mxu0 0.0
      %1155 = vmatmul.mubr.f32.gmra.mxu0 %v950
      %v1156 = vpop.f32.mrf.mxu0
      %v1157 = vadd.f32 0.0, %v1156
      %v1158 = vpop.f32.mrf.mxu0
      %1159 = vmatprep.mubr.f32.mxu0 0.0
      %1160 = vmatmul.mubr.f32.gmra.mxu0 %v952
      %v1161 = vpop.f32.mrf.mxu0
      %v1162 = vadd.f32 0.0, %v1161
      %v1163 = vpop.f32.mrf.mxu0
      %1164 = vmatprep.mubr.f32.mxu0 0.0
      %1165 = vmatmul.mubr.f32.gmra.mxu0 %v954
      %v1166 = vpop.f32.mrf.mxu0
      %v1167 = vadd.f32 0.0, %v1166
      %v1168 = vpop.f32.mrf.mxu0
      %1169 = vmatprep.mubr.f32.mxu0 0.0
      %1170 = vmatmul.mubr.f32.gmra.mxu0 %v956
      %v1171 = vpop.f32.mrf.mxu0
      %v1172 = vadd.f32 0.0, %v1171
      %v1173 = vpop.f32.mrf.mxu0
      %1174 = vmatprep.mubr.f32.mxu0 0.0
      %1175 = vmatmul.mubr.f32.gmra.mxu0 %v958
      %v1176 = vpop.f32.mrf.mxu0
      %v1177 = vadd.f32 0.0, %v1176
      %v1178 = vpop.f32.mrf.mxu0
      %1179 = vmatprep.mubr.f32.mxu0 0.0
      %1180 = vmatmul.mubr.f32.gmra.mxu0 %v960
      %v1181 = vpop.f32.mrf.mxu0
      %v1182 = vadd.f32 0.0, %v1181
      %v1183 = vpop.f32.mrf.mxu0
      %1184 = vmatprep.mubr.f32.mxu0 0.0
      %1185 = vmatmul.mubr.f32.gmra.mxu0 %v962
      %v1186 = vpop.f32.mrf.mxu0
      %v1187 = vadd.f32 0.0, %v1186
      %v1188 = vpop.f32.mrf.mxu0
      %1189 = vmatprep.mubr.f32.mxu0 0.0
      %1190 = vmatmul.mubr.f32.gmra.mxu0 %v964
      %v1191 = vpop.f32.mrf.mxu0
      %v1192 = vadd.f32 0.0, %v1191
      %v1193 = vpop.f32.mrf.mxu0
      %1194 = vdwg.mxu0
      %v1195 = vsel %vm901, %v735, 0
      %v1197 = vsel %vm901, %v736, 0
      %v1199 = vsel %vm901, %v737, 0
      %v1201 = vsel %vm901, %v738, 0
      %v1203 = vsel %vm901, %v740, 0
      %v1205 = vsel %vm901, %v741, 0
      %v1207 = vsel %vm901, %v742, 0
      %v1209 = vsel %vm901, %v743, 0
      %v1211 = vsel %vm901, %v745, 0
      %v1213 = vsel %vm901, %v746, 0
      %v1215 = vsel %vm901, %v747, 0
      %v1217 = vsel %vm901, %v748, 0
      %v1219 = vsel %vm901, %v750, 0
      %v1221 = vsel %vm901, %v751, 0
      %v1223 = vsel %vm901, %v752, 0
      %v1225 = vsel %vm901, %v753, 0
      %v1227 = vsel %vm901, %v755, 0
      %v1229 = vsel %vm901, %v756, 0
      %v1231 = vsel %vm901, %v757, 0
      %v1233 = vsel %vm901, %v758, 0
      %v1235 = vsel %vm901, %v760, 0
      %v1237 = vsel %vm901, %v761, 0
      %v1239 = vsel %vm901, %v762, 0
      %v1241 = vsel %vm901, %v763, 0
      %v1243 = vsel %vm901, %v765, 0
      %v1245 = vsel %vm901, %v766, 0
      %v1247 = vsel %vm901, %v767, 0
      %v1249 = vsel %vm901, %v768, 0
      %v1251 = vsel %vm901, %v770, 0
      %v1253 = vsel %vm901, %v771, 0
      %v1255 = vsel %vm901, %v772, 0
      %v1257 = vsel %vm901, %v773, 0
      %v1260 = vsel %vm966, %v785, 0
      %1262 = vmatprep.subr.mxu0 0.0
      %1263 = vmatpush1.msra.mxu0 0.0
      %1264 = vmatprep.subr.mxu0 0.0
      %1265 = vmatpush1.msra.mxu0 0.0
      %1266 = vmatprep.subr.mxu0 0.0
      %1267 = vmatpush1.msra.mxu0 0.0
      %1268 = vmatprep.subr.mxu0 0.0
      %1269 = vmatpush1.msra.mxu0 0.0
      %1270 = vmatprep.subr.mxu0 0.0
      %1271 = vmatpush1.msra.mxu0 0.0
      %1272 = vmatprep.subr.mxu0 0.0
      %1273 = vmatpush1.msra.mxu0 0.0
      %1274 = vmatprep.subr.mxu0 0.0
      %1275 = vmatpush1.msra.mxu0 0.0
      %1276 = vmatprep.subr.mxu0 0.0
      %1277 = vmatpush1.msra.mxu0 0.0
      %1278 = vmatprep.subr.mxu0 0.0
      %1279 = vmatpush1.msra.mxu0 0.0
      %1280 = vmatprep.subr.mxu0 0.0
      %1281 = vmatpush1.msra.mxu0 0.0
      %1282 = vmatprep.subr.mxu0 0.0
      %1283 = vmatpush1.msra.mxu0 0.0
      %1284 = vmatprep.subr.mxu0 0.0
      %1285 = vmatpush1.msra.mxu0 0.0
      %1286 = vmatprep.subr.mxu0 0.0
      %1287 = vmatpush1.msra.mxu0 0.0
      %1288 = vmatprep.subr.mxu0 0.0
      %1289 = vmatpush1.msra.mxu0 0.0
      %1290 = vmatprep.subr.mxu0 0.0
      %1291 = vmatpush1.msra.mxu0 0.0
      %1292 = vmatprep.subr.mxu0 0.0
      %1293 = vmatpush1.msra.mxu0 %v1260
      %1294 = vmatprep.subr.mxu0 0.0
      %1295 = vmatpush2.msra.mxu0 0.0
      %1296 = vmatprep.subr.mxu0 0.0
      %1297 = vmatpush2.msra.mxu0 0.0
      %1298 = vmatprep.subr.mxu0 0.0
      %1299 = vmatpush2.msra.mxu0 0.0
      %1300 = vmatprep.subr.mxu0 0.0
      %1301 = vmatpush2.msra.mxu0 0.0
      %1302 = vmatprep.subr.mxu0 0.0
      %1303 = vmatpush2.msra.mxu0 0.0
      %1304 = vmatprep.subr.mxu0 0.0
      %1305 = vmatpush2.msra.mxu0 0.0
      %1306 = vmatprep.subr.mxu0 0.0
      %1307 = vmatpush2.msra.mxu0 0.0
      %1308 = vmatprep.subr.mxu0 0.0
      %1309 = vmatpush2.msra.mxu0 0.0
      %1310 = vmatprep.subr.mxu0 0.0
      %1311 = vmatpush2.msra.mxu0 0.0
      %1312 = vmatprep.subr.mxu0 0.0
      %1313 = vmatpush2.msra.mxu0 0.0
      %1314 = vmatprep.subr.mxu0 0.0
      %1315 = vmatpush2.msra.mxu0 0.0
      %1316 = vmatprep.subr.mxu0 0.0
      %1317 = vmatpush2.msra.mxu0 0.0
      %1318 = vmatprep.subr.mxu0 0.0
      %1319 = vmatpush2.msra.mxu0 0.0
      %1320 = vmatprep.subr.mxu0 0.0
      %1321 = vmatpush2.msra.mxu0 0.0
      %1322 = vmatprep.subr.mxu0 0.0
      %1323 = vmatpush2.msra.mxu0 0.0
      %1324 = vmatprep.subr.mxu0 0.0
      %1325 = vmatpush2.msra.mxu0 0.0
      %1326 = vmatprep.mubr.f32.mxu0 0.0
      %1327 = vmatmul.mubr.f32.gmra.mxu0 %v1195
      %v1328 = vpop.f32.mrf.mxu0
      %v1329 = vadd.f32 %v1037, %v1328
      %v1330 = vpop.f32.mrf.mxu0
      %1331 = vmatprep.mubr.f32.mxu0 0.0
      %1332 = vmatmul.mubr.f32.gmra.mxu0 %v1197
      %v1333 = vpop.f32.mrf.mxu0
      %v1334 = vadd.f32 %v1042, %v1333
      %v1335 = vpop.f32.mrf.mxu0
      %1336 = vmatprep.mubr.f32.mxu0 0.0
      %1337 = vmatmul.mubr.f32.gmra.mxu0 %v1199
      %v1338 = vpop.f32.mrf.mxu0
      %v1339 = vadd.f32 %v1047, %v1338
      %v1340 = vpop.f32.mrf.mxu0
      %1341 = vmatprep.mubr.f32.mxu0 0.0
      %1342 = vmatmul.mubr.f32.gmra.mxu0 %v1201
      %v1343 = vpop.f32.mrf.mxu0
      %v1344 = vadd.f32 %v1052, %v1343
      %v1345 = vpop.f32.mrf.mxu0
      %1346 = vmatprep.mubr.f32.mxu0 0.0
      %1347 = vmatmul.mubr.f32.gmra.mxu0 %v1203
      %v1348 = vpop.f32.mrf.mxu0
      %v1349 = vadd.f32 %v1057, %v1348
      %v1350 = vpop.f32.mrf.mxu0
      %1351 = vmatprep.mubr.f32.mxu0 0.0
      %1352 = vmatmul.mubr.f32.gmra.mxu0 %v1205
      %v1353 = vpop.f32.mrf.mxu0
      %v1354 = vadd.f32 %v1062, %v1353
      %v1355 = vpop.f32.mrf.mxu0
      %1356 = vmatprep.mubr.f32.mxu0 0.0
      %1357 = vmatmul.mubr.f32.gmra.mxu0 %v1207
      %v1358 = vpop.f32.mrf.mxu0
      %v1359 = vadd.f32 %v1067, %v1358
      %v1360 = vpop.f32.mrf.mxu0
      %1361 = vmatprep.mubr.f32.mxu0 0.0
      %1362 = vmatmul.mubr.f32.gmra.mxu0 %v1209
      %v1363 = vpop.f32.mrf.mxu0
      %v1364 = vadd.f32 %v1072, %v1363
      %v1365 = vpop.f32.mrf.mxu0
      %1366 = vmatprep.mubr.f32.mxu0 0.0
      %1367 = vmatmul.mubr.f32.gmra.mxu0 %v1211
      %v1368 = vpop.f32.mrf.mxu0
      %v1369 = vadd.f32 %v1077, %v1368
      %v1370 = vpop.f32.mrf.mxu0
      %1371 = vmatprep.mubr.f32.mxu0 0.0
      %1372 = vmatmul.mubr.f32.gmra.mxu0 %v1213
      %v1373 = vpop.f32.mrf.mxu0
      %v1374 = vadd.f32 %v1082, %v1373
      %v1375 = vpop.f32.mrf.mxu0
      %1376 = vmatprep.mubr.f32.mxu0 0.0
      %1377 = vmatmul.mubr.f32.gmra.mxu0 %v1215
      %v1378 = vpop.f32.mrf.mxu0
      %v1379 = vadd.f32 %v1087, %v1378
      %v1380 = vpop.f32.mrf.mxu0
      %1381 = vmatprep.mubr.f32.mxu0 0.0
      %1382 = vmatmul.mubr.f32.gmra.mxu0 %v1217
      %v1383 = vpop.f32.mrf.mxu0
      %v1384 = vadd.f32 %v1092, %v1383
      %v1385 = vpop.f32.mrf.mxu0
      %1386 = vmatprep.mubr.f32.mxu0 0.0
      %1387 = vmatmul.mubr.f32.gmra.mxu0 %v1219
      %v1388 = vpop.f32.mrf.mxu0
      %v1389 = vadd.f32 %v1097, %v1388
      %v1390 = vpop.f32.mrf.mxu0
      %1391 = vmatprep.mubr.f32.mxu0 0.0
      %1392 = vmatmul.mubr.f32.gmra.mxu0 %v1221
      %v1393 = vpop.f32.mrf.mxu0
      %v1394 = vadd.f32 %v1102, %v1393
      %v1395 = vpop.f32.mrf.mxu0
      %1396 = vmatprep.mubr.f32.mxu0 0.0
      %1397 = vmatmul.mubr.f32.gmra.mxu0 %v1223
      %v1398 = vpop.f32.mrf.mxu0
      %v1399 = vadd.f32 %v1107, %v1398
      %v1400 = vpop.f32.mrf.mxu0
      %1401 = vmatprep.mubr.f32.mxu0 0.0
      %1402 = vmatmul.mubr.f32.gmra.mxu0 %v1225
      %v1403 = vpop.f32.mrf.mxu0
      %v1404 = vadd.f32 %v1112, %v1403
      %v1405 = vpop.f32.mrf.mxu0
      %1406 = vmatprep.mubr.f32.mxu0 0.0
      %1407 = vmatmul.mubr.f32.gmra.mxu0 %v1227
      %v1408 = vpop.f32.mrf.mxu0
      %v1409 = vadd.f32 %v1117, %v1408
      %v1410 = vpop.f32.mrf.mxu0
      %1411 = vmatprep.mubr.f32.mxu0 0.0
      %1412 = vmatmul.mubr.f32.gmra.mxu0 %v1229
      %v1413 = vpop.f32.mrf.mxu0
      %v1414 = vadd.f32 %v1122, %v1413
      %v1415 = vpop.f32.mrf.mxu0
      %1416 = vmatprep.mubr.f32.mxu0 0.0
      %1417 = vmatmul.mubr.f32.gmra.mxu0 %v1231
      %v1418 = vpop.f32.mrf.mxu0
      %v1419 = vadd.f32 %v1127, %v1418
      %v1420 = vpop.f32.mrf.mxu0
      %1421 = vmatprep.mubr.f32.mxu0 0.0
      %1422 = vmatmul.mubr.f32.gmra.mxu0 %v1233
      %v1423 = vpop.f32.mrf.mxu0
      %v1424 = vadd.f32 %v1132, %v1423
      %v1425 = vpop.f32.mrf.mxu0
      %1426 = vmatprep.mubr.f32.mxu0 0.0
      %1427 = vmatmul.mubr.f32.gmra.mxu0 %v1235
      %v1428 = vpop.f32.mrf.mxu0
      %v1429 = vadd.f32 %v1137, %v1428
      %v1430 = vpop.f32.mrf.mxu0
      %1431 = vmatprep.mubr.f32.mxu0 0.0
      %1432 = vmatmul.mubr.f32.gmra.mxu0 %v1237
      %v1433 = vpop.f32.mrf.mxu0
      %v1434 = vadd.f32 %v1142, %v1433
      %v1435 = vpop.f32.mrf.mxu0
      %1436 = vmatprep.mubr.f32.mxu0 0.0
      %1437 = vmatmul.mubr.f32.gmra.mxu0 %v1239
      %v1438 = vpop.f32.mrf.mxu0
      %v1439 = vadd.f32 %v1147, %v1438
      %v1440 = vpop.f32.mrf.mxu0
      %1441 = vmatprep.mubr.f32.mxu0 0.0
      %1442 = vmatmul.mubr.f32.gmra.mxu0 %v1241
      %v1443 = vpop.f32.mrf.mxu0
      %v1444 = vadd.f32 %v1152, %v1443
      %v1445 = vpop.f32.mrf.mxu0
      %1446 = vmatprep.mubr.f32.mxu0 0.0
      %1447 = vmatmul.mubr.f32.gmra.mxu0 %v1243
      %v1448 = vpop.f32.mrf.mxu0
      %v1449 = vadd.f32 %v1157, %v1448
      %v1450 = vpop.f32.mrf.mxu0
      %1451 = vmatprep.mubr.f32.mxu0 0.0
      %1452 = vmatmul.mubr.f32.gmra.mxu0 %v1245
      %v1453 = vpop.f32.mrf.mxu0
      %v1454 = vadd.f32 %v1162, %v1453
      %v1455 = vpop.f32.mrf.mxu0
      %1456 = vmatprep.mubr.f32.mxu0 0.0
      %1457 = vmatmul.mubr.f32.gmra.mxu0 %v1247
      %v1458 = vpop.f32.mrf.mxu0
      %v1459 = vadd.f32 %v1167, %v1458
      %v1460 = vpop.f32.mrf.mxu0
      %1461 = vmatprep.mubr.f32.mxu0 0.0
      %1462 = vmatmul.mubr.f32.gmra.mxu0 %v1249
      %v1463 = vpop.f32.mrf.mxu0
      %v1464 = vadd.f32 %v1172, %v1463
      %v1465 = vpop.f32.mrf.mxu0
      %1466 = vmatprep.mubr.f32.mxu0 0.0
      %1467 = vmatmul.mubr.f32.gmra.mxu0 %v1251
      %v1468 = vpop.f32.mrf.mxu0
      %v1469 = vadd.f32 %v1177, %v1468
      %v1470 = vpop.f32.mrf.mxu0
      %1471 = vmatprep.mubr.f32.mxu0 0.0
      %1472 = vmatmul.mubr.f32.gmra.mxu0 %v1253
      %v1473 = vpop.f32.mrf.mxu0
      %v1474 = vadd.f32 %v1182, %v1473
      %v1475 = vpop.f32.mrf.mxu0
      %1476 = vmatprep.mubr.f32.mxu0 0.0
      %1477 = vmatmul.mubr.f32.gmra.mxu0 %v1255
      %v1478 = vpop.f32.mrf.mxu0
      %v1479 = vadd.f32 %v1187, %v1478
      %v1480 = vpop.f32.mrf.mxu0
      %1481 = vmatprep.mubr.f32.mxu0 0.0
      %1482 = vmatmul.mubr.f32.gmra.mxu0 %v1257
      %v1483 = vpop.f32.mrf.mxu0
      %v1484 = vadd.f32 %v1192, %v1483
      %v1485 = vpop.f32.mrf.mxu0
      %1486 = vdwg.mxu0
      %vm1487 = vcmask 1045504
      %v1488 = vrot.slane %v735, 2
      %v1489 = vrot.slane %v736, 2
      %v1490 = vsel %vm1487, %v1488, %v1489
      %v1491 = vrot.slane %v737, 2
      %v1492 = vsel %vm1487, %v1489, %v1491
      %v1493 = vrot.slane %v738, 2
      %v1494 = vsel %vm1487, %v1491, %v1493
      %v1495 = vrot.slane %v739, 2
      %v1496 = vsel %vm1487, %v1493, %v1495
      %v1497 = vrot.slane %v740, 2
      %v1498 = vrot.slane %v741, 2
      %v1499 = vsel %vm1487, %v1497, %v1498
      %v1500 = vrot.slane %v742, 2
      %v1501 = vsel %vm1487, %v1498, %v1500
      %v1502 = vrot.slane %v743, 2
      %v1503 = vsel %vm1487, %v1500, %v1502
      %v1504 = vrot.slane %v744, 2
      %v1505 = vsel %vm1487, %v1502, %v1504
      %v1506 = vrot.slane %v745, 2
      %v1507 = vrot.slane %v746, 2
      %v1508 = vsel %vm1487, %v1506, %v1507
      %v1509 = vrot.slane %v747, 2
      %v1510 = vsel %vm1487, %v1507, %v1509
      %v1511 = vrot.slane %v748, 2
      %v1512 = vsel %vm1487, %v1509, %v1511
      %v1513 = vrot.slane %v749, 2
      %v1514 = vsel %vm1487, %v1511, %v1513
      %v1515 = vrot.slane %v750, 2
      %v1516 = vrot.slane %v751, 2
      %v1517 = vsel %vm1487, %v1515, %v1516
      %v1518 = vrot.slane %v752, 2
      %v1519 = vsel %vm1487, %v1516, %v1518
      %v1520 = vrot.slane %v753, 2
      %v1521 = vsel %vm1487, %v1518, %v1520
      %v1522 = vrot.slane %v754, 2
      %v1523 = vsel %vm1487, %v1520, %v1522
      %v1524 = vrot.slane %v755, 2
      %v1525 = vrot.slane %v756, 2
      %v1526 = vsel %vm1487, %v1524, %v1525
      %v1527 = vrot.slane %v757, 2
      %v1528 = vsel %vm1487, %v1525, %v1527
      %v1529 = vrot.slane %v758, 2
      %v1530 = vsel %vm1487, %v1527, %v1529
      %v1531 = vrot.slane %v759, 2
      %v1532 = vsel %vm1487, %v1529, %v1531
      %v1533 = vrot.slane %v760, 2
      %v1534 = vrot.slane %v761, 2
      %v1535 = vsel %vm1487, %v1533, %v1534
      %v1536 = vrot.slane %v762, 2
      %v1537 = vsel %vm1487, %v1534, %v1536
      %v1538 = vrot.slane %v763, 2
      %v1539 = vsel %vm1487, %v1536, %v1538
      %v1540 = vrot.slane %v764, 2
      %v1541 = vsel %vm1487, %v1538, %v1540
      %v1542 = vrot.slane %v765, 2
      %v1543 = vrot.slane %v766, 2
      %v1544 = vsel %vm1487, %v1542, %v1543
      %v1545 = vrot.slane %v767, 2
      %v1546 = vsel %vm1487, %v1543, %v1545
      %v1547 = vrot.slane %v768, 2
      %v1548 = vsel %vm1487, %v1545, %v1547
      %v1549 = vrot.slane %v769, 2
      %v1550 = vsel %vm1487, %v1547, %v1549
      %v1551 = vrot.slane %v770, 2
      %v1552 = vrot.slane %v771, 2
      %v1553 = vsel %vm1487, %v1551, %v1552
      %v1554 = vrot.slane %v772, 2
      %v1555 = vsel %vm1487, %v1552, %v1554
      %v1556 = vrot.slane %v773, 2
      %v1557 = vsel %vm1487, %v1554, %v1556
      %v1558 = vrot.slane %v774, 2
      %v1559 = vsel %vm1487, %v1556, %v1558
      %s1560 = scalar_lea.vmem %s3, 8
      %v1561 = vld [vmem:[%s1560] sm:$0xf]
      %v1562 = vsel %vm901, %v1490, 0
      %v1564 = vsel %vm901, %v1492, 0
      %v1566 = vsel %vm901, %v1494, 0
      %v1568 = vsel %vm901, %v1496, 0
      %v1570 = vsel %vm901, %v1499, 0
      %v1572 = vsel %vm901, %v1501, 0
      %v1574 = vsel %vm901, %v1503, 0
      %v1576 = vsel %vm901, %v1505, 0
      %v1578 = vsel %vm901, %v1508, 0
      %v1580 = vsel %vm901, %v1510, 0
      %v1582 = vsel %vm901, %v1512, 0
      %v1584 = vsel %vm901, %v1514, 0
      %v1586 = vsel %vm901, %v1517, 0
      %v1588 = vsel %vm901, %v1519, 0
      %v1590 = vsel %vm901, %v1521, 0
      %v1592 = vsel %vm901, %v1523, 0
      %v1594 = vsel %vm901, %v1526, 0
      %v1596 = vsel %vm901, %v1528, 0
      %v1598 = vsel %vm901, %v1530, 0
      %v1600 = vsel %vm901, %v1532, 0
      %v1602 = vsel %vm901, %v1535, 0
      %v1604 = vsel %vm901, %v1537, 0
      %v1606 = vsel %vm901, %v1539, 0
      %v1608 = vsel %vm901, %v1541, 0
      %v1610 = vsel %vm901, %v1544, 0
      %v1612 = vsel %vm901, %v1546, 0
      %v1614 = vsel %vm901, %v1548, 0
      %v1616 = vsel %vm901, %v1550, 0
      %v1618 = vsel %vm901, %v1553, 0
      %v1620 = vsel %vm901, %v1555, 0
      %v1622 = vsel %vm901, %v1557, 0
      %v1624 = vsel %vm901, %v1559, 0
      %v1627 = vsel %vm966, %v1561, 0
      %1629 = vmatprep.subr.mxu0 0.0
      %1630 = vmatpush1.msra.mxu0 0.0
      %1631 = vmatprep.subr.mxu0 0.0
      %1632 = vmatpush1.msra.mxu0 0.0
      %1633 = vmatprep.subr.mxu0 0.0
      %1634 = vmatpush1.msra.mxu0 0.0
      %1635 = vmatprep.subr.mxu0 0.0
      %1636 = vmatpush1.msra.mxu0 0.0
      %1637 = vmatprep.subr.mxu0 0.0
      %1638 = vmatpush1.msra.mxu0 0.0
      %1639 = vmatprep.subr.mxu0 0.0
      %1640 = vmatpush1.msra.mxu0 0.0
      %1641 = vmatprep.subr.mxu0 0.0
      %1642 = vmatpush1.msra.mxu0 0.0
      %1643 = vmatprep.subr.mxu0 0.0
      %1644 = vmatpush1.msra.mxu0 0.0
      %1645 = vmatprep.subr.mxu0 0.0
      %1646 = vmatpush1.msra.mxu0 0.0
      %1647 = vmatprep.subr.mxu0 0.0
      %1648 = vmatpush1.msra.mxu0 0.0
      %1649 = vmatprep.subr.mxu0 0.0
      %1650 = vmatpush1.msra.mxu0 0.0
      %1651 = vmatprep.subr.mxu0 0.0
      %1652 = vmatpush1.msra.mxu0 0.0
      %1653 = vmatprep.subr.mxu0 0.0
      %1654 = vmatpush1.msra.mxu0 0.0
      %1655 = vmatprep.subr.mxu0 0.0
      %1656 = vmatpush1.msra.mxu0 0.0
      %1657 = vmatprep.subr.mxu0 0.0
      %1658 = vmatpush1.msra.mxu0 0.0
      %1659 = vmatprep.subr.mxu0 0.0
      %1660 = vmatpush1.msra.mxu0 %v1627
      %1661 = vmatprep.subr.mxu0 0.0
      %1662 = vmatpush2.msra.mxu0 0.0
      %1663 = vmatprep.subr.mxu0 0.0
      %1664 = vmatpush2.msra.mxu0 0.0
      %1665 = vmatprep.subr.mxu0 0.0
      %1666 = vmatpush2.msra.mxu0 0.0
      %1667 = vmatprep.subr.mxu0 0.0
      %1668 = vmatpush2.msra.mxu0 0.0
      %1669 = vmatprep.subr.mxu0 0.0
      %1670 = vmatpush2.msra.mxu0 0.0
      %1671 = vmatprep.subr.mxu0 0.0
      %1672 = vmatpush2.msra.mxu0 0.0
      %1673 = vmatprep.subr.mxu0 0.0
      %1674 = vmatpush2.msra.mxu0 0.0
      %1675 = vmatprep.subr.mxu0 0.0
      %1676 = vmatpush2.msra.mxu0 0.0
      %1677 = vmatprep.subr.mxu0 0.0
      %1678 = vmatpush2.msra.mxu0 0.0
      %1679 = vmatprep.subr.mxu0 0.0
      %1680 = vmatpush2.msra.mxu0 0.0
      %1681 = vmatprep.subr.mxu0 0.0
      %1682 = vmatpush2.msra.mxu0 0.0
      %1683 = vmatprep.subr.mxu0 0.0
      %1684 = vmatpush2.msra.mxu0 0.0
      %1685 = vmatprep.subr.mxu0 0.0
      %1686 = vmatpush2.msra.mxu0 0.0
      %1687 = vmatprep.subr.mxu0 0.0
      %1688 = vmatpush2.msra.mxu0 0.0
      %1689 = vmatprep.subr.mxu0 0.0
      %1690 = vmatpush2.msra.mxu0 0.0
      %1691 = vmatprep.subr.mxu0 0.0
      %1692 = vmatpush2.msra.mxu0 0.0
      %1693 = vmatprep.mubr.f32.mxu0 0.0
      %1694 = vmatmul.mubr.f32.gmra.mxu0 %v1562
      %v1695 = vpop.f32.mrf.mxu0
      %v1696 = vadd.f32 0.0, %v1695
      %v1697 = vpop.f32.mrf.mxu0
      %1698 = vmatprep.mubr.f32.mxu0 0.0
      %1699 = vmatmul.mubr.f32.gmra.mxu0 %v1564
      %v1700 = vpop.f32.mrf.mxu0
      %v1701 = vadd.f32 0.0, %v1700
      %v1702 = vpop.f32.mrf.mxu0
      %1703 = vmatprep.mubr.f32.mxu0 0.0
      %1704 = vmatmul.mubr.f32.gmra.mxu0 %v1566
      %v1705 = vpop.f32.mrf.mxu0
      %v1706 = vadd.f32 0.0, %v1705
      %v1707 = vpop.f32.mrf.mxu0
      %1708 = vmatprep.mubr.f32.mxu0 0.0
      %1709 = vmatmul.mubr.f32.gmra.mxu0 %v1568
      %v1710 = vpop.f32.mrf.mxu0
      %v1711 = vadd.f32 0.0, %v1710
      %v1712 = vpop.f32.mrf.mxu0
      %1713 = vmatprep.mubr.f32.mxu0 0.0
      %1714 = vmatmul.mubr.f32.gmra.mxu0 %v1570
      %v1715 = vpop.f32.mrf.mxu0
      %v1716 = vadd.f32 0.0, %v1715
      %v1717 = vpop.f32.mrf.mxu0
      %1718 = vmatprep.mubr.f32.mxu0 0.0
      %1719 = vmatmul.mubr.f32.gmra.mxu0 %v1572
      %v1720 = vpop.f32.mrf.mxu0
      %v1721 = vadd.f32 0.0, %v1720
      %v1722 = vpop.f32.mrf.mxu0
      %1723 = vmatprep.mubr.f32.mxu0 0.0
      %1724 = vmatmul.mubr.f32.gmra.mxu0 %v1574
      %v1725 = vpop.f32.mrf.mxu0
      %v1726 = vadd.f32 0.0, %v1725
      %v1727 = vpop.f32.mrf.mxu0
      %1728 = vmatprep.mubr.f32.mxu0 0.0
      %1729 = vmatmul.mubr.f32.gmra.mxu0 %v1576
      %v1730 = vpop.f32.mrf.mxu0
      %v1731 = vadd.f32 0.0, %v1730
      %v1732 = vpop.f32.mrf.mxu0
      %1733 = vmatprep.mubr.f32.mxu0 0.0
      %1734 = vmatmul.mubr.f32.gmra.mxu0 %v1578
      %v1735 = vpop.f32.mrf.mxu0
      %v1736 = vadd.f32 0.0, %v1735
      %v1737 = vpop.f32.mrf.mxu0
      %1738 = vmatprep.mubr.f32.mxu0 0.0
      %1739 = vmatmul.mubr.f32.gmra.mxu0 %v1580
      %v1740 = vpop.f32.mrf.mxu0
      %v1741 = vadd.f32 0.0, %v1740
      %v1742 = vpop.f32.mrf.mxu0
      %1743 = vmatprep.mubr.f32.mxu0 0.0
      %1744 = vmatmul.mubr.f32.gmra.mxu0 %v1582
      %v1745 = vpop.f32.mrf.mxu0
      %v1746 = vadd.f32 0.0, %v1745
      %v1747 = vpop.f32.mrf.mxu0
      %1748 = vmatprep.mubr.f32.mxu0 0.0
      %1749 = vmatmul.mubr.f32.gmra.mxu0 %v1584
      %v1750 = vpop.f32.mrf.mxu0
      %v1751 = vadd.f32 0.0, %v1750
      %v1752 = vpop.f32.mrf.mxu0
      %1753 = vmatprep.mubr.f32.mxu0 0.0
      %1754 = vmatmul.mubr.f32.gmra.mxu0 %v1586
      %v1755 = vpop.f32.mrf.mxu0
      %v1756 = vadd.f32 0.0, %v1755
      %v1757 = vpop.f32.mrf.mxu0
      %1758 = vmatprep.mubr.f32.mxu0 0.0
      %1759 = vmatmul.mubr.f32.gmra.mxu0 %v1588
      %v1760 = vpop.f32.mrf.mxu0
      %v1761 = vadd.f32 0.0, %v1760
      %v1762 = vpop.f32.mrf.mxu0
      %1763 = vmatprep.mubr.f32.mxu0 0.0
      %1764 = vmatmul.mubr.f32.gmra.mxu0 %v1590
      %v1765 = vpop.f32.mrf.mxu0
      %v1766 = vadd.f32 0.0, %v1765
      %v1767 = vpop.f32.mrf.mxu0
      %1768 = vmatprep.mubr.f32.mxu0 0.0
      %1769 = vmatmul.mubr.f32.gmra.mxu0 %v1592
      %v1770 = vpop.f32.mrf.mxu0
      %v1771 = vadd.f32 0.0, %v1770
      %v1772 = vpop.f32.mrf.mxu0
      %1773 = vmatprep.mubr.f32.mxu0 0.0
      %1774 = vmatmul.mubr.f32.gmra.mxu0 %v1594
      %v1775 = vpop.f32.mrf.mxu0
      %v1776 = vadd.f32 0.0, %v1775
      %v1777 = vpop.f32.mrf.mxu0
      %1778 = vmatprep.mubr.f32.mxu0 0.0
      %1779 = vmatmul.mubr.f32.gmra.mxu0 %v1596
      %v1780 = vpop.f32.mrf.mxu0
      %v1781 = vadd.f32 0.0, %v1780
      %v1782 = vpop.f32.mrf.mxu0
      %1783 = vmatprep.mubr.f32.mxu0 0.0
      %1784 = vmatmul.mubr.f32.gmra.mxu0 %v1598
      %v1785 = vpop.f32.mrf.mxu0
      %v1786 = vadd.f32 0.0, %v1785
      %v1787 = vpop.f32.mrf.mxu0
      %1788 = vmatprep.mubr.f32.mxu0 0.0
      %1789 = vmatmul.mubr.f32.gmra.mxu0 %v1600
      %v1790 = vpop.f32.mrf.mxu0
      %v1791 = vadd.f32 0.0, %v1790
      %v1792 = vpop.f32.mrf.mxu0
      %1793 = vmatprep.mubr.f32.mxu0 0.0
      %1794 = vmatmul.mubr.f32.gmra.mxu0 %v1602
      %v1795 = vpop.f32.mrf.mxu0
      %v1796 = vadd.f32 0.0, %v1795
      %v1797 = vpop.f32.mrf.mxu0
      %1798 = vmatprep.mubr.f32.mxu0 0.0
      %1799 = vmatmul.mubr.f32.gmra.mxu0 %v1604
      %v1800 = vpop.f32.mrf.mxu0
      %v1801 = vadd.f32 0.0, %v1800
      %v1802 = vpop.f32.mrf.mxu0
      %1803 = vmatprep.mubr.f32.mxu0 0.0
      %1804 = vmatmul.mubr.f32.gmra.mxu0 %v1606
      %v1805 = vpop.f32.mrf.mxu0
      %v1806 = vadd.f32 0.0, %v1805
      %v1807 = vpop.f32.mrf.mxu0
      %1808 = vmatprep.mubr.f32.mxu0 0.0
      %1809 = vmatmul.mubr.f32.gmra.mxu0 %v1608
      %v1810 = vpop.f32.mrf.mxu0
      %v1811 = vadd.f32 0.0, %v1810
      %v1812 = vpop.f32.mrf.mxu0
      %1813 = vmatprep.mubr.f32.mxu0 0.0
      %1814 = vmatmul.mubr.f32.gmra.mxu0 %v1610
      %v1815 = vpop.f32.mrf.mxu0
      %v1816 = vadd.f32 0.0, %v1815
      %v1817 = vpop.f32.mrf.mxu0
      %1818 = vmatprep.mubr.f32.mxu0 0.0
      %1819 = vmatmul.mubr.f32.gmra.mxu0 %v1612
      %v1820 = vpop.f32.mrf.mxu0
      %v1821 = vadd.f32 0.0, %v1820
      %v1822 = vpop.f32.mrf.mxu0
      %1823 = vmatprep.mubr.f32.mxu0 0.0
      %1824 = vmatmul.mubr.f32.gmra.mxu0 %v1614
      %v1825 = vpop.f32.mrf.mxu0
      %v1826 = vadd.f32 0.0, %v1825
      %v1827 = vpop.f32.mrf.mxu0
      %1828 = vmatprep.mubr.f32.mxu0 0.0
      %1829 = vmatmul.mubr.f32.gmra.mxu0 %v1616
      %v1830 = vpop.f32.mrf.mxu0
      %v1831 = vadd.f32 0.0, %v1830
      %v1832 = vpop.f32.mrf.mxu0
      %1833 = vmatprep.mubr.f32.mxu0 0.0
      %1834 = vmatmul.mubr.f32.gmra.mxu0 %v1618
      %v1835 = vpop.f32.mrf.mxu0
      %v1836 = vadd.f32 0.0, %v1835
      %v1837 = vpop.f32.mrf.mxu0
      %1838 = vmatprep.mubr.f32.mxu0 0.0
      %1839 = vmatmul.mubr.f32.gmra.mxu0 %v1620
      %v1840 = vpop.f32.mrf.mxu0
      %v1841 = vadd.f32 0.0, %v1840
      %v1842 = vpop.f32.mrf.mxu0
      %1843 = vmatprep.mubr.f32.mxu0 0.0
      %1844 = vmatmul.mubr.f32.gmra.mxu0 %v1622
      %v1845 = vpop.f32.mrf.mxu0
      %v1846 = vadd.f32 0.0, %v1845
      %v1847 = vpop.f32.mrf.mxu0
      %1848 = vmatprep.mubr.f32.mxu0 0.0
      %1849 = vmatmul.mubr.f32.gmra.mxu0 %v1624
      %v1850 = vpop.f32.mrf.mxu0
      %v1851 = vadd.f32 0.0, %v1850
      %v1852 = vpop.f32.mrf.mxu0
      %1853 = vdwg.mxu0
      %v1854 = vadd.f32 %v1329, %v1696
      %v1855 = vadd.f32 %v1334, %v1701
      %v1856 = vadd.f32 %v1339, %v1706
      %v1857 = vadd.f32 %v1344, %v1711
      %v1858 = vadd.f32 %v1349, %v1716
      %v1859 = vadd.f32 %v1354, %v1721
      %v1860 = vadd.f32 %v1359, %v1726
      %v1861 = vadd.f32 %v1364, %v1731
      %v1862 = vadd.f32 %v1369, %v1736
      %v1863 = vadd.f32 %v1374, %v1741
      %v1864 = vadd.f32 %v1379, %v1746
      %v1865 = vadd.f32 %v1384, %v1751
      %v1866 = vadd.f32 %v1389, %v1756
      %v1867 = vadd.f32 %v1394, %v1761
      %v1868 = vadd.f32 %v1399, %v1766
      %v1869 = vadd.f32 %v1404, %v1771
      %v1870 = vadd.f32 %v1409, %v1776
      %v1871 = vadd.f32 %v1414, %v1781
      %v1872 = vadd.f32 %v1419, %v1786
      %v1873 = vadd.f32 %v1424, %v1791
      %v1874 = vadd.f32 %v1429, %v1796
      %v1875 = vadd.f32 %v1434, %v1801
      %v1876 = vadd.f32 %v1439, %v1806
      %v1877 = vadd.f32 %v1444, %v1811
      %v1878 = vadd.f32 %v1449, %v1816
      %v1879 = vadd.f32 %v1454, %v1821
      %v1880 = vadd.f32 %v1459, %v1826
      %v1881 = vadd.f32 %v1464, %v1831
      %v1882 = vadd.f32 %v1469, %v1836
      %v1883 = vadd.f32 %v1474, %v1841
      %v1884 = vadd.f32 %v1479, %v1846
      %v1885 = vadd.f32 %v1484, %v1851
      %s1886 = scalar_lea.vmem %s3, 12
      %v1887 = vld [vmem:[%s1886] sm:$0xf]
      %v1889 = vsel %vm901, %v775, 0
      %v1892 = vsel %vm901, %v776, 0
      %v1895 = vsel %vm901, %v777, 0
      %v1898 = vsel %vm901, %v778, 0
      %v1901 = vsel %vm966, %v1887, 0
      %1903 = vmatprep.subr.mxu0 0.0
      %1904 = vmatpush1.msra.mxu0 0.0
      %1905 = vmatprep.subr.mxu0 0.0
      %1906 = vmatpush1.msra.mxu0 0.0
      %1907 = vmatprep.subr.mxu0 0.0
      %1908 = vmatpush1.msra.mxu0 0.0
      %1909 = vmatprep.subr.mxu0 0.0
      %1910 = vmatpush1.msra.mxu0 0.0
      %1911 = vmatprep.subr.mxu0 0.0
      %1912 = vmatpush1.msra.mxu0 0.0
      %1913 = vmatprep.subr.mxu0 0.0
      %1914 = vmatpush1.msra.mxu0 0.0
      %1915 = vmatprep.subr.mxu0 0.0
      %1916 = vmatpush1.msra.mxu0 0.0
      %1917 = vmatprep.subr.mxu0 0.0
      %1918 = vmatpush1.msra.mxu0 0.0
      %1919 = vmatprep.subr.mxu0 0.0
      %1920 = vmatpush1.msra.mxu0 0.0
      %1921 = vmatprep.subr.mxu0 0.0
      %1922 = vmatpush1.msra.mxu0 0.0
      %1923 = vmatprep.subr.mxu0 0.0
      %1924 = vmatpush1.msra.mxu0 0.0
      %1925 = vmatprep.subr.mxu0 0.0
      %1926 = vmatpush1.msra.mxu0 0.0
      %1927 = vmatprep.subr.mxu0 0.0
      %1928 = vmatpush1.msra.mxu0 0.0
      %1929 = vmatprep.subr.mxu0 0.0
      %1930 = vmatpush1.msra.mxu0 0.0
      %1931 = vmatprep.subr.mxu0 0.0
      %1932 = vmatpush1.msra.mxu0 0.0
      %1933 = vmatprep.subr.mxu0 0.0
      %1934 = vmatpush1.msra.mxu0 %v1901
      %1935 = vmatprep.subr.mxu0 0.0
      %1936 = vmatpush2.msra.mxu0 0.0
      %1937 = vmatprep.subr.mxu0 0.0
      %1938 = vmatpush2.msra.mxu0 0.0
      %1939 = vmatprep.subr.mxu0 0.0
      %1940 = vmatpush2.msra.mxu0 0.0
      %1941 = vmatprep.subr.mxu0 0.0
      %1942 = vmatpush2.msra.mxu0 0.0
      %1943 = vmatprep.subr.mxu0 0.0
      %1944 = vmatpush2.msra.mxu0 0.0
      %1945 = vmatprep.subr.mxu0 0.0
      %1946 = vmatpush2.msra.mxu0 0.0
      %1947 = vmatprep.subr.mxu0 0.0
      %1948 = vmatpush2.msra.mxu0 0.0
      %1949 = vmatprep.subr.mxu0 0.0
      %1950 = vmatpush2.msra.mxu0 0.0
      %1951 = vmatprep.subr.mxu0 0.0
      %1952 = vmatpush2.msra.mxu0 0.0
      %1953 = vmatprep.subr.mxu0 0.0
      %1954 = vmatpush2.msra.mxu0 0.0
      %1955 = vmatprep.subr.mxu0 0.0
      %1956 = vmatpush2.msra.mxu0 0.0
      %1957 = vmatprep.subr.mxu0 0.0
      %1958 = vmatpush2.msra.mxu0 0.0
      %1959 = vmatprep.subr.mxu0 0.0
      %1960 = vmatpush2.msra.mxu0 0.0
      %1961 = vmatprep.subr.mxu0 0.0
      %1962 = vmatpush2.msra.mxu0 0.0
      %1963 = vmatprep.subr.mxu0 0.0
      %1964 = vmatpush2.msra.mxu0 0.0
      %1965 = vmatprep.subr.mxu0 0.0
      %1966 = vmatpush2.msra.mxu0 0.0
      %1967 = vmatprep.mubr.f32.mxu0 0.0
      %1968 = vmatmul.mubr.f32.gmra.mxu0 %v1203
      %v1969 = vpop.f32.mrf.mxu0
      %v1970 = vadd.f32 0.0, %v1969
      %v1971 = vpop.f32.mrf.mxu0
      %1972 = vmatprep.mubr.f32.mxu0 0.0
      %1973 = vmatmul.mubr.f32.gmra.mxu0 %v1205
      %v1974 = vpop.f32.mrf.mxu0
      %v1975 = vadd.f32 0.0, %v1974
      %v1976 = vpop.f32.mrf.mxu0
      %1977 = vmatprep.mubr.f32.mxu0 0.0
      %1978 = vmatmul.mubr.f32.gmra.mxu0 %v1207
      %v1979 = vpop.f32.mrf.mxu0
      %v1980 = vadd.f32 0.0, %v1979
      %v1981 = vpop.f32.mrf.mxu0
      %1982 = vmatprep.mubr.f32.mxu0 0.0
      %1983 = vmatmul.mubr.f32.gmra.mxu0 %v1209
      %v1984 = vpop.f32.mrf.mxu0
      %v1985 = vadd.f32 0.0, %v1984
      %v1986 = vpop.f32.mrf.mxu0
      %1987 = vmatprep.mubr.f32.mxu0 0.0
      %1988 = vmatmul.mubr.f32.gmra.mxu0 %v1211
      %v1989 = vpop.f32.mrf.mxu0
      %v1990 = vadd.f32 0.0, %v1989
      %v1991 = vpop.f32.mrf.mxu0
      %1992 = vmatprep.mubr.f32.mxu0 0.0
      %1993 = vmatmul.mubr.f32.gmra.mxu0 %v1213
      %v1994 = vpop.f32.mrf.mxu0
      %v1995 = vadd.f32 0.0, %v1994
      %v1996 = vpop.f32.mrf.mxu0
      %1997 = vmatprep.mubr.f32.mxu0 0.0
      %1998 = vmatmul.mubr.f32.gmra.mxu0 %v1215
      %v1999 = vpop.f32.mrf.mxu0
      %v2000 = vadd.f32 0.0, %v1999
      %v2001 = vpop.f32.mrf.mxu0
      %2002 = vmatprep.mubr.f32.mxu0 0.0
      %2003 = vmatmul.mubr.f32.gmra.mxu0 %v1217
      %v2004 = vpop.f32.mrf.mxu0
      %v2005 = vadd.f32 0.0, %v2004
      %v2006 = vpop.f32.mrf.mxu0
      %2007 = vmatprep.mubr.f32.mxu0 0.0
      %2008 = vmatmul.mubr.f32.gmra.mxu0 %v1219
      %v2009 = vpop.f32.mrf.mxu0
      %v2010 = vadd.f32 0.0, %v2009
      %v2011 = vpop.f32.mrf.mxu0
      %2012 = vmatprep.mubr.f32.mxu0 0.0
      %2013 = vmatmul.mubr.f32.gmra.mxu0 %v1221
      %v2014 = vpop.f32.mrf.mxu0
      %v2015 = vadd.f32 0.0, %v2014
      %v2016 = vpop.f32.mrf.mxu0
      %2017 = vmatprep.mubr.f32.mxu0 0.0
      %2018 = vmatmul.mubr.f32.gmra.mxu0 %v1223
      %v2019 = vpop.f32.mrf.mxu0
      %v2020 = vadd.f32 0.0, %v2019
      %v2021 = vpop.f32.mrf.mxu0
      %2022 = vmatprep.mubr.f32.mxu0 0.0
      %2023 = vmatmul.mubr.f32.gmra.mxu0 %v1225
      %v2024 = vpop.f32.mrf.mxu0
      %v2025 = vadd.f32 0.0, %v2024
      %v2026 = vpop.f32.mrf.mxu0
      %2027 = vmatprep.mubr.f32.mxu0 0.0
      %2028 = vmatmul.mubr.f32.gmra.mxu0 %v1227
      %v2029 = vpop.f32.mrf.mxu0
      %v2030 = vadd.f32 0.0, %v2029
      %v2031 = vpop.f32.mrf.mxu0
      %2032 = vmatprep.mubr.f32.mxu0 0.0
      %2033 = vmatmul.mubr.f32.gmra.mxu0 %v1229
      %v2034 = vpop.f32.mrf.mxu0
      %v2035 = vadd.f32 0.0, %v2034
      %v2036 = vpop.f32.mrf.mxu0
      %2037 = vmatprep.mubr.f32.mxu0 0.0
      %2038 = vmatmul.mubr.f32.gmra.mxu0 %v1231
      %v2039 = vpop.f32.mrf.mxu0
      %v2040 = vadd.f32 0.0, %v2039
      %v2041 = vpop.f32.mrf.mxu0
      %2042 = vmatprep.mubr.f32.mxu0 0.0
      %2043 = vmatmul.mubr.f32.gmra.mxu0 %v1233
      %v2044 = vpop.f32.mrf.mxu0
      %v2045 = vadd.f32 0.0, %v2044
      %v2046 = vpop.f32.mrf.mxu0
      %2047 = vmatprep.mubr.f32.mxu0 0.0
      %2048 = vmatmul.mubr.f32.gmra.mxu0 %v1235
      %v2049 = vpop.f32.mrf.mxu0
      %v2050 = vadd.f32 0.0, %v2049
      %v2051 = vpop.f32.mrf.mxu0
      %2052 = vmatprep.mubr.f32.mxu0 0.0
      %2053 = vmatmul.mubr.f32.gmra.mxu0 %v1237
      %v2054 = vpop.f32.mrf.mxu0
      %v2055 = vadd.f32 0.0, %v2054
      %v2056 = vpop.f32.mrf.mxu0
      %2057 = vmatprep.mubr.f32.mxu0 0.0
      %2058 = vmatmul.mubr.f32.gmra.mxu0 %v1239
      %v2059 = vpop.f32.mrf.mxu0
      %v2060 = vadd.f32 0.0, %v2059
      %v2061 = vpop.f32.mrf.mxu0
      %2062 = vmatprep.mubr.f32.mxu0 0.0
      %2063 = vmatmul.mubr.f32.gmra.mxu0 %v1241
      %v2064 = vpop.f32.mrf.mxu0
      %v2065 = vadd.f32 0.0, %v2064
      %v2066 = vpop.f32.mrf.mxu0
      %2067 = vmatprep.mubr.f32.mxu0 0.0
      %2068 = vmatmul.mubr.f32.gmra.mxu0 %v1243
      %v2069 = vpop.f32.mrf.mxu0
      %v2070 = vadd.f32 0.0, %v2069
      %v2071 = vpop.f32.mrf.mxu0
      %2072 = vmatprep.mubr.f32.mxu0 0.0
      %2073 = vmatmul.mubr.f32.gmra.mxu0 %v1245
      %v2074 = vpop.f32.mrf.mxu0
      %v2075 = vadd.f32 0.0, %v2074
      %v2076 = vpop.f32.mrf.mxu0
      %2077 = vmatprep.mubr.f32.mxu0 0.0
      %2078 = vmatmul.mubr.f32.gmra.mxu0 %v1247
      %v2079 = vpop.f32.mrf.mxu0
      %v2080 = vadd.f32 0.0, %v2079
      %v2081 = vpop.f32.mrf.mxu0
      %2082 = vmatprep.mubr.f32.mxu0 0.0
      %2083 = vmatmul.mubr.f32.gmra.mxu0 %v1249
      %v2084 = vpop.f32.mrf.mxu0
      %v2085 = vadd.f32 0.0, %v2084
      %v2086 = vpop.f32.mrf.mxu0
      %2087 = vmatprep.mubr.f32.mxu0 0.0
      %2088 = vmatmul.mubr.f32.gmra.mxu0 %v1251
      %v2089 = vpop.f32.mrf.mxu0
      %v2090 = vadd.f32 0.0, %v2089
      %v2091 = vpop.f32.mrf.mxu0
      %2092 = vmatprep.mubr.f32.mxu0 0.0
      %2093 = vmatmul.mubr.f32.gmra.mxu0 %v1253
      %v2094 = vpop.f32.mrf.mxu0
      %v2095 = vadd.f32 0.0, %v2094
      %v2096 = vpop.f32.mrf.mxu0
      %2097 = vmatprep.mubr.f32.mxu0 0.0
      %2098 = vmatmul.mubr.f32.gmra.mxu0 %v1255
      %v2099 = vpop.f32.mrf.mxu0
      %v2100 = vadd.f32 0.0, %v2099
      %v2101 = vpop.f32.mrf.mxu0
      %2102 = vmatprep.mubr.f32.mxu0 0.0
      %2103 = vmatmul.mubr.f32.gmra.mxu0 %v1257
      %v2104 = vpop.f32.mrf.mxu0
      %v2105 = vadd.f32 0.0, %v2104
      %v2106 = vpop.f32.mrf.mxu0
      %2107 = vmatprep.mubr.f32.mxu0 0.0
      %2108 = vmatmul.mubr.f32.gmra.mxu0 %v1889
      %v2109 = vpop.f32.mrf.mxu0
      %v2110 = vadd.f32 0.0, %v2109
      %v2111 = vpop.f32.mrf.mxu0
      %2112 = vmatprep.mubr.f32.mxu0 0.0
      %2113 = vmatmul.mubr.f32.gmra.mxu0 %v1892
      %v2114 = vpop.f32.mrf.mxu0
      %v2115 = vadd.f32 0.0, %v2114
      %v2116 = vpop.f32.mrf.mxu0
      %2117 = vmatprep.mubr.f32.mxu0 0.0
      %2118 = vmatmul.mubr.f32.gmra.mxu0 %v1895
      %v2119 = vpop.f32.mrf.mxu0
      %v2120 = vadd.f32 0.0, %v2119
      %v2121 = vpop.f32.mrf.mxu0
      %2122 = vmatprep.mubr.f32.mxu0 0.0
      %2123 = vmatmul.mubr.f32.gmra.mxu0 %v1898
      %v2124 = vpop.f32.mrf.mxu0
      %v2125 = vadd.f32 0.0, %v2124
      %v2126 = vpop.f32.mrf.mxu0
      %2127 = vdwg.mxu0
      %v2128 = vadd.f32 %v1854, %v1970
      %v2129 = vadd.f32 %v1855, %v1975
      %v2130 = vadd.f32 %v1856, %v1980
      %v2131 = vadd.f32 %v1857, %v1985
      %v2132 = vadd.f32 %v1858, %v1990
      %v2133 = vadd.f32 %v1859, %v1995
      %v2134 = vadd.f32 %v1860, %v2000
      %v2135 = vadd.f32 %v1861, %v2005
      %v2136 = vadd.f32 %v1862, %v2010
      %v2137 = vadd.f32 %v1863, %v2015
      %v2138 = vadd.f32 %v1864, %v2020
      %v2139 = vadd.f32 %v1865, %v2025
      %v2140 = vadd.f32 %v1866, %v2030
      %v2141 = vadd.f32 %v1867, %v2035
      %v2142 = vadd.f32 %v1868, %v2040
      %v2143 = vadd.f32 %v1869, %v2045
      %v2144 = vadd.f32 %v1870, %v2050
      %v2145 = vadd.f32 %v1871, %v2055
      %v2146 = vadd.f32 %v1872, %v2060
      %v2147 = vadd.f32 %v1873, %v2065
      %v2148 = vadd.f32 %v1874, %v2070
      %v2149 = vadd.f32 %v1875, %v2075
      %v2150 = vadd.f32 %v1876, %v2080
      %v2151 = vadd.f32 %v1877, %v2085
      %v2152 = vadd.f32 %v1878, %v2090
      %v2153 = vadd.f32 %v1879, %v2095
      %v2154 = vadd.f32 %v1880, %v2100
      %v2155 = vadd.f32 %v1881, %v2105
      %v2156 = vadd.f32 %v1882, %v2110
      %v2157 = vadd.f32 %v1883, %v2115
      %v2158 = vadd.f32 %v1884, %v2120
      %v2159 = vadd.f32 %v1885, %v2125
      %v2161 = vrot.slane %v775, 1
      %v2162 = vrot.slane %v776, 1
      %v2163 = vsel %vm826, %v2161, %v2162
      %v2164 = vrot.slane %v777, 1
      %v2165 = vsel %vm826, %v2162, %v2164
      %v2166 = vrot.slane %v778, 1
      %v2167 = vsel %vm826, %v2164, %v2166
      %v2168 = vrot.slane %v779, 1
      %v2169 = vsel %vm826, %v2166, %v2168
      %s2170 = scalar_lea.vmem %s3, 16
      %v2171 = vld [vmem:[%s2170] sm:$0xf]
      %v2172 = vsel %vm901, %v2163, 0
      %v2174 = vsel %vm901, %v2165, 0
      %v2176 = vsel %vm901, %v2167, 0
      %v2178 = vsel %vm901, %v2169, 0
      %v2181 = vsel %vm966, %v2171, 0
      %2183 = vmatprep.subr.mxu0 0.0
      %2184 = vmatpush1.msra.mxu0 0.0
      %2185 = vmatprep.subr.mxu0 0.0
      %2186 = vmatpush1.msra.mxu0 0.0
      %2187 = vmatprep.subr.mxu0 0.0
      %2188 = vmatpush1.msra.mxu0 0.0
      %2189 = vmatprep.subr.mxu0 0.0
      %2190 = vmatpush1.msra.mxu0 0.0
      %2191 = vmatprep.subr.mxu0 0.0
      %2192 = vmatpush1.msra.mxu0 0.0
      %2193 = vmatprep.subr.mxu0 0.0
      %2194 = vmatpush1.msra.mxu0 0.0
      %2195 = vmatprep.subr.mxu0 0.0
      %2196 = vmatpush1.msra.mxu0 0.0
      %2197 = vmatprep.subr.mxu0 0.0
      %2198 = vmatpush1.msra.mxu0 0.0
      %2199 = vmatprep.subr.mxu0 0.0
      %2200 = vmatpush1.msra.mxu0 0.0
      %2201 = vmatprep.subr.mxu0 0.0
      %2202 = vmatpush1.msra.mxu0 0.0
      %2203 = vmatprep.subr.mxu0 0.0
      %2204 = vmatpush1.msra.mxu0 0.0
      %2205 = vmatprep.subr.mxu0 0.0
      %2206 = vmatpush1.msra.mxu0 0.0
      %2207 = vmatprep.subr.mxu0 0.0
      %2208 = vmatpush1.msra.mxu0 0.0
      %2209 = vmatprep.subr.mxu0 0.0
      %2210 = vmatpush1.msra.mxu0 0.0
      %2211 = vmatprep.subr.mxu0 0.0
      %2212 = vmatpush1.msra.mxu0 0.0
      %2213 = vmatprep.subr.mxu0 0.0
      %2214 = vmatpush1.msra.mxu0 %v2181
      %2215 = vmatprep.subr.mxu0 0.0
      %2216 = vmatpush2.msra.mxu0 0.0
      %2217 = vmatprep.subr.mxu0 0.0
      %2218 = vmatpush2.msra.mxu0 0.0
      %2219 = vmatprep.subr.mxu0 0.0
      %2220 = vmatpush2.msra.mxu0 0.0
      %2221 = vmatprep.subr.mxu0 0.0
      %2222 = vmatpush2.msra.mxu0 0.0
      %2223 = vmatprep.subr.mxu0 0.0
      %2224 = vmatpush2.msra.mxu0 0.0
      %2225 = vmatprep.subr.mxu0 0.0
      %2226 = vmatpush2.msra.mxu0 0.0
      %2227 = vmatprep.subr.mxu0 0.0
      %2228 = vmatpush2.msra.mxu0 0.0
      %2229 = vmatprep.subr.mxu0 0.0
      %2230 = vmatpush2.msra.mxu0 0.0
      %2231 = vmatprep.subr.mxu0 0.0
      %2232 = vmatpush2.msra.mxu0 0.0
      %2233 = vmatprep.subr.mxu0 0.0
      %2234 = vmatpush2.msra.mxu0 0.0
      %2235 = vmatprep.subr.mxu0 0.0
      %2236 = vmatpush2.msra.mxu0 0.0
      %2237 = vmatprep.subr.mxu0 0.0
      %2238 = vmatpush2.msra.mxu0 0.0
      %2239 = vmatprep.subr.mxu0 0.0
      %2240 = vmatpush2.msra.mxu0 0.0
      %2241 = vmatprep.subr.mxu0 0.0
      %2242 = vmatpush2.msra.mxu0 0.0
      %2243 = vmatprep.subr.mxu0 0.0
      %2244 = vmatpush2.msra.mxu0 0.0
      %2245 = vmatprep.subr.mxu0 0.0
      %2246 = vmatpush2.msra.mxu0 0.0
      %2247 = vmatprep.mubr.f32.mxu0 0.0
      %2248 = vmatmul.mubr.f32.gmra.mxu0 %v910
      %v2249 = vpop.f32.mrf.mxu0
      %v2250 = vadd.f32 0.0, %v2249
      %v2251 = vpop.f32.mrf.mxu0
      %2252 = vmatprep.mubr.f32.mxu0 0.0
      %2253 = vmatmul.mubr.f32.gmra.mxu0 %v912
      %v2254 = vpop.f32.mrf.mxu0
      %v2255 = vadd.f32 0.0, %v2254
      %v2256 = vpop.f32.mrf.mxu0
      %2257 = vmatprep.mubr.f32.mxu0 0.0
      %2258 = vmatmul.mubr.f32.gmra.mxu0 %v914
      %v2259 = vpop.f32.mrf.mxu0
      %v2260 = vadd.f32 0.0, %v2259
      %v2261 = vpop.f32.mrf.mxu0
      %2262 = vmatprep.mubr.f32.mxu0 0.0
      %2263 = vmatmul.mubr.f32.gmra.mxu0 %v916
      %v2264 = vpop.f32.mrf.mxu0
      %v2265 = vadd.f32 0.0, %v2264
      %v2266 = vpop.f32.mrf.mxu0
      %2267 = vmatprep.mubr.f32.mxu0 0.0
      %2268 = vmatmul.mubr.f32.gmra.mxu0 %v918
      %v2269 = vpop.f32.mrf.mxu0
      %v2270 = vadd.f32 0.0, %v2269
      %v2271 = vpop.f32.mrf.mxu0
      %2272 = vmatprep.mubr.f32.mxu0 0.0
      %2273 = vmatmul.mubr.f32.gmra.mxu0 %v920
      %v2274 = vpop.f32.mrf.mxu0
      %v2275 = vadd.f32 0.0, %v2274
      %v2276 = vpop.f32.mrf.mxu0
      %2277 = vmatprep.mubr.f32.mxu0 0.0
      %2278 = vmatmul.mubr.f32.gmra.mxu0 %v922
      %v2279 = vpop.f32.mrf.mxu0
      %v2280 = vadd.f32 0.0, %v2279
      %v2281 = vpop.f32.mrf.mxu0
      %2282 = vmatprep.mubr.f32.mxu0 0.0
      %2283 = vmatmul.mubr.f32.gmra.mxu0 %v924
      %v2284 = vpop.f32.mrf.mxu0
      %v2285 = vadd.f32 0.0, %v2284
      %v2286 = vpop.f32.mrf.mxu0
      %2287 = vmatprep.mubr.f32.mxu0 0.0
      %2288 = vmatmul.mubr.f32.gmra.mxu0 %v926
      %v2289 = vpop.f32.mrf.mxu0
      %v2290 = vadd.f32 0.0, %v2289
      %v2291 = vpop.f32.mrf.mxu0
      %2292 = vmatprep.mubr.f32.mxu0 0.0
      %2293 = vmatmul.mubr.f32.gmra.mxu0 %v928
      %v2294 = vpop.f32.mrf.mxu0
      %v2295 = vadd.f32 0.0, %v2294
      %v2296 = vpop.f32.mrf.mxu0
      %2297 = vmatprep.mubr.f32.mxu0 0.0
      %2298 = vmatmul.mubr.f32.gmra.mxu0 %v930
      %v2299 = vpop.f32.mrf.mxu0
      %v2300 = vadd.f32 0.0, %v2299
      %v2301 = vpop.f32.mrf.mxu0
      %2302 = vmatprep.mubr.f32.mxu0 0.0
      %2303 = vmatmul.mubr.f32.gmra.mxu0 %v932
      %v2304 = vpop.f32.mrf.mxu0
      %v2305 = vadd.f32 0.0, %v2304
      %v2306 = vpop.f32.mrf.mxu0
      %2307 = vmatprep.mubr.f32.mxu0 0.0
      %2308 = vmatmul.mubr.f32.gmra.mxu0 %v934
      %v2309 = vpop.f32.mrf.mxu0
      %v2310 = vadd.f32 0.0, %v2309
      %v2311 = vpop.f32.mrf.mxu0
      %2312 = vmatprep.mubr.f32.mxu0 0.0
      %2313 = vmatmul.mubr.f32.gmra.mxu0 %v936
      %v2314 = vpop.f32.mrf.mxu0
      %v2315 = vadd.f32 0.0, %v2314
      %v2316 = vpop.f32.mrf.mxu0
      %2317 = vmatprep.mubr.f32.mxu0 0.0
      %2318 = vmatmul.mubr.f32.gmra.mxu0 %v938
      %v2319 = vpop.f32.mrf.mxu0
      %v2320 = vadd.f32 0.0, %v2319
      %v2321 = vpop.f32.mrf.mxu0
      %2322 = vmatprep.mubr.f32.mxu0 0.0
      %2323 = vmatmul.mubr.f32.gmra.mxu0 %v940
      %v2324 = vpop.f32.mrf.mxu0
      %v2325 = vadd.f32 0.0, %v2324
      %v2326 = vpop.f32.mrf.mxu0
      %2327 = vmatprep.mubr.f32.mxu0 0.0
      %2328 = vmatmul.mubr.f32.gmra.mxu0 %v942
      %v2329 = vpop.f32.mrf.mxu0
      %v2330 = vadd.f32 0.0, %v2329
      %v2331 = vpop.f32.mrf.mxu0
      %2332 = vmatprep.mubr.f32.mxu0 0.0
      %2333 = vmatmul.mubr.f32.gmra.mxu0 %v944
      %v2334 = vpop.f32.mrf.mxu0
      %v2335 = vadd.f32 0.0, %v2334
      %v2336 = vpop.f32.mrf.mxu0
      %2337 = vmatprep.mubr.f32.mxu0 0.0
      %2338 = vmatmul.mubr.f32.gmra.mxu0 %v946
      %v2339 = vpop.f32.mrf.mxu0
      %v2340 = vadd.f32 0.0, %v2339
      %v2341 = vpop.f32.mrf.mxu0
      %2342 = vmatprep.mubr.f32.mxu0 0.0
      %2343 = vmatmul.mubr.f32.gmra.mxu0 %v948
      %v2344 = vpop.f32.mrf.mxu0
      %v2345 = vadd.f32 0.0, %v2344
      %v2346 = vpop.f32.mrf.mxu0
      %2347 = vmatprep.mubr.f32.mxu0 0.0
      %2348 = vmatmul.mubr.f32.gmra.mxu0 %v950
      %v2349 = vpop.f32.mrf.mxu0
      %v2350 = vadd.f32 0.0, %v2349
      %v2351 = vpop.f32.mrf.mxu0
      %2352 = vmatprep.mubr.f32.mxu0 0.0
      %2353 = vmatmul.mubr.f32.gmra.mxu0 %v952
      %v2354 = vpop.f32.mrf.mxu0
      %v2355 = vadd.f32 0.0, %v2354
      %v2356 = vpop.f32.mrf.mxu0
      %2357 = vmatprep.mubr.f32.mxu0 0.0
      %2358 = vmatmul.mubr.f32.gmra.mxu0 %v954
      %v2359 = vpop.f32.mrf.mxu0
      %v2360 = vadd.f32 0.0, %v2359
      %v2361 = vpop.f32.mrf.mxu0
      %2362 = vmatprep.mubr.f32.mxu0 0.0
      %2363 = vmatmul.mubr.f32.gmra.mxu0 %v956
      %v2364 = vpop.f32.mrf.mxu0
      %v2365 = vadd.f32 0.0, %v2364
      %v2366 = vpop.f32.mrf.mxu0
      %2367 = vmatprep.mubr.f32.mxu0 0.0
      %2368 = vmatmul.mubr.f32.gmra.mxu0 %v958
      %v2369 = vpop.f32.mrf.mxu0
      %v2370 = vadd.f32 0.0, %v2369
      %v2371 = vpop.f32.mrf.mxu0
      %2372 = vmatprep.mubr.f32.mxu0 0.0
      %2373 = vmatmul.mubr.f32.gmra.mxu0 %v960
      %v2374 = vpop.f32.mrf.mxu0
      %v2375 = vadd.f32 0.0, %v2374
      %v2376 = vpop.f32.mrf.mxu0
      %2377 = vmatprep.mubr.f32.mxu0 0.0
      %2378 = vmatmul.mubr.f32.gmra.mxu0 %v962
      %v2379 = vpop.f32.mrf.mxu0
      %v2380 = vadd.f32 0.0, %v2379
      %v2381 = vpop.f32.mrf.mxu0
      %2382 = vmatprep.mubr.f32.mxu0 0.0
      %2383 = vmatmul.mubr.f32.gmra.mxu0 %v964
      %v2384 = vpop.f32.mrf.mxu0
      %v2385 = vadd.f32 0.0, %v2384
      %v2386 = vpop.f32.mrf.mxu0
      %2387 = vmatprep.mubr.f32.mxu0 0.0
      %2388 = vmatmul.mubr.f32.gmra.mxu0 %v2172
      %v2389 = vpop.f32.mrf.mxu0
      %v2390 = vadd.f32 0.0, %v2389
      %v2391 = vpop.f32.mrf.mxu0
      %2392 = vmatprep.mubr.f32.mxu0 0.0
      %2393 = vmatmul.mubr.f32.gmra.mxu0 %v2174
      %v2394 = vpop.f32.mrf.mxu0
      %v2395 = vadd.f32 0.0, %v2394
      %v2396 = vpop.f32.mrf.mxu0
      %2397 = vmatprep.mubr.f32.mxu0 0.0
      %2398 = vmatmul.mubr.f32.gmra.mxu0 %v2176
      %v2399 = vpop.f32.mrf.mxu0
      %v2400 = vadd.f32 0.0, %v2399
      %v2401 = vpop.f32.mrf.mxu0
      %2402 = vmatprep.mubr.f32.mxu0 0.0
      %2403 = vmatmul.mubr.f32.gmra.mxu0 %v2178
      %v2404 = vpop.f32.mrf.mxu0
      %v2405 = vadd.f32 0.0, %v2404
      %v2406 = vpop.f32.mrf.mxu0
      %2407 = vdwg.mxu0
      %v2408 = vadd.f32 %v2128, %v2250
      %v2409 = vadd.f32 %v2129, %v2255
      %v2410 = vadd.f32 %v2130, %v2260
      %v2411 = vadd.f32 %v2131, %v2265
      %v2412 = vadd.f32 %v2132, %v2270
      %v2413 = vadd.f32 %v2133, %v2275
      %v2414 = vadd.f32 %v2134, %v2280
      %v2415 = vadd.f32 %v2135, %v2285
      %v2416 = vadd.f32 %v2136, %v2290
      %v2417 = vadd.f32 %v2137, %v2295
      %v2418 = vadd.f32 %v2138, %v2300
      %v2419 = vadd.f32 %v2139, %v2305
      %v2420 = vadd.f32 %v2140, %v2310
      %v2421 = vadd.f32 %v2141, %v2315
      %v2422 = vadd.f32 %v2142, %v2320
      %v2423 = vadd.f32 %v2143, %v2325
      %v2424 = vadd.f32 %v2144, %v2330
      %v2425 = vadd.f32 %v2145, %v2335
      %v2426 = vadd.f32 %v2146, %v2340
      %v2427 = vadd.f32 %v2147, %v2345
      %v2428 = vadd.f32 %v2148, %v2350
      %v2429 = vadd.f32 %v2149, %v2355
      %v2430 = vadd.f32 %v2150, %v2360
      %v2431 = vadd.f32 %v2151, %v2365
      %v2432 = vadd.f32 %v2152, %v2370
      %v2433 = vadd.f32 %v2153, %v2375
      %v2434 = vadd.f32 %v2154, %v2380
      %v2435 = vadd.f32 %v2155, %v2385
      %v2436 = vadd.f32 %v2156, %v2390
      %v2437 = vadd.f32 %v2157, %v2395
      %v2438 = vadd.f32 %v2158, %v2400
      %v2439 = vadd.f32 %v2159, %v2405
      %v2440 = vrot.slane %v775, 2
      %v2441 = vrot.slane %v776, 2
      %v2442 = vsel %vm1487, %v2440, %v2441
      %v2443 = vrot.slane %v777, 2
      %v2444 = vsel %vm1487, %v2441, %v2443
      %v2445 = vrot.slane %v778, 2
      %v2446 = vsel %vm1487, %v2443, %v2445
      %v2447 = vrot.slane %v779, 2
      %v2448 = vsel %vm1487, %v2445, %v2447
      %s2449 = scalar_lea.vmem %s3, 20
      %v2450 = vld [vmem:[%s2449] sm:$0xf]
      %v2451 = vsel %vm901, %v2442, 0
      %v2453 = vsel %vm901, %v2444, 0
      %v2455 = vsel %vm901, %v2446, 0
      %v2457 = vsel %vm901, %v2448, 0
      %v2460 = vsel %vm966, %v2450, 0
      %2462 = vmatprep.subr.mxu0 0.0
      %2463 = vmatpush1.msra.mxu0 0.0
      %2464 = vmatprep.subr.mxu0 0.0
      %2465 = vmatpush1.msra.mxu0 0.0
      %2466 = vmatprep.subr.mxu0 0.0
      %2467 = vmatpush1.msra.mxu0 0.0
      %2468 = vmatprep.subr.mxu0 0.0
      %2469 = vmatpush1.msra.mxu0 0.0
      %2470 = vmatprep.subr.mxu0 0.0
      %2471 = vmatpush1.msra.mxu0 0.0
      %2472 = vmatprep.subr.mxu0 0.0
      %2473 = vmatpush1.msra.mxu0 0.0
      %2474 = vmatprep.subr.mxu0 0.0
      %2475 = vmatpush1.msra.mxu0 0.0
      %2476 = vmatprep.subr.mxu0 0.0
      %2477 = vmatpush1.msra.mxu0 0.0
      %2478 = vmatprep.subr.mxu0 0.0
      %2479 = vmatpush1.msra.mxu0 0.0
      %2480 = vmatprep.subr.mxu0 0.0
      %2481 = vmatpush1.msra.mxu0 0.0
      %2482 = vmatprep.subr.mxu0 0.0
      %2483 = vmatpush1.msra.mxu0 0.0
      %2484 = vmatprep.subr.mxu0 0.0
      %2485 = vmatpush1.msra.mxu0 0.0
      %2486 = vmatprep.subr.mxu0 0.0
      %2487 = vmatpush1.msra.mxu0 0.0
      %2488 = vmatprep.subr.mxu0 0.0
      %2489 = vmatpush1.msra.mxu0 0.0
      %2490 = vmatprep.subr.mxu0 0.0
      %2491 = vmatpush1.msra.mxu0 0.0
      %2492 = vmatprep.subr.mxu0 0.0
      %2493 = vmatpush1.msra.mxu0 %v2460
      %2494 = vmatprep.subr.mxu0 0.0
      %2495 = vmatpush2.msra.mxu0 0.0
      %2496 = vmatprep.subr.mxu0 0.0
      %2497 = vmatpush2.msra.mxu0 0.0
      %2498 = vmatprep.subr.mxu0 0.0
      %2499 = vmatpush2.msra.mxu0 0.0
      %2500 = vmatprep.subr.mxu0 0.0
      %2501 = vmatpush2.msra.mxu0 0.0
      %2502 = vmatprep.subr.mxu0 0.0
      %2503 = vmatpush2.msra.mxu0 0.0
      %2504 = vmatprep.subr.mxu0 0.0
      %2505 = vmatpush2.msra.mxu0 0.0
      %2506 = vmatprep.subr.mxu0 0.0
      %2507 = vmatpush2.msra.mxu0 0.0
      %2508 = vmatprep.subr.mxu0 0.0
      %2509 = vmatpush2.msra.mxu0 0.0
      %2510 = vmatprep.subr.mxu0 0.0
      %2511 = vmatpush2.msra.mxu0 0.0
      %2512 = vmatprep.subr.mxu0 0.0
      %2513 = vmatpush2.msra.mxu0 0.0
      %2514 = vmatprep.subr.mxu0 0.0
      %2515 = vmatpush2.msra.mxu0 0.0
      %2516 = vmatprep.subr.mxu0 0.0
      %2517 = vmatpush2.msra.mxu0 0.0
      %2518 = vmatprep.subr.mxu0 0.0
      %2519 = vmatpush2.msra.mxu0 0.0
      %2520 = vmatprep.subr.mxu0 0.0
      %2521 = vmatpush2.msra.mxu0 0.0
      %2522 = vmatprep.subr.mxu0 0.0
      %2523 = vmatpush2.msra.mxu0 0.0
      %2524 = vmatprep.subr.mxu0 0.0
      %2525 = vmatpush2.msra.mxu0 0.0
      %2526 = vmatprep.mubr.f32.mxu0 0.0
      %2527 = vmatmul.mubr.f32.gmra.mxu0 %v1570
      %v2528 = vpop.f32.mrf.mxu0
      %v2529 = vadd.f32 0.0, %v2528
      %v2530 = vpop.f32.mrf.mxu0
      %2531 = vmatprep.mubr.f32.mxu0 0.0
      %2532 = vmatmul.mubr.f32.gmra.mxu0 %v1572
      %v2533 = vpop.f32.mrf.mxu0
      %v2534 = vadd.f32 0.0, %v2533
      %v2535 = vpop.f32.mrf.mxu0
      %2536 = vmatprep.mubr.f32.mxu0 0.0
      %2537 = vmatmul.mubr.f32.gmra.mxu0 %v1574
      %v2538 = vpop.f32.mrf.mxu0
      %v2539 = vadd.f32 0.0, %v2538
      %v2540 = vpop.f32.mrf.mxu0
      %2541 = vmatprep.mubr.f32.mxu0 0.0
      %2542 = vmatmul.mubr.f32.gmra.mxu0 %v1576
      %v2543 = vpop.f32.mrf.mxu0
      %v2544 = vadd.f32 0.0, %v2543
      %v2545 = vpop.f32.mrf.mxu0
      %2546 = vmatprep.mubr.f32.mxu0 0.0
      %2547 = vmatmul.mubr.f32.gmra.mxu0 %v1578
      %v2548 = vpop.f32.mrf.mxu0
      %v2549 = vadd.f32 0.0, %v2548
      %v2550 = vpop.f32.mrf.mxu0
      %2551 = vmatprep.mubr.f32.mxu0 0.0
      %2552 = vmatmul.mubr.f32.gmra.mxu0 %v1580
      %v2553 = vpop.f32.mrf.mxu0
      %v2554 = vadd.f32 0.0, %v2553
      %v2555 = vpop.f32.mrf.mxu0
      %2556 = vmatprep.mubr.f32.mxu0 0.0
      %2557 = vmatmul.mubr.f32.gmra.mxu0 %v1582
      %v2558 = vpop.f32.mrf.mxu0
      %v2559 = vadd.f32 0.0, %v2558
      %v2560 = vpop.f32.mrf.mxu0
      %2561 = vmatprep.mubr.f32.mxu0 0.0
      %2562 = vmatmul.mubr.f32.gmra.mxu0 %v1584
      %v2563 = vpop.f32.mrf.mxu0
      %v2564 = vadd.f32 0.0, %v2563
      %v2565 = vpop.f32.mrf.mxu0
      %2566 = vmatprep.mubr.f32.mxu0 0.0
      %2567 = vmatmul.mubr.f32.gmra.mxu0 %v1586
      %v2568 = vpop.f32.mrf.mxu0
      %v2569 = vadd.f32 0.0, %v2568
      %v2570 = vpop.f32.mrf.mxu0
      %2571 = vmatprep.mubr.f32.mxu0 0.0
      %2572 = vmatmul.mubr.f32.gmra.mxu0 %v1588
      %v2573 = vpop.f32.mrf.mxu0
      %v2574 = vadd.f32 0.0, %v2573
      %v2575 = vpop.f32.mrf.mxu0
      %2576 = vmatprep.mubr.f32.mxu0 0.0
      %2577 = vmatmul.mubr.f32.gmra.mxu0 %v1590
      %v2578 = vpop.f32.mrf.mxu0
      %v2579 = vadd.f32 0.0, %v2578
      %v2580 = vpop.f32.mrf.mxu0
      %2581 = vmatprep.mubr.f32.mxu0 0.0
      %2582 = vmatmul.mubr.f32.gmra.mxu0 %v1592
      %v2583 = vpop.f32.mrf.mxu0
      %v2584 = vadd.f32 0.0, %v2583
      %v2585 = vpop.f32.mrf.mxu0
      %2586 = vmatprep.mubr.f32.mxu0 0.0
      %2587 = vmatmul.mubr.f32.gmra.mxu0 %v1594
      %v2588 = vpop.f32.mrf.mxu0
      %v2589 = vadd.f32 0.0, %v2588
      %v2590 = vpop.f32.mrf.mxu0
      %2591 = vmatprep.mubr.f32.mxu0 0.0
      %2592 = vmatmul.mubr.f32.gmra.mxu0 %v1596
      %v2593 = vpop.f32.mrf.mxu0
      %v2594 = vadd.f32 0.0, %v2593
      %v2595 = vpop.f32.mrf.mxu0
      %2596 = vmatprep.mubr.f32.mxu0 0.0
      %2597 = vmatmul.mubr.f32.gmra.mxu0 %v1598
      %v2598 = vpop.f32.mrf.mxu0
      %v2599 = vadd.f32 0.0, %v2598
      %v2600 = vpop.f32.mrf.mxu0
      %2601 = vmatprep.mubr.f32.mxu0 0.0
      %2602 = vmatmul.mubr.f32.gmra.mxu0 %v1600
      %v2603 = vpop.f32.mrf.mxu0
      %v2604 = vadd.f32 0.0, %v2603
      %v2605 = vpop.f32.mrf.mxu0
      %2606 = vmatprep.mubr.f32.mxu0 0.0
      %2607 = vmatmul.mubr.f32.gmra.mxu0 %v1602
      %v2608 = vpop.f32.mrf.mxu0
      %v2609 = vadd.f32 0.0, %v2608
      %v2610 = vpop.f32.mrf.mxu0
      %2611 = vmatprep.mubr.f32.mxu0 0.0
      %2612 = vmatmul.mubr.f32.gmra.mxu0 %v1604
      %v2613 = vpop.f32.mrf.mxu0
      %v2614 = vadd.f32 0.0, %v2613
      %v2615 = vpop.f32.mrf.mxu0
      %2616 = vmatprep.mubr.f32.mxu0 0.0
      %2617 = vmatmul.mubr.f32.gmra.mxu0 %v1606
      %v2618 = vpop.f32.mrf.mxu0
      %v2619 = vadd.f32 0.0, %v2618
      %v2620 = vpop.f32.mrf.mxu0
      %2621 = vmatprep.mubr.f32.mxu0 0.0
      %2622 = vmatmul.mubr.f32.gmra.mxu0 %v1608
      %v2623 = vpop.f32.mrf.mxu0
      %v2624 = vadd.f32 0.0, %v2623
      %v2625 = vpop.f32.mrf.mxu0
      %2626 = vmatprep.mubr.f32.mxu0 0.0
      %2627 = vmatmul.mubr.f32.gmra.mxu0 %v1610
      %v2628 = vpop.f32.mrf.mxu0
      %v2629 = vadd.f32 0.0, %v2628
      %v2630 = vpop.f32.mrf.mxu0
      %2631 = vmatprep.mubr.f32.mxu0 0.0
      %2632 = vmatmul.mubr.f32.gmra.mxu0 %v1612
      %v2633 = vpop.f32.mrf.mxu0
      %v2634 = vadd.f32 0.0, %v2633
      %v2635 = vpop.f32.mrf.mxu0
      %2636 = vmatprep.mubr.f32.mxu0 0.0
      %2637 = vmatmul.mubr.f32.gmra.mxu0 %v1614
      %v2638 = vpop.f32.mrf.mxu0
      %v2639 = vadd.f32 0.0, %v2638
      %v2640 = vpop.f32.mrf.mxu0
      %2641 = vmatprep.mubr.f32.mxu0 0.0
      %2642 = vmatmul.mubr.f32.gmra.mxu0 %v1616
      %v2643 = vpop.f32.mrf.mxu0
      %v2644 = vadd.f32 0.0, %v2643
      %v2645 = vpop.f32.mrf.mxu0
      %2646 = vmatprep.mubr.f32.mxu0 0.0
      %2647 = vmatmul.mubr.f32.gmra.mxu0 %v1618
      %v2648 = vpop.f32.mrf.mxu0
      %v2649 = vadd.f32 0.0, %v2648
      %v2650 = vpop.f32.mrf.mxu0
      %2651 = vmatprep.mubr.f32.mxu0 0.0
      %2652 = vmatmul.mubr.f32.gmra.mxu0 %v1620
      %v2653 = vpop.f32.mrf.mxu0
      %v2654 = vadd.f32 0.0, %v2653
      %v2655 = vpop.f32.mrf.mxu0
      %2656 = vmatprep.mubr.f32.mxu0 0.0
      %2657 = vmatmul.mubr.f32.gmra.mxu0 %v1622
      %v2658 = vpop.f32.mrf.mxu0
      %v2659 = vadd.f32 0.0, %v2658
      %v2660 = vpop.f32.mrf.mxu0
      %2661 = vmatprep.mubr.f32.mxu0 0.0
      %2662 = vmatmul.mubr.f32.gmra.mxu0 %v1624
      %v2663 = vpop.f32.mrf.mxu0
      %v2664 = vadd.f32 0.0, %v2663
      %v2665 = vpop.f32.mrf.mxu0
      %2666 = vmatprep.mubr.f32.mxu0 0.0
      %2667 = vmatmul.mubr.f32.gmra.mxu0 %v2451
      %v2668 = vpop.f32.mrf.mxu0
      %v2669 = vadd.f32 0.0, %v2668
      %v2670 = vpop.f32.mrf.mxu0
      %2671 = vmatprep.mubr.f32.mxu0 0.0
      %2672 = vmatmul.mubr.f32.gmra.mxu0 %v2453
      %v2673 = vpop.f32.mrf.mxu0
      %v2674 = vadd.f32 0.0, %v2673
      %v2675 = vpop.f32.mrf.mxu0
      %2676 = vmatprep.mubr.f32.mxu0 0.0
      %2677 = vmatmul.mubr.f32.gmra.mxu0 %v2455
      %v2678 = vpop.f32.mrf.mxu0
      %v2679 = vadd.f32 0.0, %v2678
      %v2680 = vpop.f32.mrf.mxu0
      %2681 = vmatprep.mubr.f32.mxu0 0.0
      %2682 = vmatmul.mubr.f32.gmra.mxu0 %v2457
      %v2683 = vpop.f32.mrf.mxu0
      %v2684 = vadd.f32 0.0, %v2683
      %v2685 = vpop.f32.mrf.mxu0
      %2686 = vdwg.mxu0
      %v2687 = vadd.f32 %v2408, %v2529
      %v2688 = vadd.f32 %v2409, %v2534
      %v2689 = vadd.f32 %v2410, %v2539
      %v2690 = vadd.f32 %v2411, %v2544
      %v2691 = vadd.f32 %v2412, %v2549
      %v2692 = vadd.f32 %v2413, %v2554
      %v2693 = vadd.f32 %v2414, %v2559
      %v2694 = vadd.f32 %v2415, %v2564
      %v2695 = vadd.f32 %v2416, %v2569
      %v2696 = vadd.f32 %v2417, %v2574
      %v2697 = vadd.f32 %v2418, %v2579
      %v2698 = vadd.f32 %v2419, %v2584
      %v2699 = vadd.f32 %v2420, %v2589
      %v2700 = vadd.f32 %v2421, %v2594
      %v2701 = vadd.f32 %v2422, %v2599
      %v2702 = vadd.f32 %v2423, %v2604
      %v2703 = vadd.f32 %v2424, %v2609
      %v2704 = vadd.f32 %v2425, %v2614
      %v2705 = vadd.f32 %v2426, %v2619
      %v2706 = vadd.f32 %v2427, %v2624
      %v2707 = vadd.f32 %v2428, %v2629
      %v2708 = vadd.f32 %v2429, %v2634
      %v2709 = vadd.f32 %v2430, %v2639
      %v2710 = vadd.f32 %v2431, %v2644
      %v2711 = vadd.f32 %v2432, %v2649
      %v2712 = vadd.f32 %v2433, %v2654
      %v2713 = vadd.f32 %v2434, %v2659
      %v2714 = vadd.f32 %v2435, %v2664
      %v2715 = vadd.f32 %v2436, %v2669
      %v2716 = vadd.f32 %v2437, %v2674
      %v2717 = vadd.f32 %v2438, %v2679
      %v2718 = vadd.f32 %v2439, %v2684
      %s2719 = scalar_lea.vmem %s3, 24
      %v2720 = vld [vmem:[%s2719] sm:$0xf]
      %v2722 = vsel %vm901, %v780, 0
      %v2725 = vsel %vm901, %v781, 0
      %v2728 = vsel %vm901, %v782, 0
      %v2731 = vsel %vm901, %v783, 0
      %v2734 = vsel %vm966, %v2720, 0
      %2736 = vmatprep.subr.mxu0 0.0
      %2737 = vmatpush1.msra.mxu0 0.0
      %2738 = vmatprep.subr.mxu0 0.0
      %2739 = vmatpush1.msra.mxu0 0.0
      %2740 = vmatprep.subr.mxu0 0.0
      %2741 = vmatpush1.msra.mxu0 0.0
      %2742 = vmatprep.subr.mxu0 0.0
      %2743 = vmatpush1.msra.mxu0 0.0
      %2744 = vmatprep.subr.mxu0 0.0
      %2745 = vmatpush1.msra.mxu0 0.0
      %2746 = vmatprep.subr.mxu0 0.0
      %2747 = vmatpush1.msra.mxu0 0.0
      %2748 = vmatprep.subr.mxu0 0.0
      %2749 = vmatpush1.msra.mxu0 0.0
      %2750 = vmatprep.subr.mxu0 0.0
      %2751 = vmatpush1.msra.mxu0 0.0
      %2752 = vmatprep.subr.mxu0 0.0
      %2753 = vmatpush1.msra.mxu0 0.0
      %2754 = vmatprep.subr.mxu0 0.0
      %2755 = vmatpush1.msra.mxu0 0.0
      %2756 = vmatprep.subr.mxu0 0.0
      %2757 = vmatpush1.msra.mxu0 0.0
      %2758 = vmatprep.subr.mxu0 0.0
      %2759 = vmatpush1.msra.mxu0 0.0
      %2760 = vmatprep.subr.mxu0 0.0
      %2761 = vmatpush1.msra.mxu0 0.0
      %2762 = vmatprep.subr.mxu0 0.0
      %2763 = vmatpush1.msra.mxu0 0.0
      %2764 = vmatprep.subr.mxu0 0.0
      %2765 = vmatpush1.msra.mxu0 0.0
      %2766 = vmatprep.subr.mxu0 0.0
      %2767 = vmatpush1.msra.mxu0 %v2734
      %2768 = vmatprep.subr.mxu0 0.0
      %2769 = vmatpush2.msra.mxu0 0.0
      %2770 = vmatprep.subr.mxu0 0.0
      %2771 = vmatpush2.msra.mxu0 0.0
      %2772 = vmatprep.subr.mxu0 0.0
      %2773 = vmatpush2.msra.mxu0 0.0
      %2774 = vmatprep.subr.mxu0 0.0
      %2775 = vmatpush2.msra.mxu0 0.0
      %2776 = vmatprep.subr.mxu0 0.0
      %2777 = vmatpush2.msra.mxu0 0.0
      %2778 = vmatprep.subr.mxu0 0.0
      %2779 = vmatpush2.msra.mxu0 0.0
      %2780 = vmatprep.subr.mxu0 0.0
      %2781 = vmatpush2.msra.mxu0 0.0
      %2782 = vmatprep.subr.mxu0 0.0
      %2783 = vmatpush2.msra.mxu0 0.0
      %2784 = vmatprep.subr.mxu0 0.0
      %2785 = vmatpush2.msra.mxu0 0.0
      %2786 = vmatprep.subr.mxu0 0.0
      %2787 = vmatpush2.msra.mxu0 0.0
      %2788 = vmatprep.subr.mxu0 0.0
      %2789 = vmatpush2.msra.mxu0 0.0
      %2790 = vmatprep.subr.mxu0 0.0
      %2791 = vmatpush2.msra.mxu0 0.0
      %2792 = vmatprep.subr.mxu0 0.0
      %2793 = vmatpush2.msra.mxu0 0.0
      %2794 = vmatprep.subr.mxu0 0.0
      %2795 = vmatpush2.msra.mxu0 0.0
      %2796 = vmatprep.subr.mxu0 0.0
      %2797 = vmatpush2.msra.mxu0 0.0
      %2798 = vmatprep.subr.mxu0 0.0
      %2799 = vmatpush2.msra.mxu0 0.0
      %2800 = vmatprep.mubr.f32.mxu0 0.0
      %2801 = vmatmul.mubr.f32.gmra.mxu0 %v1211
      %v2802 = vpop.f32.mrf.mxu0
      %v2803 = vadd.f32 0.0, %v2802
      %v2804 = vpop.f32.mrf.mxu0
      %2805 = vmatprep.mubr.f32.mxu0 0.0
      %2806 = vmatmul.mubr.f32.gmra.mxu0 %v1213
      %v2807 = vpop.f32.mrf.mxu0
      %v2808 = vadd.f32 0.0, %v2807
      %v2809 = vpop.f32.mrf.mxu0
      %2810 = vmatprep.mubr.f32.mxu0 0.0
      %2811 = vmatmul.mubr.f32.gmra.mxu0 %v1215
      %v2812 = vpop.f32.mrf.mxu0
      %v2813 = vadd.f32 0.0, %v2812
      %v2814 = vpop.f32.mrf.mxu0
      %2815 = vmatprep.mubr.f32.mxu0 0.0
      %2816 = vmatmul.mubr.f32.gmra.mxu0 %v1217
      %v2817 = vpop.f32.mrf.mxu0
      %v2818 = vadd.f32 0.0, %v2817
      %v2819 = vpop.f32.mrf.mxu0
      %2820 = vmatprep.mubr.f32.mxu0 0.0
      %2821 = vmatmul.mubr.f32.gmra.mxu0 %v1219
      %v2822 = vpop.f32.mrf.mxu0
      %v2823 = vadd.f32 0.0, %v2822
      %v2824 = vpop.f32.mrf.mxu0
      %2825 = vmatprep.mubr.f32.mxu0 0.0
      %2826 = vmatmul.mubr.f32.gmra.mxu0 %v1221
      %v2827 = vpop.f32.mrf.mxu0
      %v2828 = vadd.f32 0.0, %v2827
      %v2829 = vpop.f32.mrf.mxu0
      %2830 = vmatprep.mubr.f32.mxu0 0.0
      %2831 = vmatmul.mubr.f32.gmra.mxu0 %v1223
      %v2832 = vpop.f32.mrf.mxu0
      %v2833 = vadd.f32 0.0, %v2832
      %v2834 = vpop.f32.mrf.mxu0
      %2835 = vmatprep.mubr.f32.mxu0 0.0
      %2836 = vmatmul.mubr.f32.gmra.mxu0 %v1225
      %v2837 = vpop.f32.mrf.mxu0
      %v2838 = vadd.f32 0.0, %v2837
      %v2839 = vpop.f32.mrf.mxu0
      %2840 = vmatprep.mubr.f32.mxu0 0.0
      %2841 = vmatmul.mubr.f32.gmra.mxu0 %v1227
      %v2842 = vpop.f32.mrf.mxu0
      %v2843 = vadd.f32 0.0, %v2842
      %v2844 = vpop.f32.mrf.mxu0
      %2845 = vmatprep.mubr.f32.mxu0 0.0
      %2846 = vmatmul.mubr.f32.gmra.mxu0 %v1229
      %v2847 = vpop.f32.mrf.mxu0
      %v2848 = vadd.f32 0.0, %v2847
      %v2849 = vpop.f32.mrf.mxu0
      %2850 = vmatprep.mubr.f32.mxu0 0.0
      %2851 = vmatmul.mubr.f32.gmra.mxu0 %v1231
      %v2852 = vpop.f32.mrf.mxu0
      %v2853 = vadd.f32 0.0, %v2852
      %v2854 = vpop.f32.mrf.mxu0
      %2855 = vmatprep.mubr.f32.mxu0 0.0
      %2856 = vmatmul.mubr.f32.gmra.mxu0 %v1233
      %v2857 = vpop.f32.mrf.mxu0
      %v2858 = vadd.f32 0.0, %v2857
      %v2859 = vpop.f32.mrf.mxu0
      %2860 = vmatprep.mubr.f32.mxu0 0.0
      %2861 = vmatmul.mubr.f32.gmra.mxu0 %v1235
      %v2862 = vpop.f32.mrf.mxu0
      %v2863 = vadd.f32 0.0, %v2862
      %v2864 = vpop.f32.mrf.mxu0
      %2865 = vmatprep.mubr.f32.mxu0 0.0
      %2866 = vmatmul.mubr.f32.gmra.mxu0 %v1237
      %v2867 = vpop.f32.mrf.mxu0
      %v2868 = vadd.f32 0.0, %v2867
      %v2869 = vpop.f32.mrf.mxu0
      %2870 = vmatprep.mubr.f32.mxu0 0.0
      %2871 = vmatmul.mubr.f32.gmra.mxu0 %v1239
      %v2872 = vpop.f32.mrf.mxu0
      %v2873 = vadd.f32 0.0, %v2872
      %v2874 = vpop.f32.mrf.mxu0
      %2875 = vmatprep.mubr.f32.mxu0 0.0
      %2876 = vmatmul.mubr.f32.gmra.mxu0 %v1241
      %v2877 = vpop.f32.mrf.mxu0
      %v2878 = vadd.f32 0.0, %v2877
      %v2879 = vpop.f32.mrf.mxu0
      %2880 = vmatprep.mubr.f32.mxu0 0.0
      %2881 = vmatmul.mubr.f32.gmra.mxu0 %v1243
      %v2882 = vpop.f32.mrf.mxu0
      %v2883 = vadd.f32 0.0, %v2882
      %v2884 = vpop.f32.mrf.mxu0
      %2885 = vmatprep.mubr.f32.mxu0 0.0
      %2886 = vmatmul.mubr.f32.gmra.mxu0 %v1245
      %v2887 = vpop.f32.mrf.mxu0
      %v2888 = vadd.f32 0.0, %v2887
      %v2889 = vpop.f32.mrf.mxu0
      %2890 = vmatprep.mubr.f32.mxu0 0.0
      %2891 = vmatmul.mubr.f32.gmra.mxu0 %v1247
      %v2892 = vpop.f32.mrf.mxu0
      %v2893 = vadd.f32 0.0, %v2892
      %v2894 = vpop.f32.mrf.mxu0
      %2895 = vmatprep.mubr.f32.mxu0 0.0
      %2896 = vmatmul.mubr.f32.gmra.mxu0 %v1249
      %v2897 = vpop.f32.mrf.mxu0
      %v2898 = vadd.f32 0.0, %v2897
      %v2899 = vpop.f32.mrf.mxu0
      %2900 = vmatprep.mubr.f32.mxu0 0.0
      %2901 = vmatmul.mubr.f32.gmra.mxu0 %v1251
      %v2902 = vpop.f32.mrf.mxu0
      %v2903 = vadd.f32 0.0, %v2902
      %v2904 = vpop.f32.mrf.mxu0
      %2905 = vmatprep.mubr.f32.mxu0 0.0
      %2906 = vmatmul.mubr.f32.gmra.mxu0 %v1253
      %v2907 = vpop.f32.mrf.mxu0
      %v2908 = vadd.f32 0.0, %v2907
      %v2909 = vpop.f32.mrf.mxu0
      %2910 = vmatprep.mubr.f32.mxu0 0.0
      %2911 = vmatmul.mubr.f32.gmra.mxu0 %v1255
      %v2912 = vpop.f32.mrf.mxu0
      %v2913 = vadd.f32 0.0, %v2912
      %v2914 = vpop.f32.mrf.mxu0
      %2915 = vmatprep.mubr.f32.mxu0 0.0
      %2916 = vmatmul.mubr.f32.gmra.mxu0 %v1257
      %v2917 = vpop.f32.mrf.mxu0
      %v2918 = vadd.f32 0.0, %v2917
      %v2919 = vpop.f32.mrf.mxu0
      %2920 = vmatprep.mubr.f32.mxu0 0.0
      %2921 = vmatmul.mubr.f32.gmra.mxu0 %v1889
      %v2922 = vpop.f32.mrf.mxu0
      %v2923 = vadd.f32 0.0, %v2922
      %v2924 = vpop.f32.mrf.mxu0
      %2925 = vmatprep.mubr.f32.mxu0 0.0
      %2926 = vmatmul.mubr.f32.gmra.mxu0 %v1892
      %v2927 = vpop.f32.mrf.mxu0
      %v2928 = vadd.f32 0.0, %v2927
      %v2929 = vpop.f32.mrf.mxu0
      %2930 = vmatprep.mubr.f32.mxu0 0.0
      %2931 = vmatmul.mubr.f32.gmra.mxu0 %v1895
      %v2932 = vpop.f32.mrf.mxu0
      %v2933 = vadd.f32 0.0, %v2932
      %v2934 = vpop.f32.mrf.mxu0
      %2935 = vmatprep.mubr.f32.mxu0 0.0
      %2936 = vmatmul.mubr.f32.gmra.mxu0 %v1898
      %v2937 = vpop.f32.mrf.mxu0
      %v2938 = vadd.f32 0.0, %v2937
      %v2939 = vpop.f32.mrf.mxu0
      %2940 = vmatprep.mubr.f32.mxu0 0.0
      %2941 = vmatmul.mubr.f32.gmra.mxu0 %v2722
      %v2942 = vpop.f32.mrf.mxu0
      %v2943 = vadd.f32 0.0, %v2942
      %v2944 = vpop.f32.mrf.mxu0
      %2945 = vmatprep.mubr.f32.mxu0 0.0
      %2946 = vmatmul.mubr.f32.gmra.mxu0 %v2725
      %v2947 = vpop.f32.mrf.mxu0
      %v2948 = vadd.f32 0.0, %v2947
      %v2949 = vpop.f32.mrf.mxu0
      %2950 = vmatprep.mubr.f32.mxu0 0.0
      %2951 = vmatmul.mubr.f32.gmra.mxu0 %v2728
      %v2952 = vpop.f32.mrf.mxu0
      %v2953 = vadd.f32 0.0, %v2952
      %v2954 = vpop.f32.mrf.mxu0
      %2955 = vmatprep.mubr.f32.mxu0 0.0
      %2956 = vmatmul.mubr.f32.gmra.mxu0 %v2731
      %v2957 = vpop.f32.mrf.mxu0
      %v2958 = vadd.f32 0.0, %v2957
      %v2959 = vpop.f32.mrf.mxu0
      %2960 = vdwg.mxu0
      %v2961 = vadd.f32 %v2687, %v2803
      %v2962 = vadd.f32 %v2688, %v2808
      %v2963 = vadd.f32 %v2689, %v2813
      %v2964 = vadd.f32 %v2690, %v2818
      %v2965 = vadd.f32 %v2691, %v2823
      %v2966 = vadd.f32 %v2692, %v2828
      %v2967 = vadd.f32 %v2693, %v2833
      %v2968 = vadd.f32 %v2694, %v2838
      %v2969 = vadd.f32 %v2695, %v2843
      %v2970 = vadd.f32 %v2696, %v2848
      %v2971 = vadd.f32 %v2697, %v2853
      %v2972 = vadd.f32 %v2698, %v2858
      %v2973 = vadd.f32 %v2699, %v2863
      %v2974 = vadd.f32 %v2700, %v2868
      %v2975 = vadd.f32 %v2701, %v2873
      %v2976 = vadd.f32 %v2702, %v2878
      %v2977 = vadd.f32 %v2703, %v2883
      %v2978 = vadd.f32 %v2704, %v2888
      %v2979 = vadd.f32 %v2705, %v2893
      %v2980 = vadd.f32 %v2706, %v2898
      %v2981 = vadd.f32 %v2707, %v2903
      %v2982 = vadd.f32 %v2708, %v2908
      %v2983 = vadd.f32 %v2709, %v2913
      %v2984 = vadd.f32 %v2710, %v2918
      %v2985 = vadd.f32 %v2711, %v2923
      %v2986 = vadd.f32 %v2712, %v2928
      %v2987 = vadd.f32 %v2713, %v2933
      %v2988 = vadd.f32 %v2714, %v2938
      %v2989 = vadd.f32 %v2715, %v2943
      %v2990 = vadd.f32 %v2716, %v2948
      %v2991 = vadd.f32 %v2717, %v2953
      %v2992 = vadd.f32 %v2718, %v2958
      %v2994 = vrot.slane %v780, 1
      %v2995 = vrot.slane %v781, 1
      %v2996 = vsel %vm826, %v2994, %v2995
      %v2997 = vrot.slane %v782, 1
      %v2998 = vsel %vm826, %v2995, %v2997
      %v2999 = vrot.slane %v783, 1
      %v3000 = vsel %vm826, %v2997, %v2999
      %v3001 = vrot.slane %v784, 1
      %v3002 = vsel %vm826, %v2999, %v3001
      %s3003 = scalar_lea.vmem %s3, 28
      %v3004 = vld [vmem:[%s3003] sm:$0xf]
      %v3005 = vsel %vm901, %v2996, 0
      %v3007 = vsel %vm901, %v2998, 0
      %v3009 = vsel %vm901, %v3000, 0
      %v3011 = vsel %vm901, %v3002, 0
      %v3014 = vsel %vm966, %v3004, 0
      %3016 = vmatprep.subr.mxu0 0.0
      %3017 = vmatpush1.msra.mxu0 0.0
      %3018 = vmatprep.subr.mxu0 0.0
      %3019 = vmatpush1.msra.mxu0 0.0
      %3020 = vmatprep.subr.mxu0 0.0
      %3021 = vmatpush1.msra.mxu0 0.0
      %3022 = vmatprep.subr.mxu0 0.0
      %3023 = vmatpush1.msra.mxu0 0.0
      %3024 = vmatprep.subr.mxu0 0.0
      %3025 = vmatpush1.msra.mxu0 0.0
      %3026 = vmatprep.subr.mxu0 0.0
      %3027 = vmatpush1.msra.mxu0 0.0
      %3028 = vmatprep.subr.mxu0 0.0
      %3029 = vmatpush1.msra.mxu0 0.0
      %3030 = vmatprep.subr.mxu0 0.0
      %3031 = vmatpush1.msra.mxu0 0.0
      %3032 = vmatprep.subr.mxu0 0.0
      %3033 = vmatpush1.msra.mxu0 0.0
      %3034 = vmatprep.subr.mxu0 0.0
      %3035 = vmatpush1.msra.mxu0 0.0
      %3036 = vmatprep.subr.mxu0 0.0
      %3037 = vmatpush1.msra.mxu0 0.0
      %3038 = vmatprep.subr.mxu0 0.0
      %3039 = vmatpush1.msra.mxu0 0.0
      %3040 = vmatprep.subr.mxu0 0.0
      %3041 = vmatpush1.msra.mxu0 0.0
      %3042 = vmatprep.subr.mxu0 0.0
      %3043 = vmatpush1.msra.mxu0 0.0
      %3044 = vmatprep.subr.mxu0 0.0
      %3045 = vmatpush1.msra.mxu0 0.0
      %3046 = vmatprep.subr.mxu0 0.0
      %3047 = vmatpush1.msra.mxu0 %v3014
      %3048 = vmatprep.subr.mxu0 0.0
      %3049 = vmatpush2.msra.mxu0 0.0
      %3050 = vmatprep.subr.mxu0 0.0
      %3051 = vmatpush2.msra.mxu0 0.0
      %3052 = vmatprep.subr.mxu0 0.0
      %3053 = vmatpush2.msra.mxu0 0.0
      %3054 = vmatprep.subr.mxu0 0.0
      %3055 = vmatpush2.msra.mxu0 0.0
      %3056 = vmatprep.subr.mxu0 0.0
      %3057 = vmatpush2.msra.mxu0 0.0
      %3058 = vmatprep.subr.mxu0 0.0
      %3059 = vmatpush2.msra.mxu0 0.0
      %3060 = vmatprep.subr.mxu0 0.0
      %3061 = vmatpush2.msra.mxu0 0.0
      %3062 = vmatprep.subr.mxu0 0.0
      %3063 = vmatpush2.msra.mxu0 0.0
      %3064 = vmatprep.subr.mxu0 0.0
      %3065 = vmatpush2.msra.mxu0 0.0
      %3066 = vmatprep.subr.mxu0 0.0
      %3067 = vmatpush2.msra.mxu0 0.0
      %3068 = vmatprep.subr.mxu0 0.0
      %3069 = vmatpush2.msra.mxu0 0.0
      %3070 = vmatprep.subr.mxu0 0.0
      %3071 = vmatpush2.msra.mxu0 0.0
      %3072 = vmatprep.subr.mxu0 0.0
      %3073 = vmatpush2.msra.mxu0 0.0
      %3074 = vmatprep.subr.mxu0 0.0
      %3075 = vmatpush2.msra.mxu0 0.0
      %3076 = vmatprep.subr.mxu0 0.0
      %3077 = vmatpush2.msra.mxu0 0.0
      %3078 = vmatprep.subr.mxu0 0.0
      %3079 = vmatpush2.msra.mxu0 0.0
      %3080 = vmatprep.mubr.f32.mxu0 0.0
      %3081 = vmatmul.mubr.f32.gmra.mxu0 %v918
      %v3082 = vpop.f32.mrf.mxu0
      %v3083 = vadd.f32 0.0, %v3082
      %v3084 = vpop.f32.mrf.mxu0
      %3085 = vmatprep.mubr.f32.mxu0 0.0
      %3086 = vmatmul.mubr.f32.gmra.mxu0 %v920
      %v3087 = vpop.f32.mrf.mxu0
      %v3088 = vadd.f32 0.0, %v3087
      %v3089 = vpop.f32.mrf.mxu0
      %3090 = vmatprep.mubr.f32.mxu0 0.0
      %3091 = vmatmul.mubr.f32.gmra.mxu0 %v922
      %v3092 = vpop.f32.mrf.mxu0
      %v3093 = vadd.f32 0.0, %v3092
      %v3094 = vpop.f32.mrf.mxu0
      %3095 = vmatprep.mubr.f32.mxu0 0.0
      %3096 = vmatmul.mubr.f32.gmra.mxu0 %v924
      %v3097 = vpop.f32.mrf.mxu0
      %v3098 = vadd.f32 0.0, %v3097
      %v3099 = vpop.f32.mrf.mxu0
      %3100 = vmatprep.mubr.f32.mxu0 0.0
      %3101 = vmatmul.mubr.f32.gmra.mxu0 %v926
      %v3102 = vpop.f32.mrf.mxu0
      %v3103 = vadd.f32 0.0, %v3102
      %v3104 = vpop.f32.mrf.mxu0
      %3105 = vmatprep.mubr.f32.mxu0 0.0
      %3106 = vmatmul.mubr.f32.gmra.mxu0 %v928
      %v3107 = vpop.f32.mrf.mxu0
      %v3108 = vadd.f32 0.0, %v3107
      %v3109 = vpop.f32.mrf.mxu0
      %3110 = vmatprep.mubr.f32.mxu0 0.0
      %3111 = vmatmul.mubr.f32.gmra.mxu0 %v930
      %v3112 = vpop.f32.mrf.mxu0
      %v3113 = vadd.f32 0.0, %v3112
      %v3114 = vpop.f32.mrf.mxu0
      %3115 = vmatprep.mubr.f32.mxu0 0.0
      %3116 = vmatmul.mubr.f32.gmra.mxu0 %v932
      %v3117 = vpop.f32.mrf.mxu0
      %v3118 = vadd.f32 0.0, %v3117
      %v3119 = vpop.f32.mrf.mxu0
      %3120 = vmatprep.mubr.f32.mxu0 0.0
      %3121 = vmatmul.mubr.f32.gmra.mxu0 %v934
      %v3122 = vpop.f32.mrf.mxu0
      %v3123 = vadd.f32 0.0, %v3122
      %v3124 = vpop.f32.mrf.mxu0
      %3125 = vmatprep.mubr.f32.mxu0 0.0
      %3126 = vmatmul.mubr.f32.gmra.mxu0 %v936
      %v3127 = vpop.f32.mrf.mxu0
      %v3128 = vadd.f32 0.0, %v3127
      %v3129 = vpop.f32.mrf.mxu0
      %3130 = vmatprep.mubr.f32.mxu0 0.0
      %3131 = vmatmul.mubr.f32.gmra.mxu0 %v938
      %v3132 = vpop.f32.mrf.mxu0
      %v3133 = vadd.f32 0.0, %v3132
      %v3134 = vpop.f32.mrf.mxu0
      %3135 = vmatprep.mubr.f32.mxu0 0.0
      %3136 = vmatmul.mubr.f32.gmra.mxu0 %v940
      %v3137 = vpop.f32.mrf.mxu0
      %v3138 = vadd.f32 0.0, %v3137
      %v3139 = vpop.f32.mrf.mxu0
      %3140 = vmatprep.mubr.f32.mxu0 0.0
      %3141 = vmatmul.mubr.f32.gmra.mxu0 %v942
      %v3142 = vpop.f32.mrf.mxu0
      %v3143 = vadd.f32 0.0, %v3142
      %v3144 = vpop.f32.mrf.mxu0
      %3145 = vmatprep.mubr.f32.mxu0 0.0
      %3146 = vmatmul.mubr.f32.gmra.mxu0 %v944
      %v3147 = vpop.f32.mrf.mxu0
      %v3148 = vadd.f32 0.0, %v3147
      %v3149 = vpop.f32.mrf.mxu0
      %3150 = vmatprep.mubr.f32.mxu0 0.0
      %3151 = vmatmul.mubr.f32.gmra.mxu0 %v946
      %v3152 = vpop.f32.mrf.mxu0
      %v3153 = vadd.f32 0.0, %v3152
      %v3154 = vpop.f32.mrf.mxu0
      %3155 = vmatprep.mubr.f32.mxu0 0.0
      %3156 = vmatmul.mubr.f32.gmra.mxu0 %v948
      %v3157 = vpop.f32.mrf.mxu0
      %v3158 = vadd.f32 0.0, %v3157
      %v3159 = vpop.f32.mrf.mxu0
      %3160 = vmatprep.mubr.f32.mxu0 0.0
      %3161 = vmatmul.mubr.f32.gmra.mxu0 %v950
      %v3162 = vpop.f32.mrf.mxu0
      %v3163 = vadd.f32 0.0, %v3162
      %v3164 = vpop.f32.mrf.mxu0
      %3165 = vmatprep.mubr.f32.mxu0 0.0
      %3166 = vmatmul.mubr.f32.gmra.mxu0 %v952
      %v3167 = vpop.f32.mrf.mxu0
      %v3168 = vadd.f32 0.0, %v3167
      %v3169 = vpop.f32.mrf.mxu0
      %3170 = vmatprep.mubr.f32.mxu0 0.0
      %3171 = vmatmul.mubr.f32.gmra.mxu0 %v954
      %v3172 = vpop.f32.mrf.mxu0
      %v3173 = vadd.f32 0.0, %v3172
      %v3174 = vpop.f32.mrf.mxu0
      %3175 = vmatprep.mubr.f32.mxu0 0.0
      %3176 = vmatmul.mubr.f32.gmra.mxu0 %v956
      %v3177 = vpop.f32.mrf.mxu0
      %v3178 = vadd.f32 0.0, %v3177
      %v3179 = vpop.f32.mrf.mxu0
      %3180 = vmatprep.mubr.f32.mxu0 0.0
      %3181 = vmatmul.mubr.f32.gmra.mxu0 %v958
      %v3182 = vpop.f32.mrf.mxu0
      %v3183 = vadd.f32 0.0, %v3182
      %v3184 = vpop.f32.mrf.mxu0
      %3185 = vmatprep.mubr.f32.mxu0 0.0
      %3186 = vmatmul.mubr.f32.gmra.mxu0 %v960
      %v3187 = vpop.f32.mrf.mxu0
      %v3188 = vadd.f32 0.0, %v3187
      %v3189 = vpop.f32.mrf.mxu0
      %3190 = vmatprep.mubr.f32.mxu0 0.0
      %3191 = vmatmul.mubr.f32.gmra.mxu0 %v962
      %v3192 = vpop.f32.mrf.mxu0
      %v3193 = vadd.f32 0.0, %v3192
      %v3194 = vpop.f32.mrf.mxu0
      %3195 = vmatprep.mubr.f32.mxu0 0.0
      %3196 = vmatmul.mubr.f32.gmra.mxu0 %v964
      %v3197 = vpop.f32.mrf.mxu0
      %v3198 = vadd.f32 0.0, %v3197
      %v3199 = vpop.f32.mrf.mxu0
      %3200 = vmatprep.mubr.f32.mxu0 0.0
      %3201 = vmatmul.mubr.f32.gmra.mxu0 %v2172
      %v3202 = vpop.f32.mrf.mxu0
      %v3203 = vadd.f32 0.0, %v3202
      %v3204 = vpop.f32.mrf.mxu0
      %3205 = vmatprep.mubr.f32.mxu0 0.0
      %3206 = vmatmul.mubr.f32.gmra.mxu0 %v2174
      %v3207 = vpop.f32.mrf.mxu0
      %v3208 = vadd.f32 0.0, %v3207
      %v3209 = vpop.f32.mrf.mxu0
      %3210 = vmatprep.mubr.f32.mxu0 0.0
      %3211 = vmatmul.mubr.f32.gmra.mxu0 %v2176
      %v3212 = vpop.f32.mrf.mxu0
      %v3213 = vadd.f32 0.0, %v3212
      %v3214 = vpop.f32.mrf.mxu0
      %3215 = vmatprep.mubr.f32.mxu0 0.0
      %3216 = vmatmul.mubr.f32.gmra.mxu0 %v2178
      %v3217 = vpop.f32.mrf.mxu0
      %v3218 = vadd.f32 0.0, %v3217
      %v3219 = vpop.f32.mrf.mxu0
      %3220 = vmatprep.mubr.f32.mxu0 0.0
      %3221 = vmatmul.mubr.f32.gmra.mxu0 %v3005
      %v3222 = vpop.f32.mrf.mxu0
      %v3223 = vadd.f32 0.0, %v3222
      %v3224 = vpop.f32.mrf.mxu0
      %3225 = vmatprep.mubr.f32.mxu0 0.0
      %3226 = vmatmul.mubr.f32.gmra.mxu0 %v3007
      %v3227 = vpop.f32.mrf.mxu0
      %v3228 = vadd.f32 0.0, %v3227
      %v3229 = vpop.f32.mrf.mxu0
      %3230 = vmatprep.mubr.f32.mxu0 0.0
      %3231 = vmatmul.mubr.f32.gmra.mxu0 %v3009
      %v3232 = vpop.f32.mrf.mxu0
      %v3233 = vadd.f32 0.0, %v3232
      %v3234 = vpop.f32.mrf.mxu0
      %3235 = vmatprep.mubr.f32.mxu0 0.0
      %3236 = vmatmul.mubr.f32.gmra.mxu0 %v3011
      %v3237 = vpop.f32.mrf.mxu0
      %v3238 = vadd.f32 0.0, %v3237
      %v3239 = vpop.f32.mrf.mxu0
      %3240 = vdwg.mxu0
      %v3241 = vadd.f32 %v2961, %v3083
      %v3242 = vadd.f32 %v2962, %v3088
      %v3243 = vadd.f32 %v2963, %v3093
      %v3244 = vadd.f32 %v2964, %v3098
      %v3245 = vadd.f32 %v2965, %v3103
      %v3246 = vadd.f32 %v2966, %v3108
      %v3247 = vadd.f32 %v2967, %v3113
      %v3248 = vadd.f32 %v2968, %v3118
      %v3249 = vadd.f32 %v2969, %v3123
      %v3250 = vadd.f32 %v2970, %v3128
      %v3251 = vadd.f32 %v2971, %v3133
      %v3252 = vadd.f32 %v2972, %v3138
      %v3253 = vadd.f32 %v2973, %v3143
      %v3254 = vadd.f32 %v2974, %v3148
      %v3255 = vadd.f32 %v2975, %v3153
      %v3256 = vadd.f32 %v2976, %v3158
      %v3257 = vadd.f32 %v2977, %v3163
      %v3258 = vadd.f32 %v2978, %v3168
      %v3259 = vadd.f32 %v2979, %v3173
      %v3260 = vadd.f32 %v2980, %v3178
      %v3261 = vadd.f32 %v2981, %v3183
      %v3262 = vadd.f32 %v2982, %v3188
      %v3263 = vadd.f32 %v2983, %v3193
      %v3264 = vadd.f32 %v2984, %v3198
      %v3265 = vadd.f32 %v2985, %v3203
      %v3266 = vadd.f32 %v2986, %v3208
      %v3267 = vadd.f32 %v2987, %v3213
      %v3268 = vadd.f32 %v2988, %v3218
      %v3269 = vadd.f32 %v2989, %v3223
      %v3270 = vadd.f32 %v2990, %v3228
      %v3271 = vadd.f32 %v2991, %v3233
      %v3272 = vadd.f32 %v2992, %v3238
      %v3273 = vrot.slane %v780, 2
      %v3274 = vrot.slane %v781, 2
      %v3275 = vsel %vm1487, %v3273, %v3274
      %v3276 = vrot.slane %v782, 2
      %v3277 = vsel %vm1487, %v3274, %v3276
      %v3278 = vrot.slane %v783, 2
      %v3279 = vsel %vm1487, %v3276, %v3278
      %v3280 = vrot.slane %v784, 2
      %v3281 = vsel %vm1487, %v3278, %v3280
      %s3282 = scalar_lea.vmem %s3, 32
      %v3283 = vld [vmem:[%s3282] sm:$0xf]
      %v3284 = vsel %vm901, %v3275, 0
      %v3286 = vsel %vm901, %v3277, 0
      %v3288 = vsel %vm901, %v3279, 0
      %v3290 = vsel %vm901, %v3281, 0
      %v3293 = vsel %vm966, %v3283, 0
      %3295 = vmatprep.subr.mxu0 0.0
      %3296 = vmatpush1.msra.mxu0 0.0
      %3297 = vmatprep.subr.mxu0 0.0
      %3298 = vmatpush1.msra.mxu0 0.0
      %3299 = vmatprep.subr.mxu0 0.0
      %3300 = vmatpush1.msra.mxu0 0.0
      %3301 = vmatprep.subr.mxu0 0.0
      %3302 = vmatpush1.msra.mxu0 0.0
      %3303 = vmatprep.subr.mxu0 0.0
      %3304 = vmatpush1.msra.mxu0 0.0
      %3305 = vmatprep.subr.mxu0 0.0
      %3306 = vmatpush1.msra.mxu0 0.0
      %3307 = vmatprep.subr.mxu0 0.0
      %3308 = vmatpush1.msra.mxu0 0.0
      %3309 = vmatprep.subr.mxu0 0.0
      %3310 = vmatpush1.msra.mxu0 0.0
      %3311 = vmatprep.subr.mxu0 0.0
      %3312 = vmatpush1.msra.mxu0 0.0
      %3313 = vmatprep.subr.mxu0 0.0
      %3314 = vmatpush1.msra.mxu0 0.0
      %3315 = vmatprep.subr.mxu0 0.0
      %3316 = vmatpush1.msra.mxu0 0.0
      %3317 = vmatprep.subr.mxu0 0.0
      %3318 = vmatpush1.msra.mxu0 0.0
      %3319 = vmatprep.subr.mxu0 0.0
      %3320 = vmatpush1.msra.mxu0 0.0
      %3321 = vmatprep.subr.mxu0 0.0
      %3322 = vmatpush1.msra.mxu0 0.0
      %3323 = vmatprep.subr.mxu0 0.0
      %3324 = vmatpush1.msra.mxu0 0.0
      %3325 = vmatprep.subr.mxu0 0.0
      %3326 = vmatpush1.msra.mxu0 %v3293
      %3327 = vmatprep.subr.mxu0 0.0
      %3328 = vmatpush2.msra.mxu0 0.0
      %3329 = vmatprep.subr.mxu0 0.0
      %3330 = vmatpush2.msra.mxu0 0.0
      %3331 = vmatprep.subr.mxu0 0.0
      %3332 = vmatpush2.msra.mxu0 0.0
      %3333 = vmatprep.subr.mxu0 0.0
      %3334 = vmatpush2.msra.mxu0 0.0
      %3335 = vmatprep.subr.mxu0 0.0
      %3336 = vmatpush2.msra.mxu0 0.0
      %3337 = vmatprep.subr.mxu0 0.0
      %3338 = vmatpush2.msra.mxu0 0.0
      %3339 = vmatprep.subr.mxu0 0.0
      %3340 = vmatpush2.msra.mxu0 0.0
      %3341 = vmatprep.subr.mxu0 0.0
      %3342 = vmatpush2.msra.mxu0 0.0
      %3343 = vmatprep.subr.mxu0 0.0
      %3344 = vmatpush2.msra.mxu0 0.0
      %3345 = vmatprep.subr.mxu0 0.0
      %3346 = vmatpush2.msra.mxu0 0.0
      %3347 = vmatprep.subr.mxu0 0.0
      %3348 = vmatpush2.msra.mxu0 0.0
      %3349 = vmatprep.subr.mxu0 0.0
      %3350 = vmatpush2.msra.mxu0 0.0
      %3351 = vmatprep.subr.mxu0 0.0
      %3352 = vmatpush2.msra.mxu0 0.0
      %3353 = vmatprep.subr.mxu0 0.0
      %3354 = vmatpush2.msra.mxu0 0.0
      %3355 = vmatprep.subr.mxu0 0.0
      %3356 = vmatpush2.msra.mxu0 0.0
      %3357 = vmatprep.subr.mxu0 0.0
      %3358 = vmatpush2.msra.mxu0 0.0
      %3359 = vmatprep.mubr.f32.mxu0 0.0
      %3360 = vmatmul.mubr.f32.gmra.mxu0 %v1578
      %v3361 = vpop.f32.mrf.mxu0
      %v3362 = vadd.f32 0.0, %v3361
      %v3363 = vpop.f32.mrf.mxu0
      %3364 = vmatprep.mubr.f32.mxu0 0.0
      %3365 = vmatmul.mubr.f32.gmra.mxu0 %v1580
      %v3366 = vpop.f32.mrf.mxu0
      %v3367 = vadd.f32 0.0, %v3366
      %v3368 = vpop.f32.mrf.mxu0
      %3369 = vmatprep.mubr.f32.mxu0 0.0
      %3370 = vmatmul.mubr.f32.gmra.mxu0 %v1582
      %v3371 = vpop.f32.mrf.mxu0
      %v3372 = vadd.f32 0.0, %v3371
      %v3373 = vpop.f32.mrf.mxu0
      %3374 = vmatprep.mubr.f32.mxu0 0.0
      %3375 = vmatmul.mubr.f32.gmra.mxu0 %v1584
      %v3376 = vpop.f32.mrf.mxu0
      %v3377 = vadd.f32 0.0, %v3376
      %v3378 = vpop.f32.mrf.mxu0
      %3379 = vmatprep.mubr.f32.mxu0 0.0
      %3380 = vmatmul.mubr.f32.gmra.mxu0 %v1586
      %v3381 = vpop.f32.mrf.mxu0
      %v3382 = vadd.f32 0.0, %v3381
      %v3383 = vpop.f32.mrf.mxu0
      %3384 = vmatprep.mubr.f32.mxu0 0.0
      %3385 = vmatmul.mubr.f32.gmra.mxu0 %v1588
      %v3386 = vpop.f32.mrf.mxu0
      %v3387 = vadd.f32 0.0, %v3386
      %v3388 = vpop.f32.mrf.mxu0
      %3389 = vmatprep.mubr.f32.mxu0 0.0
      %3390 = vmatmul.mubr.f32.gmra.mxu0 %v1590
      %v3391 = vpop.f32.mrf.mxu0
      %v3392 = vadd.f32 0.0, %v3391
      %v3393 = vpop.f32.mrf.mxu0
      %3394 = vmatprep.mubr.f32.mxu0 0.0
      %3395 = vmatmul.mubr.f32.gmra.mxu0 %v1592
      %v3396 = vpop.f32.mrf.mxu0
      %v3397 = vadd.f32 0.0, %v3396
      %v3398 = vpop.f32.mrf.mxu0
      %3399 = vmatprep.mubr.f32.mxu0 0.0
      %3400 = vmatmul.mubr.f32.gmra.mxu0 %v1594
      %v3401 = vpop.f32.mrf.mxu0
      %v3402 = vadd.f32 0.0, %v3401
      %v3403 = vpop.f32.mrf.mxu0
      %3404 = vmatprep.mubr.f32.mxu0 0.0
      %3405 = vmatmul.mubr.f32.gmra.mxu0 %v1596
      %v3406 = vpop.f32.mrf.mxu0
      %v3407 = vadd.f32 0.0, %v3406
      %v3408 = vpop.f32.mrf.mxu0
      %3409 = vmatprep.mubr.f32.mxu0 0.0
      %3410 = vmatmul.mubr.f32.gmra.mxu0 %v1598
      %v3411 = vpop.f32.mrf.mxu0
      %v3412 = vadd.f32 0.0, %v3411
      %v3413 = vpop.f32.mrf.mxu0
      %3414 = vmatprep.mubr.f32.mxu0 0.0
      %3415 = vmatmul.mubr.f32.gmra.mxu0 %v1600
      %v3416 = vpop.f32.mrf.mxu0
      %v3417 = vadd.f32 0.0, %v3416
      %v3418 = vpop.f32.mrf.mxu0
      %3419 = vmatprep.mubr.f32.mxu0 0.0
      %3420 = vmatmul.mubr.f32.gmra.mxu0 %v1602
      %v3421 = vpop.f32.mrf.mxu0
      %v3422 = vadd.f32 0.0, %v3421
      %v3423 = vpop.f32.mrf.mxu0
      %3424 = vmatprep.mubr.f32.mxu0 0.0
      %3425 = vmatmul.mubr.f32.gmra.mxu0 %v1604
      %v3426 = vpop.f32.mrf.mxu0
      %v3427 = vadd.f32 0.0, %v3426
      %v3428 = vpop.f32.mrf.mxu0
      %3429 = vmatprep.mubr.f32.mxu0 0.0
      %3430 = vmatmul.mubr.f32.gmra.mxu0 %v1606
      %v3431 = vpop.f32.mrf.mxu0
      %v3432 = vadd.f32 0.0, %v3431
      %v3433 = vpop.f32.mrf.mxu0
      %3434 = vmatprep.mubr.f32.mxu0 0.0
      %3435 = vmatmul.mubr.f32.gmra.mxu0 %v1608
      %v3436 = vpop.f32.mrf.mxu0
      %v3437 = vadd.f32 0.0, %v3436
      %v3438 = vpop.f32.mrf.mxu0
      %3439 = vmatprep.mubr.f32.mxu0 0.0
      %3440 = vmatmul.mubr.f32.gmra.mxu0 %v1610
      %v3441 = vpop.f32.mrf.mxu0
      %v3442 = vadd.f32 0.0, %v3441
      %v3443 = vpop.f32.mrf.mxu0
      %3444 = vmatprep.mubr.f32.mxu0 0.0
      %3445 = vmatmul.mubr.f32.gmra.mxu0 %v1612
      %v3446 = vpop.f32.mrf.mxu0
      %v3447 = vadd.f32 0.0, %v3446
      %v3448 = vpop.f32.mrf.mxu0
      %3449 = vmatprep.mubr.f32.mxu0 0.0
      %3450 = vmatmul.mubr.f32.gmra.mxu0 %v1614
      %v3451 = vpop.f32.mrf.mxu0
      %v3452 = vadd.f32 0.0, %v3451
      %v3453 = vpop.f32.mrf.mxu0
      %3454 = vmatprep.mubr.f32.mxu0 0.0
      %3455 = vmatmul.mubr.f32.gmra.mxu0 %v1616
      %v3456 = vpop.f32.mrf.mxu0
      %v3457 = vadd.f32 0.0, %v3456
      %v3458 = vpop.f32.mrf.mxu0
      %3459 = vmatprep.mubr.f32.mxu0 0.0
      %3460 = vmatmul.mubr.f32.gmra.mxu0 %v1618
      %v3461 = vpop.f32.mrf.mxu0
      %v3462 = vadd.f32 0.0, %v3461
      %v3463 = vpop.f32.mrf.mxu0
      %3464 = vmatprep.mubr.f32.mxu0 0.0
      %3465 = vmatmul.mubr.f32.gmra.mxu0 %v1620
      %v3466 = vpop.f32.mrf.mxu0
      %v3467 = vadd.f32 0.0, %v3466
      %v3468 = vpop.f32.mrf.mxu0
      %3469 = vmatprep.mubr.f32.mxu0 0.0
      %3470 = vmatmul.mubr.f32.gmra.mxu0 %v1622
      %v3471 = vpop.f32.mrf.mxu0
      %v3472 = vadd.f32 0.0, %v3471
      %v3473 = vpop.f32.mrf.mxu0
      %3474 = vmatprep.mubr.f32.mxu0 0.0
      %3475 = vmatmul.mubr.f32.gmra.mxu0 %v1624
      %v3476 = vpop.f32.mrf.mxu0
      %v3477 = vadd.f32 0.0, %v3476
      %v3478 = vpop.f32.mrf.mxu0
      %3479 = vmatprep.mubr.f32.mxu0 0.0
      %3480 = vmatmul.mubr.f32.gmra.mxu0 %v2451
      %v3481 = vpop.f32.mrf.mxu0
      %v3482 = vadd.f32 0.0, %v3481
      %v3483 = vpop.f32.mrf.mxu0
      %3484 = vmatprep.mubr.f32.mxu0 0.0
      %3485 = vmatmul.mubr.f32.gmra.mxu0 %v2453
      %v3486 = vpop.f32.mrf.mxu0
      %v3487 = vadd.f32 0.0, %v3486
      %v3488 = vpop.f32.mrf.mxu0
      %3489 = vmatprep.mubr.f32.mxu0 0.0
      %3490 = vmatmul.mubr.f32.gmra.mxu0 %v2455
      %v3491 = vpop.f32.mrf.mxu0
      %v3492 = vadd.f32 0.0, %v3491
      %v3493 = vpop.f32.mrf.mxu0
      %3494 = vmatprep.mubr.f32.mxu0 0.0
      %3495 = vmatmul.mubr.f32.gmra.mxu0 %v2457
      %v3496 = vpop.f32.mrf.mxu0
      %v3497 = vadd.f32 0.0, %v3496
      %v3498 = vpop.f32.mrf.mxu0
      %3499 = vmatprep.mubr.f32.mxu0 0.0
      %3500 = vmatmul.mubr.f32.gmra.mxu0 %v3284
      %v3501 = vpop.f32.mrf.mxu0
      %v3502 = vadd.f32 0.0, %v3501
      %v3503 = vpop.f32.mrf.mxu0
      %3504 = vmatprep.mubr.f32.mxu0 0.0
      %3505 = vmatmul.mubr.f32.gmra.mxu0 %v3286
      %v3506 = vpop.f32.mrf.mxu0
      %v3507 = vadd.f32 0.0, %v3506
      %v3508 = vpop.f32.mrf.mxu0
      %3509 = vmatprep.mubr.f32.mxu0 0.0
      %3510 = vmatmul.mubr.f32.gmra.mxu0 %v3288
      %v3511 = vpop.f32.mrf.mxu0
      %v3512 = vadd.f32 0.0, %v3511
      %v3513 = vpop.f32.mrf.mxu0
      %3514 = vmatprep.mubr.f32.mxu0 0.0
      %3515 = vmatmul.mubr.f32.gmra.mxu0 %v3290
      %v3516 = vpop.f32.mrf.mxu0
      %v3517 = vadd.f32 0.0, %v3516
      %v3518 = vpop.f32.mrf.mxu0
      %3519 = vdwg.mxu0
      %v3520 = vadd.f32 %v3241, %v3362
      %v3521 = vadd.f32 %v3242, %v3367
      %v3522 = vadd.f32 %v3243, %v3372
      %v3523 = vadd.f32 %v3244, %v3377
      %v3524 = vadd.f32 %v3245, %v3382
      %v3525 = vadd.f32 %v3246, %v3387
      %v3526 = vadd.f32 %v3247, %v3392
      %v3527 = vadd.f32 %v3248, %v3397
      %v3528 = vadd.f32 %v3249, %v3402
      %v3529 = vadd.f32 %v3250, %v3407
      %v3530 = vadd.f32 %v3251, %v3412
      %v3531 = vadd.f32 %v3252, %v3417
      %v3532 = vadd.f32 %v3253, %v3422
      %v3533 = vadd.f32 %v3254, %v3427
      %v3534 = vadd.f32 %v3255, %v3432
      %v3535 = vadd.f32 %v3256, %v3437
      %v3536 = vadd.f32 %v3257, %v3442
      %v3537 = vadd.f32 %v3258, %v3447
      %v3538 = vadd.f32 %v3259, %v3452
      %v3539 = vadd.f32 %v3260, %v3457
      %v3540 = vadd.f32 %v3261, %v3462
      %v3541 = vadd.f32 %v3262, %v3467
      %v3542 = vadd.f32 %v3263, %v3472
      %v3543 = vadd.f32 %v3264, %v3477
      %v3544 = vadd.f32 %v3265, %v3482
      %v3545 = vadd.f32 %v3266, %v3487
      %v3546 = vadd.f32 %v3267, %v3492
      %v3547 = vadd.f32 %v3268, %v3497
      %v3548 = vadd.f32 %v3269, %v3502
      %v3549 = vadd.f32 %v3270, %v3507
      %v3550 = vadd.f32 %v3271, %v3512
      %v3551 = vadd.f32 %v3272, %v3517
      %v3552 = vld [vmem:[%s4] sm:$0x1]
      %v3554 = vlaneseq
      %v3555 = vshrl.u32 %v3554, 7
      %v3556 = vsub.s32 0, %v3555
      %v3557 = vrot.slane %v3552, %v3556
      %v3559 = vadd.f32 %v3520, %v3557
      %v3560 = vadd.f32 %v3521, %v3557
      %v3561 = vadd.f32 %v3522, %v3557
      %v3562 = vadd.f32 %v3523, %v3557
      %v3563 = vadd.f32 %v3524, %v3557
      %v3564 = vadd.f32 %v3525, %v3557
      %v3565 = vadd.f32 %v3526, %v3557
      %v3566 = vadd.f32 %v3527, %v3557
      %v3567 = vadd.f32 %v3528, %v3557
      %v3568 = vadd.f32 %v3529, %v3557
      %v3569 = vadd.f32 %v3530, %v3557
      %v3570 = vadd.f32 %v3531, %v3557
      %v3571 = vadd.f32 %v3532, %v3557
      %v3572 = vadd.f32 %v3533, %v3557
      %v3573 = vadd.f32 %v3534, %v3557
      %v3574 = vadd.f32 %v3535, %v3557
      %v3575 = vadd.f32 %v3536, %v3557
      %v3576 = vadd.f32 %v3537, %v3557
      %v3577 = vadd.f32 %v3538, %v3557
      %v3578 = vadd.f32 %v3539, %v3557
      %v3579 = vadd.f32 %v3540, %v3557
      %v3580 = vadd.f32 %v3541, %v3557
      %v3581 = vadd.f32 %v3542, %v3557
      %v3582 = vadd.f32 %v3543, %v3557
      %v3583 = vadd.f32 %v3544, %v3557
      %v3584 = vadd.f32 %v3545, %v3557
      %v3585 = vadd.f32 %v3546, %v3557
      %v3586 = vadd.f32 %v3547, %v3557
      %v3587 = vadd.f32 %v3548, %v3557
      %v3588 = vadd.f32 %v3549, %v3557
      %v3589 = vadd.f32 %v3550, %v3557
      %v3590 = vadd.f32 %v3551, %v3557
      %v3591 = vld [vmem:[%s357] sm:$0xff]
      %v3592 = vld [vmem:[%s357 + $0x8] sm:$0xff]
      %v3593 = vld [vmem:[%s357 + $0x10] sm:$0xff]
      %v3594 = vld [vmem:[%s357 + $0x18] sm:$0xff]
      %v3595 = vld [vmem:[%s357 + $0x20] sm:$0xff]
      %v3596 = vld [vmem:[%s357 + $0x28] sm:$0xff]
      %v3597 = vld [vmem:[%s357 + $0x30] sm:$0xff]
      %v3598 = vld [vmem:[%s357 + $0x38] sm:$0xff]
      %v3599 = vld [vmem:[%s357 + $0x40] sm:$0xff]
      %v3600 = vld [vmem:[%s357 + $0x48] sm:$0xff]
      %v3601 = vld [vmem:[%s357 + $0x50] sm:$0xff]
      %v3602 = vld [vmem:[%s357 + $0x58] sm:$0xff]
      %v3603 = vld [vmem:[%s357 + $0x60] sm:$0xff]
      %v3604 = vld [vmem:[%s357 + $0x68] sm:$0xff]
      %v3605 = vld [vmem:[%s357 + $0x70] sm:$0xff]
      %v3606 = vld [vmem:[%s357 + $0x78] sm:$0xff]
      %v3607 = vld [vmem:[%s357 + $0x80] sm:$0xff]
      %v3608 = vld [vmem:[%s357 + $0x88] sm:$0xff]
      %v3609 = vld [vmem:[%s357 + $0x90] sm:$0xff]
      %v3610 = vld [vmem:[%s357 + $0x98] sm:$0xff]
      %v3611 = vld [vmem:[%s357 + $0xa0] sm:$0xff]
      %v3612 = vld [vmem:[%s357 + $0xa8] sm:$0xff]
      %v3613 = vld [vmem:[%s357 + $0xb0] sm:$0xff]
      %v3614 = vld [vmem:[%s357 + $0xb8] sm:$0xff]
      %v3615 = vld [vmem:[%s357 + $0xc0] sm:$0xff]
      %v3616 = vld [vmem:[%s357 + $0xc8] sm:$0xff]
      %v3617 = vld [vmem:[%s357 + $0xd0] sm:$0xff]
      %v3618 = vld [vmem:[%s357 + $0xd8] sm:$0xff]
      %v3619 = vld [vmem:[%s357 + $0xe0] sm:$0xff]
      %v3620 = vld [vmem:[%s357 + $0xe8] sm:$0xff]
      %v3621 = vld [vmem:[%s357 + $0xf0] sm:$0xff]
      %v3622 = vld [vmem:[%s357 + $0xf8] sm:$0xff]
      %v3623 = vld [vmem:[%s6] sm:$0xf]
      %v3625 = vsel %vm901, %v3591, 0
      %v3628 = vsel %vm901, %v3592, 0
      %v3631 = vsel %vm901, %v3593, 0
      %v3634 = vsel %vm901, %v3594, 0
      %v3637 = vsel %vm901, %v3595, 0
      %v3640 = vsel %vm901, %v3596, 0
      %v3643 = vsel %vm901, %v3597, 0
      %v3646 = vsel %vm901, %v3598, 0
      %v3649 = vsel %vm901, %v3599, 0
      %v3652 = vsel %vm901, %v3600, 0
      %v3655 = vsel %vm901, %v3601, 0
      %v3658 = vsel %vm901, %v3602, 0
      %v3661 = vsel %vm901, %v3603, 0
      %v3664 = vsel %vm901, %v3604, 0
      %v3667 = vsel %vm901, %v3605, 0
      %v3670 = vsel %vm901, %v3606, 0
      %v3673 = vsel %vm901, %v3607, 0
      %v3676 = vsel %vm901, %v3608, 0
      %v3679 = vsel %vm901, %v3609, 0
      %v3682 = vsel %vm901, %v3610, 0
      %v3685 = vsel %vm901, %v3611, 0
      %v3688 = vsel %vm901, %v3612, 0
      %v3691 = vsel %vm901, %v3613, 0
      %v3694 = vsel %vm901, %v3614, 0
      %v3697 = vsel %vm901, %v3615, 0
      %v3700 = vsel %vm901, %v3616, 0
      %v3703 = vsel %vm901, %v3617, 0
      %v3706 = vsel %vm901, %v3618, 0
      %v3709 = vsel %vm901, %v3619, 0
      %v3712 = vsel %vm901, %v3620, 0
      %v3715 = vsel %vm901, %v3621, 0
      %v3718 = vsel %vm901, %v3622, 0
      %v3721 = vsel %vm966, %v3623, 0
      %3723 = vmatprep.subr.mxu0 0.0
      %3724 = vmatpush1.msra.mxu0 0.0
      %3725 = vmatprep.subr.mxu0 0.0
      %3726 = vmatpush1.msra.mxu0 0.0
      %3727 = vmatprep.subr.mxu0 0.0
      %3728 = vmatpush1.msra.mxu0 0.0
      %3729 = vmatprep.subr.mxu0 0.0
      %3730 = vmatpush1.msra.mxu0 0.0
      %3731 = vmatprep.subr.mxu0 0.0
      %3732 = vmatpush1.msra.mxu0 0.0
      %3733 = vmatprep.subr.mxu0 0.0
      %3734 = vmatpush1.msra.mxu0 0.0
      %3735 = vmatprep.subr.mxu0 0.0
      %3736 = vmatpush1.msra.mxu0 0.0
      %3737 = vmatprep.subr.mxu0 0.0
      %3738 = vmatpush1.msra.mxu0 0.0
      %3739 = vmatprep.subr.mxu0 0.0
      %3740 = vmatpush1.msra.mxu0 0.0
      %3741 = vmatprep.subr.mxu0 0.0
      %3742 = vmatpush1.msra.mxu0 0.0
      %3743 = vmatprep.subr.mxu0 0.0
      %3744 = vmatpush1.msra.mxu0 0.0
      %3745 = vmatprep.subr.mxu0 0.0
      %3746 = vmatpush1.msra.mxu0 0.0
      %3747 = vmatprep.subr.mxu0 0.0
      %3748 = vmatpush1.msra.mxu0 0.0
      %3749 = vmatprep.subr.mxu0 0.0
      %3750 = vmatpush1.msra.mxu0 0.0
      %3751 = vmatprep.subr.mxu0 0.0
      %3752 = vmatpush1.msra.mxu0 0.0
      %3753 = vmatprep.subr.mxu0 0.0
      %3754 = vmatpush1.msra.mxu0 %v3721
      %3755 = vmatprep.subr.mxu0 0.0
      %3756 = vmatpush2.msra.mxu0 0.0
      %3757 = vmatprep.subr.mxu0 0.0
      %3758 = vmatpush2.msra.mxu0 0.0
      %3759 = vmatprep.subr.mxu0 0.0
      %3760 = vmatpush2.msra.mxu0 0.0
      %3761 = vmatprep.subr.mxu0 0.0
      %3762 = vmatpush2.msra.mxu0 0.0
      %3763 = vmatprep.subr.mxu0 0.0
      %3764 = vmatpush2.msra.mxu0 0.0
      %3765 = vmatprep.subr.mxu0 0.0
      %3766 = vmatpush2.msra.mxu0 0.0
      %3767 = vmatprep.subr.mxu0 0.0
      %3768 = vmatpush2.msra.mxu0 0.0
      %3769 = vmatprep.subr.mxu0 0.0
      %3770 = vmatpush2.msra.mxu0 0.0
      %3771 = vmatprep.subr.mxu0 0.0
      %3772 = vmatpush2.msra.mxu0 0.0
      %3773 = vmatprep.subr.mxu0 0.0
      %3774 = vmatpush2.msra.mxu0 0.0
      %3775 = vmatprep.subr.mxu0 0.0
      %3776 = vmatpush2.msra.mxu0 0.0
      %3777 = vmatprep.subr.mxu0 0.0
      %3778 = vmatpush2.msra.mxu0 0.0
      %3779 = vmatprep.subr.mxu0 0.0
      %3780 = vmatpush2.msra.mxu0 0.0
      %3781 = vmatprep.subr.mxu0 0.0
      %3782 = vmatpush2.msra.mxu0 0.0
      %3783 = vmatprep.subr.mxu0 0.0
      %3784 = vmatpush2.msra.mxu0 0.0
      %3785 = vmatprep.subr.mxu0 0.0
      %3786 = vmatpush2.msra.mxu0 0.0
      %3787 = vmatprep.mubr.f32.mxu0 0.0
      %3788 = vmatmul.mubr.f32.gmra.mxu0 %v3625
      %v3789 = vpop.f32.mrf.mxu0
      %v3790 = vadd.f32 0.0, %v3789
      %v3791 = vpop.f32.mrf.mxu0
      %3792 = vmatprep.mubr.f32.mxu0 0.0
      %3793 = vmatmul.mubr.f32.gmra.mxu0 %v3628
      %v3794 = vpop.f32.mrf.mxu0
      %v3795 = vadd.f32 0.0, %v3794
      %v3796 = vpop.f32.mrf.mxu0
      %3797 = vmatprep.mubr.f32.mxu0 0.0
      %3798 = vmatmul.mubr.f32.gmra.mxu0 %v3631
      %v3799 = vpop.f32.mrf.mxu0
      %v3800 = vadd.f32 0.0, %v3799
      %v3801 = vpop.f32.mrf.mxu0
      %3802 = vmatprep.mubr.f32.mxu0 0.0
      %3803 = vmatmul.mubr.f32.gmra.mxu0 %v3634
      %v3804 = vpop.f32.mrf.mxu0
      %v3805 = vadd.f32 0.0, %v3804
      %v3806 = vpop.f32.mrf.mxu0
      %3807 = vmatprep.mubr.f32.mxu0 0.0
      %3808 = vmatmul.mubr.f32.gmra.mxu0 %v3637
      %v3809 = vpop.f32.mrf.mxu0
      %v3810 = vadd.f32 0.0, %v3809
      %v3811 = vpop.f32.mrf.mxu0
      %3812 = vmatprep.mubr.f32.mxu0 0.0
      %3813 = vmatmul.mubr.f32.gmra.mxu0 %v3640
      %v3814 = vpop.f32.mrf.mxu0
      %v3815 = vadd.f32 0.0, %v3814
      %v3816 = vpop.f32.mrf.mxu0
      %3817 = vmatprep.mubr.f32.mxu0 0.0
      %3818 = vmatmul.mubr.f32.gmra.mxu0 %v3643
      %v3819 = vpop.f32.mrf.mxu0
      %v3820 = vadd.f32 0.0, %v3819
      %v3821 = vpop.f32.mrf.mxu0
      %3822 = vmatprep.mubr.f32.mxu0 0.0
      %3823 = vmatmul.mubr.f32.gmra.mxu0 %v3646
      %v3824 = vpop.f32.mrf.mxu0
      %v3825 = vadd.f32 0.0, %v3824
      %v3826 = vpop.f32.mrf.mxu0
      %3827 = vmatprep.mubr.f32.mxu0 0.0
      %3828 = vmatmul.mubr.f32.gmra.mxu0 %v3649
      %v3829 = vpop.f32.mrf.mxu0
      %v3830 = vadd.f32 0.0, %v3829
      %v3831 = vpop.f32.mrf.mxu0
      %3832 = vmatprep.mubr.f32.mxu0 0.0
      %3833 = vmatmul.mubr.f32.gmra.mxu0 %v3652
      %v3834 = vpop.f32.mrf.mxu0
      %v3835 = vadd.f32 0.0, %v3834
      %v3836 = vpop.f32.mrf.mxu0
      %3837 = vmatprep.mubr.f32.mxu0 0.0
      %3838 = vmatmul.mubr.f32.gmra.mxu0 %v3655
      %v3839 = vpop.f32.mrf.mxu0
      %v3840 = vadd.f32 0.0, %v3839
      %v3841 = vpop.f32.mrf.mxu0
      %3842 = vmatprep.mubr.f32.mxu0 0.0
      %3843 = vmatmul.mubr.f32.gmra.mxu0 %v3658
      %v3844 = vpop.f32.mrf.mxu0
      %v3845 = vadd.f32 0.0, %v3844
      %v3846 = vpop.f32.mrf.mxu0
      %3847 = vmatprep.mubr.f32.mxu0 0.0
      %3848 = vmatmul.mubr.f32.gmra.mxu0 %v3661
      %v3849 = vpop.f32.mrf.mxu0
      %v3850 = vadd.f32 0.0, %v3849
      %v3851 = vpop.f32.mrf.mxu0
      %3852 = vmatprep.mubr.f32.mxu0 0.0
      %3853 = vmatmul.mubr.f32.gmra.mxu0 %v3664
      %v3854 = vpop.f32.mrf.mxu0
      %v3855 = vadd.f32 0.0, %v3854
      %v3856 = vpop.f32.mrf.mxu0
      %3857 = vmatprep.mubr.f32.mxu0 0.0
      %3858 = vmatmul.mubr.f32.gmra.mxu0 %v3667
      %v3859 = vpop.f32.mrf.mxu0
      %v3860 = vadd.f32 0.0, %v3859
      %v3861 = vpop.f32.mrf.mxu0
      %3862 = vmatprep.mubr.f32.mxu0 0.0
      %3863 = vmatmul.mubr.f32.gmra.mxu0 %v3670
      %v3864 = vpop.f32.mrf.mxu0
      %v3865 = vadd.f32 0.0, %v3864
      %v3866 = vpop.f32.mrf.mxu0
      %3867 = vmatprep.mubr.f32.mxu0 0.0
      %3868 = vmatmul.mubr.f32.gmra.mxu0 %v3673
      %v3869 = vpop.f32.mrf.mxu0
      %v3870 = vadd.f32 0.0, %v3869
      %v3871 = vpop.f32.mrf.mxu0
      %3872 = vmatprep.mubr.f32.mxu0 0.0
      %3873 = vmatmul.mubr.f32.gmra.mxu0 %v3676
      %v3874 = vpop.f32.mrf.mxu0
      %v3875 = vadd.f32 0.0, %v3874
      %v3876 = vpop.f32.mrf.mxu0
      %3877 = vmatprep.mubr.f32.mxu0 0.0
      %3878 = vmatmul.mubr.f32.gmra.mxu0 %v3679
      %v3879 = vpop.f32.mrf.mxu0
      %v3880 = vadd.f32 0.0, %v3879
      %v3881 = vpop.f32.mrf.mxu0
      %3882 = vmatprep.mubr.f32.mxu0 0.0
      %3883 = vmatmul.mubr.f32.gmra.mxu0 %v3682
      %v3884 = vpop.f32.mrf.mxu0
      %v3885 = vadd.f32 0.0, %v3884
      %v3886 = vpop.f32.mrf.mxu0
      %3887 = vmatprep.mubr.f32.mxu0 0.0
      %3888 = vmatmul.mubr.f32.gmra.mxu0 %v3685
      %v3889 = vpop.f32.mrf.mxu0
      %v3890 = vadd.f32 0.0, %v3889
      %v3891 = vpop.f32.mrf.mxu0
      %3892 = vmatprep.mubr.f32.mxu0 0.0
      %3893 = vmatmul.mubr.f32.gmra.mxu0 %v3688
      %v3894 = vpop.f32.mrf.mxu0
      %v3895 = vadd.f32 0.0, %v3894
      %v3896 = vpop.f32.mrf.mxu0
      %3897 = vmatprep.mubr.f32.mxu0 0.0
      %3898 = vmatmul.mubr.f32.gmra.mxu0 %v3691
      %v3899 = vpop.f32.mrf.mxu0
      %v3900 = vadd.f32 0.0, %v3899
      %v3901 = vpop.f32.mrf.mxu0
      %3902 = vmatprep.mubr.f32.mxu0 0.0
      %3903 = vmatmul.mubr.f32.gmra.mxu0 %v3694
      %v3904 = vpop.f32.mrf.mxu0
      %v3905 = vadd.f32 0.0, %v3904
      %v3906 = vpop.f32.mrf.mxu0
      %3907 = vmatprep.mubr.f32.mxu0 0.0
      %3908 = vmatmul.mubr.f32.gmra.mxu0 %v3697
      %v3909 = vpop.f32.mrf.mxu0
      %v3910 = vadd.f32 0.0, %v3909
      %v3911 = vpop.f32.mrf.mxu0
      %3912 = vmatprep.mubr.f32.mxu0 0.0
      %3913 = vmatmul.mubr.f32.gmra.mxu0 %v3700
      %v3914 = vpop.f32.mrf.mxu0
      %v3915 = vadd.f32 0.0, %v3914
      %v3916 = vpop.f32.mrf.mxu0
      %3917 = vmatprep.mubr.f32.mxu0 0.0
      %3918 = vmatmul.mubr.f32.gmra.mxu0 %v3703
      %v3919 = vpop.f32.mrf.mxu0
      %v3920 = vadd.f32 0.0, %v3919
      %v3921 = vpop.f32.mrf.mxu0
      %3922 = vmatprep.mubr.f32.mxu0 0.0
      %3923 = vmatmul.mubr.f32.gmra.mxu0 %v3706
      %v3924 = vpop.f32.mrf.mxu0
      %v3925 = vadd.f32 0.0, %v3924
      %v3926 = vpop.f32.mrf.mxu0
      %3927 = vmatprep.mubr.f32.mxu0 0.0
      %3928 = vmatmul.mubr.f32.gmra.mxu0 %v3709
      %v3929 = vpop.f32.mrf.mxu0
      %v3930 = vadd.f32 0.0, %v3929
      %v3931 = vpop.f32.mrf.mxu0
      %3932 = vmatprep.mubr.f32.mxu0 0.0
      %3933 = vmatmul.mubr.f32.gmra.mxu0 %v3712
      %v3934 = vpop.f32.mrf.mxu0
      %v3935 = vadd.f32 0.0, %v3934
      %v3936 = vpop.f32.mrf.mxu0
      %3937 = vmatprep.mubr.f32.mxu0 0.0
      %3938 = vmatmul.mubr.f32.gmra.mxu0 %v3715
      %v3939 = vpop.f32.mrf.mxu0
      %v3940 = vadd.f32 0.0, %v3939
      %v3941 = vpop.f32.mrf.mxu0
      %3942 = vmatprep.mubr.f32.mxu0 0.0
      %3943 = vmatmul.mubr.f32.gmra.mxu0 %v3718
      %v3944 = vpop.f32.mrf.mxu0
      %v3945 = vadd.f32 0.0, %v3944
      %v3946 = vpop.f32.mrf.mxu0
      %3947 = vdwg.mxu0
      %v3948 = vadd.f32 %v3559, %v3790
      %v3949 = vadd.f32 %v3560, %v3795
      %v3950 = vadd.f32 %v3561, %v3800
      %v3951 = vadd.f32 %v3562, %v3805
      %v3952 = vadd.f32 %v3563, %v3810
      %v3953 = vadd.f32 %v3564, %v3815
      %v3954 = vadd.f32 %v3565, %v3820
      %v3955 = vadd.f32 %v3566, %v3825
      %v3956 = vadd.f32 %v3567, %v3830
      %v3957 = vadd.f32 %v3568, %v3835
      %v3958 = vadd.f32 %v3569, %v3840
      %v3959 = vadd.f32 %v3570, %v3845
      %v3960 = vadd.f32 %v3571, %v3850
      %v3961 = vadd.f32 %v3572, %v3855
      %v3962 = vadd.f32 %v3573, %v3860
      %v3963 = vadd.f32 %v3574, %v3865
      %v3964 = vadd.f32 %v3575, %v3870
      %v3965 = vadd.f32 %v3576, %v3875
      %v3966 = vadd.f32 %v3577, %v3880
      %v3967 = vadd.f32 %v3578, %v3885
      %v3968 = vadd.f32 %v3579, %v3890
      %v3969 = vadd.f32 %v3580, %v3895
      %v3970 = vadd.f32 %v3581, %v3900
      %v3971 = vadd.f32 %v3582, %v3905
      %v3972 = vadd.f32 %v3583, %v3910
      %v3973 = vadd.f32 %v3584, %v3915
      %v3974 = vadd.f32 %v3585, %v3920
      %v3975 = vadd.f32 %v3586, %v3925
      %v3976 = vadd.f32 %v3587, %v3930
      %v3977 = vadd.f32 %v3588, %v3935
      %v3978 = vadd.f32 %v3589, %v3940
      %v3979 = vadd.f32 %v3590, %v3945
      %v3980 = vld [vmem:[%s7] sm:$0x1]
      %v3982 = vlaneseq
      %v3983 = vshrl.u32 %v3982, 7
      %v3984 = vsub.s32 0, %v3983
      %v3985 = vrot.slane %v3980, %v3984
      %v3987 = vadd.f32 %v3948, %v3985
      %v3988 = vadd.f32 %v3949, %v3985
      %v3989 = vadd.f32 %v3950, %v3985
      %v3990 = vadd.f32 %v3951, %v3985
      %v3991 = vadd.f32 %v3952, %v3985
      %v3992 = vadd.f32 %v3953, %v3985
      %v3993 = vadd.f32 %v3954, %v3985
      %v3994 = vadd.f32 %v3955, %v3985
      %v3995 = vadd.f32 %v3956, %v3985
      %v3996 = vadd.f32 %v3957, %v3985
      %v3997 = vadd.f32 %v3958, %v3985
      %v3998 = vadd.f32 %v3959, %v3985
      %v3999 = vadd.f32 %v3960, %v3985
      %v4000 = vadd.f32 %v3961, %v3985
      %v4001 = vadd.f32 %v3962, %v3985
      %v4002 = vadd.f32 %v3963, %v3985
      %v4003 = vadd.f32 %v3964, %v3985
      %v4004 = vadd.f32 %v3965, %v3985
      %v4005 = vadd.f32 %v3966, %v3985
      %v4006 = vadd.f32 %v3967, %v3985
      %v4007 = vadd.f32 %v3968, %v3985
      %v4008 = vadd.f32 %v3969, %v3985
      %v4009 = vadd.f32 %v3970, %v3985
      %v4010 = vadd.f32 %v3971, %v3985
      %v4011 = vadd.f32 %v3972, %v3985
      %v4012 = vadd.f32 %v3973, %v3985
      %v4013 = vadd.f32 %v3974, %v3985
      %v4014 = vadd.f32 %v3975, %v3985
      %v4015 = vadd.f32 %v3976, %v3985
      %v4016 = vadd.f32 %v3977, %v3985
      %v4017 = vadd.f32 %v3978, %v3985
      %v4018 = vadd.f32 %v3979, %v3985
      %vm4019 = vcmask 64512
      %4020 = vst.msk [vmem:[%s368] sm:$0xff] %vm4019, %v3987
      %4021 = vst.msk [vmem:[%s368 + $0x8] sm:$0xff] %vm4019, %v3988
      %4022 = vst.msk [vmem:[%s368 + $0x10] sm:$0xff] %vm4019, %v3989
      %4023 = vst.msk [vmem:[%s368 + $0x18] sm:$0xff] %vm4019, %v3990
      %4024 = vst.msk [vmem:[%s368 + $0x20] sm:$0xff] %vm4019, %v3991
      %4025 = vst.msk [vmem:[%s368 + $0x28] sm:$0xff] %vm4019, %v3992
      %4026 = vst.msk [vmem:[%s368 + $0x30] sm:$0xff] %vm4019, %v3993
      %4027 = vst.msk [vmem:[%s368 + $0x38] sm:$0xff] %vm4019, %v3994
      %4028 = vst.msk [vmem:[%s368 + $0x40] sm:$0xff] %vm4019, %v3995
      %4029 = vst.msk [vmem:[%s368 + $0x48] sm:$0xff] %vm4019, %v3996
      %4030 = vst.msk [vmem:[%s368 + $0x50] sm:$0xff] %vm4019, %v3997
      %4031 = vst.msk [vmem:[%s368 + $0x58] sm:$0xff] %vm4019, %v3998
      %4032 = vst.msk [vmem:[%s368 + $0x60] sm:$0xff] %vm4019, %v3999
      %4033 = vst.msk [vmem:[%s368 + $0x68] sm:$0xff] %vm4019, %v4000
      %4034 = vst.msk [vmem:[%s368 + $0x70] sm:$0xff] %vm4019, %v4001
      %4035 = vst.msk [vmem:[%s368 + $0x78] sm:$0xff] %vm4019, %v4002
      %4036 = vst.msk [vmem:[%s368 + $0x80] sm:$0xff] %vm4019, %v4003
      %4037 = vst.msk [vmem:[%s368 + $0x88] sm:$0xff] %vm4019, %v4004
      %4038 = vst.msk [vmem:[%s368 + $0x90] sm:$0xff] %vm4019, %v4005
      %4039 = vst.msk [vmem:[%s368 + $0x98] sm:$0xff] %vm4019, %v4006
      %4040 = vst.msk [vmem:[%s368 + $0xa0] sm:$0xff] %vm4019, %v4007
      %4041 = vst.msk [vmem:[%s368 + $0xa8] sm:$0xff] %vm4019, %v4008
      %4042 = vst.msk [vmem:[%s368 + $0xb0] sm:$0xff] %vm4019, %v4009
      %4043 = vst.msk [vmem:[%s368 + $0xb8] sm:$0xff] %vm4019, %v4010
      %4044 = vst.msk [vmem:[%s368 + $0xc0] sm:$0xff] %vm4019, %v4011
      %4045 = vst.msk [vmem:[%s368 + $0xc8] sm:$0xff] %vm4019, %v4012
      %4046 = vst.msk [vmem:[%s368 + $0xd0] sm:$0xff] %vm4019, %v4013
      %4047 = vst.msk [vmem:[%s368 + $0xd8] sm:$0xff] %vm4019, %v4014
      %4048 = vst.msk [vmem:[%s368 + $0xe0] sm:$0xff] %vm4019, %v4015
      %4049 = vst.msk [vmem:[%s368 + $0xe8] sm:$0xff] %vm4019, %v4016
      %4050 = vst.msk [vmem:[%s368 + $0xf0] sm:$0xff] %vm4019, %v4017
      %4051 = vst.msk [vmem:[%s368 + $0xf8] sm:$0xff] %vm4019, %v4018
      %s4052 = smul.u32 8, %s24
      %p4053 = scmp.lt.s32.totalorder %s23, 1
      %s4054 = scalar_select %p4053, %s23, 1
      %p4055 = scmp.lt.s32.totalorder %s4052, 31
      %s4056 = scalar_select %p4055, %s4052, 31
      %s4057 = smul.addr %s4056, 4
      %s4058 = smul.addr %s4054, 128
      %s4059 = sadd.s32 %s4057, %s4058
      %s4060 = smul.addr %s4059, 8
      %s4061 = scalar_lea.vmem %s8, %s4060
      // Predicated region
      $region64: #{gblock_forward.7} parent=51 // pred_check
        %p4062 = pneg %p231
      $region65: #{gblock_forward.7} parent=51 // pred_check_branch
        %4064 = sbr.rel (%p4062) target = $region67
      $region66: #{gblock_forward.7} parent=51 // pred_region
        %s4065 = smul.u32 8, %s24
      $region67: #{gblock_forward.7} parent=51 // pred_fallthru
        _
    $region52: #{gblock_forward.7} parent=5 // pred_fallthru
      _
    %p4066 = scmp.le.s32.totalorder 2, %s14
    // Predicated region
    $region68: #{gblock_forward.7} parent=5 // pred_check
      %p4067 = pneg %p4066
    $region69: #{gblock_forward.7} parent=5 // pred_check_branch
      %4069 = sbr.rel (%p4067) target = $region71
    $region70: #{gblock_forward.7} parent=5 // pred_region
      %s4070 = ssub.s32 %s14, 2
      // Predicated region
      $region72: #{gblock_forward.7} parent=70 // pred_check
        %p4071 = pneg %p237
      $region73: #{gblock_forward.7} parent=70 // pred_check_branch
        %4073 = sbr.rel (%p4071) target = $region75
      $region74: #{gblock_forward.7} parent=70 // pred_region
        %s4074 = smul.u32 8, %s26
        %p4075 = scmp.lt.s32.totalorder %s25, 1
        %s4076 = scalar_select %p4075, %s25, 1
        %p4077 = scmp.lt.s32.totalorder %s4074, 31
        %s4078 = scalar_select %p4077, %s4074, 31
        %s4079 = smul.addr %s4078, 4
        %s4080 = smul.addr %s4076, 128
        %s4081 = sadd.s32 %s4079, %s4080
        %s4082 = smul.addr %s4081, 8
        %s4083 = scalar_lea.vmem %s8, %s4082
      $region75: #{gblock_forward.7} parent=70 // pred_fallthru
        _
    $region71: #{gblock_forward.7} parent=5 // pred_fallthru
      _
  $region6: #{gblock_forward.7} parent=0 // loop_footer
    %s18 = sadd.s32 1, %s14
  $region7: #{gblock_forward.7} parent=0 // loop_footer_branch
    %13 = sbr.rel target = $region3
  $region8: #{gblock_forward.7} parent=0 // loop_exit
    _

</llo_original>
